<compile_context>
chip_gen: v7x
topology: tpu7x:2x2x1
jax: 0.10.0
libtpu: 0.0.40
codegen_flags: <defaults>
</compile_context>

<pallas_src>
import functools
import math

import jax
import jax.numpy as jnp
from jax.experimental import pallas as pl
from jax.experimental.pallas import tpu as pltpu

E_MODEL = 256          # d_model used by TransGOP
NHEAD = 8
DFF = 512              # dim_feedforward
NUM_LAYERS = 2
LN_EPS = 1e-5
VMEM_LIMIT = 32 * 1024 * 1024


# ----------------------------------------------------------------------------
# helpers
# ----------------------------------------------------------------------------
def _rup(x, m):
    return ((x + m - 1) // m) * m


def _plan(dim, align, cap):
    """Return (tile, padded_dim): tile divides padded_dim, no pad when aligned."""
    d = _rup(dim, align)
    if d <= cap:
        return d, d
    return cap, _rup(d, cap)


# ----------------------------------------------------------------------------
# Pallas kernels
# ----------------------------------------------------------------------------
def _make_mm_kernel(relu):
    def kernel(a_ref, b_ref, bias_ref, o_ref, acc_ref):
        @pl.when(pl.program_id(2) == 0)
        def _():
            acc_ref[...] = jnp.zeros_like(acc_ref)

        acc_ref[...] += jnp.dot(a_ref[...], b_ref[...],
                                preferred_element_type=jnp.float32)

        @pl.when(pl.program_id(2) == pl.num_programs(2) - 1)
        def _():
            y = acc_ref[...] + bias_ref[...]
            if relu:
                y = jnp.maximum(y, 0.0)
            o_ref[...] = y
    return kernel


_MM_KERNELS = {False: _make_mm_kernel(False), True: _make_mm_kernel(True)}


def matmul_bias_act(a, b, bias=None, relu=False):
    """y = relu?(a @ b + bias); bf16 MXU operands, f32 accumulation."""
    M, K = a.shape
    K2, N = b.shape
    assert K == K2
    if bias is None:
        bias = jnp.zeros((N,), jnp.float32)

    tm, Mp = _plan(M, 8, 256)
    tk, Kp = _plan(K, 128, 512)
    tn, Np = _plan(N, 128, 512)

    a_bf = a.astype(jnp.bfloat16)
    b_bf = b.astype(jnp.bfloat16)
    if (Mp, Kp) != (M, K):
        a_bf = jnp.pad(a_bf, ((0, Mp - M), (0, Kp - K)))
    if (Kp, Np) != (K, N):
        b_bf = jnp.pad(b_bf, ((0, Kp - K), (0, Np - N)))
    bias_p = bias.astype(jnp.float32).reshape(1, N)
    if Np != N:
        bias_p = jnp.pad(bias_p, ((0, 0), (0, Np - N)))

    out = pl.pallas_call(
        _MM_KERNELS[bool(relu)],
        out_shape=jax.ShapeDtypeStruct((Mp, Np), jnp.float32),
        grid=(Mp // tm, Np // tn, Kp // tk),
        in_specs=[
            pl.BlockSpec((tm, tk), lambda i, j, k: (i, k)),
            pl.BlockSpec((tk, tn), lambda i, j, k: (k, j)),
            pl.BlockSpec((1, tn), lambda i, j, k: (0, j)),
        ],
        out_specs=pl.BlockSpec((tm, tn), lambda i, j, k: (i, j)),
        scratch_shapes=[pltpu.VMEM((tm, tn), jnp.float32)],
        compiler_params=pltpu.CompilerParams(
            dimension_semantics=("parallel", "parallel", "arbitrary"),
            vmem_limit_bytes=VMEM_LIMIT),
    )(a_bf, b_bf, bias_p)
    if (Mp, Np) != (M, N):
        out = out[:M, :N]
    return out


def _make_ln_kernel(with_res):
    if with_res:
        def kernel(x_ref, r_ref, g_ref, b_ref, o_ref):
            x = x_ref[...] + r_ref[...]
            mu = jnp.mean(x, axis=-1, keepdims=True)
            xc = x - mu
            var = jnp.mean(xc * xc, axis=-1, keepdims=True)
            o_ref[...] = xc * jax.lax.rsqrt(var + LN_EPS) * g_ref[...] + b_ref[...]
    else:
        def kernel(x_ref, g_ref, b_ref, o_ref):
            x = x_ref[...]
            mu = jnp.mean(x, axis=-1, keepdims=True)
            xc = x - mu
            var = jnp.mean(xc * xc, axis=-1, keepdims=True)
            o_ref[...] = xc * jax.lax.rsqrt(var + LN_EPS) * g_ref[...] + b_ref[...]
    return kernel


_LN_KERNELS = {False: _make_ln_kernel(False), True: _make_ln_kernel(True)}


def pallas_layernorm(x, g, b, residual=None):
    """LayerNorm over the last dim, with the residual add fused in-kernel."""
    shp = x.shape
    D = shp[-1]
    rows = int(math.prod(shp[:-1]))
    tr, Rp = _plan(rows, 8, 512)

    x2 = x.reshape(rows, D).astype(jnp.float32)
    if Rp != rows:
        x2 = jnp.pad(x2, ((0, Rp - rows), (0, 0)))
    args = [x2]
    in_specs = [pl.BlockSpec((tr, D), lambda i: (i, 0))]
    if residual is not None:
        r2 = residual.reshape(rows, D).astype(jnp.float32)
        if Rp != rows:
            r2 = jnp.pad(r2, ((0, Rp - rows), (0, 0)))
        args.append(r2)
        in_specs.append(pl.BlockSpec((tr, D), lambda i: (i, 0)))
    args += [g.reshape(1, D).astype(jnp.float32),
             b.reshape(1, D).astype(jnp.float32)]
    in_specs += [pl.BlockSpec((1, D), lambda i: (0, 0)),
                 pl.BlockSpec((1, D), lambda i: (0, 0))]

    y = pl.pallas_call(
        _LN_KERNELS[residual is not None],
        out_shape=jax.ShapeDtypeStruct((Rp, D), jnp.float32),
        grid=(Rp // tr,),
        in_specs=in_specs,
        out_specs=pl.BlockSpec((tr, D), lambda i: (i, 0)),
        compiler_params=pltpu.CompilerParams(
            dimension_semantics=("parallel",),
            vmem_limit_bytes=VMEM_LIMIT),
    )(*args)
    return y[:rows].reshape(shp)


def _attn_kernel(q_ref, k_ref, v_ref, bias_ref, o_ref, *, scale):
    # one (batch, head) group per grid step; everything stays in VMEM
    q = q_ref[0, 0]                                    # (Lq, hd) bf16
    k = k_ref[0, 0]                                    # (Lk, hd) bf16
    v = v_ref[0, 0]                                    # (Lk, hd) bf16
    s = jax.lax.dot_general(q, k, (((1,), (1,)), ((), ())),
                            preferred_element_type=jnp.float32)
    s = s * scale + bias_ref[0]                        # (Lq, Lk) + (1, Lk)
    m = jnp.max(s, axis=-1, keepdims=True)
    p = jnp.exp(s - m)
    l = jnp.sum(p, axis=-1, keepdims=True)
    p = p * pl.reciprocal(l, approx=True)
    o_ref[0, 0] = jnp.dot(p.astype(jnp.bfloat16), v,
                          preferred_element_type=jnp.float32)


def fused_attention(qh, kh, vh, key_bias, scale):
    """qh/kh/vh: (B, H, L, hd).  key_bias: (B, 1, Lk) additive f32 or None."""
    B, H, Lq, hd = qh.shape
    Lk = kh.shape[2]
    if key_bias is None:
        key_bias = jnp.zeros((B, 1, Lk), jnp.float32)
    kernel = functools.partial(_attn_kernel, scale=scale)
    return pl.pallas_call(
        kernel,
        out_shape=jax.ShapeDtypeStruct((B, H, Lq, hd), jnp.float32),
        grid=(B, H),
        in_specs=[
            pl.BlockSpec((1, 1, Lq, hd), lambda b, h: (b, h, 0, 0)),
            pl.BlockSpec((1, 1, Lk, hd), lambda b, h: (b, h, 0, 0)),
            pl.BlockSpec((1, 1, Lk, hd), lambda b, h: (b, h, 0, 0)),
            pl.BlockSpec((1, 1, Lk), lambda b, h: (b, 0, 0)),
        ],
        out_specs=pl.BlockSpec((1, 1, Lq, hd), lambda b, h: (b, h, 0, 0)),
        compiler_params=pltpu.CompilerParams(
            dimension_semantics=("parallel", "parallel"),
            vmem_limit_bytes=VMEM_LIMIT),
    )(qh.astype(jnp.bfloat16), kh.astype(jnp.bfloat16),
      vh.astype(jnp.bfloat16), key_bias.astype(jnp.float32))


# ----------------------------------------------------------------------------
# Multi-head attention / FFN / decoder layer
# ----------------------------------------------------------------------------
def mha(q_in, k_in, v_in, p, nhead, key_bias=None):
    Lq, B, E = q_in.shape
    Lk = k_in.shape[0]
    hd = E // nhead
    Wq, Wk, Wv = p['in_w'][:E], p['in_w'][E:2 * E], p['in_w'][2 * E:]
    bq, bk, bv = p['in_b'][:E], p['in_b'][E:2 * E], p['in_b'][2 * E:]

    q2d = q_in.reshape(Lq * B, E)
    v2d = v_in.reshape(Lk * B, E)
    if q_in is k_in:
        # self-attention: fused Q/K projection (one GEMM, N = 2E)
        qk = matmul_bias_act(q2d, jnp.concatenate([Wq, Wk], axis=0).T,
                             bias=jnp.concatenate([bq, bk]))
        q, k = qk[:, :E], qk[:, E:]
        v = matmul_bias_act(v2d, Wv.T, bias=bv)
    else:
        # cross-attention: q/k/v come from three different tensors
        k2d = k_in.reshape(Lk * B, E)
        q = matmul_bias_act(q2d, Wq.T, bias=bq)
        k = matmul_bias_act(k2d, Wk.T, bias=bk)
        v = matmul_bias_act(v2d, Wv.T, bias=bv)

    qh = q.reshape(Lq, B, nhead, hd).transpose(1, 2, 0, 3)
    kh = k.reshape(Lk, B, nhead, hd).transpose(1, 2, 0, 3)
    vh = v.reshape(Lk, B, nhead, hd).transpose(1, 2, 0, 3)

    out = fused_attention(qh, kh, vh, key_bias, 1.0 / math.sqrt(hd))  # (B,H,Lq,hd)
    out2d = out.transpose(2, 0, 1, 3).reshape(Lq * B, E)
    out2d = matmul_bias_act(out2d, p['out_w'].T, bias=p['out_b'])
    return out2d.reshape(Lq, B, E)


def ffn(x, p):
    L, B, E = x.shape
    h = matmul_bias_act(x.reshape(L * B, E), p['lin1_w'].T, bias=p['lin1_b'],
                        relu=True)
    y = matmul_bias_act(h, p['lin2_w'].T, bias=p['lin2_b'])
    return y.reshape(L, B, E)


def decoder_layer_fwd(p, tgt, memory, pos, query_pos, mem_key_bias):
    # self-attention (q = k = tgt + query_pos, v = tgt)
    q = tgt + query_pos
    tgt2 = mha(q, q, tgt, p['self_attn'], NHEAD, None)
    tgt = pallas_layernorm(tgt2, p['norm1_g'], p['norm1_b'], residual=tgt)
    # cross-attention (q = tgt + query_pos, k = memory + pos, v = memory)
    tgt2 = mha(tgt + query_pos, memory + pos, memory, p['cross_attn'],
               NHEAD, mem_key_bias)
    tgt = pallas_layernorm(tgt2, p['norm2_g'], p['norm2_b'], residual=tgt)
    # FFN
    tgt2 = ffn(tgt, p)
    tgt = pallas_layernorm(tgt2, p['norm3_g'], p['norm3_b'], residual=tgt)
    return tgt


def transformer_decoder_fwd(params, tgt, memory,
                            memory_key_padding_mask=None,
                            pos=None, query_pos=None,
                            return_intermediate=False):
    """Matches TransformerDecoder.forward (post-norm DETR decoder layers)."""
    if pos is None:
        pos = jnp.zeros_like(memory)
    if query_pos is None:
        query_pos = jnp.zeros_like(tgt)
    if memory_key_padding_mask is not None:
        mem_key_bias = jnp.where(memory_key_padding_mask, -1e9, 0.0
                                 )[:, None, :].astype(jnp.float32)  # (B,1,Lk)
    else:
        mem_key_bias = None

    output = tgt
    intermediate = []
    for lp in params['layers']:
        output = decoder_layer_fwd(lp, output, memory, pos, query_pos,
                                   mem_key_bias)
        if return_intermediate:
            intermediate.append(
                pallas_layernorm(output, params['norm_g'], params['norm_b']))
    if params.get('norm_g') is not None:
        output = pallas_layernorm(output, params['norm_g'], params['norm_b'])
        if return_intermediate:
            intermediate[-1] = output
    if return_intermediate:
        return jnp.stack(intermediate)
    return output[None]                       # == output.unsqueeze(0)


# ----------------------------------------------------------------------------
# Pure-JAX f32 reference (for validation)
# ----------------------------------------------------------------------------
def reference_decoder(params, tgt, memory, mem_mask, pos, query_pos):
    def ln(x, g, b):
        mu = x.mean(-1, keepdims=True)
        var = ((x - mu) ** 2).mean(-1, keepdims=True)
        return (x - mu) / jnp.sqrt(var + LN_EPS) * g + b

    def attn(q_in, k_in, v_in, p, key_mask=None):
        Lq, B, E = q_in.shape
        Lk = k_in.shape[0]
        hd = E // NHEAD
        Wq, Wk, Wv = p['in_w'][:E], p['in_w'][E:2 * E], p['in_w'][2 * E:]
        bq, bk, bv = p['in_b'][:E], p['in_b'][E:2 * E], p['in_b'][2 * E:]
        q = q_in @ Wq.T + bq
        k = k_in @ Wk.T + bk
        v = v_in @ Wv.T + bv
        qh = q.reshape(Lq, B, NHEAD, hd).transpose(1, 2, 0, 3)
        kh = k.reshape(Lk, B, NHEAD, hd).transpose(1, 2, 0, 3)
        vh = v.reshape(Lk, B, NHEAD, hd).transpose(1, 2, 0, 3)
        s = jnp.einsum('bhqd,bhkd->bhqk', qh, kh) / math.sqrt(hd)
        if key_mask is not None:
            s = s + jnp.where(key_mask, -1e9, 0.0)[:, None, None, :]
        a = jax.nn.softmax(s, axis=-1)
        o = jnp.einsum('bhqk,bhkd->bhqd', a, vh)
        o = o.transpose(2, 0, 1, 3).reshape(Lq, B, E)
        return o @ p['out_w'].T + p['out_b']

    out = tgt
    for lp in params['layers']:
        q = out + query_pos
        t2 = attn(q, q, out, lp['self_attn'])
        out = ln(out + t2, lp['norm1_g'], lp['norm1_b'])
        t2 = attn(out + query_pos, memory + pos, memory, lp['cross_attn'],
                  mem_mask)
        out = ln(out + t2, lp['norm2_g'], lp['norm2_b'])
        L, B, E = out.shape
        h = jax.nn.relu(out.reshape(L * B, E) @ lp['lin1_w'].T + lp['lin1_b'])
        t2 = (h @ lp['lin2_w'].T + lp['lin2_b']).reshape(L, B, E)
        out = ln(out + t2, lp['norm3_g'], lp['norm3_b'])
    out = ln(out, params['norm_g'], params['norm_b'])
    return out[None]


# ----------------------------------------------------------------------------
# Deterministic parameter init
# ----------------------------------------------------------------------------
def init_params(key, num_layers=NUM_LAYERS):
    keys = iter(jax.random.split(key, 18 * num_layers + 4))

    def nk():
        return next(keys)

    def lin(out_f, in_f):
        w = jax.random.normal(nk(), (out_f, in_f), jnp.float32) * math.sqrt(1.0 / in_f)
        b = 0.01 * jax.random.normal(nk(), (out_f,), jnp.float32)
        return w, b

    def mha_p(E):
        return {'in_w': jax.random.normal(nk(), (3 * E, E), jnp.float32) * math.sqrt(1.0 / E),
                'in_b': 0.01 * jax.random.normal(nk(), (3 * E,), jnp.float32),
                'out_w': jax.random.normal(nk(), (E, E), jnp.float32) * math.sqrt(1.0 / E),
                'out_b': 0.01 * jax.random.normal(nk(), (E,), jnp.float32)}

    def ln(E):
        return (1.0 + 0.05 * jax.random.normal(nk(), (E,), jnp.float32),
                0.05 * jax.random.normal(nk(), (E,), jnp.float32))

    layers = []
    for _ in range(num_layers):
        lp = {'self_attn': mha_p(E_MODEL), 'cross_attn': mha_p(E_MODEL)}
        lp['lin1_w'], lp['lin1_b'] = lin(DFF, E_MODEL)
        lp['lin2_w'], lp['lin2_b'] = lin(E_MODEL, DFF)
        lp['norm1_g'], lp['norm1_b'] = ln(E_MODEL)
        lp['norm2_g'], lp['norm2_b'] = ln(E_MODEL)
        lp['norm3_g'], lp['norm3_b'] = ln(E_MODEL)
        layers.append(lp)
    ng, nb = ln(E_MODEL)
    return {'layers': layers, 'norm_g': ng, 'norm_b': nb}


# ----------------------------------------------------------------------------
if __name__ == "__main__":
    key = jax.random.PRNGKey(0)
    kp, k1, k2, k3, k4 = jax.random.split(key, 5)

    B = 2
    L_TGT = 64           # query (tgt) sequence length
    L_MEM = 32           # memory sequence length

    params = init_params(kp)
    tgt = jax.random.normal(k1, (L_TGT, B, E_MODEL), jnp.float32)
    memory = jax.random.normal(k2, (L_MEM, B, E_MODEL), jnp.float32)
    query_pos = jax.random.normal(k3, (L_TGT, B, E_MODEL), jnp.float32)
    pos = jax.random.normal(k4, (L_MEM, B, E_MODEL), jnp.float32)
    mem_mask = jnp.zeros((B, L_MEM), dtype=bool).at[:, -4:].set(True)

    @jax.jit
    def fwd(params, tgt, memory, mem_mask, pos, query_pos):
        return transformer_decoder_fwd(
            params, tgt, memory,
            memory_key_padding_mask=mem_mask,
            pos=pos, query_pos=query_pos,
            return_intermediate=False)

    out = fwd(params, tgt, memory, mem_mask, pos, query_pos)
    out = jax.block_until_ready(out)

    assert out.shape == (1, L_TGT, B, E_MODEL), out.shape
    assert bool(jnp.all(jnp.isfinite(out)))

    ref = reference_decoder(params, tgt, memory, mem_mask, pos, query_pos)
    err = float(jnp.max(jnp.abs(out - ref)))
    assert err < 0.25, f"max abs error vs f32 reference too large: {err}"

    print("KERNEL_OK")
</pallas_src>

<mosaic_0001>
module attributes {stable_mosaic.version = 11 : i64} {
  func.func @kernel(%arg0: i32, %arg1: i32, %arg2: i32, %arg3: memref<128x256xbf16, #tpu.memory_space<vmem>>, %arg4: memref<256x512xbf16, #tpu.memory_space<vmem>>, %arg5: memref<1x512xf32, #tpu.memory_space<vmem>>, %arg6: memref<128x512xf32, #tpu.memory_space<vmem>>, %arg7: memref<128x512xf32, #tpu.memory_space<vmem>>) attributes {dimension_semantics = [#tpu.dimension_semantics<parallel>, #tpu.dimension_semantics<parallel>, #tpu.dimension_semantics<arbitrary>], iteration_bounds = array<i64: 1, 1, 1>, scalar_prefetch = 0 : i64, scratch_operands = 1 : i64, tpu.core_type = #tpu.core_type<tc>, window_params = [{transform_indices = @transform_0, window_bounds = array<i64: 128, 256>}, {transform_indices = @transform_1, window_bounds = array<i64: 256, 512>}, {transform_indices = @transform_2, window_bounds = array<i64: 1, 512>}, {transform_indices = @transform_3, window_bounds = array<i64: 128, 512>}]} {
    %c0_i32 = arith.constant 0 : i32
    %0 = arith.cmpi eq, %arg2, %c0_i32 : i32
    %1 = arith.extui %0 : i1 to i32
    %c0_i32_0 = arith.constant 0 : i32
    %2 = arith.cmpi ne, %1, %c0_i32_0 : i32
    scf.if %2 {
      %cst_10 = arith.constant 0.000000e+00 : f32
      %12 = vector.broadcast %cst_10 : f32 to vector<128x512xf32>
      %c0_11 = arith.constant 0 : index
      %c0_12 = arith.constant 0 : index
      %13 = vector.load %arg7[%c0_11, %c0_12] : memref<128x512xf32, #tpu.memory_space<vmem>>, vector<128x512xf32>
      tpu.vector_store %arg7[%c0_11, %c0_12], %12 {strides = array<i32>} : memref<128x512xf32, #tpu.memory_space<vmem>>, vector<128x512xf32>,
    } else {
    }
    %c0 = arith.constant 0 : index
    %c0_1 = arith.constant 0 : index
    %3 = vector.load %arg7[%c0, %c0_1] : memref<128x512xf32, #tpu.memory_space<vmem>>, vector<128x512xf32>
    %c0_2 = arith.constant 0 : index
    %c0_3 = arith.constant 0 : index
    %4 = vector.load %arg3[%c0_2, %c0_3] : memref<128x256xbf16, #tpu.memory_space<vmem>>, vector<128x256xbf16>
    %c0_4 = arith.constant 0 : index
    %c0_5 = arith.constant 0 : index
    %5 = vector.load %arg4[%c0_4, %c0_5] : memref<256x512xbf16, #tpu.memory_space<vmem>>, vector<256x512xbf16>
    %cst = arith.constant dense<0.000000e+00> : vector<128x512xf32>
    %6 = tpu.matmul %4, %5, %cst {dimension_numbers = #tpu.dot_dimension_numbers<[1], [0], [0], [1], [0, 0, 1, 1], [], []>} : vector<128x256xbf16>, vector<256x512xbf16>, vector<128x512xf32> -> vector<128x512xf32>
    %7 = arith.addf %3, %6 : vector<128x512xf32>
    %c0_6 = arith.constant 0 : index
    %c0_7 = arith.constant 0 : index
    %8 = vector.load %arg7[%c0_6, %c0_7] : memref<128x512xf32, #tpu.memory_space<vmem>>, vector<128x512xf32>
    tpu.vector_store %arg7[%c0_6, %c0_7], %7 {strides = array<i32>} : memref<128x512xf32, #tpu.memory_space<vmem>>, vector<128x512xf32>,
    %c0_i32_8 = arith.constant 0 : i32
    %9 = arith.cmpi eq, %arg2, %c0_i32_8 : i32
    %10 = arith.extui %9 : i1 to i32
    %c0_i32_9 = arith.constant 0 : i32
    %11 = arith.cmpi ne, %10, %c0_i32_9 : i32
    scf.if %11 {
      %c0_10 = arith.constant 0 : index
      %c0_11 = arith.constant 0 : index
      %12 = vector.load %arg7[%c0_10, %c0_11] : memref<128x512xf32, #tpu.memory_space<vmem>>, vector<128x512xf32>
      %c0_12 = arith.constant 0 : index
      %c0_13 = arith.constant 0 : index
      %13 = vector.load %arg5[%c0_12, %c0_13] : memref<1x512xf32, #tpu.memory_space<vmem>>, vector<1x512xf32>
      %14 = vector.broadcast %13 : vector<1x512xf32> to vector<128x512xf32>
      %15 = arith.addf %12, %14 : vector<128x512xf32>
      %c0_14 = arith.constant 0 : index
      %c0_15 = arith.constant 0 : index
      %16 = vector.load %arg6[%c0_14, %c0_15] : memref<128x512xf32, #tpu.memory_space<vmem>>, vector<128x512xf32>
      tpu.vector_store %arg6[%c0_14, %c0_15], %15 {strides = array<i32>} : memref<128x512xf32, #tpu.memory_space<vmem>>, vector<128x512xf32>,
    } else {
    }
    return
  }
  func.func @transform_0(%arg0: i32, %arg1: i32, %arg2: i32) -> (i32, i32) {
    %c0_i32 = arith.constant 0 : i32
    return %arg0, %arg2 : i32, i32
  }
  func.func @transform_1(%arg0: i32, %arg1: i32, %arg2: i32) -> (i32, i32) {
    %c0_i32 = arith.constant 0 : i32
    return %arg2, %arg1 : i32, i32
  }
  func.func @transform_2(%arg0: i32, %arg1: i32, %arg2: i32) -> (i32, i32) {
    %c0_i32 = arith.constant 0 : i32
    %c0_i32_0 = arith.constant 0 : i32
    return %c0_i32, %arg1 : i32, i32
  }
  func.func @transform_3(%arg0: i32, %arg1: i32, %arg2: i32) -> (i32, i32) {
    %c0_i32 = arith.constant 0 : i32
    return %arg0, %arg1 : i32, i32
  }
}

module attributes {stable_mosaic.version = 11 : i64} {
  func.func @kernel(%arg0: i32, %arg1: i32, %arg2: i32, %arg3: memref<128x256xbf16, #tpu.memory_space<vmem>>, %arg4: memref<256x256xbf16, #tpu.memory_space<vmem>>, %arg5: memref<1x256xf32, #tpu.memory_space<vmem>>, %arg6: memref<128x256xf32, #tpu.memory_space<vmem>>, %arg7: memref<128x256xf32, #tpu.memory_space<vmem>>) attributes {dimension_semantics = [#tpu.dimension_semantics<parallel>, #tpu.dimension_semantics<parallel>, #tpu.dimension_semantics<arbitrary>], iteration_bounds = array<i64: 1, 1, 1>, scalar_prefetch = 0 : i64, scratch_operands = 1 : i64, tpu.core_type = #tpu.core_type<tc>, window_params = [{transform_indices = @transform_0, window_bounds = array<i64: 128, 256>}, {transform_indices = @transform_1, window_bounds = array<i64: 256, 256>}, {transform_indices = @transform_2, window_bounds = array<i64: 1, 256>}, {transform_indices = @transform_3, window_bounds = array<i64: 128, 256>}]} {
    %c0_i32 = arith.constant 0 : i32
    %0 = arith.cmpi eq, %arg2, %c0_i32 : i32
    %1 = arith.extui %0 : i1 to i32
    %c0_i32_0 = arith.constant 0 : i32
    %2 = arith.cmpi ne, %1, %c0_i32_0 : i32
    scf.if %2 {
      %cst_10 = arith.constant 0.000000e+00 : f32
      %12 = vector.broadcast %cst_10 : f32 to vector<128x256xf32>
      %c0_11 = arith.constant 0 : index
      %c0_12 = arith.constant 0 : index
      %13 = vector.load %arg7[%c0_11, %c0_12] : memref<128x256xf32, #tpu.memory_space<vmem>>, vector<128x256xf32>
      tpu.vector_store %arg7[%c0_11, %c0_12], %12 {strides = array<i32>} : memref<128x256xf32, #tpu.memory_space<vmem>>, vector<128x256xf32>,
    } else {
    }
    %c0 = arith.constant 0 : index
    %c0_1 = arith.constant 0 : index
    %3 = vector.load %arg7[%c0, %c0_1] : memref<128x256xf32, #tpu.memory_space<vmem>>, vector<128x256xf32>
    %c0_2 = arith.constant 0 : index
    %c0_3 = arith.constant 0 : index
    %4 = vector.load %arg3[%c0_2, %c0_3] : memref<128x256xbf16, #tpu.memory_space<vmem>>, vector<128x256xbf16>
    %c0_4 = arith.constant 0 : index
    %c0_5 = arith.constant 0 : index
    %5 = vector.load %arg4[%c0_4, %c0_5] : memref<256x256xbf16, #tpu.memory_space<vmem>>, vector<256x256xbf16>
    %cst = arith.constant dense<0.000000e+00> : vector<128x256xf32>
    %6 = tpu.matmul %4, %5, %cst {dimension_numbers = #tpu.dot_dimension_numbers<[1], [0], [0], [1], [0, 0, 1, 1], [], []>} : vector<128x256xbf16>, vector<256x256xbf16>, vector<128x256xf32> -> vector<128x256xf32>
    %7 = arith.addf %3, %6 : vector<128x256xf32>
    %c0_6 = arith.constant 0 : index
    %c0_7 = arith.constant 0 : index
    %8 = vector.load %arg7[%c0_6, %c0_7] : memref<128x256xf32, #tpu.memory_space<vmem>>, vector<128x256xf32>
    tpu.vector_store %arg7[%c0_6, %c0_7], %7 {strides = array<i32>} : memref<128x256xf32, #tpu.memory_space<vmem>>, vector<128x256xf32>,
    %c0_i32_8 = arith.constant 0 : i32
    %9 = arith.cmpi eq, %arg2, %c0_i32_8 : i32
    %10 = arith.extui %9 : i1 to i32
    %c0_i32_9 = arith.constant 0 : i32
    %11 = arith.cmpi ne, %10, %c0_i32_9 : i32
    scf.if %11 {
      %c0_10 = arith.constant 0 : index
      %c0_11 = arith.constant 0 : index
      %12 = vector.load %arg7[%c0_10, %c0_11] : memref<128x256xf32, #tpu.memory_space<vmem>>, vector<128x256xf32>
      %c0_12 = arith.constant 0 : index
      %c0_13 = arith.constant 0 : index
      %13 = vector.load %arg5[%c0_12, %c0_13] : memref<1x256xf32, #tpu.memory_space<vmem>>, vector<1x256xf32>
      %14 = vector.broadcast %13 : vector<1x256xf32> to vector<128x256xf32>
      %15 = arith.addf %12, %14 : vector<128x256xf32>
      %c0_14 = arith.constant 0 : index
      %c0_15 = arith.constant 0 : index
      %16 = vector.load %arg6[%c0_14, %c0_15] : memref<128x256xf32, #tpu.memory_space<vmem>>, vector<128x256xf32>
      tpu.vector_store %arg6[%c0_14, %c0_15], %15 {strides = array<i32>} : memref<128x256xf32, #tpu.memory_space<vmem>>, vector<128x256xf32>,
    } else {
    }
    return
  }
  func.func @transform_0(%arg0: i32, %arg1: i32, %arg2: i32) -> (i32, i32) {
    %c0_i32 = arith.constant 0 : i32
    return %arg0, %arg2 : i32, i32
  }
  func.func @transform_1(%arg0: i32, %arg1: i32, %arg2: i32) -> (i32, i32) {
    %c0_i32 = arith.constant 0 : i32
    return %arg2, %arg1 : i32, i32
  }
  func.func @transform_2(%arg0: i32, %arg1: i32, %arg2: i32) -> (i32, i32) {
    %c0_i32 = arith.constant 0 : i32
    %c0_i32_0 = arith.constant 0 : i32
    return %c0_i32, %arg1 : i32, i32
  }
  func.func @transform_3(%arg0: i32, %arg1: i32, %arg2: i32) -> (i32, i32) {
    %c0_i32 = arith.constant 0 : i32
    return %arg0, %arg1 : i32, i32
  }
}

module attributes {stable_mosaic.version = 11 : i64} {
  func.func @_attn_kernel(%arg0: i32, %arg1: i32, %arg2: memref<1x1x64x32xbf16, #tpu.memory_space<vmem>>, %arg3: memref<1x1x64x32xbf16, #tpu.memory_space<vmem>>, %arg4: memref<1x1x64x32xbf16, #tpu.memory_space<vmem>>, %arg5: memref<1x1x64xf32, #tpu.memory_space<vmem>>, %arg6: memref<1x1x64x32xf32, #tpu.memory_space<vmem>>) attributes {dimension_semantics = [#tpu.dimension_semantics<parallel>, #tpu.dimension_semantics<parallel>], iteration_bounds = array<i64: 2, 8>, scalar_prefetch = 0 : i64, scratch_operands = 0 : i64, tpu.core_type = #tpu.core_type<tc>, window_params = [{transform_indices = @transform_0, window_bounds = array<i64: 1, 1, 64, 32>}, {transform_indices = @transform_1, window_bounds = array<i64: 1, 1, 64, 32>}, {transform_indices = @transform_2, window_bounds = array<i64: 1, 1, 64, 32>}, {transform_indices = @transform_3, window_bounds = array<i64: 1, 1, 64>}, {transform_indices = @transform_4, window_bounds = array<i64: 1, 1, 64, 32>}]} {
    %c0 = arith.constant 0 : index
    %c0_0 = arith.constant 0 : index
    %c0_1 = arith.constant 0 : index
    %c0_2 = arith.constant 0 : index
    %0 = vector.load %arg2[%c0, %c0_0, %c0_1, %c0_2] : memref<1x1x64x32xbf16, #tpu.memory_space<vmem>>, vector<1x1x64x32xbf16>
    %1 = vector.shape_cast %0 : vector<1x1x64x32xbf16> to vector<64x32xbf16>
    %c0_3 = arith.constant 0 : index
    %c0_4 = arith.constant 0 : index
    %c0_5 = arith.constant 0 : index
    %c0_6 = arith.constant 0 : index
    %2 = vector.load %arg3[%c0_3, %c0_4, %c0_5, %c0_6] : memref<1x1x64x32xbf16, #tpu.memory_space<vmem>>, vector<1x1x64x32xbf16>
    %3 = vector.shape_cast %2 : vector<1x1x64x32xbf16> to vector<64x32xbf16>
    %c0_7 = arith.constant 0 : index
    %c0_8 = arith.constant 0 : index
    %c0_9 = arith.constant 0 : index
    %c0_10 = arith.constant 0 : index
    %4 = vector.load %arg4[%c0_7, %c0_8, %c0_9, %c0_10] : memref<1x1x64x32xbf16, #tpu.memory_space<vmem>>, vector<1x1x64x32xbf16>
    %5 = vector.shape_cast %4 : vector<1x1x64x32xbf16> to vector<64x32xbf16>
    %cst = arith.constant dense<0.000000e+00> : vector<64x64xf32>
    %6 = tpu.matmul %1, %3, %cst {dimension_numbers = #tpu.dot_dimension_numbers<[1], [1], [0], [0], [0, 0, 1, 0], [], []>} : vector<64x32xbf16>, vector<64x32xbf16>, vector<64x64xf32> -> vector<64x64xf32>
    %cst_11 = arith.constant 0.176776692 : f32
    %7 = vector.broadcast %cst_11 : f32 to vector<64x64xf32>
    %8 = arith.mulf %6, %7 : vector<64x64xf32>
    %c0_12 = arith.constant 0 : index
    %c0_13 = arith.constant 0 : index
    %c0_14 = arith.constant 0 : index
    %9 = vector.load %arg5[%c0_12, %c0_13, %c0_14] : memref<1x1x64xf32, #tpu.memory_space<vmem>>, vector<1x1x64xf32>
    %10 = vector.shape_cast %9 : vector<1x1x64xf32> to vector<1x64xf32>
    %11 = vector.broadcast %10 : vector<1x64xf32> to vector<64x64xf32>
    %12 = arith.addf %8, %11 : vector<64x64xf32>
    %cst_15 = arith.constant dense<0xFF800000> : vector<64xf32>
    %13 = vector.multi_reduction <maximumf>, %12, %cst_15 [1] : vector<64x64xf32> to vector<64xf32>
    %14 = vector.shape_cast %13 : vector<64xf32> to vector<64x1xf32>
    %15 = vector.broadcast %14 : vector<64x1xf32> to vector<64x64xf32>
    %16 = arith.subf %12, %15 : vector<64x64xf32>
    %17 = math.exp %16 : vector<64x64xf32>
    %cst_16 = arith.constant dense<0.000000e+00> : vector<64xf32>
    %18 = vector.multi_reduction <add>, %17, %cst_16 [1] : vector<64x64xf32> to vector<64xf32>
    %19 = vector.shape_cast %18 : vector<64xf32> to vector<64x1xf32>
    %20 = tpu.reciprocal %19 {approx = true} : vector<64x1xf32> -> vector<64x1xf32>
    %21 = vector.broadcast %20 : vector<64x1xf32> to vector<64x64xf32>
    %22 = arith.mulf %17, %21 : vector<64x64xf32>
    %23 = arith.truncf %22 : vector<64x64xf32> to vector<64x64xbf16>
    %cst_17 = arith.constant dense<0.000000e+00> : vector<64x32xf32>
    %24 = tpu.matmul %23, %5, %cst_17 {dimension_numbers = #tpu.dot_dimension_numbers<[1], [0], [0], [1], [0, 0, 1, 1], [], []>} : vector<64x64xbf16>, vector<64x32xbf16>, vector<64x32xf32> -> vector<64x32xf32>
    %c0_18 = arith.constant 0 : index
    %c0_19 = arith.constant 0 : index
    %c0_20 = arith.constant 0 : index
    %c0_21 = arith.constant 0 : index
    %25 = vector.load %arg6[%c0_18, %c0_19, %c0_20, %c0_21] : memref<1x1x64x32xf32, #tpu.memory_space<vmem>>, vector<1x1x64x32xf32>
    %26 = vector.shape_cast %25 : vector<1x1x64x32xf32> to vector<64x32xf32>
    %27 = vector.shape_cast %24 : vector<64x32xf32> to vector<1x1x64x32xf32>
    tpu.vector_store %arg6[%c0_18, %c0_19, %c0_20, %c0_21], %27 {strides = array<i32>} : memref<1x1x64x32xf32, #tpu.memory_space<vmem>>, vector<1x1x64x32xf32>,
    return
  }
  func.func @transform_0(%arg0: i32, %arg1: i32) -> (i32, i32, i32, i32) {
    %c0_i32 = arith.constant 0 : i32
    %c0_i32_0 = arith.constant 0 : i32
    %c0_i32_1 = arith.constant 0 : i32
    return %arg0, %arg1, %c0_i32, %c0_i32_0 : i32, i32, i32, i32
  }
  func.func @transform_1(%arg0: i32, %arg1: i32) -> (i32, i32, i32, i32) {
    %c0_i32 = arith.constant 0 : i32
    %c0_i32_0 = arith.constant 0 : i32
    %c0_i32_1 = arith.constant 0 : i32
    return %arg0, %arg1, %c0_i32, %c0_i32_0 : i32, i32, i32, i32
  }
  func.func @transform_2(%arg0: i32, %arg1: i32) -> (i32, i32, i32, i32) {
    %c0_i32 = arith.constant 0 : i32
    %c0_i32_0 = arith.constant 0 : i32
    %c0_i32_1 = arith.constant 0 : i32
    return %arg0, %arg1, %c0_i32, %c0_i32_0 : i32, i32, i32, i32
  }
  func.func @transform_3(%arg0: i32, %arg1: i32) -> (i32, i32, i32) {
    %c0_i32 = arith.constant 0 : i32
    %c0_i32_0 = arith.constant 0 : i32
    %c0_i32_1 = arith.constant 0 : i32
    return %arg0, %c0_i32, %c0_i32_0 : i32, i32, i32
  }
  func.func @transform_4(%arg0: i32, %arg1: i32) -> (i32, i32, i32, i32) {
    %c0_i32 = arith.constant 0 : i32
    %c0_i32_0 = arith.constant 0 : i32
    %c0_i32_1 = arith.constant 0 : i32
    return %arg0, %arg1, %c0_i32, %c0_i32_0 : i32, i32, i32, i32
  }
}

module attributes {stable_mosaic.version = 11 : i64} {
  func.func @kernel(%arg0: i32, %arg1: memref<128x256xf32, #tpu.memory_space<vmem>>, %arg2: memref<128x256xf32, #tpu.memory_space<vmem>>, %arg3: memref<1x256xf32, #tpu.memory_space<vmem>>, %arg4: memref<1x256xf32, #tpu.memory_space<vmem>>, %arg5: memref<128x256xf32, #tpu.memory_space<vmem>>) attributes {dimension_semantics = [#tpu.dimension_semantics<parallel>], iteration_bounds = array<i64: 1>, scalar_prefetch = 0 : i64, scratch_operands = 0 : i64, tpu.core_type = #tpu.core_type<tc>, window_params = [{transform_indices = @transform_0, window_bounds = array<i64: 128, 256>}, {transform_indices = @transform_1, window_bounds = array<i64: 128, 256>}, {pipeline_mode = #tpu.pipeline_mode<synchronous>, transform_indices = @transform_2, window_bounds = array<i64: 1, 256>}, {pipeline_mode = #tpu.pipeline_mode<synchronous>, transform_indices = @transform_3, window_bounds = array<i64: 1, 256>}, {transform_indices = @transform_4, window_bounds = array<i64: 128, 256>}]} {
    %c0 = arith.constant 0 : index
    %c0_0 = arith.constant 0 : index
    %0 = vector.load %arg1[%c0, %c0_0] : memref<128x256xf32, #tpu.memory_space<vmem>>, vector<128x256xf32>
    %c0_1 = arith.constant 0 : index
    %c0_2 = arith.constant 0 : index
    %1 = vector.load %arg2[%c0_1, %c0_2] : memref<128x256xf32, #tpu.memory_space<vmem>>, vector<128x256xf32>
    %2 = arith.addf %0, %1 : vector<128x256xf32>
    %cst = arith.constant dense<0.000000e+00> : vector<128xf32>
    %3 = vector.multi_reduction <add>, %2, %cst [1] : vector<128x256xf32> to vector<128xf32>
    %4 = vector.shape_cast %3 : vector<128xf32> to vector<128x1xf32>
    %cst_3 = arith.constant 2.560000e+02 : f32
    %5 = vector.broadcast %cst_3 : f32 to vector<128x1xf32>
    %6 = arith.divf %4, %5 : vector<128x1xf32>
    %7 = vector.broadcast %6 : vector<128x1xf32> to vector<128x256xf32>
    %8 = arith.subf %2, %7 : vector<128x256xf32>
    %9 = arith.mulf %8, %8 : vector<128x256xf32>
    %cst_4 = arith.constant dense<0.000000e+00> : vector<128xf32>
    %10 = vector.multi_reduction <add>, %9, %cst_4 [1] : vector<128x256xf32> to vector<128xf32>
    %11 = vector.shape_cast %10 : vector<128xf32> to vector<128x1xf32>
    %cst_5 = arith.constant 2.560000e+02 : f32
    %12 = vector.broadcast %cst_5 : f32 to vector<128x1xf32>
    %13 = arith.divf %11, %12 : vector<128x1xf32>
    %cst_6 = arith.constant 9.99999974E-6 : f32
    %14 = vector.broadcast %cst_6 : f32 to vector<128x1xf32>
    %15 = arith.addf %13, %14 : vector<128x1xf32>
    %16 = math.rsqrt %15 : vector<128x1xf32>
    %17 = vector.broadcast %16 : vector<128x1xf32> to vector<128x256xf32>
    %18 = arith.mulf %8, %17 : vector<128x256xf32>
    %c0_7 = arith.constant 0 : index
    %c0_8 = arith.constant 0 : index
    %19 = vector.load %arg3[%c0_7, %c0_8] : memref<1x256xf32, #tpu.memory_space<vmem>>, vector<1x256xf32>
    %20 = vector.broadcast %19 : vector<1x256xf32> to vector<128x256xf32>
    %21 = arith.mulf %18, %20 : vector<128x256xf32>
    %c0_9 = arith.constant 0 : index
    %c0_10 = arith.constant 0 : index
    %22 = vector.load %arg4[%c0_9, %c0_10] : memref<1x256xf32, #tpu.memory_space<vmem>>, vector<1x256xf32>
    %23 = vector.broadcast %22 : vector<1x256xf32> to vector<128x256xf32>
    %24 = arith.addf %21, %23 : vector<128x256xf32>
    %c0_11 = arith.constant 0 : index
    %c0_12 = arith.constant 0 : index
    %25 = vector.load %arg5[%c0_11, %c0_12] : memref<128x256xf32, #tpu.memory_space<vmem>>, vector<128x256xf32>
    tpu.vector_store %arg5[%c0_11, %c0_12], %24 {strides = array<i32>} : memref<128x256xf32, #tpu.memory_space<vmem>>, vector<128x256xf32>,
    return
  }
  func.func @transform_0(%arg0: i32) -> (i32, i32) {
    %c0_i32 = arith.constant 0 : i32
    %c0_i32_0 = arith.constant 0 : i32
    return %arg0, %c0_i32 : i32, i32
  }
  func.func @transform_1(%arg0: i32) -> (i32, i32) {
    %c0_i32 = arith.constant 0 : i32
    %c0_i32_0 = arith.constant 0 : i32
    return %arg0, %c0_i32 : i32, i32
  }
  func.func @transform_2(%arg0: i32) -> (i32, i32) {
    %c0_i32 = arith.constant 0 : i32
    %c0_i32_0 = arith.constant 0 : i32
    %c0_i32_1 = arith.constant 0 : i32
    return %c0_i32, %c0_i32_0 : i32, i32
  }
  func.func @transform_3(%arg0: i32) -> (i32, i32) {
    %c0_i32 = arith.constant 0 : i32
    %c0_i32_0 = arith.constant 0 : i32
    %c0_i32_1 = arith.constant 0 : i32
    return %c0_i32, %c0_i32_0 : i32, i32
  }
  func.func @transform_4(%arg0: i32) -> (i32, i32) {
    %c0_i32 = arith.constant 0 : i32
    %c0_i32_0 = arith.constant 0 : i32
    return %arg0, %c0_i32 : i32, i32
  }
}

module attributes {stable_mosaic.version = 11 : i64} {
  func.func @kernel(%arg0: i32, %arg1: i32, %arg2: i32, %arg3: memref<64x256xbf16, #tpu.memory_space<vmem>>, %arg4: memref<256x256xbf16, #tpu.memory_space<vmem>>, %arg5: memref<1x256xf32, #tpu.memory_space<vmem>>, %arg6: memref<64x256xf32, #tpu.memory_space<vmem>>, %arg7: memref<64x256xf32, #tpu.memory_space<vmem>>) attributes {dimension_semantics = [#tpu.dimension_semantics<parallel>, #tpu.dimension_semantics<parallel>, #tpu.dimension_semantics<arbitrary>], iteration_bounds = array<i64: 1, 1, 1>, scalar_prefetch = 0 : i64, scratch_operands = 1 : i64, tpu.core_type = #tpu.core_type<tc>, window_params = [{transform_indices = @transform_0, window_bounds = array<i64: 64, 256>}, {transform_indices = @transform_1, window_bounds = array<i64: 256, 256>}, {transform_indices = @transform_2, window_bounds = array<i64: 1, 256>}, {transform_indices = @transform_3, window_bounds = array<i64: 64, 256>}]} {
    %c0_i32 = arith.constant 0 : i32
    %0 = arith.cmpi eq, %arg2, %c0_i32 : i32
    %1 = arith.extui %0 : i1 to i32
    %c0_i32_0 = arith.constant 0 : i32
    %2 = arith.cmpi ne, %1, %c0_i32_0 : i32
    scf.if %2 {
      %cst_10 = arith.constant 0.000000e+00 : f32
      %12 = vector.broadcast %cst_10 : f32 to vector<64x256xf32>
      %c0_11 = arith.constant 0 : index
      %c0_12 = arith.constant 0 : index
      %13 = vector.load %arg7[%c0_11, %c0_12] : memref<64x256xf32, #tpu.memory_space<vmem>>, vector<64x256xf32>
      tpu.vector_store %arg7[%c0_11, %c0_12], %12 {strides = array<i32>} : memref<64x256xf32, #tpu.memory_space<vmem>>, vector<64x256xf32>,
    } else {
    }
    %c0 = arith.constant 0 : index
    %c0_1 = arith.constant 0 : index
    %3 = vector.load %arg7[%c0, %c0_1] : memref<64x256xf32, #tpu.memory_space<vmem>>, vector<64x256xf32>
    %c0_2 = arith.constant 0 : index
    %c0_3 = arith.constant 0 : index
    %4 = vector.load %arg3[%c0_2, %c0_3] : memref<64x256xbf16, #tpu.memory_space<vmem>>, vector<64x256xbf16>
    %c0_4 = arith.constant 0 : index
    %c0_5 = arith.constant 0 : index
    %5 = vector.load %arg4[%c0_4, %c0_5] : memref<256x256xbf16, #tpu.memory_space<vmem>>, vector<256x256xbf16>
    %cst = arith.constant dense<0.000000e+00> : vector<64x256xf32>
    %6 = tpu.matmul %4, %5, %cst {dimension_numbers = #tpu.dot_dimension_numbers<[1], [0], [0], [1], [0, 0, 1, 1], [], []>} : vector<64x256xbf16>, vector<256x256xbf16>, vector<64x256xf32> -> vector<64x256xf32>
    %7 = arith.addf %3, %6 : vector<64x256xf32>
    %c0_6 = arith.constant 0 : index
    %c0_7 = arith.constant 0 : index
    %8 = vector.load %arg7[%c0_6, %c0_7] : memref<64x256xf32, #tpu.memory_space<vmem>>, vector<64x256xf32>
    tpu.vector_store %arg7[%c0_6, %c0_7], %7 {strides = array<i32>} : memref<64x256xf32, #tpu.memory_space<vmem>>, vector<64x256xf32>,
    %c0_i32_8 = arith.constant 0 : i32
    %9 = arith.cmpi eq, %arg2, %c0_i32_8 : i32
    %10 = arith.extui %9 : i1 to i32
    %c0_i32_9 = arith.constant 0 : i32
    %11 = arith.cmpi ne, %10, %c0_i32_9 : i32
    scf.if %11 {
      %c0_10 = arith.constant 0 : index
      %c0_11 = arith.constant 0 : index
      %12 = vector.load %arg7[%c0_10, %c0_11] : memref<64x256xf32, #tpu.memory_space<vmem>>, vector<64x256xf32>
      %c0_12 = arith.constant 0 : index
      %c0_13 = arith.constant 0 : index
      %13 = vector.load %arg5[%c0_12, %c0_13] : memref<1x256xf32, #tpu.memory_space<vmem>>, vector<1x256xf32>
      %14 = vector.broadcast %13 : vector<1x256xf32> to vector<64x256xf32>
      %15 = arith.addf %12, %14 : vector<64x256xf32>
      %c0_14 = arith.constant 0 : index
      %c0_15 = arith.constant 0 : index
      %16 = vector.load %arg6[%c0_14, %c0_15] : memref<64x256xf32, #tpu.memory_space<vmem>>, vector<64x256xf32>
      tpu.vector_store %arg6[%c0_14, %c0_15], %15 {strides = array<i32>} : memref<64x256xf32, #tpu.memory_space<vmem>>, vector<64x256xf32>,
    } else {
    }
    return
  }
  func.func @transform_0(%arg0: i32, %arg1: i32, %arg2: i32) -> (i32, i32) {
    %c0_i32 = arith.constant 0 : i32
    return %arg0, %arg2 : i32, i32
  }
  func.func @transform_1(%arg0: i32, %arg1: i32, %arg2: i32) -> (i32, i32) {
    %c0_i32 = arith.constant 0 : i32
    return %arg2, %arg1 : i32, i32
  }
  func.func @transform_2(%arg0: i32, %arg1: i32, %arg2: i32) -> (i32, i32) {
    %c0_i32 = arith.constant 0 : i32
    %c0_i32_0 = arith.constant 0 : i32
    return %c0_i32, %arg1 : i32, i32
  }
  func.func @transform_3(%arg0: i32, %arg1: i32, %arg2: i32) -> (i32, i32) {
    %c0_i32 = arith.constant 0 : i32
    return %arg0, %arg1 : i32, i32
  }
}

module attributes {stable_mosaic.version = 11 : i64} {
  func.func @_attn_kernel(%arg0: i32, %arg1: i32, %arg2: memref<1x1x64x32xbf16, #tpu.memory_space<vmem>>, %arg3: memref<1x1x32x32xbf16, #tpu.memory_space<vmem>>, %arg4: memref<1x1x32x32xbf16, #tpu.memory_space<vmem>>, %arg5: memref<1x1x32xf32, #tpu.memory_space<vmem>>, %arg6: memref<1x1x64x32xf32, #tpu.memory_space<vmem>>) attributes {dimension_semantics = [#tpu.dimension_semantics<parallel>, #tpu.dimension_semantics<parallel>], iteration_bounds = array<i64: 2, 8>, scalar_prefetch = 0 : i64, scratch_operands = 0 : i64, tpu.core_type = #tpu.core_type<tc>, window_params = [{transform_indices = @transform_0, window_bounds = array<i64: 1, 1, 64, 32>}, {transform_indices = @transform_1, window_bounds = array<i64: 1, 1, 32, 32>}, {transform_indices = @transform_2, window_bounds = array<i64: 1, 1, 32, 32>}, {transform_indices = @transform_3, window_bounds = array<i64: 1, 1, 32>}, {transform_indices = @transform_4, window_bounds = array<i64: 1, 1, 64, 32>}]} {
    %c0 = arith.constant 0 : index
    %c0_0 = arith.constant 0 : index
    %c0_1 = arith.constant 0 : index
    %c0_2 = arith.constant 0 : index
    %0 = vector.load %arg2[%c0, %c0_0, %c0_1, %c0_2] : memref<1x1x64x32xbf16, #tpu.memory_space<vmem>>, vector<1x1x64x32xbf16>
    %1 = vector.shape_cast %0 : vector<1x1x64x32xbf16> to vector<64x32xbf16>
    %c0_3 = arith.constant 0 : index
    %c0_4 = arith.constant 0 : index
    %c0_5 = arith.constant 0 : index
    %c0_6 = arith.constant 0 : index
    %2 = vector.load %arg3[%c0_3, %c0_4, %c0_5, %c0_6] : memref<1x1x32x32xbf16, #tpu.memory_space<vmem>>, vector<1x1x32x32xbf16>
    %3 = vector.shape_cast %2 : vector<1x1x32x32xbf16> to vector<32x32xbf16>
    %c0_7 = arith.constant 0 : index
    %c0_8 = arith.constant 0 : index
    %c0_9 = arith.constant 0 : index
    %c0_10 = arith.constant 0 : index
    %4 = vector.load %arg4[%c0_7, %c0_8, %c0_9, %c0_10] : memref<1x1x32x32xbf16, #tpu.memory_space<vmem>>, vector<1x1x32x32xbf16>
    %5 = vector.shape_cast %4 : vector<1x1x32x32xbf16> to vector<32x32xbf16>
    %cst = arith.constant dense<0.000000e+00> : vector<64x32xf32>
    %6 = tpu.matmul %1, %3, %cst {dimension_numbers = #tpu.dot_dimension_numbers<[1], [1], [0], [0], [0, 0, 1, 0], [], []>} : vector<64x32xbf16>, vector<32x32xbf16>, vector<64x32xf32> -> vector<64x32xf32>
    %cst_11 = arith.constant 0.176776692 : f32
    %7 = vector.broadcast %cst_11 : f32 to vector<64x32xf32>
    %8 = arith.mulf %6, %7 : vector<64x32xf32>
    %c0_12 = arith.constant 0 : index
    %c0_13 = arith.constant 0 : index
    %c0_14 = arith.constant 0 : index
    %9 = vector.load %arg5[%c0_12, %c0_13, %c0_14] : memref<1x1x32xf32, #tpu.memory_space<vmem>>, vector<1x1x32xf32>
    %10 = vector.shape_cast %9 : vector<1x1x32xf32> to vector<1x32xf32>
    %11 = vector.broadcast %10 : vector<1x32xf32> to vector<64x32xf32>
    %12 = arith.addf %8, %11 : vector<64x32xf32>
    %cst_15 = arith.constant dense<0xFF800000> : vector<64xf32>
    %13 = vector.multi_reduction <maximumf>, %12, %cst_15 [1] : vector<64x32xf32> to vector<64xf32>
    %14 = vector.shape_cast %13 : vector<64xf32> to vector<64x1xf32>
    %15 = vector.broadcast %14 : vector<64x1xf32> to vector<64x32xf32>
    %16 = arith.subf %12, %15 : vector<64x32xf32>
    %17 = math.exp %16 : vector<64x32xf32>
    %cst_16 = arith.constant dense<0.000000e+00> : vector<64xf32>
    %18 = vector.multi_reduction <add>, %17, %cst_16 [1] : vector<64x32xf32> to vector<64xf32>
    %19 = vector.shape_cast %18 : vector<64xf32> to vector<64x1xf32>
    %20 = tpu.reciprocal %19 {approx = true} : vector<64x1xf32> -> vector<64x1xf32>
    %21 = vector.broadcast %20 : vector<64x1xf32> to vector<64x32xf32>
    %22 = arith.mulf %17, %21 : vector<64x32xf32>
    %23 = arith.truncf %22 : vector<64x32xf32> to vector<64x32xbf16>
    %cst_17 = arith.constant dense<0.000000e+00> : vector<64x32xf32>
    %24 = tpu.matmul %23, %5, %cst_17 {dimension_numbers = #tpu.dot_dimension_numbers<[1], [0], [0], [1], [0, 0, 1, 1], [], []>} : vector<64x32xbf16>, vector<32x32xbf16>, vector<64x32xf32> -> vector<64x32xf32>
    %c0_18 = arith.constant 0 : index
    %c0_19 = arith.constant 0 : index
    %c0_20 = arith.constant 0 : index
    %c0_21 = arith.constant 0 : index
    %25 = vector.load %arg6[%c0_18, %c0_19, %c0_20, %c0_21] : memref<1x1x64x32xf32, #tpu.memory_space<vmem>>, vector<1x1x64x32xf32>
    %26 = vector.shape_cast %25 : vector<1x1x64x32xf32> to vector<64x32xf32>
    %27 = vector.shape_cast %24 : vector<64x32xf32> to vector<1x1x64x32xf32>
    tpu.vector_store %arg6[%c0_18, %c0_19, %c0_20, %c0_21], %27 {strides = array<i32>} : memref<1x1x64x32xf32, #tpu.memory_space<vmem>>, vector<1x1x64x32xf32>,
    return
  }
  func.func @transform_0(%arg0: i32, %arg1: i32) -> (i32, i32, i32, i32) {
    %c0_i32 = arith.constant 0 : i32
    %c0_i32_0 = arith.constant 0 : i32
    %c0_i32_1 = arith.constant 0 : i32
    return %arg0, %arg1, %c0_i32, %c0_i32_0 : i32, i32, i32, i32
  }
  func.func @transform_1(%arg0: i32, %arg1: i32) -> (i32, i32, i32, i32) {
    %c0_i32 = arith.constant 0 : i32
    %c0_i32_0 = arith.constant 0 : i32
    %c0_i32_1 = arith.constant 0 : i32
    return %arg0, %arg1, %c0_i32, %c0_i32_0 : i32, i32, i32, i32
  }
  func.func @transform_2(%arg0: i32, %arg1: i32) -> (i32, i32, i32, i32) {
    %c0_i32 = arith.constant 0 : i32
    %c0_i32_0 = arith.constant 0 : i32
    %c0_i32_1 = arith.constant 0 : i32
    return %arg0, %arg1, %c0_i32, %c0_i32_0 : i32, i32, i32, i32
  }
  func.func @transform_3(%arg0: i32, %arg1: i32) -> (i32, i32, i32) {
    %c0_i32 = arith.constant 0 : i32
    %c0_i32_0 = arith.constant 0 : i32
    %c0_i32_1 = arith.constant 0 : i32
    return %arg0, %c0_i32, %c0_i32_0 : i32, i32, i32
  }
  func.func @transform_4(%arg0: i32, %arg1: i32) -> (i32, i32, i32, i32) {
    %c0_i32 = arith.constant 0 : i32
    %c0_i32_0 = arith.constant 0 : i32
    %c0_i32_1 = arith.constant 0 : i32
    return %arg0, %arg1, %c0_i32, %c0_i32_0 : i32, i32, i32, i32
  }
}

module attributes {stable_mosaic.version = 11 : i64} {
  func.func @kernel(%arg0: i32, %arg1: i32, %arg2: i32, %arg3: memref<128x256xbf16, #tpu.memory_space<vmem>>, %arg4: memref<256x512xbf16, #tpu.memory_space<vmem>>, %arg5: memref<1x512xf32, #tpu.memory_space<vmem>>, %arg6: memref<128x512xf32, #tpu.memory_space<vmem>>, %arg7: memref<128x512xf32, #tpu.memory_space<vmem>>) attributes {dimension_semantics = [#tpu.dimension_semantics<parallel>, #tpu.dimension_semantics<parallel>, #tpu.dimension_semantics<arbitrary>], iteration_bounds = array<i64: 1, 1, 1>, scalar_prefetch = 0 : i64, scratch_operands = 1 : i64, tpu.core_type = #tpu.core_type<tc>, window_params = [{transform_indices = @transform_0, window_bounds = array<i64: 128, 256>}, {transform_indices = @transform_1, window_bounds = array<i64: 256, 512>}, {transform_indices = @transform_2, window_bounds = array<i64: 1, 512>}, {transform_indices = @transform_3, window_bounds = array<i64: 128, 512>}]} {
    %c0_i32 = arith.constant 0 : i32
    %0 = arith.cmpi eq, %arg2, %c0_i32 : i32
    %1 = arith.extui %0 : i1 to i32
    %c0_i32_0 = arith.constant 0 : i32
    %2 = arith.cmpi ne, %1, %c0_i32_0 : i32
    scf.if %2 {
      %cst_10 = arith.constant 0.000000e+00 : f32
      %12 = vector.broadcast %cst_10 : f32 to vector<128x512xf32>
      %c0_11 = arith.constant 0 : index
      %c0_12 = arith.constant 0 : index
      %13 = vector.load %arg7[%c0_11, %c0_12] : memref<128x512xf32, #tpu.memory_space<vmem>>, vector<128x512xf32>
      tpu.vector_store %arg7[%c0_11, %c0_12], %12 {strides = array<i32>} : memref<128x512xf32, #tpu.memory_space<vmem>>, vector<128x512xf32>,
    } else {
    }
    %c0 = arith.constant 0 : index
    %c0_1 = arith.constant 0 : index
    %3 = vector.load %arg7[%c0, %c0_1] : memref<128x512xf32, #tpu.memory_space<vmem>>, vector<128x512xf32>
    %c0_2 = arith.constant 0 : index
    %c0_3 = arith.constant 0 : index
    %4 = vector.load %arg3[%c0_2, %c0_3] : memref<128x256xbf16, #tpu.memory_space<vmem>>, vector<128x256xbf16>
    %c0_4 = arith.constant 0 : index
    %c0_5 = arith.constant 0 : index
    %5 = vector.load %arg4[%c0_4, %c0_5] : memref<256x512xbf16, #tpu.memory_space<vmem>>, vector<256x512xbf16>
    %cst = arith.constant dense<0.000000e+00> : vector<128x512xf32>
    %6 = tpu.matmul %4, %5, %cst {dimension_numbers = #tpu.dot_dimension_numbers<[1], [0], [0], [1], [0, 0, 1, 1], [], []>} : vector<128x256xbf16>, vector<256x512xbf16>, vector<128x512xf32> -> vector<128x512xf32>
    %7 = arith.addf %3, %6 : vector<128x512xf32>
    %c0_6 = arith.constant 0 : index
    %c0_7 = arith.constant 0 : index
    %8 = vector.load %arg7[%c0_6, %c0_7] : memref<128x512xf32, #tpu.memory_space<vmem>>, vector<128x512xf32>
    tpu.vector_store %arg7[%c0_6, %c0_7], %7 {strides = array<i32>} : memref<128x512xf32, #tpu.memory_space<vmem>>, vector<128x512xf32>,
    %c0_i32_8 = arith.constant 0 : i32
    %9 = arith.cmpi eq, %arg2, %c0_i32_8 : i32
    %10 = arith.extui %9 : i1 to i32
    %c0_i32_9 = arith.constant 0 : i32
    %11 = arith.cmpi ne, %10, %c0_i32_9 : i32
    scf.if %11 {
      %c0_10 = arith.constant 0 : index
      %c0_11 = arith.constant 0 : index
      %12 = vector.load %arg7[%c0_10, %c0_11] : memref<128x512xf32, #tpu.memory_space<vmem>>, vector<128x512xf32>
      %c0_12 = arith.constant 0 : index
      %c0_13 = arith.constant 0 : index
      %13 = vector.load %arg5[%c0_12, %c0_13] : memref<1x512xf32, #tpu.memory_space<vmem>>, vector<1x512xf32>
      %14 = vector.broadcast %13 : vector<1x512xf32> to vector<128x512xf32>
      %15 = arith.addf %12, %14 : vector<128x512xf32>
      %cst_14 = arith.constant 0.000000e+00 : f32
      %16 = vector.broadcast %cst_14 : f32 to vector<128x512xf32>
      %17 = arith.maximumf %15, %16 : vector<128x512xf32>
      %c0_15 = arith.constant 0 : index
      %c0_16 = arith.constant 0 : index
      %18 = vector.load %arg6[%c0_15, %c0_16] : memref<128x512xf32, #tpu.memory_space<vmem>>, vector<128x512xf32>
      tpu.vector_store %arg6[%c0_15, %c0_16], %17 {strides = array<i32>} : memref<128x512xf32, #tpu.memory_space<vmem>>, vector<128x512xf32>,
    } else {
    }
    return
  }
  func.func @transform_0(%arg0: i32, %arg1: i32, %arg2: i32) -> (i32, i32) {
    %c0_i32 = arith.constant 0 : i32
    return %arg0, %arg2 : i32, i32
  }
  func.func @transform_1(%arg0: i32, %arg1: i32, %arg2: i32) -> (i32, i32) {
    %c0_i32 = arith.constant 0 : i32
    return %arg2, %arg1 : i32, i32
  }
  func.func @transform_2(%arg0: i32, %arg1: i32, %arg2: i32) -> (i32, i32) {
    %c0_i32 = arith.constant 0 : i32
    %c0_i32_0 = arith.constant 0 : i32
    return %c0_i32, %arg1 : i32, i32
  }
  func.func @transform_3(%arg0: i32, %arg1: i32, %arg2: i32) -> (i32, i32) {
    %c0_i32 = arith.constant 0 : i32
    return %arg0, %arg1 : i32, i32
  }
}

module attributes {stable_mosaic.version = 11 : i64} {
  func.func @kernel(%arg0: i32, %arg1: memref<128x256xf32, #tpu.memory_space<vmem>>, %arg2: memref<1x256xf32, #tpu.memory_space<vmem>>, %arg3: memref<1x256xf32, #tpu.memory_space<vmem>>, %arg4: memref<128x256xf32, #tpu.memory_space<vmem>>) attributes {dimension_semantics = [#tpu.dimension_semantics<parallel>], iteration_bounds = array<i64: 1>, scalar_prefetch = 0 : i64, scratch_operands = 0 : i64, tpu.core_type = #tpu.core_type<tc>, window_params = [{transform_indices = @transform_0, window_bounds = array<i64: 128, 256>}, {pipeline_mode = #tpu.pipeline_mode<synchronous>, transform_indices = @transform_1, window_bounds = array<i64: 1, 256>}, {pipeline_mode = #tpu.pipeline_mode<synchronous>, transform_indices = @transform_2, window_bounds = array<i64: 1, 256>}, {transform_indices = @transform_3, window_bounds = array<i64: 128, 256>}]} {
    %c0 = arith.constant 0 : index
    %c0_0 = arith.constant 0 : index
    %0 = vector.load %arg1[%c0, %c0_0] : memref<128x256xf32, #tpu.memory_space<vmem>>, vector<128x256xf32>
    %cst = arith.constant dense<0.000000e+00> : vector<128xf32>
    %1 = vector.multi_reduction <add>, %0, %cst [1] : vector<128x256xf32> to vector<128xf32>
    %2 = vector.shape_cast %1 : vector<128xf32> to vector<128x1xf32>
    %cst_1 = arith.constant 2.560000e+02 : f32
    %3 = vector.broadcast %cst_1 : f32 to vector<128x1xf32>
    %4 = arith.divf %2, %3 : vector<128x1xf32>
    %5 = vector.broadcast %4 : vector<128x1xf32> to vector<128x256xf32>
    %6 = arith.subf %0, %5 : vector<128x256xf32>
    %7 = arith.mulf %6, %6 : vector<128x256xf32>
    %cst_2 = arith.constant dense<0.000000e+00> : vector<128xf32>
    %8 = vector.multi_reduction <add>, %7, %cst_2 [1] : vector<128x256xf32> to vector<128xf32>
    %9 = vector.shape_cast %8 : vector<128xf32> to vector<128x1xf32>
    %cst_3 = arith.constant 2.560000e+02 : f32
    %10 = vector.broadcast %cst_3 : f32 to vector<128x1xf32>
    %11 = arith.divf %9, %10 : vector<128x1xf32>
    %cst_4 = arith.constant 9.99999974E-6 : f32
    %12 = vector.broadcast %cst_4 : f32 to vector<128x1xf32>
    %13 = arith.addf %11, %12 : vector<128x1xf32>
    %14 = math.rsqrt %13 : vector<128x1xf32>
    %15 = vector.broadcast %14 : vector<128x1xf32> to vector<128x256xf32>
    %16 = arith.mulf %6, %15 : vector<128x256xf32>
    %c0_5 = arith.constant 0 : index
    %c0_6 = arith.constant 0 : index
    %17 = vector.load %arg2[%c0_5, %c0_6] : memref<1x256xf32, #tpu.memory_space<vmem>>, vector<1x256xf32>
    %18 = vector.broadcast %17 : vector<1x256xf32> to vector<128x256xf32>
    %19 = arith.mulf %16, %18 : vector<128x256xf32>
    %c0_7 = arith.constant 0 : index
    %c0_8 = arith.constant 0 : index
    %20 = vector.load %arg3[%c0_7, %c0_8] : memref<1x256xf32, #tpu.memory_space<vmem>>, vector<1x256xf32>
    %21 = vector.broadcast %20 : vector<1x256xf32> to vector<128x256xf32>
    %22 = arith.addf %19, %21 : vector<128x256xf32>
    %c0_9 = arith.constant 0 : index
    %c0_10 = arith.constant 0 : index
    %23 = vector.load %arg4[%c0_9, %c0_10] : memref<128x256xf32, #tpu.memory_space<vmem>>, vector<128x256xf32>
    tpu.vector_store %arg4[%c0_9, %c0_10], %22 {strides = array<i32>} : memref<128x256xf32, #tpu.memory_space<vmem>>, vector<128x256xf32>,
    return
  }
  func.func @transform_0(%arg0: i32) -> (i32, i32) {
    %c0_i32 = arith.constant 0 : i32
    %c0_i32_0 = arith.constant 0 : i32
    return %arg0, %c0_i32 : i32, i32
  }
  func.func @transform_1(%arg0: i32) -> (i32, i32) {
    %c0_i32 = arith.constant 0 : i32
    %c0_i32_0 = arith.constant 0 : i32
    %c0_i32_1 = arith.constant 0 : i32
    return %c0_i32, %c0_i32_0 : i32, i32
  }
  func.func @transform_2(%arg0: i32) -> (i32, i32) {
    %c0_i32 = arith.constant 0 : i32
    %c0_i32_0 = arith.constant 0 : i32
    %c0_i32_1 = arith.constant 0 : i32
    return %c0_i32, %c0_i32_0 : i32, i32
  }
  func.func @transform_3(%arg0: i32) -> (i32, i32) {
    %c0_i32 = arith.constant 0 : i32
    %c0_i32_0 = arith.constant 0 : i32
    return %arg0, %c0_i32 : i32, i32
  }
}

module attributes {stable_mosaic.version = 11 : i64} {
  func.func @kernel(%arg0: i32, %arg1: i32, %arg2: i32, %arg3: memref<128x512xbf16, #tpu.memory_space<vmem>>, %arg4: memref<512x256xbf16, #tpu.memory_space<vmem>>, %arg5: memref<1x256xf32, #tpu.memory_space<vmem>>, %arg6: memref<128x256xf32, #tpu.memory_space<vmem>>, %arg7: memref<128x256xf32, #tpu.memory_space<vmem>>) attributes {dimension_semantics = [#tpu.dimension_semantics<parallel>, #tpu.dimension_semantics<parallel>, #tpu.dimension_semantics<arbitrary>], iteration_bounds = array<i64: 1, 1, 1>, scalar_prefetch = 0 : i64, scratch_operands = 1 : i64, tpu.core_type = #tpu.core_type<tc>, window_params = [{transform_indices = @transform_0, window_bounds = array<i64: 128, 512>}, {transform_indices = @transform_1, window_bounds = array<i64: 512, 256>}, {transform_indices = @transform_2, window_bounds = array<i64: 1, 256>}, {transform_indices = @transform_3, window_bounds = array<i64: 128, 256>}]} {
    %c0_i32 = arith.constant 0 : i32
    %0 = arith.cmpi eq, %arg2, %c0_i32 : i32
    %1 = arith.extui %0 : i1 to i32
    %c0_i32_0 = arith.constant 0 : i32
    %2 = arith.cmpi ne, %1, %c0_i32_0 : i32
    scf.if %2 {
      %cst_10 = arith.constant 0.000000e+00 : f32
      %12 = vector.broadcast %cst_10 : f32 to vector<128x256xf32>
      %c0_11 = arith.constant 0 : index
      %c0_12 = arith.constant 0 : index
      %13 = vector.load %arg7[%c0_11, %c0_12] : memref<128x256xf32, #tpu.memory_space<vmem>>, vector<128x256xf32>
      tpu.vector_store %arg7[%c0_11, %c0_12], %12 {strides = array<i32>} : memref<128x256xf32, #tpu.memory_space<vmem>>, vector<128x256xf32>,
    } else {
    }
    %c0 = arith.constant 0 : index
    %c0_1 = arith.constant 0 : index
    %3 = vector.load %arg7[%c0, %c0_1] : memref<128x256xf32, #tpu.memory_space<vmem>>, vector<128x256xf32>
    %c0_2 = arith.constant 0 : index
    %c0_3 = arith.constant 0 : index
    %4 = vector.load %arg3[%c0_2, %c0_3] : memref<128x512xbf16, #tpu.memory_space<vmem>>, vector<128x512xbf16>
    %c0_4 = arith.constant 0 : index
    %c0_5 = arith.constant 0 : index
    %5 = vector.load %arg4[%c0_4, %c0_5] : memref<512x256xbf16, #tpu.memory_space<vmem>>, vector<512x256xbf16>
    %cst = arith.constant dense<0.000000e+00> : vector<128x256xf32>
    %6 = tpu.matmul %4, %5, %cst {dimension_numbers = #tpu.dot_dimension_numbers<[1], [0], [0], [1], [0, 0, 1, 1], [], []>} : vector<128x512xbf16>, vector<512x256xbf16>, vector<128x256xf32> -> vector<128x256xf32>
    %7 = arith.addf %3, %6 : vector<128x256xf32>
    %c0_6 = arith.constant 0 : index
    %c0_7 = arith.constant 0 : index
    %8 = vector.load %arg7[%c0_6, %c0_7] : memref<128x256xf32, #tpu.memory_space<vmem>>, vector<128x256xf32>
    tpu.vector_store %arg7[%c0_6, %c0_7], %7 {strides = array<i32>} : memref<128x256xf32, #tpu.memory_space<vmem>>, vector<128x256xf32>,
    %c0_i32_8 = arith.constant 0 : i32
    %9 = arith.cmpi eq, %arg2, %c0_i32_8 : i32
    %10 = arith.extui %9 : i1 to i32
    %c0_i32_9 = arith.constant 0 : i32
    %11 = arith.cmpi ne, %10, %c0_i32_9 : i32
    scf.if %11 {
      %c0_10 = arith.constant 0 : index
      %c0_11 = arith.constant 0 : index
      %12 = vector.load %arg7[%c0_10, %c0_11] : memref<128x256xf32, #tpu.memory_space<vmem>>, vector<128x256xf32>
      %c0_12 = arith.constant 0 : index
      %c0_13 = arith.constant 0 : index
      %13 = vector.load %arg5[%c0_12, %c0_13] : memref<1x256xf32, #tpu.memory_space<vmem>>, vector<1x256xf32>
      %14 = vector.broadcast %13 : vector<1x256xf32> to vector<128x256xf32>
      %15 = arith.addf %12, %14 : vector<128x256xf32>
      %c0_14 = arith.constant 0 : index
      %c0_15 = arith.constant 0 : index
      %16 = vector.load %arg6[%c0_14, %c0_15] : memref<128x256xf32, #tpu.memory_space<vmem>>, vector<128x256xf32>
      tpu.vector_store %arg6[%c0_14, %c0_15], %15 {strides = array<i32>} : memref<128x256xf32, #tpu.memory_space<vmem>>, vector<128x256xf32>,
    } else {
    }
    return
  }
  func.func @transform_0(%arg0: i32, %arg1: i32, %arg2: i32) -> (i32, i32) {
    %c0_i32 = arith.constant 0 : i32
    return %arg0, %arg2 : i32, i32
  }
  func.func @transform_1(%arg0: i32, %arg1: i32, %arg2: i32) -> (i32, i32) {
    %c0_i32 = arith.constant 0 : i32
    return %arg2, %arg1 : i32, i32
  }
  func.func @transform_2(%arg0: i32, %arg1: i32, %arg2: i32) -> (i32, i32) {
    %c0_i32 = arith.constant 0 : i32
    %c0_i32_0 = arith.constant 0 : i32
    return %c0_i32, %arg1 : i32, i32
  }
  func.func @transform_3(%arg0: i32, %arg1: i32, %arg2: i32) -> (i32, i32) {
    %c0_i32 = arith.constant 0 : i32
    return %arg0, %arg1 : i32, i32
  }
}

</mosaic_0001>

<llo_original>
// kernel: fwd.30
$region0: #{fwd.30}
  #allocation0 [shape = 'u32[]', space=smem, size = 0x4, offset = 0x4, fixed_abs, tag = 'smem constant byte address 0x4 - core index']
  #allocation1 [shape = 'u32[144,128]{1,0:T(1,128)}', space=vmem, size = 0x12000, scoped, tag = 'internal scratch']
  #allocation2 [shape = 'f32[128,256]{1,0:T(8,128)}', space=vmem, size = 0x20000, scoped, tag = 'scratch operand']
  %s0 = inlined_call_operand.vmem [shape: bf16[128,256], index: 0, kind: input, shape index: {}]
  %s1 = inlined_call_operand.vmem [shape: bf16[256,256], index: 1, kind: input, shape index: {}]
  %s2 = inlined_call_operand.vmem [shape: f32[1,256], index: 2, kind: input, shape index: {}]
  %s3 = inlined_call_operand.vmem [shape: f32[128,256], index: 3, kind: output, shape index: {}]
  %s4 = sld [smem:[#allocation0]]
  $region30: #{fwd.30} parent=0
    _
  %s6 = ssub.s32 1, %s4
  %s7 = scalar_select 0, %s6, %s4
  // Predicated region
  $region2: #{fwd.30} parent=0 // pred_check
    _
  $region3: #{fwd.30} parent=0 // pred_check_branch
    %9 = sbr.rel (0) target = $region5
  $region4: #{fwd.30} parent=0 // pred_region
    _
  $region5: #{fwd.30} parent=0 // pred_fallthru
    _
  // Predicated region
  $region6: #{fwd.30} parent=0 // pred_check
    _
  $region7: #{fwd.30} parent=0 // pred_check_branch
    %11 = sbr.rel (0) target = $region9
  $region8: #{fwd.30} parent=0 // pred_region
    _
  $region9: #{fwd.30} parent=0 // pred_fallthru
    _
  // Predicated region
  $region10: #{fwd.30} parent=0 // pred_check
    _
  $region11: #{fwd.30} parent=0 // pred_check_branch
    %13 = sbr.rel (0) target = $region13
  $region12: #{fwd.30} parent=0 // pred_region
    _
  $region13: #{fwd.30} parent=0 // pred_fallthru
    _
  %p14 = scmp.eq.s32.totalorder 0, 0
  // Predicated region
  $region14: #{fwd.30} parent=0 // pred_check
    %p15 = pneg %p14
  $region15: #{fwd.30} parent=0 // pred_check_branch
    %17 = sbr.rel (%p15) target = $region17
  $region16: #{fwd.30} parent=0 // pred_region
    %18 = vst [vmem:[#allocation2] sm:$0xff] 0.0
    %19 = vst [vmem:[#allocation2 + $0x8] sm:$0xff] 0.0
    %20 = vst [vmem:[#allocation2 + $0x10] sm:$0xff] 0.0
    %21 = vst [vmem:[#allocation2 + $0x18] sm:$0xff] 0.0
    %22 = vst [vmem:[#allocation2 + $0x20] sm:$0xff] 0.0
    %23 = vst [vmem:[#allocation2 + $0x28] sm:$0xff] 0.0
    %24 = vst [vmem:[#allocation2 + $0x30] sm:$0xff] 0.0
    %25 = vst [vmem:[#allocation2 + $0x38] sm:$0xff] 0.0
    %26 = vst [vmem:[#allocation2 + $0x40] sm:$0xff] 0.0
    %27 = vst [vmem:[#allocation2 + $0x48] sm:$0xff] 0.0
    %28 = vst [vmem:[#allocation2 + $0x50] sm:$0xff] 0.0
    %29 = vst [vmem:[#allocation2 + $0x58] sm:$0xff] 0.0
    %30 = vst [vmem:[#allocation2 + $0x60] sm:$0xff] 0.0
    %31 = vst [vmem:[#allocation2 + $0x68] sm:$0xff] 0.0
    %32 = vst [vmem:[#allocation2 + $0x70] sm:$0xff] 0.0
    %33 = vst [vmem:[#allocation2 + $0x78] sm:$0xff] 0.0
    %34 = vst [vmem:[#allocation2 + $0x80] sm:$0xff] 0.0
    %35 = vst [vmem:[#allocation2 + $0x88] sm:$0xff] 0.0
    %36 = vst [vmem:[#allocation2 + $0x90] sm:$0xff] 0.0
    %37 = vst [vmem:[#allocation2 + $0x98] sm:$0xff] 0.0
    %38 = vst [vmem:[#allocation2 + $0xa0] sm:$0xff] 0.0
    %39 = vst [vmem:[#allocation2 + $0xa8] sm:$0xff] 0.0
    %40 = vst [vmem:[#allocation2 + $0xb0] sm:$0xff] 0.0
    %41 = vst [vmem:[#allocation2 + $0xb8] sm:$0xff] 0.0
    %42 = vst [vmem:[#allocation2 + $0xc0] sm:$0xff] 0.0
    %43 = vst [vmem:[#allocation2 + $0xc8] sm:$0xff] 0.0
    %44 = vst [vmem:[#allocation2 + $0xd0] sm:$0xff] 0.0
    %45 = vst [vmem:[#allocation2 + $0xd8] sm:$0xff] 0.0
    %46 = vst [vmem:[#allocation2 + $0xe0] sm:$0xff] 0.0
    %47 = vst [vmem:[#allocation2 + $0xe8] sm:$0xff] 0.0
    %48 = vst [vmem:[#allocation2 + $0xf0] sm:$0xff] 0.0
    %49 = vst [vmem:[#allocation2 + $0xf8] sm:$0xff] 0.0
  $region17: #{fwd.30} parent=0 // pred_fallthru
    _
  %v50 = vld [vmem:[#allocation2] sm:$0xff]
  %v51 = vld [vmem:[#allocation2 + $0x8] sm:$0xff]
  %v52 = vld [vmem:[#allocation2 + $0x10] sm:$0xff]
  %v53 = vld [vmem:[#allocation2 + $0x18] sm:$0xff]
  %v54 = vld [vmem:[#allocation2 + $0x20] sm:$0xff]
  %v55 = vld [vmem:[#allocation2 + $0x28] sm:$0xff]
  %v56 = vld [vmem:[#allocation2 + $0x30] sm:$0xff]
  %v57 = vld [vmem:[#allocation2 + $0x38] sm:$0xff]
  %v58 = vld [vmem:[#allocation2 + $0x40] sm:$0xff]
  %v59 = vld [vmem:[#allocation2 + $0x48] sm:$0xff]
  %v60 = vld [vmem:[#allocation2 + $0x50] sm:$0xff]
  %v61 = vld [vmem:[#allocation2 + $0x58] sm:$0xff]
  %v62 = vld [vmem:[#allocation2 + $0x60] sm:$0xff]
  %v63 = vld [vmem:[#allocation2 + $0x68] sm:$0xff]
  %v64 = vld [vmem:[#allocation2 + $0x70] sm:$0xff]
  %v65 = vld [vmem:[#allocation2 + $0x78] sm:$0xff]
  %v66 = vld [vmem:[#allocation2 + $0x80] sm:$0xff]
  %v67 = vld [vmem:[#allocation2 + $0x88] sm:$0xff]
  %v68 = vld [vmem:[#allocation2 + $0x90] sm:$0xff]
  %v69 = vld [vmem:[#allocation2 + $0x98] sm:$0xff]
  %v70 = vld [vmem:[#allocation2 + $0xa0] sm:$0xff]
  %v71 = vld [vmem:[#allocation2 + $0xa8] sm:$0xff]
  %v72 = vld [vmem:[#allocation2 + $0xb0] sm:$0xff]
  %v73 = vld [vmem:[#allocation2 + $0xb8] sm:$0xff]
  %v74 = vld [vmem:[#allocation2 + $0xc0] sm:$0xff]
  %v75 = vld [vmem:[#allocation2 + $0xc8] sm:$0xff]
  %v76 = vld [vmem:[#allocation2 + $0xd0] sm:$0xff]
  %v77 = vld [vmem:[#allocation2 + $0xd8] sm:$0xff]
  %v78 = vld [vmem:[#allocation2 + $0xe0] sm:$0xff]
  %v79 = vld [vmem:[#allocation2 + $0xe8] sm:$0xff]
  %v80 = vld [vmem:[#allocation2 + $0xf0] sm:$0xff]
  %v81 = vld [vmem:[#allocation2 + $0xf8] sm:$0xff]
  %v82 = vld [vmem:[%s0] sm:$0xff]
  %v83 = vld [vmem:[%s0 + $0x8] sm:$0xff]
  %v84 = vld [vmem:[%s0 + $0x10] sm:$0xff]
  %v85 = vld [vmem:[%s0 + $0x18] sm:$0xff]
  %v86 = vld [vmem:[%s0 + $0x20] sm:$0xff]
  %v87 = vld [vmem:[%s0 + $0x28] sm:$0xff]
  %v88 = vld [vmem:[%s0 + $0x30] sm:$0xff]
  %v89 = vld [vmem:[%s0 + $0x38] sm:$0xff]
  %v90 = vld [vmem:[%s0 + $0x40] sm:$0xff]
  %v91 = vld [vmem:[%s0 + $0x48] sm:$0xff]
  %v92 = vld [vmem:[%s0 + $0x50] sm:$0xff]
  %v93 = vld [vmem:[%s0 + $0x58] sm:$0xff]
  %v94 = vld [vmem:[%s0 + $0x60] sm:$0xff]
  %v95 = vld [vmem:[%s0 + $0x68] sm:$0xff]
  %v96 = vld [vmem:[%s0 + $0x70] sm:$0xff]
  %v97 = vld [vmem:[%s0 + $0x78] sm:$0xff]
  %v98 = vld [vmem:[%s1] sm:$0xff]
  %v99 = vld [vmem:[%s1 + $0x8] sm:$0xff]
  %v100 = vld [vmem:[%s1 + $0x10] sm:$0xff]
  %v101 = vld [vmem:[%s1 + $0x18] sm:$0xff]
  %v102 = vld [vmem:[%s1 + $0x20] sm:$0xff]
  %v103 = vld [vmem:[%s1 + $0x28] sm:$0xff]
  %v104 = vld [vmem:[%s1 + $0x30] sm:$0xff]
  %v105 = vld [vmem:[%s1 + $0x38] sm:$0xff]
  %v106 = vld [vmem:[%s1 + $0x40] sm:$0xff]
  %v107 = vld [vmem:[%s1 + $0x48] sm:$0xff]
  %v108 = vld [vmem:[%s1 + $0x50] sm:$0xff]
  %v109 = vld [vmem:[%s1 + $0x58] sm:$0xff]
  %v110 = vld [vmem:[%s1 + $0x60] sm:$0xff]
  %v111 = vld [vmem:[%s1 + $0x68] sm:$0xff]
  %v112 = vld [vmem:[%s1 + $0x70] sm:$0xff]
  %v113 = vld [vmem:[%s1 + $0x78] sm:$0xff]
  %v114 = vld [vmem:[%s1 + $0x80] sm:$0xff]
  %v115 = vld [vmem:[%s1 + $0x88] sm:$0xff]
  %v116 = vld [vmem:[%s1 + $0x90] sm:$0xff]
  %v117 = vld [vmem:[%s1 + $0x98] sm:$0xff]
  %v118 = vld [vmem:[%s1 + $0xa0] sm:$0xff]
  %v119 = vld [vmem:[%s1 + $0xa8] sm:$0xff]
  %v120 = vld [vmem:[%s1 + $0xb0] sm:$0xff]
  %v121 = vld [vmem:[%s1 + $0xb8] sm:$0xff]
  %v122 = vld [vmem:[%s1 + $0xc0] sm:$0xff]
  %v123 = vld [vmem:[%s1 + $0xc8] sm:$0xff]
  %v124 = vld [vmem:[%s1 + $0xd0] sm:$0xff]
  %v125 = vld [vmem:[%s1 + $0xd8] sm:$0xff]
  %v126 = vld [vmem:[%s1 + $0xe0] sm:$0xff]
  %v127 = vld [vmem:[%s1 + $0xe8] sm:$0xff]
  %v128 = vld [vmem:[%s1 + $0xf0] sm:$0xff]
  %v129 = vld [vmem:[%s1 + $0xf8] sm:$0xff]
  %v146 = vunpack.c.l.b16 %v82
  %v147 = vunpack.c.h.b16 %v82
  %v148 = vunpack.c.l.b16 %v83
  %v149 = vunpack.c.h.b16 %v83
  %v150 = vunpack.c.l.b16 %v84
  %v151 = vunpack.c.h.b16 %v84
  %v152 = vunpack.c.l.b16 %v85
  %v153 = vunpack.c.h.b16 %v85
  %v154 = vunpack.c.l.b16 %v86
  %v155 = vunpack.c.h.b16 %v86
  %v156 = vunpack.c.l.b16 %v87
  %v157 = vunpack.c.h.b16 %v87
  %v158 = vunpack.c.l.b16 %v88
  %v159 = vunpack.c.h.b16 %v88
  %v160 = vunpack.c.l.b16 %v89
  %v161 = vunpack.c.h.b16 %v89
  %v162 = vunpack.c.l.b16 %v90
  %v163 = vunpack.c.h.b16 %v90
  %v164 = vunpack.c.l.b16 %v91
  %v165 = vunpack.c.h.b16 %v91
  %v166 = vunpack.c.l.b16 %v92
  %v167 = vunpack.c.h.b16 %v92
  %v168 = vunpack.c.l.b16 %v93
  %v169 = vunpack.c.h.b16 %v93
  %v170 = vunpack.c.l.b16 %v94
  %v171 = vunpack.c.h.b16 %v94
  %v172 = vunpack.c.l.b16 %v95
  %v173 = vunpack.c.h.b16 %v95
  %v174 = vunpack.c.l.b16 %v96
  %v175 = vunpack.c.h.b16 %v96
  %v176 = vunpack.c.l.b16 %v97
  %v177 = vunpack.c.h.b16 %v97
  %v178 = vpack.c.b16 %v148, %v146
  %v179 = vpack.c.b16 %v149, %v147
  %v180 = vpack.c.b16 %v152, %v150
  %v181 = vpack.c.b16 %v153, %v151
  %v182 = vpack.c.b16 %v156, %v154
  %v183 = vpack.c.b16 %v157, %v155
  %v184 = vpack.c.b16 %v160, %v158
  %v185 = vpack.c.b16 %v161, %v159
  %v186 = vpack.c.b16 %v164, %v162
  %v187 = vpack.c.b16 %v165, %v163
  %v188 = vpack.c.b16 %v168, %v166
  %v189 = vpack.c.b16 %v169, %v167
  %v190 = vpack.c.b16 %v172, %v170
  %v191 = vpack.c.b16 %v173, %v171
  %v192 = vpack.c.b16 %v176, %v174
  %v193 = vpack.c.b16 %v177, %v175
  %v242 = vunpack.c.l.b16 %v98
  %v243 = vunpack.c.h.b16 %v98
  %v244 = vunpack.c.l.b16 %v99
  %v245 = vunpack.c.h.b16 %v99
  %v246 = vunpack.c.l.b16 %v100
  %v247 = vunpack.c.h.b16 %v100
  %v248 = vunpack.c.l.b16 %v101
  %v249 = vunpack.c.h.b16 %v101
  %v250 = vunpack.c.l.b16 %v102
  %v251 = vunpack.c.h.b16 %v102
  %v252 = vunpack.c.l.b16 %v103
  %v253 = vunpack.c.h.b16 %v103
  %v254 = vunpack.c.l.b16 %v104
  %v255 = vunpack.c.h.b16 %v104
  %v256 = vunpack.c.l.b16 %v105
  %v257 = vunpack.c.h.b16 %v105
  %v258 = vunpack.c.l.b16 %v106
  %v259 = vunpack.c.h.b16 %v106
  %v260 = vunpack.c.l.b16 %v107
  %v261 = vunpack.c.h.b16 %v107
  %v262 = vunpack.c.l.b16 %v108
  %v263 = vunpack.c.h.b16 %v108
  %v264 = vunpack.c.l.b16 %v109
  %v265 = vunpack.c.h.b16 %v109
  %v266 = vunpack.c.l.b16 %v110
  %v267 = vunpack.c.h.b16 %v110
  %v268 = vunpack.c.l.b16 %v111
  %v269 = vunpack.c.h.b16 %v111
  %v270 = vunpack.c.l.b16 %v112
  %v271 = vunpack.c.h.b16 %v112
  %v272 = vunpack.c.l.b16 %v113
  %v273 = vunpack.c.h.b16 %v113
  %v274 = vunpack.c.l.b16 %v114
  %v275 = vunpack.c.h.b16 %v114
  %v276 = vunpack.c.l.b16 %v115
  %v277 = vunpack.c.h.b16 %v115
  %v278 = vunpack.c.l.b16 %v116
  %v279 = vunpack.c.h.b16 %v116
  %v280 = vunpack.c.l.b16 %v117
  %v281 = vunpack.c.h.b16 %v117
  %v282 = vunpack.c.l.b16 %v118
  %v283 = vunpack.c.h.b16 %v118
  %v284 = vunpack.c.l.b16 %v119
  %v285 = vunpack.c.h.b16 %v119
  %v286 = vunpack.c.l.b16 %v120
  %v287 = vunpack.c.h.b16 %v120
  %v288 = vunpack.c.l.b16 %v121
  %v289 = vunpack.c.h.b16 %v121
  %v290 = vunpack.c.l.b16 %v122
  %v291 = vunpack.c.h.b16 %v122
  %v292 = vunpack.c.l.b16 %v123
  %v293 = vunpack.c.h.b16 %v123
  %v294 = vunpack.c.l.b16 %v124
  %v295 = vunpack.c.h.b16 %v124
  %v296 = vunpack.c.l.b16 %v125
  %v297 = vunpack.c.h.b16 %v125
  %v298 = vunpack.c.l.b16 %v126
  %v299 = vunpack.c.h.b16 %v126
  %v300 = vunpack.c.l.b16 %v127
  %v301 = vunpack.c.h.b16 %v127
  %v302 = vunpack.c.l.b16 %v128
  %v303 = vunpack.c.h.b16 %v128
  %v304 = vunpack.c.l.b16 %v129
  %v305 = vunpack.c.h.b16 %v129
  %v306 = vpack.c.b16 %v244, %v242
  %v307 = vpack.c.b16 %v245, %v243
  %v308 = vpack.c.b16 %v248, %v246
  %v309 = vpack.c.b16 %v249, %v247
  %v310 = vpack.c.b16 %v252, %v250
  %v311 = vpack.c.b16 %v253, %v251
  %v312 = vpack.c.b16 %v256, %v254
  %v313 = vpack.c.b16 %v257, %v255
  %v314 = vpack.c.b16 %v260, %v258
  %v315 = vpack.c.b16 %v261, %v259
  %v316 = vpack.c.b16 %v264, %v262
  %v317 = vpack.c.b16 %v265, %v263
  %v318 = vpack.c.b16 %v268, %v266
  %v319 = vpack.c.b16 %v269, %v267
  %v320 = vpack.c.b16 %v272, %v270
  %v321 = vpack.c.b16 %v273, %v271
  %v322 = vpack.c.b16 %v276, %v274
  %v323 = vpack.c.b16 %v277, %v275
  %v324 = vpack.c.b16 %v280, %v278
  %v325 = vpack.c.b16 %v281, %v279
  %v326 = vpack.c.b16 %v284, %v282
  %v327 = vpack.c.b16 %v285, %v283
  %v328 = vpack.c.b16 %v288, %v286
  %v329 = vpack.c.b16 %v289, %v287
  %v330 = vpack.c.b16 %v292, %v290
  %v331 = vpack.c.b16 %v293, %v291
  %v332 = vpack.c.b16 %v296, %v294
  %v333 = vpack.c.b16 %v297, %v295
  %v334 = vpack.c.b16 %v300, %v298
  %v335 = vpack.c.b16 %v301, %v299
  %v336 = vpack.c.b16 %v304, %v302
  %v337 = vpack.c.b16 %v305, %v303
  %370 = vmatprep.subr.bf16.mxu0 %v307
  %371 = vmatpush1.bf16.msra.mxu0 %v306
  %372 = vmatprep.subr.bf16.mxu0 %v309
  %373 = vmatpush1.bf16.msra.mxu0 %v308
  %374 = vmatprep.subr.bf16.mxu0 %v311
  %375 = vmatpush1.bf16.msra.mxu0 %v310
  %376 = vmatprep.subr.bf16.mxu0 %v313
  %377 = vmatpush1.bf16.msra.mxu0 %v312
  %378 = vmatprep.subr.bf16.mxu0 %v315
  %379 = vmatpush1.bf16.msra.mxu0 %v314
  %380 = vmatprep.subr.bf16.mxu0 %v317
  %381 = vmatpush1.bf16.msra.mxu0 %v316
  %382 = vmatprep.subr.bf16.mxu0 %v319
  %383 = vmatpush1.bf16.msra.mxu0 %v318
  %384 = vmatprep.subr.bf16.mxu0 %v321
  %385 = vmatpush1.bf16.msra.mxu0 %v320
  %386 = vmatprep.subr.bf16.mxu0 %v323
  %387 = vmatpush1.bf16.msra.mxu0 %v322
  %388 = vmatprep.subr.bf16.mxu0 %v325
  %389 = vmatpush1.bf16.msra.mxu0 %v324
  %390 = vmatprep.subr.bf16.mxu0 %v327
  %391 = vmatpush1.bf16.msra.mxu0 %v326
  %392 = vmatprep.subr.bf16.mxu0 %v329
  %393 = vmatpush1.bf16.msra.mxu0 %v328
  %394 = vmatprep.subr.bf16.mxu0 %v331
  %395 = vmatpush1.bf16.msra.mxu0 %v330
  %396 = vmatprep.subr.bf16.mxu0 %v333
  %397 = vmatpush1.bf16.msra.mxu0 %v332
  %398 = vmatprep.subr.bf16.mxu0 %v335
  %399 = vmatpush1.bf16.msra.mxu0 %v334
  %400 = vmatprep.subr.bf16.mxu0 %v337
  %401 = vmatpush1.bf16.msra.mxu0 %v336
  %402 = vmatprep.mubr.bf16.mxu0 %v179
  %403 = vmatmul.mubr.bf16.gmra.mrb[0].mxu0 %v178
  %v404 = vpop.f32.mrb[0].mxu0
  %v405 = vadd.f32 0.0, %v404
  %v406 = vpop.f32.mrb[0].mxu0
  %v407 = vadd.f32 0.0, %v406
  %v408 = vpop.f32.mrb[0].mxu0
  %v409 = vadd.f32 0.0, %v408
  %v410 = vpop.f32.mrb[0].mxu0
  %v411 = vadd.f32 0.0, %v410
  %412 = vmatprep.mubr.bf16.mxu0 %v181
  %413 = vmatmul.mubr.bf16.gmra.mrb[0].mxu0 %v180
  %v414 = vpop.f32.mrb[0].mxu0
  %v415 = vadd.f32 0.0, %v414
  %v416 = vpop.f32.mrb[0].mxu0
  %v417 = vadd.f32 0.0, %v416
  %v418 = vpop.f32.mrb[0].mxu0
  %v419 = vadd.f32 0.0, %v418
  %v420 = vpop.f32.mrb[0].mxu0
  %v421 = vadd.f32 0.0, %v420
  %422 = vmatprep.mubr.bf16.mxu0 %v183
  %423 = vmatmul.mubr.bf16.gmra.mrb[0].mxu0 %v182
  %v424 = vpop.f32.mrb[0].mxu0
  %v425 = vadd.f32 0.0, %v424
  %v426 = vpop.f32.mrb[0].mxu0
  %v427 = vadd.f32 0.0, %v426
  %v428 = vpop.f32.mrb[0].mxu0
  %v429 = vadd.f32 0.0, %v428
  %v430 = vpop.f32.mrb[0].mxu0
  %v431 = vadd.f32 0.0, %v430
  %432 = vmatprep.mubr.bf16.mxu0 %v185
  %433 = vmatmul.mubr.bf16.gmra.mrb[0].mxu0 %v184
  %v434 = vpop.f32.mrb[0].mxu0
  %v435 = vadd.f32 0.0, %v434
  %v436 = vpop.f32.mrb[0].mxu0
  %v437 = vadd.f32 0.0, %v436
  %v438 = vpop.f32.mrb[0].mxu0
  %v439 = vadd.f32 0.0, %v438
  %v440 = vpop.f32.mrb[0].mxu0
  %v441 = vadd.f32 0.0, %v440
  %442 = vmatprep.mubr.bf16.mxu0 %v187
  %443 = vmatmul.mubr.bf16.gmra.mrb[0].mxu0 %v186
  %v444 = vpop.f32.mrb[0].mxu0
  %v445 = vadd.f32 0.0, %v444
  %v446 = vpop.f32.mrb[0].mxu0
  %v447 = vadd.f32 0.0, %v446
  %v448 = vpop.f32.mrb[0].mxu0
  %v449 = vadd.f32 0.0, %v448
  %v450 = vpop.f32.mrb[0].mxu0
  %v451 = vadd.f32 0.0, %v450
  %452 = vmatprep.mubr.bf16.mxu0 %v189
  %453 = vmatmul.mubr.bf16.gmra.mrb[0].mxu0 %v188
  %v454 = vpop.f32.mrb[0].mxu0
  %v455 = vadd.f32 0.0, %v454
  %v456 = vpop.f32.mrb[0].mxu0
  %v457 = vadd.f32 0.0, %v456
  %v458 = vpop.f32.mrb[0].mxu0
  %v459 = vadd.f32 0.0, %v458
  %v460 = vpop.f32.mrb[0].mxu0
  %v461 = vadd.f32 0.0, %v460
  %462 = vmatprep.mubr.bf16.mxu0 %v191
  %463 = vmatmul.mubr.bf16.gmra.mrb[0].mxu0 %v190
  %v464 = vpop.f32.mrb[0].mxu0
  %v465 = vadd.f32 0.0, %v464
  %v466 = vpop.f32.mrb[0].mxu0
  %v467 = vadd.f32 0.0, %v466
  %v468 = vpop.f32.mrb[0].mxu0
  %v469 = vadd.f32 0.0, %v468
  %v470 = vpop.f32.mrb[0].mxu0
  %v471 = vadd.f32 0.0, %v470
  %472 = vmatprep.mubr.bf16.mxu0 %v193
  %473 = vmatmul.mubr.bf16.gmra.mrb[0].mxu0 %v192
  %v474 = vpop.f32.mrb[0].mxu0
  %v475 = vadd.f32 0.0, %v474
  %v476 = vpop.f32.mrb[0].mxu0
  %v477 = vadd.f32 0.0, %v476
  %v478 = vpop.f32.mrb[0].mxu0
  %v479 = vadd.f32 0.0, %v478
  %v480 = vpop.f32.mrb[0].mxu0
  %v481 = vadd.f32 0.0, %v480
  %482 = vdwg.mxu0
  %v483 = vadd.f32 %v50, %v405
  %v484 = vadd.f32 %v51, %v407
  %v485 = vadd.f32 %v52, %v409
  %v486 = vadd.f32 %v53, %v411
  %v487 = vadd.f32 %v54, %v415
  %v488 = vadd.f32 %v55, %v417
  %v489 = vadd.f32 %v56, %v419
  %v490 = vadd.f32 %v57, %v421
  %v491 = vadd.f32 %v58, %v425
  %v492 = vadd.f32 %v59, %v427
  %v493 = vadd.f32 %v60, %v429
  %v494 = vadd.f32 %v61, %v431
  %v495 = vadd.f32 %v62, %v435
  %v496 = vadd.f32 %v63, %v437
  %v497 = vadd.f32 %v64, %v439
  %v498 = vadd.f32 %v65, %v441
  %v499 = vadd.f32 %v66, %v445
  %v500 = vadd.f32 %v67, %v447
  %v501 = vadd.f32 %v68, %v449
  %v502 = vadd.f32 %v69, %v451
  %v503 = vadd.f32 %v70, %v455
  %v504 = vadd.f32 %v71, %v457
  %v505 = vadd.f32 %v72, %v459
  %v506 = vadd.f32 %v73, %v461
  %v507 = vadd.f32 %v74, %v465
  %v508 = vadd.f32 %v75, %v467
  %v509 = vadd.f32 %v76, %v469
  %v510 = vadd.f32 %v77, %v471
  %v511 = vadd.f32 %v78, %v475
  %v512 = vadd.f32 %v79, %v477
  %v513 = vadd.f32 %v80, %v479
  %v514 = vadd.f32 %v81, %v481
  %515 = vst [vmem:[#allocation2] sm:$0xff] %v483
  %516 = vst [vmem:[#allocation2 + $0x8] sm:$0xff] %v484
  %517 = vst [vmem:[#allocation2 + $0x10] sm:$0xff] %v485
  %518 = vst [vmem:[#allocation2 + $0x18] sm:$0xff] %v486
  %519 = vst [vmem:[#allocation2 + $0x20] sm:$0xff] %v487
  %520 = vst [vmem:[#allocation2 + $0x28] sm:$0xff] %v488
  %521 = vst [vmem:[#allocation2 + $0x30] sm:$0xff] %v489
  %522 = vst [vmem:[#allocation2 + $0x38] sm:$0xff] %v490
  %523 = vst [vmem:[#allocation2 + $0x40] sm:$0xff] %v491
  %524 = vst [vmem:[#allocation2 + $0x48] sm:$0xff] %v492
  %525 = vst [vmem:[#allocation2 + $0x50] sm:$0xff] %v493
  %526 = vst [vmem:[#allocation2 + $0x58] sm:$0xff] %v494
  %527 = vst [vmem:[#allocation2 + $0x60] sm:$0xff] %v495
  %528 = vst [vmem:[#allocation2 + $0x68] sm:$0xff] %v496
  %529 = vst [vmem:[#allocation2 + $0x70] sm:$0xff] %v497
  %530 = vst [vmem:[#allocation2 + $0x78] sm:$0xff] %v498
  %531 = vst [vmem:[#allocation2 + $0x80] sm:$0xff] %v499
  %532 = vst [vmem:[#allocation2 + $0x88] sm:$0xff] %v500
  %533 = vst [vmem:[#allocation2 + $0x90] sm:$0xff] %v501
  %534 = vst [vmem:[#allocation2 + $0x98] sm:$0xff] %v502
  %535 = vst [vmem:[#allocation2 + $0xa0] sm:$0xff] %v503
  %536 = vst [vmem:[#allocation2 + $0xa8] sm:$0xff] %v504
  %537 = vst [vmem:[#allocation2 + $0xb0] sm:$0xff] %v505
  %538 = vst [vmem:[#allocation2 + $0xb8] sm:$0xff] %v506
  %539 = vst [vmem:[#allocation2 + $0xc0] sm:$0xff] %v507
  %540 = vst [vmem:[#allocation2 + $0xc8] sm:$0xff] %v508
  %541 = vst [vmem:[#allocation2 + $0xd0] sm:$0xff] %v509
  %542 = vst [vmem:[#allocation2 + $0xd8] sm:$0xff] %v510
  %543 = vst [vmem:[#allocation2 + $0xe0] sm:$0xff] %v511
  %544 = vst [vmem:[#allocation2 + $0xe8] sm:$0xff] %v512
  %545 = vst [vmem:[#allocation2 + $0xf0] sm:$0xff] %v513
  %546 = vst [vmem:[#allocation2 + $0xf8] sm:$0xff] %v514
  // Predicated region
  $region18: #{fwd.30} parent=0 // pred_check
    %p547 = pneg %p14
  $region19: #{fwd.30} parent=0 // pred_check_branch
    %549 = sbr.rel (%p547) target = $region21
  $region20: #{fwd.30} parent=0 // pred_region
    %v550 = vld [vmem:[#allocation2] sm:$0xff]
    %v551 = vld [vmem:[#allocation2 + $0x8] sm:$0xff]
    %v552 = vld [vmem:[#allocation2 + $0x10] sm:$0xff]
    %v553 = vld [vmem:[#allocation2 + $0x18] sm:$0xff]
    %v554 = vld [vmem:[#allocation2 + $0x20] sm:$0xff]
    %v555 = vld [vmem:[#allocation2 + $0x28] sm:$0xff]
    %v556 = vld [vmem:[#allocation2 + $0x30] sm:$0xff]
    %v557 = vld [vmem:[#allocation2 + $0x38] sm:$0xff]
    %v558 = vld [vmem:[#allocation2 + $0x40] sm:$0xff]
    %v559 = vld [vmem:[#allocation2 + $0x48] sm:$0xff]
    %v560 = vld [vmem:[#allocation2 + $0x50] sm:$0xff]
    %v561 = vld [vmem:[#allocation2 + $0x58] sm:$0xff]
    %v562 = vld [vmem:[#allocation2 + $0x60] sm:$0xff]
    %v563 = vld [vmem:[#allocation2 + $0x68] sm:$0xff]
    %v564 = vld [vmem:[#allocation2 + $0x70] sm:$0xff]
    %v565 = vld [vmem:[#allocation2 + $0x78] sm:$0xff]
    %v566 = vld [vmem:[#allocation2 + $0x80] sm:$0xff]
    %v567 = vld [vmem:[#allocation2 + $0x88] sm:$0xff]
    %v568 = vld [vmem:[#allocation2 + $0x90] sm:$0xff]
    %v569 = vld [vmem:[#allocation2 + $0x98] sm:$0xff]
    %v570 = vld [vmem:[#allocation2 + $0xa0] sm:$0xff]
    %v571 = vld [vmem:[#allocation2 + $0xa8] sm:$0xff]
    %v572 = vld [vmem:[#allocation2 + $0xb0] sm:$0xff]
    %v573 = vld [vmem:[#allocation2 + $0xb8] sm:$0xff]
    %v574 = vld [vmem:[#allocation2 + $0xc0] sm:$0xff]
    %v575 = vld [vmem:[#allocation2 + $0xc8] sm:$0xff]
    %v576 = vld [vmem:[#allocation2 + $0xd0] sm:$0xff]
    %v577 = vld [vmem:[#allocation2 + $0xd8] sm:$0xff]
    %v578 = vld [vmem:[#allocation2 + $0xe0] sm:$0xff]
    %v579 = vld [vmem:[#allocation2 + $0xe8] sm:$0xff]
    %v580 = vld [vmem:[#allocation2 + $0xf0] sm:$0xff]
    %v581 = vld [vmem:[#allocation2 + $0xf8] sm:$0xff]
    %v582 = vld [vmem:[%s2] sm:$0x3]
    %v584 = vlaneseq
    %v585 = vshrl.u32 %v584, 7
    %v586 = vsub.s32 0, %v585
    %v587 = vrot.slane %v582, %v586
    %v588 = vlaneseq
    %v589 = vshrl.u32 %v588, 7
    %v590 = vsub.s32 1, %v589
    %v591 = vrot.slane %v582, %v590
    %v594 = vadd.f32 %v550, %v587
    %v595 = vadd.f32 %v551, %v591
    %v596 = vadd.f32 %v552, %v587
    %v597 = vadd.f32 %v553, %v591
    %v598 = vadd.f32 %v554, %v587
    %v599 = vadd.f32 %v555, %v591
    %v600 = vadd.f32 %v556, %v587
    %v601 = vadd.f32 %v557, %v591
    %v602 = vadd.f32 %v558, %v587
    %v603 = vadd.f32 %v559, %v591
    %v604 = vadd.f32 %v560, %v587
    %v605 = vadd.f32 %v561, %v591
    %v606 = vadd.f32 %v562, %v587
    %v607 = vadd.f32 %v563, %v591
    %v608 = vadd.f32 %v564, %v587
    %v609 = vadd.f32 %v565, %v591
    %v610 = vadd.f32 %v566, %v587
    %v611 = vadd.f32 %v567, %v591
    %v612 = vadd.f32 %v568, %v587
    %v613 = vadd.f32 %v569, %v591
    %v614 = vadd.f32 %v570, %v587
    %v615 = vadd.f32 %v571, %v591
    %v616 = vadd.f32 %v572, %v587
    %v617 = vadd.f32 %v573, %v591
    %v618 = vadd.f32 %v574, %v587
    %v619 = vadd.f32 %v575, %v591
    %v620 = vadd.f32 %v576, %v587
    %v621 = vadd.f32 %v577, %v591
    %v622 = vadd.f32 %v578, %v587
    %v623 = vadd.f32 %v579, %v591
    %v624 = vadd.f32 %v580, %v587
    %v625 = vadd.f32 %v581, %v591
    %626 = vst [vmem:[%s3] sm:$0xff] %v594
    %627 = vst [vmem:[%s3 + $0x8] sm:$0xff] %v595
    %628 = vst [vmem:[%s3 + $0x10] sm:$0xff] %v596
    %629 = vst [vmem:[%s3 + $0x18] sm:$0xff] %v597
    %630 = vst [vmem:[%s3 + $0x20] sm:$0xff] %v598
    %631 = vst [vmem:[%s3 + $0x28] sm:$0xff] %v599
    %632 = vst [vmem:[%s3 + $0x30] sm:$0xff] %v600
    %633 = vst [vmem:[%s3 + $0x38] sm:$0xff] %v601
    %634 = vst [vmem:[%s3 + $0x40] sm:$0xff] %v602
    %635 = vst [vmem:[%s3 + $0x48] sm:$0xff] %v603
    %636 = vst [vmem:[%s3 + $0x50] sm:$0xff] %v604
    %637 = vst [vmem:[%s3 + $0x58] sm:$0xff] %v605
    %638 = vst [vmem:[%s3 + $0x60] sm:$0xff] %v606
    %639 = vst [vmem:[%s3 + $0x68] sm:$0xff] %v607
    %640 = vst [vmem:[%s3 + $0x70] sm:$0xff] %v608
    %641 = vst [vmem:[%s3 + $0x78] sm:$0xff] %v609
    %642 = vst [vmem:[%s3 + $0x80] sm:$0xff] %v610
    %643 = vst [vmem:[%s3 + $0x88] sm:$0xff] %v611
    %644 = vst [vmem:[%s3 + $0x90] sm:$0xff] %v612
    %645 = vst [vmem:[%s3 + $0x98] sm:$0xff] %v613
    %646 = vst [vmem:[%s3 + $0xa0] sm:$0xff] %v614
    %647 = vst [vmem:[%s3 + $0xa8] sm:$0xff] %v615
    %648 = vst [vmem:[%s3 + $0xb0] sm:$0xff] %v616
    %649 = vst [vmem:[%s3 + $0xb8] sm:$0xff] %v617
    %650 = vst [vmem:[%s3 + $0xc0] sm:$0xff] %v618
    %651 = vst [vmem:[%s3 + $0xc8] sm:$0xff] %v619
    %652 = vst [vmem:[%s3 + $0xd0] sm:$0xff] %v620
    %653 = vst [vmem:[%s3 + $0xd8] sm:$0xff] %v621
    %654 = vst [vmem:[%s3 + $0xe0] sm:$0xff] %v622
    %655 = vst [vmem:[%s3 + $0xe8] sm:$0xff] %v623
    %656 = vst [vmem:[%s3 + $0xf0] sm:$0xff] %v624
    %657 = vst [vmem:[%s3 + $0xf8] sm:$0xff] %v625
  $region21: #{fwd.30} parent=0 // pred_fallthru
    _
  // Predicated region
  $region22: #{fwd.30} parent=0 // pred_check
    _
  $region23: #{fwd.30} parent=0 // pred_check_branch
    %659 = sbr.rel (0) target = $region25
  $region24: #{fwd.30} parent=0 // pred_region
    _
  $region25: #{fwd.30} parent=0 // pred_fallthru
    _
  // Predicated region
  $region26: #{fwd.30} parent=0 // pred_check
    _
  $region27: #{fwd.30} parent=0 // pred_check_branch
    %661 = sbr.rel (0) target = $region29
  $region28: #{fwd.30} parent=0 // pred_region
    _
  $region29: #{fwd.30} parent=0 // pred_fallthru
    _

// kernel: fwd.29
$region0: #{fwd.29}
  #allocation0 [shape = 'u32[]', space=smem, size = 0x4, offset = 0x4, fixed_abs, tag = 'smem constant byte address 0x4 - core index']
  #allocation1 [shape = 'u32[144,128]{1,0:T(1,128)}', space=vmem, size = 0x12000, scoped, tag = 'internal scratch']
  #allocation2 [shape = 'f32[128,512]{1,0:T(8,128)}', space=vmem, size = 0x40000, scoped, tag = 'scratch operand']
  %s0 = inlined_call_operand.vmem [shape: bf16[128,256], index: 0, kind: input, shape index: {}]
  %s1 = inlined_call_operand.vmem [shape: bf16[256,512], index: 1, kind: input, shape index: {}]
  %s2 = inlined_call_operand.vmem [shape: f32[1,512], index: 2, kind: input, shape index: {}]
  %s3 = inlined_call_operand.vmem [shape: f32[128,512], index: 3, kind: output, shape index: {}]
  %s4 = sld [smem:[#allocation0]]
  $region30: #{fwd.29} parent=0
    _
  %s6 = ssub.s32 1, %s4
  %s7 = scalar_select 0, %s6, %s4
  // Predicated region
  $region2: #{fwd.29} parent=0 // pred_check
    _
  $region3: #{fwd.29} parent=0 // pred_check_branch
    %9 = sbr.rel (0) target = $region5
  $region4: #{fwd.29} parent=0 // pred_region
    _
  $region5: #{fwd.29} parent=0 // pred_fallthru
    _
  // Predicated region
  $region6: #{fwd.29} parent=0 // pred_check
    _
  $region7: #{fwd.29} parent=0 // pred_check_branch
    %11 = sbr.rel (0) target = $region9
  $region8: #{fwd.29} parent=0 // pred_region
    _
  $region9: #{fwd.29} parent=0 // pred_fallthru
    _
  // Predicated region
  $region10: #{fwd.29} parent=0 // pred_check
    _
  $region11: #{fwd.29} parent=0 // pred_check_branch
    %13 = sbr.rel (0) target = $region13
  $region12: #{fwd.29} parent=0 // pred_region
    _
  $region13: #{fwd.29} parent=0 // pred_fallthru
    _
  %p14 = scmp.eq.s32.totalorder 0, 0
  // Predicated region
  $region14: #{fwd.29} parent=0 // pred_check
    %p15 = pneg %p14
  $region15: #{fwd.29} parent=0 // pred_check_branch
    %17 = sbr.rel (%p15) target = $region17
  $region16: #{fwd.29} parent=0 // pred_region
    %18 = vst [vmem:[#allocation2] sm:$0xff] 0.0
    %19 = vst [vmem:[#allocation2 + $0x8] sm:$0xff] 0.0
    %20 = vst [vmem:[#allocation2 + $0x10] sm:$0xff] 0.0
    %21 = vst [vmem:[#allocation2 + $0x18] sm:$0xff] 0.0
    %22 = vst [vmem:[#allocation2 + $0x20] sm:$0xff] 0.0
    %23 = vst [vmem:[#allocation2 + $0x28] sm:$0xff] 0.0
    %24 = vst [vmem:[#allocation2 + $0x30] sm:$0xff] 0.0
    %25 = vst [vmem:[#allocation2 + $0x38] sm:$0xff] 0.0
    %26 = vst [vmem:[#allocation2 + $0x40] sm:$0xff] 0.0
    %27 = vst [vmem:[#allocation2 + $0x48] sm:$0xff] 0.0
    %28 = vst [vmem:[#allocation2 + $0x50] sm:$0xff] 0.0
    %29 = vst [vmem:[#allocation2 + $0x58] sm:$0xff] 0.0
    %30 = vst [vmem:[#allocation2 + $0x60] sm:$0xff] 0.0
    %31 = vst [vmem:[#allocation2 + $0x68] sm:$0xff] 0.0
    %32 = vst [vmem:[#allocation2 + $0x70] sm:$0xff] 0.0
    %33 = vst [vmem:[#allocation2 + $0x78] sm:$0xff] 0.0
    %34 = vst [vmem:[#allocation2 + $0x80] sm:$0xff] 0.0
    %35 = vst [vmem:[#allocation2 + $0x88] sm:$0xff] 0.0
    %36 = vst [vmem:[#allocation2 + $0x90] sm:$0xff] 0.0
    %37 = vst [vmem:[#allocation2 + $0x98] sm:$0xff] 0.0
    %38 = vst [vmem:[#allocation2 + $0xa0] sm:$0xff] 0.0
    %39 = vst [vmem:[#allocation2 + $0xa8] sm:$0xff] 0.0
    %40 = vst [vmem:[#allocation2 + $0xb0] sm:$0xff] 0.0
    %41 = vst [vmem:[#allocation2 + $0xb8] sm:$0xff] 0.0
    %42 = vst [vmem:[#allocation2 + $0xc0] sm:$0xff] 0.0
    %43 = vst [vmem:[#allocation2 + $0xc8] sm:$0xff] 0.0
    %44 = vst [vmem:[#allocation2 + $0xd0] sm:$0xff] 0.0
    %45 = vst [vmem:[#allocation2 + $0xd8] sm:$0xff] 0.0
    %46 = vst [vmem:[#allocation2 + $0xe0] sm:$0xff] 0.0
    %47 = vst [vmem:[#allocation2 + $0xe8] sm:$0xff] 0.0
    %48 = vst [vmem:[#allocation2 + $0xf0] sm:$0xff] 0.0
    %49 = vst [vmem:[#allocation2 + $0xf8] sm:$0xff] 0.0
    %50 = vst [vmem:[#allocation2 + $0x100] sm:$0xff] 0.0
    %51 = vst [vmem:[#allocation2 + $0x108] sm:$0xff] 0.0
    %52 = vst [vmem:[#allocation2 + $0x110] sm:$0xff] 0.0
    %53 = vst [vmem:[#allocation2 + $0x118] sm:$0xff] 0.0
    %54 = vst [vmem:[#allocation2 + $0x120] sm:$0xff] 0.0
    %55 = vst [vmem:[#allocation2 + $0x128] sm:$0xff] 0.0
    %56 = vst [vmem:[#allocation2 + $0x130] sm:$0xff] 0.0
    %57 = vst [vmem:[#allocation2 + $0x138] sm:$0xff] 0.0
    %58 = vst [vmem:[#allocation2 + $0x140] sm:$0xff] 0.0
    %59 = vst [vmem:[#allocation2 + $0x148] sm:$0xff] 0.0
    %60 = vst [vmem:[#allocation2 + $0x150] sm:$0xff] 0.0
    %61 = vst [vmem:[#allocation2 + $0x158] sm:$0xff] 0.0
    %62 = vst [vmem:[#allocation2 + $0x160] sm:$0xff] 0.0
    %63 = vst [vmem:[#allocation2 + $0x168] sm:$0xff] 0.0
    %64 = vst [vmem:[#allocation2 + $0x170] sm:$0xff] 0.0
    %65 = vst [vmem:[#allocation2 + $0x178] sm:$0xff] 0.0
    %66 = vst [vmem:[#allocation2 + $0x180] sm:$0xff] 0.0
    %67 = vst [vmem:[#allocation2 + $0x188] sm:$0xff] 0.0
    %68 = vst [vmem:[#allocation2 + $0x190] sm:$0xff] 0.0
    %69 = vst [vmem:[#allocation2 + $0x198] sm:$0xff] 0.0
    %70 = vst [vmem:[#allocation2 + $0x1a0] sm:$0xff] 0.0
    %71 = vst [vmem:[#allocation2 + $0x1a8] sm:$0xff] 0.0
    %72 = vst [vmem:[#allocation2 + $0x1b0] sm:$0xff] 0.0
    %73 = vst [vmem:[#allocation2 + $0x1b8] sm:$0xff] 0.0
    %74 = vst [vmem:[#allocation2 + $0x1c0] sm:$0xff] 0.0
    %75 = vst [vmem:[#allocation2 + $0x1c8] sm:$0xff] 0.0
    %76 = vst [vmem:[#allocation2 + $0x1d0] sm:$0xff] 0.0
    %77 = vst [vmem:[#allocation2 + $0x1d8] sm:$0xff] 0.0
    %78 = vst [vmem:[#allocation2 + $0x1e0] sm:$0xff] 0.0
    %79 = vst [vmem:[#allocation2 + $0x1e8] sm:$0xff] 0.0
    %80 = vst [vmem:[#allocation2 + $0x1f0] sm:$0xff] 0.0
    %81 = vst [vmem:[#allocation2 + $0x1f8] sm:$0xff] 0.0
  $region17: #{fwd.29} parent=0 // pred_fallthru
    _
  %v82 = vld [vmem:[#allocation2] sm:$0xff]
  %v83 = vld [vmem:[#allocation2 + $0x8] sm:$0xff]
  %v84 = vld [vmem:[#allocation2 + $0x10] sm:$0xff]
  %v85 = vld [vmem:[#allocation2 + $0x18] sm:$0xff]
  %v86 = vld [vmem:[#allocation2 + $0x20] sm:$0xff]
  %v87 = vld [vmem:[#allocation2 + $0x28] sm:$0xff]
  %v88 = vld [vmem:[#allocation2 + $0x30] sm:$0xff]
  %v89 = vld [vmem:[#allocation2 + $0x38] sm:$0xff]
  %v90 = vld [vmem:[#allocation2 + $0x40] sm:$0xff]
  %v91 = vld [vmem:[#allocation2 + $0x48] sm:$0xff]
  %v92 = vld [vmem:[#allocation2 + $0x50] sm:$0xff]
  %v93 = vld [vmem:[#allocation2 + $0x58] sm:$0xff]
  %v94 = vld [vmem:[#allocation2 + $0x60] sm:$0xff]
  %v95 = vld [vmem:[#allocation2 + $0x68] sm:$0xff]
  %v96 = vld [vmem:[#allocation2 + $0x70] sm:$0xff]
  %v97 = vld [vmem:[#allocation2 + $0x78] sm:$0xff]
  %v98 = vld [vmem:[#allocation2 + $0x80] sm:$0xff]
  %v99 = vld [vmem:[#allocation2 + $0x88] sm:$0xff]
  %v100 = vld [vmem:[#allocation2 + $0x90] sm:$0xff]
  %v101 = vld [vmem:[#allocation2 + $0x98] sm:$0xff]
  %v102 = vld [vmem:[#allocation2 + $0xa0] sm:$0xff]
  %v103 = vld [vmem:[#allocation2 + $0xa8] sm:$0xff]
  %v104 = vld [vmem:[#allocation2 + $0xb0] sm:$0xff]
  %v105 = vld [vmem:[#allocation2 + $0xb8] sm:$0xff]
  %v106 = vld [vmem:[#allocation2 + $0xc0] sm:$0xff]
  %v107 = vld [vmem:[#allocation2 + $0xc8] sm:$0xff]
  %v108 = vld [vmem:[#allocation2 + $0xd0] sm:$0xff]
  %v109 = vld [vmem:[#allocation2 + $0xd8] sm:$0xff]
  %v110 = vld [vmem:[#allocation2 + $0xe0] sm:$0xff]
  %v111 = vld [vmem:[#allocation2 + $0xe8] sm:$0xff]
  %v112 = vld [vmem:[#allocation2 + $0xf0] sm:$0xff]
  %v113 = vld [vmem:[#allocation2 + $0xf8] sm:$0xff]
  %v114 = vld [vmem:[#allocation2 + $0x100] sm:$0xff]
  %v115 = vld [vmem:[#allocation2 + $0x108] sm:$0xff]
  %v116 = vld [vmem:[#allocation2 + $0x110] sm:$0xff]
  %v117 = vld [vmem:[#allocation2 + $0x118] sm:$0xff]
  %v118 = vld [vmem:[#allocation2 + $0x120] sm:$0xff]
  %v119 = vld [vmem:[#allocation2 + $0x128] sm:$0xff]
  %v120 = vld [vmem:[#allocation2 + $0x130] sm:$0xff]
  %v121 = vld [vmem:[#allocation2 + $0x138] sm:$0xff]
  %v122 = vld [vmem:[#allocation2 + $0x140] sm:$0xff]
  %v123 = vld [vmem:[#allocation2 + $0x148] sm:$0xff]
  %v124 = vld [vmem:[#allocation2 + $0x150] sm:$0xff]
  %v125 = vld [vmem:[#allocation2 + $0x158] sm:$0xff]
  %v126 = vld [vmem:[#allocation2 + $0x160] sm:$0xff]
  %v127 = vld [vmem:[#allocation2 + $0x168] sm:$0xff]
  %v128 = vld [vmem:[#allocation2 + $0x170] sm:$0xff]
  %v129 = vld [vmem:[#allocation2 + $0x178] sm:$0xff]
  %v130 = vld [vmem:[#allocation2 + $0x180] sm:$0xff]
  %v131 = vld [vmem:[#allocation2 + $0x188] sm:$0xff]
  %v132 = vld [vmem:[#allocation2 + $0x190] sm:$0xff]
  %v133 = vld [vmem:[#allocation2 + $0x198] sm:$0xff]
  %v134 = vld [vmem:[#allocation2 + $0x1a0] sm:$0xff]
  %v135 = vld [vmem:[#allocation2 + $0x1a8] sm:$0xff]
  %v136 = vld [vmem:[#allocation2 + $0x1b0] sm:$0xff]
  %v137 = vld [vmem:[#allocation2 + $0x1b8] sm:$0xff]
  %v138 = vld [vmem:[#allocation2 + $0x1c0] sm:$0xff]
  %v139 = vld [vmem:[#allocation2 + $0x1c8] sm:$0xff]
  %v140 = vld [vmem:[#allocation2 + $0x1d0] sm:$0xff]
  %v141 = vld [vmem:[#allocation2 + $0x1d8] sm:$0xff]
  %v142 = vld [vmem:[#allocation2 + $0x1e0] sm:$0xff]
  %v143 = vld [vmem:[#allocation2 + $0x1e8] sm:$0xff]
  %v144 = vld [vmem:[#allocation2 + $0x1f0] sm:$0xff]
  %v145 = vld [vmem:[#allocation2 + $0x1f8] sm:$0xff]
  %v146 = vld [vmem:[%s0] sm:$0xff]
  %v147 = vld [vmem:[%s0 + $0x8] sm:$0xff]
  %v148 = vld [vmem:[%s0 + $0x10] sm:$0xff]
  %v149 = vld [vmem:[%s0 + $0x18] sm:$0xff]
  %v150 = vld [vmem:[%s0 + $0x20] sm:$0xff]
  %v151 = vld [vmem:[%s0 + $0x28] sm:$0xff]
  %v152 = vld [vmem:[%s0 + $0x30] sm:$0xff]
  %v153 = vld [vmem:[%s0 + $0x38] sm:$0xff]
  %v154 = vld [vmem:[%s0 + $0x40] sm:$0xff]
  %v155 = vld [vmem:[%s0 + $0x48] sm:$0xff]
  %v156 = vld [vmem:[%s0 + $0x50] sm:$0xff]
  %v157 = vld [vmem:[%s0 + $0x58] sm:$0xff]
  %v158 = vld [vmem:[%s0 + $0x60] sm:$0xff]
  %v159 = vld [vmem:[%s0 + $0x68] sm:$0xff]
  %v160 = vld [vmem:[%s0 + $0x70] sm:$0xff]
  %v161 = vld [vmem:[%s0 + $0x78] sm:$0xff]
  %v162 = vld [vmem:[%s1] sm:$0xff]
  %v163 = vld [vmem:[%s1 + $0x8] sm:$0xff]
  %v164 = vld [vmem:[%s1 + $0x10] sm:$0xff]
  %v165 = vld [vmem:[%s1 + $0x18] sm:$0xff]
  %v166 = vld [vmem:[%s1 + $0x20] sm:$0xff]
  %v167 = vld [vmem:[%s1 + $0x28] sm:$0xff]
  %v168 = vld [vmem:[%s1 + $0x30] sm:$0xff]
  %v169 = vld [vmem:[%s1 + $0x38] sm:$0xff]
  %v170 = vld [vmem:[%s1 + $0x40] sm:$0xff]
  %v171 = vld [vmem:[%s1 + $0x48] sm:$0xff]
  %v172 = vld [vmem:[%s1 + $0x50] sm:$0xff]
  %v173 = vld [vmem:[%s1 + $0x58] sm:$0xff]
  %v174 = vld [vmem:[%s1 + $0x60] sm:$0xff]
  %v175 = vld [vmem:[%s1 + $0x68] sm:$0xff]
  %v176 = vld [vmem:[%s1 + $0x70] sm:$0xff]
  %v177 = vld [vmem:[%s1 + $0x78] sm:$0xff]
  %v178 = vld [vmem:[%s1 + $0x80] sm:$0xff]
  %v179 = vld [vmem:[%s1 + $0x88] sm:$0xff]
  %v180 = vld [vmem:[%s1 + $0x90] sm:$0xff]
  %v181 = vld [vmem:[%s1 + $0x98] sm:$0xff]
  %v182 = vld [vmem:[%s1 + $0xa0] sm:$0xff]
  %v183 = vld [vmem:[%s1 + $0xa8] sm:$0xff]
  %v184 = vld [vmem:[%s1 + $0xb0] sm:$0xff]
  %v185 = vld [vmem:[%s1 + $0xb8] sm:$0xff]
  %v186 = vld [vmem:[%s1 + $0xc0] sm:$0xff]
  %v187 = vld [vmem:[%s1 + $0xc8] sm:$0xff]
  %v188 = vld [vmem:[%s1 + $0xd0] sm:$0xff]
  %v189 = vld [vmem:[%s1 + $0xd8] sm:$0xff]
  %v190 = vld [vmem:[%s1 + $0xe0] sm:$0xff]
  %v191 = vld [vmem:[%s1 + $0xe8] sm:$0xff]
  %v192 = vld [vmem:[%s1 + $0xf0] sm:$0xff]
  %v193 = vld [vmem:[%s1 + $0xf8] sm:$0xff]
  %v194 = vld [vmem:[%s1 + $0x100] sm:$0xff]
  %v195 = vld [vmem:[%s1 + $0x108] sm:$0xff]
  %v196 = vld [vmem:[%s1 + $0x110] sm:$0xff]
  %v197 = vld [vmem:[%s1 + $0x118] sm:$0xff]
  %v198 = vld [vmem:[%s1 + $0x120] sm:$0xff]
  %v199 = vld [vmem:[%s1 + $0x128] sm:$0xff]
  %v200 = vld [vmem:[%s1 + $0x130] sm:$0xff]
  %v201 = vld [vmem:[%s1 + $0x138] sm:$0xff]
  %v202 = vld [vmem:[%s1 + $0x140] sm:$0xff]
  %v203 = vld [vmem:[%s1 + $0x148] sm:$0xff]
  %v204 = vld [vmem:[%s1 + $0x150] sm:$0xff]
  %v205 = vld [vmem:[%s1 + $0x158] sm:$0xff]
  %v206 = vld [vmem:[%s1 + $0x160] sm:$0xff]
  %v207 = vld [vmem:[%s1 + $0x168] sm:$0xff]
  %v208 = vld [vmem:[%s1 + $0x170] sm:$0xff]
  %v209 = vld [vmem:[%s1 + $0x178] sm:$0xff]
  %v210 = vld [vmem:[%s1 + $0x180] sm:$0xff]
  %v211 = vld [vmem:[%s1 + $0x188] sm:$0xff]
  %v212 = vld [vmem:[%s1 + $0x190] sm:$0xff]
  %v213 = vld [vmem:[%s1 + $0x198] sm:$0xff]
  %v214 = vld [vmem:[%s1 + $0x1a0] sm:$0xff]
  %v215 = vld [vmem:[%s1 + $0x1a8] sm:$0xff]
  %v216 = vld [vmem:[%s1 + $0x1b0] sm:$0xff]
  %v217 = vld [vmem:[%s1 + $0x1b8] sm:$0xff]
  %v218 = vld [vmem:[%s1 + $0x1c0] sm:$0xff]
  %v219 = vld [vmem:[%s1 + $0x1c8] sm:$0xff]
  %v220 = vld [vmem:[%s1 + $0x1d0] sm:$0xff]
  %v221 = vld [vmem:[%s1 + $0x1d8] sm:$0xff]
  %v222 = vld [vmem:[%s1 + $0x1e0] sm:$0xff]
  %v223 = vld [vmem:[%s1 + $0x1e8] sm:$0xff]
  %v224 = vld [vmem:[%s1 + $0x1f0] sm:$0xff]
  %v225 = vld [vmem:[%s1 + $0x1f8] sm:$0xff]
  %v242 = vunpack.c.l.b16 %v146
  %v243 = vunpack.c.h.b16 %v146
  %v244 = vunpack.c.l.b16 %v147
  %v245 = vunpack.c.h.b16 %v147
  %v246 = vunpack.c.l.b16 %v148
  %v247 = vunpack.c.h.b16 %v148
  %v248 = vunpack.c.l.b16 %v149
  %v249 = vunpack.c.h.b16 %v149
  %v250 = vunpack.c.l.b16 %v150
  %v251 = vunpack.c.h.b16 %v150
  %v252 = vunpack.c.l.b16 %v151
  %v253 = vunpack.c.h.b16 %v151
  %v254 = vunpack.c.l.b16 %v152
  %v255 = vunpack.c.h.b16 %v152
  %v256 = vunpack.c.l.b16 %v153
  %v257 = vunpack.c.h.b16 %v153
  %v258 = vunpack.c.l.b16 %v154
  %v259 = vunpack.c.h.b16 %v154
  %v260 = vunpack.c.l.b16 %v155
  %v261 = vunpack.c.h.b16 %v155
  %v262 = vunpack.c.l.b16 %v156
  %v263 = vunpack.c.h.b16 %v156
  %v264 = vunpack.c.l.b16 %v157
  %v265 = vunpack.c.h.b16 %v157
  %v266 = vunpack.c.l.b16 %v158
  %v267 = vunpack.c.h.b16 %v158
  %v268 = vunpack.c.l.b16 %v159
  %v269 = vunpack.c.h.b16 %v159
  %v270 = vunpack.c.l.b16 %v160
  %v271 = vunpack.c.h.b16 %v160
  %v272 = vunpack.c.l.b16 %v161
  %v273 = vunpack.c.h.b16 %v161
  %v274 = vpack.c.b16 %v244, %v242
  %v275 = vpack.c.b16 %v245, %v243
  %v276 = vpack.c.b16 %v248, %v246
  %v277 = vpack.c.b16 %v249, %v247
  %v278 = vpack.c.b16 %v252, %v250
  %v279 = vpack.c.b16 %v253, %v251
  %v280 = vpack.c.b16 %v256, %v254
  %v281 = vpack.c.b16 %v257, %v255
  %v282 = vpack.c.b16 %v260, %v258
  %v283 = vpack.c.b16 %v261, %v259
  %v284 = vpack.c.b16 %v264, %v262
  %v285 = vpack.c.b16 %v265, %v263
  %v286 = vpack.c.b16 %v268, %v266
  %v287 = vpack.c.b16 %v269, %v267
  %v288 = vpack.c.b16 %v272, %v270
  %v289 = vpack.c.b16 %v273, %v271
  %v370 = vunpack.c.l.b16 %v162
  %v371 = vunpack.c.h.b16 %v162
  %v372 = vunpack.c.l.b16 %v163
  %v373 = vunpack.c.h.b16 %v163
  %v374 = vunpack.c.l.b16 %v164
  %v375 = vunpack.c.h.b16 %v164
  %v376 = vunpack.c.l.b16 %v165
  %v377 = vunpack.c.h.b16 %v165
  %v378 = vunpack.c.l.b16 %v166
  %v379 = vunpack.c.h.b16 %v166
  %v380 = vunpack.c.l.b16 %v167
  %v381 = vunpack.c.h.b16 %v167
  %v382 = vunpack.c.l.b16 %v168
  %v383 = vunpack.c.h.b16 %v168
  %v384 = vunpack.c.l.b16 %v169
  %v385 = vunpack.c.h.b16 %v169
  %v386 = vunpack.c.l.b16 %v170
  %v387 = vunpack.c.h.b16 %v170
  %v388 = vunpack.c.l.b16 %v171
  %v389 = vunpack.c.h.b16 %v171
  %v390 = vunpack.c.l.b16 %v172
  %v391 = vunpack.c.h.b16 %v172
  %v392 = vunpack.c.l.b16 %v173
  %v393 = vunpack.c.h.b16 %v173
  %v394 = vunpack.c.l.b16 %v174
  %v395 = vunpack.c.h.b16 %v174
  %v396 = vunpack.c.l.b16 %v175
  %v397 = vunpack.c.h.b16 %v175
  %v398 = vunpack.c.l.b16 %v176
  %v399 = vunpack.c.h.b16 %v176
  %v400 = vunpack.c.l.b16 %v177
  %v401 = vunpack.c.h.b16 %v177
  %v402 = vunpack.c.l.b16 %v178
  %v403 = vunpack.c.h.b16 %v178
  %v404 = vunpack.c.l.b16 %v179
  %v405 = vunpack.c.h.b16 %v179
  %v406 = vunpack.c.l.b16 %v180
  %v407 = vunpack.c.h.b16 %v180
  %v408 = vunpack.c.l.b16 %v181
  %v409 = vunpack.c.h.b16 %v181
  %v410 = vunpack.c.l.b16 %v182
  %v411 = vunpack.c.h.b16 %v182
  %v412 = vunpack.c.l.b16 %v183
  %v413 = vunpack.c.h.b16 %v183
  %v414 = vunpack.c.l.b16 %v184
  %v415 = vunpack.c.h.b16 %v184
  %v416 = vunpack.c.l.b16 %v185
  %v417 = vunpack.c.h.b16 %v185
  %v418 = vunpack.c.l.b16 %v186
  %v419 = vunpack.c.h.b16 %v186
  %v420 = vunpack.c.l.b16 %v187
  %v421 = vunpack.c.h.b16 %v187
  %v422 = vunpack.c.l.b16 %v188
  %v423 = vunpack.c.h.b16 %v188
  %v424 = vunpack.c.l.b16 %v189
  %v425 = vunpack.c.h.b16 %v189
  %v426 = vunpack.c.l.b16 %v190
  %v427 = vunpack.c.h.b16 %v190
  %v428 = vunpack.c.l.b16 %v191
  %v429 = vunpack.c.h.b16 %v191
  %v430 = vunpack.c.l.b16 %v192
  %v431 = vunpack.c.h.b16 %v192
  %v432 = vunpack.c.l.b16 %v193
  %v433 = vunpack.c.h.b16 %v193
  %v434 = vunpack.c.l.b16 %v194
  %v435 = vunpack.c.h.b16 %v194
  %v436 = vunpack.c.l.b16 %v195
  %v437 = vunpack.c.h.b16 %v195
  %v438 = vunpack.c.l.b16 %v196
  %v439 = vunpack.c.h.b16 %v196
  %v440 = vunpack.c.l.b16 %v197
  %v441 = vunpack.c.h.b16 %v197
  %v442 = vunpack.c.l.b16 %v198
  %v443 = vunpack.c.h.b16 %v198
  %v444 = vunpack.c.l.b16 %v199
  %v445 = vunpack.c.h.b16 %v199
  %v446 = vunpack.c.l.b16 %v200
  %v447 = vunpack.c.h.b16 %v200
  %v448 = vunpack.c.l.b16 %v201
  %v449 = vunpack.c.h.b16 %v201
  %v450 = vunpack.c.l.b16 %v202
  %v451 = vunpack.c.h.b16 %v202
  %v452 = vunpack.c.l.b16 %v203
  %v453 = vunpack.c.h.b16 %v203
  %v454 = vunpack.c.l.b16 %v204
  %v455 = vunpack.c.h.b16 %v204
  %v456 = vunpack.c.l.b16 %v205
  %v457 = vunpack.c.h.b16 %v205
  %v458 = vunpack.c.l.b16 %v206
  %v459 = vunpack.c.h.b16 %v206
  %v460 = vunpack.c.l.b16 %v207
  %v461 = vunpack.c.h.b16 %v207
  %v462 = vunpack.c.l.b16 %v208
  %v463 = vunpack.c.h.b16 %v208
  %v464 = vunpack.c.l.b16 %v209
  %v465 = vunpack.c.h.b16 %v209
  %v466 = vunpack.c.l.b16 %v210
  %v467 = vunpack.c.h.b16 %v210
  %v468 = vunpack.c.l.b16 %v211
  %v469 = vunpack.c.h.b16 %v211
  %v470 = vunpack.c.l.b16 %v212
  %v471 = vunpack.c.h.b16 %v212
  %v472 = vunpack.c.l.b16 %v213
  %v473 = vunpack.c.h.b16 %v213
  %v474 = vunpack.c.l.b16 %v214
  %v475 = vunpack.c.h.b16 %v214
  %v476 = vunpack.c.l.b16 %v215
  %v477 = vunpack.c.h.b16 %v215
  %v478 = vunpack.c.l.b16 %v216
  %v479 = vunpack.c.h.b16 %v216
  %v480 = vunpack.c.l.b16 %v217
  %v481 = vunpack.c.h.b16 %v217
  %v482 = vunpack.c.l.b16 %v218
  %v483 = vunpack.c.h.b16 %v218
  %v484 = vunpack.c.l.b16 %v219
  %v485 = vunpack.c.h.b16 %v219
  %v486 = vunpack.c.l.b16 %v220
  %v487 = vunpack.c.h.b16 %v220
  %v488 = vunpack.c.l.b16 %v221
  %v489 = vunpack.c.h.b16 %v221
  %v490 = vunpack.c.l.b16 %v222
  %v491 = vunpack.c.h.b16 %v222
  %v492 = vunpack.c.l.b16 %v223
  %v493 = vunpack.c.h.b16 %v223
  %v494 = vunpack.c.l.b16 %v224
  %v495 = vunpack.c.h.b16 %v224
  %v496 = vunpack.c.l.b16 %v225
  %v497 = vunpack.c.h.b16 %v225
  %v498 = vpack.c.b16 %v374, %v370
  %v499 = vpack.c.b16 %v375, %v371
  %v500 = vpack.c.b16 %v376, %v372
  %v501 = vpack.c.b16 %v377, %v373
  %v502 = vpack.c.b16 %v382, %v378
  %v503 = vpack.c.b16 %v383, %v379
  %v504 = vpack.c.b16 %v384, %v380
  %v505 = vpack.c.b16 %v385, %v381
  %v506 = vpack.c.b16 %v390, %v386
  %v507 = vpack.c.b16 %v391, %v387
  %v508 = vpack.c.b16 %v392, %v388
  %v509 = vpack.c.b16 %v393, %v389
  %v510 = vpack.c.b16 %v398, %v394
  %v511 = vpack.c.b16 %v399, %v395
  %v512 = vpack.c.b16 %v400, %v396
  %v513 = vpack.c.b16 %v401, %v397
  %v514 = vpack.c.b16 %v406, %v402
  %v515 = vpack.c.b16 %v407, %v403
  %v516 = vpack.c.b16 %v408, %v404
  %v517 = vpack.c.b16 %v409, %v405
  %v518 = vpack.c.b16 %v414, %v410
  %v519 = vpack.c.b16 %v415, %v411
  %v520 = vpack.c.b16 %v416, %v412
  %v521 = vpack.c.b16 %v417, %v413
  %v522 = vpack.c.b16 %v422, %v418
  %v523 = vpack.c.b16 %v423, %v419
  %v524 = vpack.c.b16 %v424, %v420
  %v525 = vpack.c.b16 %v425, %v421
  %v526 = vpack.c.b16 %v430, %v426
  %v527 = vpack.c.b16 %v431, %v427
  %v528 = vpack.c.b16 %v432, %v428
  %v529 = vpack.c.b16 %v433, %v429
  %v530 = vpack.c.b16 %v438, %v434
  %v531 = vpack.c.b16 %v439, %v435
  %v532 = vpack.c.b16 %v440, %v436
  %v533 = vpack.c.b16 %v441, %v437
  %v534 = vpack.c.b16 %v446, %v442
  %v535 = vpack.c.b16 %v447, %v443
  %v536 = vpack.c.b16 %v448, %v444
  %v537 = vpack.c.b16 %v449, %v445
  %v538 = vpack.c.b16 %v454, %v450
  %v539 = vpack.c.b16 %v455, %v451
  %v540 = vpack.c.b16 %v456, %v452
  %v541 = vpack.c.b16 %v457, %v453
  %v542 = vpack.c.b16 %v462, %v458
  %v543 = vpack.c.b16 %v463, %v459
  %v544 = vpack.c.b16 %v464, %v460
  %v545 = vpack.c.b16 %v465, %v461
  %v546 = vpack.c.b16 %v470, %v466
  %v547 = vpack.c.b16 %v471, %v467
  %v548 = vpack.c.b16 %v472, %v468
  %v549 = vpack.c.b16 %v473, %v469
  %v550 = vpack.c.b16 %v478, %v474
  %v551 = vpack.c.b16 %v479, %v475
  %v552 = vpack.c.b16 %v480, %v476
  %v553 = vpack.c.b16 %v481, %v477
  %v554 = vpack.c.b16 %v486, %v482
  %v555 = vpack.c.b16 %v487, %v483
  %v556 = vpack.c.b16 %v488, %v484
  %v557 = vpack.c.b16 %v489, %v485
  %v558 = vpack.c.b16 %v494, %v490
  %v559 = vpack.c.b16 %v495, %v491
  %v560 = vpack.c.b16 %v496, %v492
  %v561 = vpack.c.b16 %v497, %v493
  %626 = vmatprep.subr.bf16.mxu0 %v499
  %627 = vmatpush1.bf16.msra.mxu0 %v498
  %628 = vmatprep.subr.bf16.mxu0 %v503
  %629 = vmatpush1.bf16.msra.mxu0 %v502
  %630 = vmatprep.subr.bf16.mxu0 %v507
  %631 = vmatpush1.bf16.msra.mxu0 %v506
  %632 = vmatprep.subr.bf16.mxu0 %v511
  %633 = vmatpush1.bf16.msra.mxu0 %v510
  %634 = vmatprep.subr.bf16.mxu0 %v515
  %635 = vmatpush1.bf16.msra.mxu0 %v514
  %636 = vmatprep.subr.bf16.mxu0 %v519
  %637 = vmatpush1.bf16.msra.mxu0 %v518
  %638 = vmatprep.subr.bf16.mxu0 %v523
  %639 = vmatpush1.bf16.msra.mxu0 %v522
  %640 = vmatprep.subr.bf16.mxu0 %v527
  %641 = vmatpush1.bf16.msra.mxu0 %v526
  %642 = vmatprep.subr.bf16.mxu0 %v531
  %643 = vmatpush1.bf16.msra.mxu0 %v530
  %644 = vmatprep.subr.bf16.mxu0 %v535
  %645 = vmatpush1.bf16.msra.mxu0 %v534
  %646 = vmatprep.subr.bf16.mxu0 %v539
  %647 = vmatpush1.bf16.msra.mxu0 %v538
  %648 = vmatprep.subr.bf16.mxu0 %v543
  %649 = vmatpush1.bf16.msra.mxu0 %v542
  %650 = vmatprep.subr.bf16.mxu0 %v547
  %651 = vmatpush1.bf16.msra.mxu0 %v546
  %652 = vmatprep.subr.bf16.mxu0 %v551
  %653 = vmatpush1.bf16.msra.mxu0 %v550
  %654 = vmatprep.subr.bf16.mxu0 %v555
  %655 = vmatpush1.bf16.msra.mxu0 %v554
  %656 = vmatprep.subr.bf16.mxu0 %v559
  %657 = vmatpush1.bf16.msra.mxu0 %v558
  %658 = vmatprep.mubr.bf16.mxu0 %v275
  %659 = vmatmul.mubr.bf16.gmra.mrb[0].mxu0 %v274
  %v660 = vpop.f32.mrb[0].mxu0
  %v661 = vadd.f32 0.0, %v660
  %v662 = vpop.f32.mrb[0].mxu0
  %v663 = vadd.f32 0.0, %v662
  %v664 = vpop.f32.mrb[0].mxu0
  %v665 = vadd.f32 0.0, %v664
  %v666 = vpop.f32.mrb[0].mxu0
  %v667 = vadd.f32 0.0, %v666
  %668 = vmatprep.mubr.bf16.mxu0 %v277
  %669 = vmatmul.mubr.bf16.gmra.mrb[0].mxu0 %v276
  %v670 = vpop.f32.mrb[0].mxu0
  %v671 = vadd.f32 0.0, %v670
  %v672 = vpop.f32.mrb[0].mxu0
  %v673 = vadd.f32 0.0, %v672
  %v674 = vpop.f32.mrb[0].mxu0
  %v675 = vadd.f32 0.0, %v674
  %v676 = vpop.f32.mrb[0].mxu0
  %v677 = vadd.f32 0.0, %v676
  %678 = vmatprep.mubr.bf16.mxu0 %v279
  %679 = vmatmul.mubr.bf16.gmra.mrb[0].mxu0 %v278
  %v680 = vpop.f32.mrb[0].mxu0
  %v681 = vadd.f32 0.0, %v680
  %v682 = vpop.f32.mrb[0].mxu0
  %v683 = vadd.f32 0.0, %v682
  %v684 = vpop.f32.mrb[0].mxu0
  %v685 = vadd.f32 0.0, %v684
  %v686 = vpop.f32.mrb[0].mxu0
  %v687 = vadd.f32 0.0, %v686
  %688 = vmatprep.mubr.bf16.mxu0 %v281
  %689 = vmatmul.mubr.bf16.gmra.mrb[0].mxu0 %v280
  %v690 = vpop.f32.mrb[0].mxu0
  %v691 = vadd.f32 0.0, %v690
  %v692 = vpop.f32.mrb[0].mxu0
  %v693 = vadd.f32 0.0, %v692
  %v694 = vpop.f32.mrb[0].mxu0
  %v695 = vadd.f32 0.0, %v694
  %v696 = vpop.f32.mrb[0].mxu0
  %v697 = vadd.f32 0.0, %v696
  %698 = vmatprep.mubr.bf16.mxu0 %v283
  %699 = vmatmul.mubr.bf16.gmra.mrb[0].mxu0 %v282
  %v700 = vpop.f32.mrb[0].mxu0
  %v701 = vadd.f32 0.0, %v700
  %v702 = vpop.f32.mrb[0].mxu0
  %v703 = vadd.f32 0.0, %v702
  %v704 = vpop.f32.mrb[0].mxu0
  %v705 = vadd.f32 0.0, %v704
  %v706 = vpop.f32.mrb[0].mxu0
  %v707 = vadd.f32 0.0, %v706
  %708 = vmatprep.mubr.bf16.mxu0 %v285
  %709 = vmatmul.mubr.bf16.gmra.mrb[0].mxu0 %v284
  %v710 = vpop.f32.mrb[0].mxu0
  %v711 = vadd.f32 0.0, %v710
  %v712 = vpop.f32.mrb[0].mxu0
  %v713 = vadd.f32 0.0, %v712
  %v714 = vpop.f32.mrb[0].mxu0
  %v715 = vadd.f32 0.0, %v714
  %v716 = vpop.f32.mrb[0].mxu0
  %v717 = vadd.f32 0.0, %v716
  %718 = vmatprep.mubr.bf16.mxu0 %v287
  %719 = vmatmul.mubr.bf16.gmra.mrb[0].mxu0 %v286
  %v720 = vpop.f32.mrb[0].mxu0
  %v721 = vadd.f32 0.0, %v720
  %v722 = vpop.f32.mrb[0].mxu0
  %v723 = vadd.f32 0.0, %v722
  %v724 = vpop.f32.mrb[0].mxu0
  %v725 = vadd.f32 0.0, %v724
  %v726 = vpop.f32.mrb[0].mxu0
  %v727 = vadd.f32 0.0, %v726
  %728 = vmatprep.mubr.bf16.mxu0 %v289
  %729 = vmatmul.mubr.bf16.gmra.mrb[0].mxu0 %v288
  %v730 = vpop.f32.mrb[0].mxu0
  %v731 = vadd.f32 0.0, %v730
  %v732 = vpop.f32.mrb[0].mxu0
  %v733 = vadd.f32 0.0, %v732
  %v734 = vpop.f32.mrb[0].mxu0
  %v735 = vadd.f32 0.0, %v734
  %v736 = vpop.f32.mrb[0].mxu0
  %v737 = vadd.f32 0.0, %v736
  %738 = vdwg.mxu0
  %739 = vmatprep.subr.bf16.mxu0 %v501
  %740 = vmatpush1.bf16.msra.mxu0 %v500
  %741 = vmatprep.subr.bf16.mxu0 %v505
  %742 = vmatpush1.bf16.msra.mxu0 %v504
  %743 = vmatprep.subr.bf16.mxu0 %v509
  %744 = vmatpush1.bf16.msra.mxu0 %v508
  %745 = vmatprep.subr.bf16.mxu0 %v513
  %746 = vmatpush1.bf16.msra.mxu0 %v512
  %747 = vmatprep.subr.bf16.mxu0 %v517
  %748 = vmatpush1.bf16.msra.mxu0 %v516
  %749 = vmatprep.subr.bf16.mxu0 %v521
  %750 = vmatpush1.bf16.msra.mxu0 %v520
  %751 = vmatprep.subr.bf16.mxu0 %v525
  %752 = vmatpush1.bf16.msra.mxu0 %v524
  %753 = vmatprep.subr.bf16.mxu0 %v529
  %754 = vmatpush1.bf16.msra.mxu0 %v528
  %755 = vmatprep.subr.bf16.mxu0 %v533
  %756 = vmatpush1.bf16.msra.mxu0 %v532
  %757 = vmatprep.subr.bf16.mxu0 %v537
  %758 = vmatpush1.bf16.msra.mxu0 %v536
  %759 = vmatprep.subr.bf16.mxu0 %v541
  %760 = vmatpush1.bf16.msra.mxu0 %v540
  %761 = vmatprep.subr.bf16.mxu0 %v545
  %762 = vmatpush1.bf16.msra.mxu0 %v544
  %763 = vmatprep.subr.bf16.mxu0 %v549
  %764 = vmatpush1.bf16.msra.mxu0 %v548
  %765 = vmatprep.subr.bf16.mxu0 %v553
  %766 = vmatpush1.bf16.msra.mxu0 %v552
  %767 = vmatprep.subr.bf16.mxu0 %v557
  %768 = vmatpush1.bf16.msra.mxu0 %v556
  %769 = vmatprep.subr.bf16.mxu0 %v561
  %770 = vmatpush1.bf16.msra.mxu0 %v560
  %771 = vmatprep.mubr.bf16.mxu0 %v275
  %772 = vmatmul.mubr.bf16.gmra.mrb[0].mxu0 %v274
  %v773 = vpop.f32.mrb[0].mxu0
  %v774 = vadd.f32 0.0, %v773
  %v775 = vpop.f32.mrb[0].mxu0
  %v776 = vadd.f32 0.0, %v775
  %v777 = vpop.f32.mrb[0].mxu0
  %v778 = vadd.f32 0.0, %v777
  %v779 = vpop.f32.mrb[0].mxu0
  %v780 = vadd.f32 0.0, %v779
  %781 = vmatprep.mubr.bf16.mxu0 %v277
  %782 = vmatmul.mubr.bf16.gmra.mrb[0].mxu0 %v276
  %v783 = vpop.f32.mrb[0].mxu0
  %v784 = vadd.f32 0.0, %v783
  %v785 = vpop.f32.mrb[0].mxu0
  %v786 = vadd.f32 0.0, %v785
  %v787 = vpop.f32.mrb[0].mxu0
  %v788 = vadd.f32 0.0, %v787
  %v789 = vpop.f32.mrb[0].mxu0
  %v790 = vadd.f32 0.0, %v789
  %791 = vmatprep.mubr.bf16.mxu0 %v279
  %792 = vmatmul.mubr.bf16.gmra.mrb[0].mxu0 %v278
  %v793 = vpop.f32.mrb[0].mxu0
  %v794 = vadd.f32 0.0, %v793
  %v795 = vpop.f32.mrb[0].mxu0
  %v796 = vadd.f32 0.0, %v795
  %v797 = vpop.f32.mrb[0].mxu0
  %v798 = vadd.f32 0.0, %v797
  %v799 = vpop.f32.mrb[0].mxu0
  %v800 = vadd.f32 0.0, %v799
  %801 = vmatprep.mubr.bf16.mxu0 %v281
  %802 = vmatmul.mubr.bf16.gmra.mrb[0].mxu0 %v280
  %v803 = vpop.f32.mrb[0].mxu0
  %v804 = vadd.f32 0.0, %v803
  %v805 = vpop.f32.mrb[0].mxu0
  %v806 = vadd.f32 0.0, %v805
  %v807 = vpop.f32.mrb[0].mxu0
  %v808 = vadd.f32 0.0, %v807
  %v809 = vpop.f32.mrb[0].mxu0
  %v810 = vadd.f32 0.0, %v809
  %811 = vmatprep.mubr.bf16.mxu0 %v283
  %812 = vmatmul.mubr.bf16.gmra.mrb[0].mxu0 %v282
  %v813 = vpop.f32.mrb[0].mxu0
  %v814 = vadd.f32 0.0, %v813
  %v815 = vpop.f32.mrb[0].mxu0
  %v816 = vadd.f32 0.0, %v815
  %v817 = vpop.f32.mrb[0].mxu0
  %v818 = vadd.f32 0.0, %v817
  %v819 = vpop.f32.mrb[0].mxu0
  %v820 = vadd.f32 0.0, %v819
  %821 = vmatprep.mubr.bf16.mxu0 %v285
  %822 = vmatmul.mubr.bf16.gmra.mrb[0].mxu0 %v284
  %v823 = vpop.f32.mrb[0].mxu0
  %v824 = vadd.f32 0.0, %v823
  %v825 = vpop.f32.mrb[0].mxu0
  %v826 = vadd.f32 0.0, %v825
  %v827 = vpop.f32.mrb[0].mxu0
  %v828 = vadd.f32 0.0, %v827
  %v829 = vpop.f32.mrb[0].mxu0
  %v830 = vadd.f32 0.0, %v829
  %831 = vmatprep.mubr.bf16.mxu0 %v287
  %832 = vmatmul.mubr.bf16.gmra.mrb[0].mxu0 %v286
  %v833 = vpop.f32.mrb[0].mxu0
  %v834 = vadd.f32 0.0, %v833
  %v835 = vpop.f32.mrb[0].mxu0
  %v836 = vadd.f32 0.0, %v835
  %v837 = vpop.f32.mrb[0].mxu0
  %v838 = vadd.f32 0.0, %v837
  %v839 = vpop.f32.mrb[0].mxu0
  %v840 = vadd.f32 0.0, %v839
  %841 = vmatprep.mubr.bf16.mxu0 %v289
  %842 = vmatmul.mubr.bf16.gmra.mrb[0].mxu0 %v288
  %v843 = vpop.f32.mrb[0].mxu0
  %v844 = vadd.f32 0.0, %v843
  %v845 = vpop.f32.mrb[0].mxu0
  %v846 = vadd.f32 0.0, %v845
  %v847 = vpop.f32.mrb[0].mxu0
  %v848 = vadd.f32 0.0, %v847
  %v849 = vpop.f32.mrb[0].mxu0
  %v850 = vadd.f32 0.0, %v849
  %851 = vdwg.mxu0
  %v852 = vadd.f32 %v82, %v661
  %v853 = vadd.f32 %v83, %v663
  %v854 = vadd.f32 %v84, %v774
  %v855 = vadd.f32 %v85, %v776
  %v856 = vadd.f32 %v86, %v665
  %v857 = vadd.f32 %v87, %v667
  %v858 = vadd.f32 %v88, %v778
  %v859 = vadd.f32 %v89, %v780
  %v860 = vadd.f32 %v90, %v671
  %v861 = vadd.f32 %v91, %v673
  %v862 = vadd.f32 %v92, %v784
  %v863 = vadd.f32 %v93, %v786
  %v864 = vadd.f32 %v94, %v675
  %v865 = vadd.f32 %v95, %v677
  %v866 = vadd.f32 %v96, %v788
  %v867 = vadd.f32 %v97, %v790
  %v868 = vadd.f32 %v98, %v681
  %v869 = vadd.f32 %v99, %v683
  %v870 = vadd.f32 %v100, %v794
  %v871 = vadd.f32 %v101, %v796
  %v872 = vadd.f32 %v102, %v685
  %v873 = vadd.f32 %v103, %v687
  %v874 = vadd.f32 %v104, %v798
  %v875 = vadd.f32 %v105, %v800
  %v876 = vadd.f32 %v106, %v691
  %v877 = vadd.f32 %v107, %v693
  %v878 = vadd.f32 %v108, %v804
  %v879 = vadd.f32 %v109, %v806
  %v880 = vadd.f32 %v110, %v695
  %v881 = vadd.f32 %v111, %v697
  %v882 = vadd.f32 %v112, %v808
  %v883 = vadd.f32 %v113, %v810
  %v884 = vadd.f32 %v114, %v701
  %v885 = vadd.f32 %v115, %v703
  %v886 = vadd.f32 %v116, %v814
  %v887 = vadd.f32 %v117, %v816
  %v888 = vadd.f32 %v118, %v705
  %v889 = vadd.f32 %v119, %v707
  %v890 = vadd.f32 %v120, %v818
  %v891 = vadd.f32 %v121, %v820
  %v892 = vadd.f32 %v122, %v711
  %v893 = vadd.f32 %v123, %v713
  %v894 = vadd.f32 %v124, %v824
  %v895 = vadd.f32 %v125, %v826
  %v896 = vadd.f32 %v126, %v715
  %v897 = vadd.f32 %v127, %v717
  %v898 = vadd.f32 %v128, %v828
  %v899 = vadd.f32 %v129, %v830
  %v900 = vadd.f32 %v130, %v721
  %v901 = vadd.f32 %v131, %v723
  %v902 = vadd.f32 %v132, %v834
  %v903 = vadd.f32 %v133, %v836
  %v904 = vadd.f32 %v134, %v725
  %v905 = vadd.f32 %v135, %v727
  %v906 = vadd.f32 %v136, %v838
  %v907 = vadd.f32 %v137, %v840
  %v908 = vadd.f32 %v138, %v731
  %v909 = vadd.f32 %v139, %v733
  %v910 = vadd.f32 %v140, %v844
  %v911 = vadd.f32 %v141, %v846
  %v912 = vadd.f32 %v142, %v735
  %v913 = vadd.f32 %v143, %v737
  %v914 = vadd.f32 %v144, %v848
  %v915 = vadd.f32 %v145, %v850
  %916 = vst [vmem:[#allocation2] sm:$0xff] %v852
  %917 = vst [vmem:[#allocation2 + $0x8] sm:$0xff] %v853
  %918 = vst [vmem:[#allocation2 + $0x10] sm:$0xff] %v854
  %919 = vst [vmem:[#allocation2 + $0x18] sm:$0xff] %v855
  %920 = vst [vmem:[#allocation2 + $0x20] sm:$0xff] %v856
  %921 = vst [vmem:[#allocation2 + $0x28] sm:$0xff] %v857
  %922 = vst [vmem:[#allocation2 + $0x30] sm:$0xff] %v858
  %923 = vst [vmem:[#allocation2 + $0x38] sm:$0xff] %v859
  %924 = vst [vmem:[#allocation2 + $0x40] sm:$0xff] %v860
  %925 = vst [vmem:[#allocation2 + $0x48] sm:$0xff] %v861
  %926 = vst [vmem:[#allocation2 + $0x50] sm:$0xff] %v862
  %927 = vst [vmem:[#allocation2 + $0x58] sm:$0xff] %v863
  %928 = vst [vmem:[#allocation2 + $0x60] sm:$0xff] %v864
  %929 = vst [vmem:[#allocation2 + $0x68] sm:$0xff] %v865
  %930 = vst [vmem:[#allocation2 + $0x70] sm:$0xff] %v866
  %931 = vst [vmem:[#allocation2 + $0x78] sm:$0xff] %v867
  %932 = vst [vmem:[#allocation2 + $0x80] sm:$0xff] %v868
  %933 = vst [vmem:[#allocation2 + $0x88] sm:$0xff] %v869
  %934 = vst [vmem:[#allocation2 + $0x90] sm:$0xff] %v870
  %935 = vst [vmem:[#allocation2 + $0x98] sm:$0xff] %v871
  %936 = vst [vmem:[#allocation2 + $0xa0] sm:$0xff] %v872
  %937 = vst [vmem:[#allocation2 + $0xa8] sm:$0xff] %v873
  %938 = vst [vmem:[#allocation2 + $0xb0] sm:$0xff] %v874
  %939 = vst [vmem:[#allocation2 + $0xb8] sm:$0xff] %v875
  %940 = vst [vmem:[#allocation2 + $0xc0] sm:$0xff] %v876
  %941 = vst [vmem:[#allocation2 + $0xc8] sm:$0xff] %v877
  %942 = vst [vmem:[#allocation2 + $0xd0] sm:$0xff] %v878
  %943 = vst [vmem:[#allocation2 + $0xd8] sm:$0xff] %v879
  %944 = vst [vmem:[#allocation2 + $0xe0] sm:$0xff] %v880
  %945 = vst [vmem:[#allocation2 + $0xe8] sm:$0xff] %v881
  %946 = vst [vmem:[#allocation2 + $0xf0] sm:$0xff] %v882
  %947 = vst [vmem:[#allocation2 + $0xf8] sm:$0xff] %v883
  %948 = vst [vmem:[#allocation2 + $0x100] sm:$0xff] %v884
  %949 = vst [vmem:[#allocation2 + $0x108] sm:$0xff] %v885
  %950 = vst [vmem:[#allocation2 + $0x110] sm:$0xff] %v886
  %951 = vst [vmem:[#allocation2 + $0x118] sm:$0xff] %v887
  %952 = vst [vmem:[#allocation2 + $0x120] sm:$0xff] %v888
  %953 = vst [vmem:[#allocation2 + $0x128] sm:$0xff] %v889
  %954 = vst [vmem:[#allocation2 + $0x130] sm:$0xff] %v890
  %955 = vst [vmem:[#allocation2 + $0x138] sm:$0xff] %v891
  %956 = vst [vmem:[#allocation2 + $0x140] sm:$0xff] %v892
  %957 = vst [vmem:[#allocation2 + $0x148] sm:$0xff] %v893
  %958 = vst [vmem:[#allocation2 + $0x150] sm:$0xff] %v894
  %959 = vst [vmem:[#allocation2 + $0x158] sm:$0xff] %v895
  %960 = vst [vmem:[#allocation2 + $0x160] sm:$0xff] %v896
  %961 = vst [vmem:[#allocation2 + $0x168] sm:$0xff] %v897
  %962 = vst [vmem:[#allocation2 + $0x170] sm:$0xff] %v898
  %963 = vst [vmem:[#allocation2 + $0x178] sm:$0xff] %v899
  %964 = vst [vmem:[#allocation2 + $0x180] sm:$0xff] %v900
  %965 = vst [vmem:[#allocation2 + $0x188] sm:$0xff] %v901
  %966 = vst [vmem:[#allocation2 + $0x190] sm:$0xff] %v902
  %967 = vst [vmem:[#allocation2 + $0x198] sm:$0xff] %v903
  %968 = vst [vmem:[#allocation2 + $0x1a0] sm:$0xff] %v904
  %969 = vst [vmem:[#allocation2 + $0x1a8] sm:$0xff] %v905
  %970 = vst [vmem:[#allocation2 + $0x1b0] sm:$0xff] %v906
  %971 = vst [vmem:[#allocation2 + $0x1b8] sm:$0xff] %v907
  %972 = vst [vmem:[#allocation2 + $0x1c0] sm:$0xff] %v908
  %973 = vst [vmem:[#allocation2 + $0x1c8] sm:$0xff] %v909
  %974 = vst [vmem:[#allocation2 + $0x1d0] sm:$0xff] %v910
  %975 = vst [vmem:[#allocation2 + $0x1d8] sm:$0xff] %v911
  %976 = vst [vmem:[#allocation2 + $0x1e0] sm:$0xff] %v912
  %977 = vst [vmem:[#allocation2 + $0x1e8] sm:$0xff] %v913
  %978 = vst [vmem:[#allocation2 + $0x1f0] sm:$0xff] %v914
  %979 = vst [vmem:[#allocation2 + $0x1f8] sm:$0xff] %v915
  // Predicated region
  $region18: #{fwd.29} parent=0 // pred_check
    %p980 = pneg %p14
  $region19: #{fwd.29} parent=0 // pred_check_branch
    %982 = sbr.rel (%p980) target = $region21
  $region20: #{fwd.29} parent=0 // pred_region
    %v983 = vld [vmem:[#allocation2] sm:$0xff]
    %v984 = vld [vmem:[#allocation2 + $0x8] sm:$0xff]
    %v985 = vld [vmem:[#allocation2 + $0x10] sm:$0xff]
    %v986 = vld [vmem:[#allocation2 + $0x18] sm:$0xff]
    %v987 = vld [vmem:[#allocation2 + $0x20] sm:$0xff]
    %v988 = vld [vmem:[#allocation2 + $0x28] sm:$0xff]
    %v989 = vld [vmem:[#allocation2 + $0x30] sm:$0xff]
    %v990 = vld [vmem:[#allocation2 + $0x38] sm:$0xff]
    %v991 = vld [vmem:[#allocation2 + $0x40] sm:$0xff]
    %v992 = vld [vmem:[#allocation2 + $0x48] sm:$0xff]
    %v993 = vld [vmem:[#allocation2 + $0x50] sm:$0xff]
    %v994 = vld [vmem:[#allocation2 + $0x58] sm:$0xff]
    %v995 = vld [vmem:[#allocation2 + $0x60] sm:$0xff]
    %v996 = vld [vmem:[#allocation2 + $0x68] sm:$0xff]
    %v997 = vld [vmem:[#allocation2 + $0x70] sm:$0xff]
    %v998 = vld [vmem:[#allocation2 + $0x78] sm:$0xff]
    %v999 = vld [vmem:[#allocation2 + $0x80] sm:$0xff]
    %v1000 = vld [vmem:[#allocation2 + $0x88] sm:$0xff]
    %v1001 = vld [vmem:[#allocation2 + $0x90] sm:$0xff]
    %v1002 = vld [vmem:[#allocation2 + $0x98] sm:$0xff]
    %v1003 = vld [vmem:[#allocation2 + $0xa0] sm:$0xff]
    %v1004 = vld [vmem:[#allocation2 + $0xa8] sm:$0xff]
    %v1005 = vld [vmem:[#allocation2 + $0xb0] sm:$0xff]
    %v1006 = vld [vmem:[#allocation2 + $0xb8] sm:$0xff]
    %v1007 = vld [vmem:[#allocation2 + $0xc0] sm:$0xff]
    %v1008 = vld [vmem:[#allocation2 + $0xc8] sm:$0xff]
    %v1009 = vld [vmem:[#allocation2 + $0xd0] sm:$0xff]
    %v1010 = vld [vmem:[#allocation2 + $0xd8] sm:$0xff]
    %v1011 = vld [vmem:[#allocation2 + $0xe0] sm:$0xff]
    %v1012 = vld [vmem:[#allocation2 + $0xe8] sm:$0xff]
    %v1013 = vld [vmem:[#allocation2 + $0xf0] sm:$0xff]
    %v1014 = vld [vmem:[#allocation2 + $0xf8] sm:$0xff]
    %v1015 = vld [vmem:[#allocation2 + $0x100] sm:$0xff]
    %v1016 = vld [vmem:[#allocation2 + $0x108] sm:$0xff]
    %v1017 = vld [vmem:[#allocation2 + $0x110] sm:$0xff]
    %v1018 = vld [vmem:[#allocation2 + $0x118] sm:$0xff]
    %v1019 = vld [vmem:[#allocation2 + $0x120] sm:$0xff]
    %v1020 = vld [vmem:[#allocation2 + $0x128] sm:$0xff]
    %v1021 = vld [vmem:[#allocation2 + $0x130] sm:$0xff]
    %v1022 = vld [vmem:[#allocation2 + $0x138] sm:$0xff]
    %v1023 = vld [vmem:[#allocation2 + $0x140] sm:$0xff]
    %v1024 = vld [vmem:[#allocation2 + $0x148] sm:$0xff]
    %v1025 = vld [vmem:[#allocation2 + $0x150] sm:$0xff]
    %v1026 = vld [vmem:[#allocation2 + $0x158] sm:$0xff]
    %v1027 = vld [vmem:[#allocation2 + $0x160] sm:$0xff]
    %v1028 = vld [vmem:[#allocation2 + $0x168] sm:$0xff]
    %v1029 = vld [vmem:[#allocation2 + $0x170] sm:$0xff]
    %v1030 = vld [vmem:[#allocation2 + $0x178] sm:$0xff]
    %v1031 = vld [vmem:[#allocation2 + $0x180] sm:$0xff]
    %v1032 = vld [vmem:[#allocation2 + $0x188] sm:$0xff]
    %v1033 = vld [vmem:[#allocation2 + $0x190] sm:$0xff]
    %v1034 = vld [vmem:[#allocation2 + $0x198] sm:$0xff]
    %v1035 = vld [vmem:[#allocation2 + $0x1a0] sm:$0xff]
    %v1036 = vld [vmem:[#allocation2 + $0x1a8] sm:$0xff]
    %v1037 = vld [vmem:[#allocation2 + $0x1b0] sm:$0xff]
    %v1038 = vld [vmem:[#allocation2 + $0x1b8] sm:$0xff]
    %v1039 = vld [vmem:[#allocation2 + $0x1c0] sm:$0xff]
    %v1040 = vld [vmem:[#allocation2 + $0x1c8] sm:$0xff]
    %v1041 = vld [vmem:[#allocation2 + $0x1d0] sm:$0xff]
    %v1042 = vld [vmem:[#allocation2 + $0x1d8] sm:$0xff]
    %v1043 = vld [vmem:[#allocation2 + $0x1e0] sm:$0xff]
    %v1044 = vld [vmem:[#allocation2 + $0x1e8] sm:$0xff]
    %v1045 = vld [vmem:[#allocation2 + $0x1f0] sm:$0xff]
    %v1046 = vld [vmem:[#allocation2 + $0x1f8] sm:$0xff]
    %v1047 = vld [vmem:[%s2] sm:$0xf]
    %v1049 = vlaneseq
    %v1050 = vshrl.u32 %v1049, 7
    %v1051 = vsub.s32 0, %v1050
    %v1052 = vrot.slane %v1047, %v1051
    %v1053 = vlaneseq
    %v1054 = vshrl.u32 %v1053, 7
    %v1055 = vsub.s32 1, %v1054
    %v1056 = vrot.slane %v1047, %v1055
    %v1057 = vlaneseq
    %v1058 = vshrl.u32 %v1057, 7
    %v1059 = vsub.s32 2, %v1058
    %v1060 = vrot.slane %v1047, %v1059
    %v1061 = vlaneseq
    %v1062 = vshrl.u32 %v1061, 7
    %v1063 = vsub.s32 3, %v1062
    %v1064 = vrot.slane %v1047, %v1063
    %v1069 = vadd.f32 %v983, %v1052
    %v1070 = vadd.f32 %v984, %v1056
    %v1071 = vadd.f32 %v985, %v1060
    %v1072 = vadd.f32 %v986, %v1064
    %v1073 = vadd.f32 %v987, %v1052
    %v1074 = vadd.f32 %v988, %v1056
    %v1075 = vadd.f32 %v989, %v1060
    %v1076 = vadd.f32 %v990, %v1064
    %v1077 = vadd.f32 %v991, %v1052
    %v1078 = vadd.f32 %v992, %v1056
    %v1079 = vadd.f32 %v993, %v1060
    %v1080 = vadd.f32 %v994, %v1064
    %v1081 = vadd.f32 %v995, %v1052
    %v1082 = vadd.f32 %v996, %v1056
    %v1083 = vadd.f32 %v997, %v1060
    %v1084 = vadd.f32 %v998, %v1064
    %v1085 = vadd.f32 %v999, %v1052
    %v1086 = vadd.f32 %v1000, %v1056
    %v1087 = vadd.f32 %v1001, %v1060
    %v1088 = vadd.f32 %v1002, %v1064
    %v1089 = vadd.f32 %v1003, %v1052
    %v1090 = vadd.f32 %v1004, %v1056
    %v1091 = vadd.f32 %v1005, %v1060
    %v1092 = vadd.f32 %v1006, %v1064
    %v1093 = vadd.f32 %v1007, %v1052
    %v1094 = vadd.f32 %v1008, %v1056
    %v1095 = vadd.f32 %v1009, %v1060
    %v1096 = vadd.f32 %v1010, %v1064
    %v1097 = vadd.f32 %v1011, %v1052
    %v1098 = vadd.f32 %v1012, %v1056
    %v1099 = vadd.f32 %v1013, %v1060
    %v1100 = vadd.f32 %v1014, %v1064
    %v1101 = vadd.f32 %v1015, %v1052
    %v1102 = vadd.f32 %v1016, %v1056
    %v1103 = vadd.f32 %v1017, %v1060
    %v1104 = vadd.f32 %v1018, %v1064
    %v1105 = vadd.f32 %v1019, %v1052
    %v1106 = vadd.f32 %v1020, %v1056
    %v1107 = vadd.f32 %v1021, %v1060
    %v1108 = vadd.f32 %v1022, %v1064
    %v1109 = vadd.f32 %v1023, %v1052
    %v1110 = vadd.f32 %v1024, %v1056
    %v1111 = vadd.f32 %v1025, %v1060
    %v1112 = vadd.f32 %v1026, %v1064
    %v1113 = vadd.f32 %v1027, %v1052
    %v1114 = vadd.f32 %v1028, %v1056
    %v1115 = vadd.f32 %v1029, %v1060
    %v1116 = vadd.f32 %v1030, %v1064
    %v1117 = vadd.f32 %v1031, %v1052
    %v1118 = vadd.f32 %v1032, %v1056
    %v1119 = vadd.f32 %v1033, %v1060
    %v1120 = vadd.f32 %v1034, %v1064
    %v1121 = vadd.f32 %v1035, %v1052
    %v1122 = vadd.f32 %v1036, %v1056
    %v1123 = vadd.f32 %v1037, %v1060
    %v1124 = vadd.f32 %v1038, %v1064
    %v1125 = vadd.f32 %v1039, %v1052
    %v1126 = vadd.f32 %v1040, %v1056
    %v1127 = vadd.f32 %v1041, %v1060
    %v1128 = vadd.f32 %v1042, %v1064
    %v1129 = vadd.f32 %v1043, %v1052
    %v1130 = vadd.f32 %v1044, %v1056
    %v1131 = vadd.f32 %v1045, %v1060
    %v1132 = vadd.f32 %v1046, %v1064
    %1133 = vst [vmem:[%s3] sm:$0xff] %v1069
    %1134 = vst [vmem:[%s3 + $0x8] sm:$0xff] %v1070
    %1135 = vst [vmem:[%s3 + $0x10] sm:$0xff] %v1071
    %1136 = vst [vmem:[%s3 + $0x18] sm:$0xff] %v1072
    %1137 = vst [vmem:[%s3 + $0x20] sm:$0xff] %v1073
    %1138 = vst [vmem:[%s3 + $0x28] sm:$0xff] %v1074
    %1139 = vst [vmem:[%s3 + $0x30] sm:$0xff] %v1075
    %1140 = vst [vmem:[%s3 + $0x38] sm:$0xff] %v1076
    %1141 = vst [vmem:[%s3 + $0x40] sm:$0xff] %v1077
    %1142 = vst [vmem:[%s3 + $0x48] sm:$0xff] %v1078
    %1143 = vst [vmem:[%s3 + $0x50] sm:$0xff] %v1079
    %1144 = vst [vmem:[%s3 + $0x58] sm:$0xff] %v1080
    %1145 = vst [vmem:[%s3 + $0x60] sm:$0xff] %v1081
    %1146 = vst [vmem:[%s3 + $0x68] sm:$0xff] %v1082
    %1147 = vst [vmem:[%s3 + $0x70] sm:$0xff] %v1083
    %1148 = vst [vmem:[%s3 + $0x78] sm:$0xff] %v1084
    %1149 = vst [vmem:[%s3 + $0x80] sm:$0xff] %v1085
    %1150 = vst [vmem:[%s3 + $0x88] sm:$0xff] %v1086
    %1151 = vst [vmem:[%s3 + $0x90] sm:$0xff] %v1087
    %1152 = vst [vmem:[%s3 + $0x98] sm:$0xff] %v1088
    %1153 = vst [vmem:[%s3 + $0xa0] sm:$0xff] %v1089
    %1154 = vst [vmem:[%s3 + $0xa8] sm:$0xff] %v1090
    %1155 = vst [vmem:[%s3 + $0xb0] sm:$0xff] %v1091
    %1156 = vst [vmem:[%s3 + $0xb8] sm:$0xff] %v1092
    %1157 = vst [vmem:[%s3 + $0xc0] sm:$0xff] %v1093
    %1158 = vst [vmem:[%s3 + $0xc8] sm:$0xff] %v1094
    %1159 = vst [vmem:[%s3 + $0xd0] sm:$0xff] %v1095
    %1160 = vst [vmem:[%s3 + $0xd8] sm:$0xff] %v1096
    %1161 = vst [vmem:[%s3 + $0xe0] sm:$0xff] %v1097
    %1162 = vst [vmem:[%s3 + $0xe8] sm:$0xff] %v1098
    %1163 = vst [vmem:[%s3 + $0xf0] sm:$0xff] %v1099
    %1164 = vst [vmem:[%s3 + $0xf8] sm:$0xff] %v1100
    %1165 = vst [vmem:[%s3 + $0x100] sm:$0xff] %v1101
    %1166 = vst [vmem:[%s3 + $0x108] sm:$0xff] %v1102
    %1167 = vst [vmem:[%s3 + $0x110] sm:$0xff] %v1103
    %1168 = vst [vmem:[%s3 + $0x118] sm:$0xff] %v1104
    %1169 = vst [vmem:[%s3 + $0x120] sm:$0xff] %v1105
    %1170 = vst [vmem:[%s3 + $0x128] sm:$0xff] %v1106
    %1171 = vst [vmem:[%s3 + $0x130] sm:$0xff] %v1107
    %1172 = vst [vmem:[%s3 + $0x138] sm:$0xff] %v1108
    %1173 = vst [vmem:[%s3 + $0x140] sm:$0xff] %v1109
    %1174 = vst [vmem:[%s3 + $0x148] sm:$0xff] %v1110
    %1175 = vst [vmem:[%s3 + $0x150] sm:$0xff] %v1111
    %1176 = vst [vmem:[%s3 + $0x158] sm:$0xff] %v1112
    %1177 = vst [vmem:[%s3 + $0x160] sm:$0xff] %v1113
    %1178 = vst [vmem:[%s3 + $0x168] sm:$0xff] %v1114
    %1179 = vst [vmem:[%s3 + $0x170] sm:$0xff] %v1115
    %1180 = vst [vmem:[%s3 + $0x178] sm:$0xff] %v1116
    %1181 = vst [vmem:[%s3 + $0x180] sm:$0xff] %v1117
    %1182 = vst [vmem:[%s3 + $0x188] sm:$0xff] %v1118
    %1183 = vst [vmem:[%s3 + $0x190] sm:$0xff] %v1119
    %1184 = vst [vmem:[%s3 + $0x198] sm:$0xff] %v1120
    %1185 = vst [vmem:[%s3 + $0x1a0] sm:$0xff] %v1121
    %1186 = vst [vmem:[%s3 + $0x1a8] sm:$0xff] %v1122
    %1187 = vst [vmem:[%s3 + $0x1b0] sm:$0xff] %v1123
    %1188 = vst [vmem:[%s3 + $0x1b8] sm:$0xff] %v1124
    %1189 = vst [vmem:[%s3 + $0x1c0] sm:$0xff] %v1125
    %1190 = vst [vmem:[%s3 + $0x1c8] sm:$0xff] %v1126
    %1191 = vst [vmem:[%s3 + $0x1d0] sm:$0xff] %v1127
    %1192 = vst [vmem:[%s3 + $0x1d8] sm:$0xff] %v1128
    %1193 = vst [vmem:[%s3 + $0x1e0] sm:$0xff] %v1129
    %1194 = vst [vmem:[%s3 + $0x1e8] sm:$0xff] %v1130
    %1195 = vst [vmem:[%s3 + $0x1f0] sm:$0xff] %v1131
    %1196 = vst [vmem:[%s3 + $0x1f8] sm:$0xff] %v1132
  $region21: #{fwd.29} parent=0 // pred_fallthru
    _
  // Predicated region
  $region22: #{fwd.29} parent=0 // pred_check
    _
  $region23: #{fwd.29} parent=0 // pred_check_branch
    %1198 = sbr.rel (0) target = $region25
  $region24: #{fwd.29} parent=0 // pred_region
    _
  $region25: #{fwd.29} parent=0 // pred_fallthru
    _
  // Predicated region
  $region26: #{fwd.29} parent=0 // pred_check
    _
  $region27: #{fwd.29} parent=0 // pred_check_branch
    %1200 = sbr.rel (0) target = $region29
  $region28: #{fwd.29} parent=0 // pred_region
    _
  $region29: #{fwd.29} parent=0 // pred_fallthru
    _

// kernel: fwd.31
$region0: #{fwd.31}
  #allocation0 [shape = 'u32[]', space=smem, size = 0x4, offset = 0x4, fixed_abs, tag = 'smem constant byte address 0x4 - core index']
  #allocation1 [shape = 'u32[144,128]{1,0:T(1,128)}', space=vmem, size = 0x12000, scoped, tag = 'internal scratch']
  %s0 = inlined_call_operand.vmem [shape: bf16[2,8,64,32], index: 0, kind: input, shape index: {}]
  %s1 = inlined_call_operand.vmem [shape: bf16[2,8,64,32], index: 1, kind: input, shape index: {}]
  %s2 = inlined_call_operand.vmem [shape: bf16[2,8,64,32], index: 2, kind: input, shape index: {}]
  %s3 = inlined_call_operand.vmem [shape: f32[2,1,64], index: 3, kind: input, shape index: {}]
  %s4 = inlined_call_operand.vmem [shape: f32[2,8,64,32], index: 4, kind: output, shape index: {}]
  %s5 = sld [smem:[#allocation0]]
  $region49: #{fwd.31} parent=0
    _
  %s7 = ssub.s32 1, %s5
  %s8 = scalar_select 0, %s7, %s5
  loop: start=0, step=1, limit=18
  $region2: #{fwd.31} parent=0 // loop_pre_header
    _
  $region3: #{fwd.31} parent=0 // loop_header
    %s10 = sphi 0, %s14
    %p11 = scmp.ge.s32.totalorder %s10, 18
    %s17 = sphi 0, %s29
    %s18 = sphi 0, %s25
    %s19 = sphi 0, %s17
    %s20 = sphi 0, %s18
    %s21 = sphi 0, %s19
    %s22 = sphi 0, %s20
    %s34 = sphi 0, %s36
    %s37 = sphi 0, %s34
    %s38 = sphi 0, %s37
    %s54 = sphi 0, %s38
    %s62 = sphi 0, %s64
    %s65 = sphi 0, %s62
    %s66 = sphi 0, %s65
    %s82 = sphi 0, %s66
    %s90 = sphi 0, %s92
    %s93 = sphi 0, %s90
    %s94 = sphi 0, %s93
    %s110 = sphi 0, %s94
    %s116 = sphi 0, %s118
    %s119 = sphi 0, %s116
    %s120 = sphi 0, %s119
    %s136 = sphi 0, %s120
    %s144 = sphi 0, %s146
    %s147 = sphi 0, %s144
    %s148 = sphi 0, %s147
    %s164 = sphi 0, %s148
  $region4: #{fwd.31} parent=0 // loop_header_branch
    %13 = sbr.rel (%p11) target = $region8
  $region5: #{fwd.31} parent=0 // loop_body
    %s15 = ssub.s32 %s10, 1
    %s16 = ssub.s32 %s10, 2
    %s23 = sadd.s32 1, %s18
    %p24 = scmp.ge.s32.totalorder %s23, 8
    %s25 = scalar_select %p24, 0, %s23
    %s26 = sadd.s32 1, %s17
    %s27 = scalar_select %p24, %s26, %s17
    %p28 = scmp.ge.s32.totalorder %s27, 2
    %s29 = scalar_select %p28, 0, %s27
    %s30 = ssub.s32 %s17, %s29
    %s31 = ssub.s32 %s18, %s25
    %s32 = sor.u32 %s30, %s31
    %p33 = scmp.eq.s32.totalorder %s32, 0
    %s35 = sadd.s32 %s34, 1
    %s36 = scalar_select %p33, %s34, %s35
    %p39 = pneg %p33
    %p40 = scmp.eq.s32.totalorder %s10, 15
    %p41 = por %p39, %p40
    %p42 = scmp.ne.s32.totalorder %s34, %s37
    %p43 = scmp.eq.s32.totalorder %s10, 0
    %p44 = por %p42, %p43
    %p45 = scmp.ne.s32.totalorder %s34, %s37
    %p46 = scmp.eq.s32.totalorder %s15, 15
    %p47 = por %p45, %p46
    %p48 = scmp.ne.s32.totalorder %s37, %s38
    %p49 = scmp.eq.s32.totalorder %s15, 0
    %p50 = por %p48, %p49
    %p51 = scmp.ne.s32.totalorder %s37, %s38
    %p52 = scmp.eq.s32.totalorder %s16, 15
    %p53 = por %p51, %p52
    %p55 = scmp.ne.s32.totalorder %s38, %s54
    %p56 = scmp.eq.s32.totalorder %s16, 0
    %p57 = por %p55, %p56
    %s58 = ssub.s32 %s17, %s29
    %s59 = ssub.s32 %s18, %s25
    %s60 = sor.u32 %s58, %s59
    %p61 = scmp.eq.s32.totalorder %s60, 0
    %s63 = sadd.s32 %s62, 1
    %s64 = scalar_select %p61, %s62, %s63
    %p67 = pneg %p61
    %p68 = scmp.eq.s32.totalorder %s10, 15
    %p69 = por %p67, %p68
    %p70 = scmp.ne.s32.totalorder %s62, %s65
    %p71 = scmp.eq.s32.totalorder %s10, 0
    %p72 = por %p70, %p71
    %p73 = scmp.ne.s32.totalorder %s62, %s65
    %p74 = scmp.eq.s32.totalorder %s15, 15
    %p75 = por %p73, %p74
    %p76 = scmp.ne.s32.totalorder %s65, %s66
    %p77 = scmp.eq.s32.totalorder %s15, 0
    %p78 = por %p76, %p77
    %p79 = scmp.ne.s32.totalorder %s65, %s66
    %p80 = scmp.eq.s32.totalorder %s16, 15
    %p81 = por %p79, %p80
    %p83 = scmp.ne.s32.totalorder %s66, %s82
    %p84 = scmp.eq.s32.totalorder %s16, 0
    %p85 = por %p83, %p84
    %s86 = ssub.s32 %s17, %s29
    %s87 = ssub.s32 %s18, %s25
    %s88 = sor.u32 %s86, %s87
    %p89 = scmp.eq.s32.totalorder %s88, 0
    %s91 = sadd.s32 %s90, 1
    %s92 = scalar_select %p89, %s90, %s91
    %p95 = pneg %p89
    %p96 = scmp.eq.s32.totalorder %s10, 15
    %p97 = por %p95, %p96
    %p98 = scmp.ne.s32.totalorder %s90, %s93
    %p99 = scmp.eq.s32.totalorder %s10, 0
    %p100 = por %p98, %p99
    %p101 = scmp.ne.s32.totalorder %s90, %s93
    %p102 = scmp.eq.s32.totalorder %s15, 15
    %p103 = por %p101, %p102
    %p104 = scmp.ne.s32.totalorder %s93, %s94
    %p105 = scmp.eq.s32.totalorder %s15, 0
    %p106 = por %p104, %p105
    %p107 = scmp.ne.s32.totalorder %s93, %s94
    %p108 = scmp.eq.s32.totalorder %s16, 15
    %p109 = por %p107, %p108
    %p111 = scmp.ne.s32.totalorder %s94, %s110
    %p112 = scmp.eq.s32.totalorder %s16, 0
    %p113 = por %p111, %p112
    %s114 = ssub.s32 %s17, %s29
    %p115 = scmp.eq.s32.totalorder %s114, 0
    %s117 = sadd.s32 %s116, 1
    %s118 = scalar_select %p115, %s116, %s117
    %p121 = pneg %p115
    %p122 = scmp.eq.s32.totalorder %s10, 15
    %p123 = por %p121, %p122
    %p124 = scmp.ne.s32.totalorder %s116, %s119
    %p125 = scmp.eq.s32.totalorder %s10, 0
    %p126 = por %p124, %p125
    %p127 = scmp.ne.s32.totalorder %s116, %s119
    %p128 = scmp.eq.s32.totalorder %s15, 15
    %p129 = por %p127, %p128
    %p130 = scmp.ne.s32.totalorder %s119, %s120
    %p131 = scmp.eq.s32.totalorder %s15, 0
    %p132 = por %p130, %p131
    %p133 = scmp.ne.s32.totalorder %s119, %s120
    %p134 = scmp.eq.s32.totalorder %s16, 15
    %p135 = por %p133, %p134
    %p137 = scmp.ne.s32.totalorder %s120, %s136
    %p138 = scmp.eq.s32.totalorder %s16, 0
    %p139 = por %p137, %p138
    %s140 = ssub.s32 %s17, %s29
    %s141 = ssub.s32 %s18, %s25
    %s142 = sor.u32 %s140, %s141
    %p143 = scmp.eq.s32.totalorder %s142, 0
    %s145 = sadd.s32 %s144, 1
    %s146 = scalar_select %p143, %s144, %s145
    %p149 = pneg %p143
    %p150 = scmp.eq.s32.totalorder %s10, 15
    %p151 = por %p149, %p150
    %p152 = scmp.ne.s32.totalorder %s144, %s147
    %p153 = scmp.eq.s32.totalorder %s10, 0
    %p154 = por %p152, %p153
    %p155 = scmp.ne.s32.totalorder %s144, %s147
    %p156 = scmp.eq.s32.totalorder %s15, 15
    %p157 = por %p155, %p156
    %p158 = scmp.ne.s32.totalorder %s147, %s148
    %p159 = scmp.eq.s32.totalorder %s15, 0
    %p160 = por %p158, %p159
    %p161 = scmp.ne.s32.totalorder %s147, %s148
    %p162 = scmp.eq.s32.totalorder %s16, 15
    %p163 = por %p161, %p162
    %p165 = scmp.ne.s32.totalorder %s148, %s164
    %p166 = scmp.eq.s32.totalorder %s16, 0
    %p167 = por %p165, %p166
    %p168 = scmp.le.s32.totalorder 1, %s10
    %p169 = scmp.lt.s32.totalorder %s10, 17
    %p170 = pnand %p168, %p169
    %p171 = pneg %p170
    // Predicated region
    $region9: #{fwd.31} parent=5 // pred_check
      _
    $region10: #{fwd.31} parent=5 // pred_check_branch
      %173 = sbr.rel (%p170) target = $region12
    $region11: #{fwd.31} parent=5 // pred_region
      %s174 = ssub.s32 %s10, 1
    $region12: #{fwd.31} parent=5 // pred_fallthru
      _
    %p175 = scmp.lt.s32.totalorder %s10, 16
    // Predicated region
    $region13: #{fwd.31} parent=5 // pred_check
      %p176 = pneg %p175
    $region14: #{fwd.31} parent=5 // pred_check_branch
      %178 = sbr.rel (%p176) target = $region16
    $region15: #{fwd.31} parent=5 // pred_region
      // Predicated region
      $region17: #{fwd.31} parent=15 // pred_check
        %p179 = pneg %p44
      $region18: #{fwd.31} parent=15 // pred_check_branch
        %181 = sbr.rel (%p179) target = $region20
      $region19: #{fwd.31} parent=15 // pred_region
        %p182 = scmp.lt.s32.totalorder %s17, 1
        %s183 = scalar_select %p182, %s17, 1
        %p184 = scmp.lt.s32.totalorder %s18, 7
        %s185 = scalar_select %p184, %s18, 7
        %s186 = smul.addr %s185, 8
        %s187 = smul.addr %s183, 64
        %s188 = sadd.s32 %s186, %s187
        %s189 = smul.addr %s188, 4
        %s190 = scalar_lea.vmem %s0, %s189
      $region20: #{fwd.31} parent=15 // pred_fallthru
        _
      // Predicated region
      $region21: #{fwd.31} parent=15 // pred_check
        %p191 = pneg %p72
      $region22: #{fwd.31} parent=15 // pred_check_branch
        %193 = sbr.rel (%p191) target = $region24
      $region23: #{fwd.31} parent=15 // pred_region
        %p194 = scmp.lt.s32.totalorder %s17, 1
        %s195 = scalar_select %p194, %s17, 1
        %p196 = scmp.lt.s32.totalorder %s18, 7
        %s197 = scalar_select %p196, %s18, 7
        %s198 = smul.addr %s197, 8
        %s199 = smul.addr %s195, 64
        %s200 = sadd.s32 %s198, %s199
        %s201 = smul.addr %s200, 4
        %s202 = scalar_lea.vmem %s1, %s201
      $region24: #{fwd.31} parent=15 // pred_fallthru
        _
      // Predicated region
      $region25: #{fwd.31} parent=15 // pred_check
        %p203 = pneg %p100
      $region26: #{fwd.31} parent=15 // pred_check_branch
        %205 = sbr.rel (%p203) target = $region28
      $region27: #{fwd.31} parent=15 // pred_region
        %p206 = scmp.lt.s32.totalorder %s17, 1
        %s207 = scalar_select %p206, %s17, 1
        %p208 = scmp.lt.s32.totalorder %s18, 7
        %s209 = scalar_select %p208, %s18, 7
        %s210 = smul.addr %s209, 8
        %s211 = smul.addr %s207, 64
        %s212 = sadd.s32 %s210, %s211
        %s213 = smul.addr %s212, 4
        %s214 = scalar_lea.vmem %s2, %s213
      $region28: #{fwd.31} parent=15 // pred_fallthru
        _
      // Predicated region
      $region29: #{fwd.31} parent=15 // pred_check
        %p215 = pneg %p126
      $region30: #{fwd.31} parent=15 // pred_check_branch
        %217 = sbr.rel (%p215) target = $region32
      $region31: #{fwd.31} parent=15 // pred_region
        %p218 = scmp.lt.s32.totalorder %s17, 1
        %s219 = scalar_select %p218, %s17, 1
        %s220 = scalar_lea.vmem %s3, %s219
      $region32: #{fwd.31} parent=15 // pred_fallthru
        _
    $region16: #{fwd.31} parent=5 // pred_fallthru
      _
    %p221 = scmp.le.s32.totalorder 1, %s10
    %p222 = scmp.lt.s32.totalorder %s10, 17
    %p223 = pnand %p221, %p222
    %p224 = pneg %p223
    // Predicated region
    $region33: #{fwd.31} parent=5 // pred_check
      _
    $region34: #{fwd.31} parent=5 // pred_check_branch
      %226 = sbr.rel (%p223) target = $region36
    $region35: #{fwd.31} parent=5 // pred_region
      %s227 = ssub.s32 %s10, 1
      %p228 = scmp.lt.s32.totalorder %s19, 1
      %s229 = scalar_select %p228, %s19, 1
      %p230 = scmp.lt.s32.totalorder %s20, 7
      %s231 = scalar_select %p230, %s20, 7
      %s232 = smul.addr %s231, 8
      %s233 = smul.addr %s229, 64
      %s234 = sadd.s32 %s232, %s233
      %s235 = smul.addr %s234, 4
      %s236 = scalar_lea.vmem %s0, %s235
      %p237 = pneg %p50
      %p238 = pneg %p47
      %p239 = scmp.lt.s32.totalorder %s19, 1
      %s240 = scalar_select %p239, %s19, 1
      %p241 = scmp.lt.s32.totalorder %s20, 7
      %s242 = scalar_select %p241, %s20, 7
      %s243 = smul.addr %s242, 8
      %s244 = smul.addr %s240, 64
      %s245 = sadd.s32 %s243, %s244
      %s246 = smul.addr %s245, 4
      %s247 = scalar_lea.vmem %s1, %s246
      %p248 = pneg %p78
      %p249 = pneg %p75
      %p250 = scmp.lt.s32.totalorder %s19, 1
      %s251 = scalar_select %p250, %s19, 1
      %p252 = scmp.lt.s32.totalorder %s20, 7
      %s253 = scalar_select %p252, %s20, 7
      %s254 = smul.addr %s253, 8
      %s255 = smul.addr %s251, 64
      %s256 = sadd.s32 %s254, %s255
      %s257 = smul.addr %s256, 4
      %s258 = scalar_lea.vmem %s2, %s257
      %p259 = pneg %p106
      %p260 = pneg %p103
      %p261 = scmp.lt.s32.totalorder %s19, 1
      %s262 = scalar_select %p261, %s19, 1
      %s263 = scalar_lea.vmem %s3, %s262
      %p264 = pneg %p132
      %p265 = pneg %p129
      %p266 = pneg %p160
      %p267 = pneg %p157
      %p268 = scmp.lt.s32.totalorder %s19, 1
      %s269 = scalar_select %p268, %s19, 1
      %p270 = scmp.lt.s32.totalorder %s20, 7
      %s271 = scalar_select %p270, %s20, 7
      %s272 = smul.addr %s271, 8
      %s273 = smul.addr %s269, 64
      %s274 = sadd.s32 %s272, %s273
      %s275 = smul.addr %s274, 8
      %s276 = scalar_lea.vmem %s4, %s275
      %p277 = scmp.lt.s32.totalorder %s19, 1
      %s278 = scalar_select %p277, %s19, 1
      %p279 = scmp.lt.s32.totalorder %s20, 7
      %s280 = scalar_select %p279, %s20, 7
      %s281 = smul.addr %s280, 8
      %s282 = smul.addr %s278, 64
      %s283 = sadd.s32 %s281, %s282
      %s284 = smul.addr %s283, 4
      %s285 = scalar_lea.vmem %s0, %s284
      %p286 = scmp.lt.s32.totalorder %s19, 1
      %s287 = scalar_select %p286, %s19, 1
      %p288 = scmp.lt.s32.totalorder %s20, 7
      %s289 = scalar_select %p288, %s20, 7
      %s290 = smul.addr %s289, 8
      %s291 = smul.addr %s287, 64
      %s292 = sadd.s32 %s290, %s291
      %s293 = smul.addr %s292, 4
      %s294 = scalar_lea.vmem %s1, %s293
      %p295 = scmp.lt.s32.totalorder %s19, 1
      %s296 = scalar_select %p295, %s19, 1
      %p297 = scmp.lt.s32.totalorder %s20, 7
      %s298 = scalar_select %p297, %s20, 7
      %s299 = smul.addr %s298, 8
      %s300 = smul.addr %s296, 64
      %s301 = sadd.s32 %s299, %s300
      %s302 = smul.addr %s301, 4
      %s303 = scalar_lea.vmem %s2, %s302
      %p304 = scmp.lt.s32.totalorder %s19, 1
      %s305 = scalar_select %p304, %s19, 1
      %s306 = scalar_lea.vmem %s3, %s305
      %p307 = scmp.lt.s32.totalorder %s19, 1
      %s308 = scalar_select %p307, %s19, 1
      %p309 = scmp.lt.s32.totalorder %s20, 7
      %s310 = scalar_select %p309, %s20, 7
      %s311 = smul.addr %s310, 8
      %s312 = smul.addr %s308, 64
      %s313 = sadd.s32 %s311, %s312
      %s314 = smul.addr %s313, 8
      %s315 = scalar_lea.vmem %s4, %s314
      %v317 = vld [vmem:[%s285] sm:$0xf]
      %v318 = vld [vmem:[%s285 + $0x4] sm:$0xf]
      %v319 = vld [vmem:[%s285 + $0x8] sm:$0xf]
      %v320 = vld [vmem:[%s285 + $0xc] sm:$0xf]
      %v321 = vld [vmem:[%s285 + $0x10] sm:$0xf]
      %v322 = vld [vmem:[%s285 + $0x14] sm:$0xf]
      %v323 = vld [vmem:[%s285 + $0x18] sm:$0xf]
      %v324 = vld [vmem:[%s285 + $0x1c] sm:$0xf]
      %v325 = vld [vmem:[%s294] sm:$0xf]
      %v326 = vld [vmem:[%s294 + $0x4] sm:$0xf]
      %v327 = vld [vmem:[%s294 + $0x8] sm:$0xf]
      %v328 = vld [vmem:[%s294 + $0xc] sm:$0xf]
      %v329 = vld [vmem:[%s294 + $0x10] sm:$0xf]
      %v330 = vld [vmem:[%s294 + $0x14] sm:$0xf]
      %v331 = vld [vmem:[%s294 + $0x18] sm:$0xf]
      %v332 = vld [vmem:[%s294 + $0x1c] sm:$0xf]
      %v333 = vld [vmem:[%s303] sm:$0xf]
      %v334 = vld [vmem:[%s303 + $0x4] sm:$0xf]
      %v335 = vld [vmem:[%s303 + $0x8] sm:$0xf]
      %v336 = vld [vmem:[%s303 + $0xc] sm:$0xf]
      %v337 = vld [vmem:[%s303 + $0x10] sm:$0xf]
      %v338 = vld [vmem:[%s303 + $0x14] sm:$0xf]
      %v339 = vld [vmem:[%s303 + $0x18] sm:$0xf]
      %v340 = vld [vmem:[%s303 + $0x1c] sm:$0xf]
      %v349 = vunpack.c.l.b16 %v317
      %v350 = vunpack.c.l.b16 %v318
      %v351 = vunpack.c.l.b16 %v319
      %v352 = vunpack.c.l.b16 %v320
      %v353 = vunpack.c.l.b16 %v321
      %v354 = vunpack.c.l.b16 %v322
      %v355 = vunpack.c.l.b16 %v323
      %v356 = vunpack.c.l.b16 %v324
      %v357 = vpack.c.b16 %v350, %v349
      %v358 = vpack.c.b16 %v352, %v351
      %v359 = vpack.c.b16 %v354, %v353
      %v360 = vpack.c.b16 %v356, %v355
      %v369 = vunpack.c.l.b16 %v325
      %v370 = vunpack.c.l.b16 %v326
      %v371 = vunpack.c.l.b16 %v327
      %v372 = vunpack.c.l.b16 %v328
      %v373 = vunpack.c.l.b16 %v329
      %v374 = vunpack.c.l.b16 %v330
      %v375 = vunpack.c.l.b16 %v331
      %v376 = vunpack.c.l.b16 %v332
      %v377 = vpack.c.b16 %v370, %v369
      %v378 = vpack.c.b16 %v372, %v371
      %v379 = vpack.c.b16 %v374, %v373
      %v380 = vpack.c.b16 %v376, %v375
      %vm381 = vcmask 261120
      %v383 = vsel %vm381, %v357, 0
      %v386 = vsel %vm381, %v358, 0
      %v389 = vsel %vm381, %v359, 0
      %v392 = vsel %vm381, %v360, 0
      %v395 = vsel %vm381, %v377, 0
      %v398 = vsel %vm381, %v378, 0
      %v401 = vsel %vm381, %v379, 0
      %v404 = vsel %vm381, %v380, 0
      %406 = vmatprep.subr.bf16.mxu0 0
      %407 = vmatpush1.bf16.xpose.msra.mxu0 %v395
      %408 = vmatprep.subr.bf16.mxu0 0
      %409 = vmatpush1.bf16.xpose.msra.mxu0 %v398
      %410 = vmatprep.subr.bf16.mxu0 0
      %411 = vmatpush1.bf16.xpose.msra.mxu0 %v401
      %412 = vmatprep.subr.bf16.mxu0 0
      %413 = vmatpush1.bf16.xpose.msra.mxu0 %v404
      %414 = vmatprep.subr.bf16.mxu0 0
      %415 = vmatpush1.bf16.xpose.msra.mxu0 0
      %416 = vmatprep.subr.bf16.mxu0 0
      %417 = vmatpush1.bf16.xpose.msra.mxu0 0
      %418 = vmatprep.subr.bf16.mxu0 0
      %419 = vmatpush1.bf16.xpose.msra.mxu0 0
      %420 = vmatprep.subr.bf16.mxu0 0
      %421 = vmatpush1.bf16.xpose.msra.mxu0 0
      %422 = vmatprep.subr.bf16.mxu0 0
      %423 = vmatpush1.bf16.xpose.msra.mxu0 0
      %424 = vmatprep.subr.bf16.mxu0 0
      %425 = vmatpush1.bf16.xpose.msra.mxu0 0
      %426 = vmatprep.subr.bf16.mxu0 0
      %427 = vmatpush1.bf16.xpose.msra.mxu0 0
      %428 = vmatprep.subr.bf16.mxu0 0
      %429 = vmatpush1.bf16.xpose.msra.mxu0 0
      %430 = vmatprep.subr.bf16.mxu0 0
      %431 = vmatpush1.bf16.xpose.msra.mxu0 0
      %432 = vmatprep.subr.bf16.mxu0 0
      %433 = vmatpush1.bf16.xpose.msra.mxu0 0
      %434 = vmatprep.subr.bf16.mxu0 0
      %435 = vmatpush1.bf16.xpose.msra.mxu0 0
      %436 = vmatprep.subr.bf16.mxu0 0
      %437 = vmatpush1.bf16.xpose.msra.mxu0 0
      %438 = vmatprep.mubr.bf16.mxu0 0
      %439 = vmatmul.mubr.bf16.gmra.mrb[0].mxu0 %v383
      %v440 = vpop.f32.mrb[0].mxu0
      %v441 = vadd.f32 0.0, %v440
      %v442 = vpop.f32.mrb[0].mxu0
      %v443 = vpop.f32.mrb[0].mxu0
      %v444 = vadd.f32 0.0, %v443
      %v445 = vpop.f32.mrb[0].mxu0
      %446 = vmatprep.mubr.bf16.mxu0 0
      %447 = vmatmul.mubr.bf16.gmra.mrb[0].mxu0 %v386
      %v448 = vpop.f32.mrb[0].mxu0
      %v449 = vadd.f32 0.0, %v448
      %v450 = vpop.f32.mrb[0].mxu0
      %v451 = vpop.f32.mrb[0].mxu0
      %v452 = vadd.f32 0.0, %v451
      %v453 = vpop.f32.mrb[0].mxu0
      %454 = vmatprep.mubr.bf16.mxu0 0
      %455 = vmatmul.mubr.bf16.gmra.mrb[0].mxu0 %v389
      %v456 = vpop.f32.mrb[0].mxu0
      %v457 = vadd.f32 0.0, %v456
      %v458 = vpop.f32.mrb[0].mxu0
      %v459 = vpop.f32.mrb[0].mxu0
      %v460 = vadd.f32 0.0, %v459
      %v461 = vpop.f32.mrb[0].mxu0
      %462 = vmatprep.mubr.bf16.mxu0 0
      %463 = vmatmul.mubr.bf16.gmra.mrb[0].mxu0 %v392
      %v464 = vpop.f32.mrb[0].mxu0
      %v465 = vadd.f32 0.0, %v464
      %v466 = vpop.f32.mrb[0].mxu0
      %v467 = vpop.f32.mrb[0].mxu0
      %v468 = vadd.f32 0.0, %v467
      %v469 = vpop.f32.mrb[0].mxu0
      %470 = vdwg.mxu0
      %v471 = vmul.f32 %v441, 0.17677669
      %v472 = vmul.f32 %v444, 0.17677669
      %v473 = vmul.f32 %v449, 0.17677669
      %v474 = vmul.f32 %v452, 0.17677669
      %v475 = vmul.f32 %v457, 0.17677669
      %v476 = vmul.f32 %v460, 0.17677669
      %v477 = vmul.f32 %v465, 0.17677669
      %v478 = vmul.f32 %v468, 0.17677669
      %v479 = vld [vmem:[%s306] sm:$0x1]
      %v481 = vlaneseq
      %v482 = vshrl.u32 %v481, 7
      %v483 = vsub.s32 0, %v482
      %v484 = vrot.slane %v479, %v483
      %v486 = vadd.f32 %v471, %v484
      %v487 = vadd.f32 %v472, %v484
      %v488 = vadd.f32 %v473, %v484
      %v489 = vadd.f32 %v474, %v484
      %v490 = vadd.f32 %v475, %v484
      %v491 = vadd.f32 %v476, %v484
      %v492 = vadd.f32 %v477, %v484
      %v493 = vadd.f32 %v478, %v484
      %vm494 = vcmask 523264
      %v495 = vsel %vm494, %v486, -inf
      %496 = vmax.xlane.f32.xlu0 %v495
      %v497 = vpop.xlane.xlu0 %496
      %v498 = vsel %vm494, %v487, -inf
      %499 = vmax.xlane.f32.xlu0 %v498
      %v500 = vpop.xlane.xlu0 %499
      %v501 = vsel %vm494, %v488, -inf
      %502 = vmax.xlane.f32.xlu0 %v501
      %v503 = vpop.xlane.xlu0 %502
      %v504 = vsel %vm494, %v489, -inf
      %505 = vmax.xlane.f32.xlu0 %v504
      %v506 = vpop.xlane.xlu0 %505
      %v507 = vsel %vm494, %v490, -inf
      %508 = vmax.xlane.f32.xlu0 %v507
      %v509 = vpop.xlane.xlu0 %508
      %v510 = vsel %vm494, %v491, -inf
      %511 = vmax.xlane.f32.xlu0 %v510
      %v512 = vpop.xlane.xlu0 %511
      %v513 = vsel %vm494, %v492, -inf
      %514 = vmax.xlane.f32.xlu0 %v513
      %v515 = vpop.xlane.xlu0 %514
      %v516 = vsel %vm494, %v493, -inf
      %517 = vmax.xlane.f32.xlu0 %v516
      %v518 = vpop.xlane.xlu0 %517
      %v519 = vsub.f32 %v486, %v497
      %v520 = vsub.f32 %v487, %v500
      %v521 = vsub.f32 %v488, %v503
      %v522 = vsub.f32 %v489, %v506
      %v523 = vsub.f32 %v490, %v509
      %v524 = vsub.f32 %v491, %v512
      %v525 = vsub.f32 %v492, %v515
      %v526 = vsub.f32 %v493, %v518
      %v527 = vmul.f32 %v519, 1.442695
      %v528 = vpow.pop %v527
      %v529 = vmul.f32 %v520, 1.442695
      %v530 = vpow.pop %v529
      %v531 = vmul.f32 %v521, 1.442695
      %v532 = vpow.pop %v531
      %v533 = vmul.f32 %v522, 1.442695
      %v534 = vpow.pop %v533
      %v535 = vmul.f32 %v523, 1.442695
      %v536 = vpow.pop %v535
      %v537 = vmul.f32 %v524, 1.442695
      %v538 = vpow.pop %v537
      %v539 = vmul.f32 %v525, 1.442695
      %v540 = vpow.pop %v539
      %v541 = vmul.f32 %v526, 1.442695
      %v542 = vpow.pop %v541
      %v543 = vsel %vm494, %v528, 0.0
      %544 = vadd.xlane.f32.xlu0 %v543
      %v545 = vpop.xlane.xlu0 %544
      %v546 = vsel %vm494, %v530, 0.0
      %547 = vadd.xlane.f32.xlu0 %v546
      %v548 = vpop.xlane.xlu0 %547
      %v549 = vsel %vm494, %v532, 0.0
      %550 = vadd.xlane.f32.xlu0 %v549
      %v551 = vpop.xlane.xlu0 %550
      %v552 = vsel %vm494, %v534, 0.0
      %553 = vadd.xlane.f32.xlu0 %v552
      %v554 = vpop.xlane.xlu0 %553
      %v555 = vsel %vm494, %v536, 0.0
      %556 = vadd.xlane.f32.xlu0 %v555
      %v557 = vpop.xlane.xlu0 %556
      %v558 = vsel %vm494, %v538, 0.0
      %559 = vadd.xlane.f32.xlu0 %v558
      %v560 = vpop.xlane.xlu0 %559
      %v561 = vsel %vm494, %v540, 0.0
      %562 = vadd.xlane.f32.xlu0 %v561
      %v563 = vpop.xlane.xlu0 %562
      %v564 = vsel %vm494, %v542, 0.0
      %565 = vadd.xlane.f32.xlu0 %v564
      %v566 = vpop.xlane.xlu0 %565
      %v567 = vrcp.pop %v545
      %v568 = vrcp.pop %v548
      %v569 = vrcp.pop %v551
      %v570 = vrcp.pop %v554
      %v571 = vrcp.pop %v557
      %v572 = vrcp.pop %v560
      %v573 = vrcp.pop %v563
      %v574 = vrcp.pop %v566
      %v575 = vmul.f32 %v528, %v567
      %v576 = vmul.f32 %v530, %v568
      %v577 = vmul.f32 %v532, %v569
      %v578 = vmul.f32 %v534, %v570
      %v579 = vmul.f32 %v536, %v571
      %v580 = vmul.f32 %v538, %v572
      %v581 = vmul.f32 %v540, %v573
      %v582 = vmul.f32 %v542, %v574
      %v583 = vpack.c.bf16 %v576, %v575
      %v584 = vpack.c.bf16 %v578, %v577
      %v585 = vpack.c.bf16 %v580, %v579
      %v586 = vpack.c.bf16 %v582, %v581
      %v595 = vunpack.c.l.b16 %v333
      %v596 = vunpack.c.l.b16 %v334
      %v597 = vunpack.c.l.b16 %v335
      %v598 = vunpack.c.l.b16 %v336
      %v599 = vunpack.c.l.b16 %v337
      %v600 = vunpack.c.l.b16 %v338
      %v601 = vunpack.c.l.b16 %v339
      %v602 = vunpack.c.l.b16 %v340
      %v603 = vpack.c.b16 %v596, %v595
      %v604 = vpack.c.b16 %v598, %v597
      %v605 = vpack.c.b16 %v600, %v599
      %v606 = vpack.c.b16 %v602, %v601
      %v612 = vsel %vm494, %v583, 0
      %v615 = vsel %vm494, %v584, 0
      %v618 = vsel %vm494, %v585, 0
      %v621 = vsel %vm494, %v586, 0
      %623 = vmatprep.subr.bf16.mxu0 0
      %624 = vmatpush1.bf16.msra.mxu0 %v603
      %625 = vmatprep.subr.bf16.mxu0 0
      %626 = vmatpush1.bf16.msra.mxu0 %v604
      %627 = vmatprep.subr.bf16.mxu0 0
      %628 = vmatpush1.bf16.msra.mxu0 %v605
      %629 = vmatprep.subr.bf16.mxu0 0
      %630 = vmatpush1.bf16.msra.mxu0 %v606
      %631 = vmatprep.subr.bf16.mxu0 0
      %632 = vmatpush1.bf16.msra.mxu0 0
      %633 = vmatprep.subr.bf16.mxu0 0
      %634 = vmatpush1.bf16.msra.mxu0 0
      %635 = vmatprep.subr.bf16.mxu0 0
      %636 = vmatpush1.bf16.msra.mxu0 0
      %637 = vmatprep.subr.bf16.mxu0 0
      %638 = vmatpush1.bf16.msra.mxu0 0
      %639 = vmatprep.subr.bf16.mxu0 0
      %640 = vmatpush1.bf16.msra.mxu0 0
      %641 = vmatprep.subr.bf16.mxu0 0
      %642 = vmatpush1.bf16.msra.mxu0 0
      %643 = vmatprep.subr.bf16.mxu0 0
      %644 = vmatpush1.bf16.msra.mxu0 0
      %645 = vmatprep.subr.bf16.mxu0 0
      %646 = vmatpush1.bf16.msra.mxu0 0
      %647 = vmatprep.subr.bf16.mxu0 0
      %648 = vmatpush1.bf16.msra.mxu0 0
      %649 = vmatprep.subr.bf16.mxu0 0
      %650 = vmatpush1.bf16.msra.mxu0 0
      %651 = vmatprep.subr.bf16.mxu0 0
      %652 = vmatpush1.bf16.msra.mxu0 0
      %653 = vmatprep.subr.bf16.mxu0 0
      %654 = vmatpush1.bf16.msra.mxu0 0
      %655 = vmatprep.mubr.bf16.mxu0 0
      %656 = vmatmul.mubr.bf16.gmra.mrb[0].mxu0 %v612
      %v657 = vpop.f32.mrb[0].mxu0
      %v658 = vadd.f32 0.0, %v657
      %v659 = vpop.f32.mrb[0].mxu0
      %v660 = vpop.f32.mrb[0].mxu0
      %v661 = vadd.f32 0.0, %v660
      %v662 = vpop.f32.mrb[0].mxu0
      %663 = vmatprep.mubr.bf16.mxu0 0
      %664 = vmatmul.mubr.bf16.gmra.mrb[0].mxu0 %v615
      %v665 = vpop.f32.mrb[0].mxu0
      %v666 = vadd.f32 0.0, %v665
      %v667 = vpop.f32.mrb[0].mxu0
      %v668 = vpop.f32.mrb[0].mxu0
      %v669 = vadd.f32 0.0, %v668
      %v670 = vpop.f32.mrb[0].mxu0
      %671 = vmatprep.mubr.bf16.mxu0 0
      %672 = vmatmul.mubr.bf16.gmra.mrb[0].mxu0 %v618
      %v673 = vpop.f32.mrb[0].mxu0
      %v674 = vadd.f32 0.0, %v673
      %v675 = vpop.f32.mrb[0].mxu0
      %v676 = vpop.f32.mrb[0].mxu0
      %v677 = vadd.f32 0.0, %v676
      %v678 = vpop.f32.mrb[0].mxu0
      %679 = vmatprep.mubr.bf16.mxu0 0
      %680 = vmatmul.mubr.bf16.gmra.mrb[0].mxu0 %v621
      %v681 = vpop.f32.mrb[0].mxu0
      %v682 = vadd.f32 0.0, %v681
      %v683 = vpop.f32.mrb[0].mxu0
      %v684 = vpop.f32.mrb[0].mxu0
      %v685 = vadd.f32 0.0, %v684
      %v686 = vpop.f32.mrb[0].mxu0
      %687 = vdwg.mxu0
      %688 = vst.msk [vmem:[%s315] sm:$0xff] %vm381, %v658
      %689 = vst.msk [vmem:[%s315 + $0x8] sm:$0xff] %vm381, %v661
      %690 = vst.msk [vmem:[%s315 + $0x10] sm:$0xff] %vm381, %v666
      %691 = vst.msk [vmem:[%s315 + $0x18] sm:$0xff] %vm381, %v669
      %692 = vst.msk [vmem:[%s315 + $0x20] sm:$0xff] %vm381, %v674
      %693 = vst.msk [vmem:[%s315 + $0x28] sm:$0xff] %vm381, %v677
      %694 = vst.msk [vmem:[%s315 + $0x30] sm:$0xff] %vm381, %v682
      %695 = vst.msk [vmem:[%s315 + $0x38] sm:$0xff] %vm381, %v685
      %p696 = scmp.lt.s32.totalorder %s19, 1
      %s697 = scalar_select %p696, %s19, 1
      %p698 = scmp.lt.s32.totalorder %s20, 7
      %s699 = scalar_select %p698, %s20, 7
      %s700 = smul.addr %s699, 8
      %s701 = smul.addr %s697, 64
      %s702 = sadd.s32 %s700, %s701
      %s703 = smul.addr %s702, 8
      %s704 = scalar_lea.vmem %s4, %s703
      // Predicated region
      $region37: #{fwd.31} parent=35 // pred_check
        %p705 = pneg %p157
      $region38: #{fwd.31} parent=35 // pred_check_branch
        %707 = sbr.rel (%p705) target = $region40
      $region39: #{fwd.31} parent=35 // pred_region
        _
      $region40: #{fwd.31} parent=35 // pred_fallthru
        _
    $region36: #{fwd.31} parent=5 // pred_fallthru
      _
    %p708 = scmp.le.s32.totalorder 2, %s10
    // Predicated region
    $region41: #{fwd.31} parent=5 // pred_check
      %p709 = pneg %p708
    $region42: #{fwd.31} parent=5 // pred_check_branch
      %711 = sbr.rel (%p709) target = $region44
    $region43: #{fwd.31} parent=5 // pred_region
      %s712 = ssub.s32 %s10, 2
      // Predicated region
      $region45: #{fwd.31} parent=43 // pred_check
        %p713 = pneg %p163
      $region46: #{fwd.31} parent=43 // pred_check_branch
        %715 = sbr.rel (%p713) target = $region48
      $region47: #{fwd.31} parent=43 // pred_region
        %p716 = scmp.lt.s32.totalorder %s21, 1
        %s717 = scalar_select %p716, %s21, 1
        %p718 = scmp.lt.s32.totalorder %s22, 7
        %s719 = scalar_select %p718, %s22, 7
        %s720 = smul.addr %s719, 8
        %s721 = smul.addr %s717, 64
        %s722 = sadd.s32 %s720, %s721
        %s723 = smul.addr %s722, 8
        %s724 = scalar_lea.vmem %s4, %s723
      $region48: #{fwd.31} parent=43 // pred_fallthru
        _
    $region44: #{fwd.31} parent=5 // pred_fallthru
      _
  $region6: #{fwd.31} parent=0 // loop_footer
    %s14 = sadd.s32 1, %s10
  $region7: #{fwd.31} parent=0 // loop_footer_branch
    %9 = sbr.rel target = $region3
  $region8: #{fwd.31} parent=0 // loop_exit
    _

// kernel: fwd.33
$region0: #{fwd.33}
  #allocation0 [shape = 'u32[]', space=smem, size = 0x4, offset = 0x4, fixed_abs, tag = 'smem constant byte address 0x4 - core index']
  #allocation1 [shape = 'u32[144,128]{1,0:T(1,128)}', space=vmem, size = 0x12000, scoped, tag = 'internal scratch']
  %s0 = inlined_call_operand.vmem [shape: f32[128,256], index: 0, kind: input, shape index: {}]
  %s1 = inlined_call_operand.vmem [shape: f32[128,256], index: 1, kind: input, shape index: {}]
  %s2 = inlined_call_operand.vmem [shape: f32[1,256], index: 2, kind: input, shape index: {}]
  %s3 = inlined_call_operand.vmem [shape: f32[1,256], index: 3, kind: input, shape index: {}]
  %s4 = inlined_call_operand.vmem [shape: f32[128,256], index: 4, kind: output, shape index: {}]
  %s5 = sld [smem:[#allocation0]]
  $region26: #{fwd.33} parent=0
    _
  %s7 = ssub.s32 1, %s5
  %s8 = scalar_select 0, %s7, %s5
  // Predicated region
  $region2: #{fwd.33} parent=0 // pred_check
    _
  $region3: #{fwd.33} parent=0 // pred_check_branch
    %10 = sbr.rel (0) target = $region5
  $region4: #{fwd.33} parent=0 // pred_region
    _
  $region5: #{fwd.33} parent=0 // pred_fallthru
    _
  // Predicated region
  $region6: #{fwd.33} parent=0 // pred_check
    _
  $region7: #{fwd.33} parent=0 // pred_check_branch
    %12 = sbr.rel (0) target = $region9
  $region8: #{fwd.33} parent=0 // pred_region
    _
  $region9: #{fwd.33} parent=0 // pred_fallthru
    _
  // Predicated region
  $region10: #{fwd.33} parent=0 // pred_check
    _
  $region11: #{fwd.33} parent=0 // pred_check_branch
    %14 = sbr.rel (0) target = $region13
  $region12: #{fwd.33} parent=0 // pred_region
    _
  $region13: #{fwd.33} parent=0 // pred_fallthru
    _
  // Predicated region
  $region14: #{fwd.33} parent=0 // pred_check
    _
  $region15: #{fwd.33} parent=0 // pred_check_branch
    %16 = sbr.rel (0) target = $region17
  $region16: #{fwd.33} parent=0 // pred_region
    _
  $region17: #{fwd.33} parent=0 // pred_fallthru
    _
  %v17 = vld [vmem:[%s0] sm:$0xff]
  %v18 = vld [vmem:[%s0 + $0x8] sm:$0xff]
  %v19 = vld [vmem:[%s0 + $0x10] sm:$0xff]
  %v20 = vld [vmem:[%s0 + $0x18] sm:$0xff]
  %v21 = vld [vmem:[%s0 + $0x20] sm:$0xff]
  %v22 = vld [vmem:[%s0 + $0x28] sm:$0xff]
  %v23 = vld [vmem:[%s0 + $0x30] sm:$0xff]
  %v24 = vld [vmem:[%s0 + $0x38] sm:$0xff]
  %v25 = vld [vmem:[%s0 + $0x40] sm:$0xff]
  %v26 = vld [vmem:[%s0 + $0x48] sm:$0xff]
  %v27 = vld [vmem:[%s0 + $0x50] sm:$0xff]
  %v28 = vld [vmem:[%s0 + $0x58] sm:$0xff]
  %v29 = vld [vmem:[%s0 + $0x60] sm:$0xff]
  %v30 = vld [vmem:[%s0 + $0x68] sm:$0xff]
  %v31 = vld [vmem:[%s0 + $0x70] sm:$0xff]
  %v32 = vld [vmem:[%s0 + $0x78] sm:$0xff]
  %v33 = vld [vmem:[%s0 + $0x80] sm:$0xff]
  %v34 = vld [vmem:[%s0 + $0x88] sm:$0xff]
  %v35 = vld [vmem:[%s0 + $0x90] sm:$0xff]
  %v36 = vld [vmem:[%s0 + $0x98] sm:$0xff]
  %v37 = vld [vmem:[%s0 + $0xa0] sm:$0xff]
  %v38 = vld [vmem:[%s0 + $0xa8] sm:$0xff]
  %v39 = vld [vmem:[%s0 + $0xb0] sm:$0xff]
  %v40 = vld [vmem:[%s0 + $0xb8] sm:$0xff]
  %v41 = vld [vmem:[%s0 + $0xc0] sm:$0xff]
  %v42 = vld [vmem:[%s0 + $0xc8] sm:$0xff]
  %v43 = vld [vmem:[%s0 + $0xd0] sm:$0xff]
  %v44 = vld [vmem:[%s0 + $0xd8] sm:$0xff]
  %v45 = vld [vmem:[%s0 + $0xe0] sm:$0xff]
  %v46 = vld [vmem:[%s0 + $0xe8] sm:$0xff]
  %v47 = vld [vmem:[%s0 + $0xf0] sm:$0xff]
  %v48 = vld [vmem:[%s0 + $0xf8] sm:$0xff]
  %v49 = vld [vmem:[%s1] sm:$0xff]
  %v50 = vld [vmem:[%s1 + $0x8] sm:$0xff]
  %v51 = vld [vmem:[%s1 + $0x10] sm:$0xff]
  %v52 = vld [vmem:[%s1 + $0x18] sm:$0xff]
  %v53 = vld [vmem:[%s1 + $0x20] sm:$0xff]
  %v54 = vld [vmem:[%s1 + $0x28] sm:$0xff]
  %v55 = vld [vmem:[%s1 + $0x30] sm:$0xff]
  %v56 = vld [vmem:[%s1 + $0x38] sm:$0xff]
  %v57 = vld [vmem:[%s1 + $0x40] sm:$0xff]
  %v58 = vld [vmem:[%s1 + $0x48] sm:$0xff]
  %v59 = vld [vmem:[%s1 + $0x50] sm:$0xff]
  %v60 = vld [vmem:[%s1 + $0x58] sm:$0xff]
  %v61 = vld [vmem:[%s1 + $0x60] sm:$0xff]
  %v62 = vld [vmem:[%s1 + $0x68] sm:$0xff]
  %v63 = vld [vmem:[%s1 + $0x70] sm:$0xff]
  %v64 = vld [vmem:[%s1 + $0x78] sm:$0xff]
  %v65 = vld [vmem:[%s1 + $0x80] sm:$0xff]
  %v66 = vld [vmem:[%s1 + $0x88] sm:$0xff]
  %v67 = vld [vmem:[%s1 + $0x90] sm:$0xff]
  %v68 = vld [vmem:[%s1 + $0x98] sm:$0xff]
  %v69 = vld [vmem:[%s1 + $0xa0] sm:$0xff]
  %v70 = vld [vmem:[%s1 + $0xa8] sm:$0xff]
  %v71 = vld [vmem:[%s1 + $0xb0] sm:$0xff]
  %v72 = vld [vmem:[%s1 + $0xb8] sm:$0xff]
  %v73 = vld [vmem:[%s1 + $0xc0] sm:$0xff]
  %v74 = vld [vmem:[%s1 + $0xc8] sm:$0xff]
  %v75 = vld [vmem:[%s1 + $0xd0] sm:$0xff]
  %v76 = vld [vmem:[%s1 + $0xd8] sm:$0xff]
  %v77 = vld [vmem:[%s1 + $0xe0] sm:$0xff]
  %v78 = vld [vmem:[%s1 + $0xe8] sm:$0xff]
  %v79 = vld [vmem:[%s1 + $0xf0] sm:$0xff]
  %v80 = vld [vmem:[%s1 + $0xf8] sm:$0xff]
  %v81 = vadd.f32 %v17, %v49
  %v82 = vadd.f32 %v18, %v50
  %v83 = vadd.f32 %v19, %v51
  %v84 = vadd.f32 %v20, %v52
  %v85 = vadd.f32 %v21, %v53
  %v86 = vadd.f32 %v22, %v54
  %v87 = vadd.f32 %v23, %v55
  %v88 = vadd.f32 %v24, %v56
  %v89 = vadd.f32 %v25, %v57
  %v90 = vadd.f32 %v26, %v58
  %v91 = vadd.f32 %v27, %v59
  %v92 = vadd.f32 %v28, %v60
  %v93 = vadd.f32 %v29, %v61
  %v94 = vadd.f32 %v30, %v62
  %v95 = vadd.f32 %v31, %v63
  %v96 = vadd.f32 %v32, %v64
  %v97 = vadd.f32 %v33, %v65
  %v98 = vadd.f32 %v34, %v66
  %v99 = vadd.f32 %v35, %v67
  %v100 = vadd.f32 %v36, %v68
  %v101 = vadd.f32 %v37, %v69
  %v102 = vadd.f32 %v38, %v70
  %v103 = vadd.f32 %v39, %v71
  %v104 = vadd.f32 %v40, %v72
  %v105 = vadd.f32 %v41, %v73
  %v106 = vadd.f32 %v42, %v74
  %v107 = vadd.f32 %v43, %v75
  %v108 = vadd.f32 %v44, %v76
  %v109 = vadd.f32 %v45, %v77
  %v110 = vadd.f32 %v46, %v78
  %v111 = vadd.f32 %v47, %v79
  %v112 = vadd.f32 %v48, %v80
  %v113 = vadd.f32 %v81, %v82
  %114 = vadd.xlane.f32.xlu0 %v113
  %v115 = vpop.xlane.xlu0 %114
  %v116 = vadd.f32 %v83, %v84
  %117 = vadd.xlane.f32.xlu0 %v116
  %v118 = vpop.xlane.xlu0 %117
  %v119 = vadd.f32 %v85, %v86
  %120 = vadd.xlane.f32.xlu0 %v119
  %v121 = vpop.xlane.xlu0 %120
  %v122 = vadd.f32 %v87, %v88
  %123 = vadd.xlane.f32.xlu0 %v122
  %v124 = vpop.xlane.xlu0 %123
  %v125 = vadd.f32 %v89, %v90
  %126 = vadd.xlane.f32.xlu0 %v125
  %v127 = vpop.xlane.xlu0 %126
  %v128 = vadd.f32 %v91, %v92
  %129 = vadd.xlane.f32.xlu0 %v128
  %v130 = vpop.xlane.xlu0 %129
  %v131 = vadd.f32 %v93, %v94
  %132 = vadd.xlane.f32.xlu0 %v131
  %v133 = vpop.xlane.xlu0 %132
  %v134 = vadd.f32 %v95, %v96
  %135 = vadd.xlane.f32.xlu0 %v134
  %v136 = vpop.xlane.xlu0 %135
  %v137 = vadd.f32 %v97, %v98
  %138 = vadd.xlane.f32.xlu0 %v137
  %v139 = vpop.xlane.xlu0 %138
  %v140 = vadd.f32 %v99, %v100
  %141 = vadd.xlane.f32.xlu0 %v140
  %v142 = vpop.xlane.xlu0 %141
  %v143 = vadd.f32 %v101, %v102
  %144 = vadd.xlane.f32.xlu0 %v143
  %v145 = vpop.xlane.xlu0 %144
  %v146 = vadd.f32 %v103, %v104
  %147 = vadd.xlane.f32.xlu0 %v146
  %v148 = vpop.xlane.xlu0 %147
  %v149 = vadd.f32 %v105, %v106
  %150 = vadd.xlane.f32.xlu0 %v149
  %v151 = vpop.xlane.xlu0 %150
  %v152 = vadd.f32 %v107, %v108
  %153 = vadd.xlane.f32.xlu0 %v152
  %v154 = vpop.xlane.xlu0 %153
  %v155 = vadd.f32 %v109, %v110
  %156 = vadd.xlane.f32.xlu0 %v155
  %v157 = vpop.xlane.xlu0 %156
  %v158 = vadd.f32 %v111, %v112
  %159 = vadd.xlane.f32.xlu0 %v158
  %v160 = vpop.xlane.xlu0 %159
  %v161 = vrcp.pop 256.0
  %v162 = vmul.f32 %v115, %v161
  %v163 = vmul.f32 %v118, %v161
  %v164 = vmul.f32 %v121, %v161
  %v165 = vmul.f32 %v124, %v161
  %v166 = vmul.f32 %v127, %v161
  %v167 = vmul.f32 %v130, %v161
  %v168 = vmul.f32 %v133, %v161
  %v169 = vmul.f32 %v136, %v161
  %v170 = vmul.f32 %v139, %v161
  %v171 = vmul.f32 %v142, %v161
  %v172 = vmul.f32 %v145, %v161
  %v173 = vmul.f32 %v148, %v161
  %v174 = vmul.f32 %v151, %v161
  %v175 = vmul.f32 %v154, %v161
  %v176 = vmul.f32 %v157, %v161
  %v177 = vmul.f32 %v160, %v161
  %v178 = vsub.f32 %v81, %v162
  %v179 = vsub.f32 %v82, %v162
  %v180 = vsub.f32 %v83, %v163
  %v181 = vsub.f32 %v84, %v163
  %v182 = vsub.f32 %v85, %v164
  %v183 = vsub.f32 %v86, %v164
  %v184 = vsub.f32 %v87, %v165
  %v185 = vsub.f32 %v88, %v165
  %v186 = vsub.f32 %v89, %v166
  %v187 = vsub.f32 %v90, %v166
  %v188 = vsub.f32 %v91, %v167
  %v189 = vsub.f32 %v92, %v167
  %v190 = vsub.f32 %v93, %v168
  %v191 = vsub.f32 %v94, %v168
  %v192 = vsub.f32 %v95, %v169
  %v193 = vsub.f32 %v96, %v169
  %v194 = vsub.f32 %v97, %v170
  %v195 = vsub.f32 %v98, %v170
  %v196 = vsub.f32 %v99, %v171
  %v197 = vsub.f32 %v100, %v171
  %v198 = vsub.f32 %v101, %v172
  %v199 = vsub.f32 %v102, %v172
  %v200 = vsub.f32 %v103, %v173
  %v201 = vsub.f32 %v104, %v173
  %v202 = vsub.f32 %v105, %v174
  %v203 = vsub.f32 %v106, %v174
  %v204 = vsub.f32 %v107, %v175
  %v205 = vsub.f32 %v108, %v175
  %v206 = vsub.f32 %v109, %v176
  %v207 = vsub.f32 %v110, %v176
  %v208 = vsub.f32 %v111, %v177
  %v209 = vsub.f32 %v112, %v177
  %v210 = vmul.f32 %v178, %v178
  %v211 = vmul.f32 %v179, %v179
  %v212 = vmul.f32 %v180, %v180
  %v213 = vmul.f32 %v181, %v181
  %v214 = vmul.f32 %v182, %v182
  %v215 = vmul.f32 %v183, %v183
  %v216 = vmul.f32 %v184, %v184
  %v217 = vmul.f32 %v185, %v185
  %v218 = vmul.f32 %v186, %v186
  %v219 = vmul.f32 %v187, %v187
  %v220 = vmul.f32 %v188, %v188
  %v221 = vmul.f32 %v189, %v189
  %v222 = vmul.f32 %v190, %v190
  %v223 = vmul.f32 %v191, %v191
  %v224 = vmul.f32 %v192, %v192
  %v225 = vmul.f32 %v193, %v193
  %v226 = vmul.f32 %v194, %v194
  %v227 = vmul.f32 %v195, %v195
  %v228 = vmul.f32 %v196, %v196
  %v229 = vmul.f32 %v197, %v197
  %v230 = vmul.f32 %v198, %v198
  %v231 = vmul.f32 %v199, %v199
  %v232 = vmul.f32 %v200, %v200
  %v233 = vmul.f32 %v201, %v201
  %v234 = vmul.f32 %v202, %v202
  %v235 = vmul.f32 %v203, %v203
  %v236 = vmul.f32 %v204, %v204
  %v237 = vmul.f32 %v205, %v205
  %v238 = vmul.f32 %v206, %v206
  %v239 = vmul.f32 %v207, %v207
  %v240 = vmul.f32 %v208, %v208
  %v241 = vmul.f32 %v209, %v209
  %v242 = vadd.f32 %v210, %v211
  %243 = vadd.xlane.f32.xlu0 %v242
  %v244 = vpop.xlane.xlu0 %243
  %v245 = vadd.f32 %v212, %v213
  %246 = vadd.xlane.f32.xlu0 %v245
  %v247 = vpop.xlane.xlu0 %246
  %v248 = vadd.f32 %v214, %v215
  %249 = vadd.xlane.f32.xlu0 %v248
  %v250 = vpop.xlane.xlu0 %249
  %v251 = vadd.f32 %v216, %v217
  %252 = vadd.xlane.f32.xlu0 %v251
  %v253 = vpop.xlane.xlu0 %252
  %v254 = vadd.f32 %v218, %v219
  %255 = vadd.xlane.f32.xlu0 %v254
  %v256 = vpop.xlane.xlu0 %255
  %v257 = vadd.f32 %v220, %v221
  %258 = vadd.xlane.f32.xlu0 %v257
  %v259 = vpop.xlane.xlu0 %258
  %v260 = vadd.f32 %v222, %v223
  %261 = vadd.xlane.f32.xlu0 %v260
  %v262 = vpop.xlane.xlu0 %261
  %v263 = vadd.f32 %v224, %v225
  %264 = vadd.xlane.f32.xlu0 %v263
  %v265 = vpop.xlane.xlu0 %264
  %v266 = vadd.f32 %v226, %v227
  %267 = vadd.xlane.f32.xlu0 %v266
  %v268 = vpop.xlane.xlu0 %267
  %v269 = vadd.f32 %v228, %v229
  %270 = vadd.xlane.f32.xlu0 %v269
  %v271 = vpop.xlane.xlu0 %270
  %v272 = vadd.f32 %v230, %v231
  %273 = vadd.xlane.f32.xlu0 %v272
  %v274 = vpop.xlane.xlu0 %273
  %v275 = vadd.f32 %v232, %v233
  %276 = vadd.xlane.f32.xlu0 %v275
  %v277 = vpop.xlane.xlu0 %276
  %v278 = vadd.f32 %v234, %v235
  %279 = vadd.xlane.f32.xlu0 %v278
  %v280 = vpop.xlane.xlu0 %279
  %v281 = vadd.f32 %v236, %v237
  %282 = vadd.xlane.f32.xlu0 %v281
  %v283 = vpop.xlane.xlu0 %282
  %v284 = vadd.f32 %v238, %v239
  %285 = vadd.xlane.f32.xlu0 %v284
  %v286 = vpop.xlane.xlu0 %285
  %v287 = vadd.f32 %v240, %v241
  %288 = vadd.xlane.f32.xlu0 %v287
  %v289 = vpop.xlane.xlu0 %288
  %v290 = vmul.f32 %v244, %v161
  %v291 = vmul.f32 %v247, %v161
  %v292 = vmul.f32 %v250, %v161
  %v293 = vmul.f32 %v253, %v161
  %v294 = vmul.f32 %v256, %v161
  %v295 = vmul.f32 %v259, %v161
  %v296 = vmul.f32 %v262, %v161
  %v297 = vmul.f32 %v265, %v161
  %v298 = vmul.f32 %v268, %v161
  %v299 = vmul.f32 %v271, %v161
  %v300 = vmul.f32 %v274, %v161
  %v301 = vmul.f32 %v277, %v161
  %v302 = vmul.f32 %v280, %v161
  %v303 = vmul.f32 %v283, %v161
  %v304 = vmul.f32 %v286, %v161
  %v305 = vmul.f32 %v289, %v161
  %v306 = vadd.f32 %v290, 1e-05
  %v307 = vadd.f32 %v291, 1e-05
  %v308 = vadd.f32 %v292, 1e-05
  %v309 = vadd.f32 %v293, 1e-05
  %v310 = vadd.f32 %v294, 1e-05
  %v311 = vadd.f32 %v295, 1e-05
  %v312 = vadd.f32 %v296, 1e-05
  %v313 = vadd.f32 %v297, 1e-05
  %v314 = vadd.f32 %v298, 1e-05
  %v315 = vadd.f32 %v299, 1e-05
  %v316 = vadd.f32 %v300, 1e-05
  %v317 = vadd.f32 %v301, 1e-05
  %v318 = vadd.f32 %v302, 1e-05
  %v319 = vadd.f32 %v303, 1e-05
  %v320 = vadd.f32 %v304, 1e-05
  %v321 = vadd.f32 %v305, 1e-05
  %v322 = vrsqrt.pop %v306
  %v323 = vrsqrt.pop %v307
  %v324 = vrsqrt.pop %v308
  %v325 = vrsqrt.pop %v309
  %v326 = vrsqrt.pop %v310
  %v327 = vrsqrt.pop %v311
  %v328 = vrsqrt.pop %v312
  %v329 = vrsqrt.pop %v313
  %v330 = vrsqrt.pop %v314
  %v331 = vrsqrt.pop %v315
  %v332 = vrsqrt.pop %v316
  %v333 = vrsqrt.pop %v317
  %v334 = vrsqrt.pop %v318
  %v335 = vrsqrt.pop %v319
  %v336 = vrsqrt.pop %v320
  %v337 = vrsqrt.pop %v321
  %v338 = vmul.f32 %v178, %v322
  %v339 = vmul.f32 %v179, %v322
  %v340 = vmul.f32 %v180, %v323
  %v341 = vmul.f32 %v181, %v323
  %v342 = vmul.f32 %v182, %v324
  %v343 = vmul.f32 %v183, %v324
  %v344 = vmul.f32 %v184, %v325
  %v345 = vmul.f32 %v185, %v325
  %v346 = vmul.f32 %v186, %v326
  %v347 = vmul.f32 %v187, %v326
  %v348 = vmul.f32 %v188, %v327
  %v349 = vmul.f32 %v189, %v327
  %v350 = vmul.f32 %v190, %v328
  %v351 = vmul.f32 %v191, %v328
  %v352 = vmul.f32 %v192, %v329
  %v353 = vmul.f32 %v193, %v329
  %v354 = vmul.f32 %v194, %v330
  %v355 = vmul.f32 %v195, %v330
  %v356 = vmul.f32 %v196, %v331
  %v357 = vmul.f32 %v197, %v331
  %v358 = vmul.f32 %v198, %v332
  %v359 = vmul.f32 %v199, %v332
  %v360 = vmul.f32 %v200, %v333
  %v361 = vmul.f32 %v201, %v333
  %v362 = vmul.f32 %v202, %v334
  %v363 = vmul.f32 %v203, %v334
  %v364 = vmul.f32 %v204, %v335
  %v365 = vmul.f32 %v205, %v335
  %v366 = vmul.f32 %v206, %v336
  %v367 = vmul.f32 %v207, %v336
  %v368 = vmul.f32 %v208, %v337
  %v369 = vmul.f32 %v209, %v337
  %v370 = vld [vmem:[%s2] sm:$0x3]
  %v372 = vlaneseq
  %v373 = vshrl.u32 %v372, 7
  %v374 = vsub.s32 0, %v373
  %v375 = vrot.slane %v370, %v374
  %v376 = vlaneseq
  %v377 = vshrl.u32 %v376, 7
  %v378 = vsub.s32 1, %v377
  %v379 = vrot.slane %v370, %v378
  %v382 = vmul.f32 %v338, %v375
  %v383 = vmul.f32 %v339, %v379
  %v384 = vmul.f32 %v340, %v375
  %v385 = vmul.f32 %v341, %v379
  %v386 = vmul.f32 %v342, %v375
  %v387 = vmul.f32 %v343, %v379
  %v388 = vmul.f32 %v344, %v375
  %v389 = vmul.f32 %v345, %v379
  %v390 = vmul.f32 %v346, %v375
  %v391 = vmul.f32 %v347, %v379
  %v392 = vmul.f32 %v348, %v375
  %v393 = vmul.f32 %v349, %v379
  %v394 = vmul.f32 %v350, %v375
  %v395 = vmul.f32 %v351, %v379
  %v396 = vmul.f32 %v352, %v375
  %v397 = vmul.f32 %v353, %v379
  %v398 = vmul.f32 %v354, %v375
  %v399 = vmul.f32 %v355, %v379
  %v400 = vmul.f32 %v356, %v375
  %v401 = vmul.f32 %v357, %v379
  %v402 = vmul.f32 %v358, %v375
  %v403 = vmul.f32 %v359, %v379
  %v404 = vmul.f32 %v360, %v375
  %v405 = vmul.f32 %v361, %v379
  %v406 = vmul.f32 %v362, %v375
  %v407 = vmul.f32 %v363, %v379
  %v408 = vmul.f32 %v364, %v375
  %v409 = vmul.f32 %v365, %v379
  %v410 = vmul.f32 %v366, %v375
  %v411 = vmul.f32 %v367, %v379
  %v412 = vmul.f32 %v368, %v375
  %v413 = vmul.f32 %v369, %v379
  %v414 = vld [vmem:[%s3] sm:$0x3]
  %v416 = vlaneseq
  %v417 = vshrl.u32 %v416, 7
  %v418 = vsub.s32 0, %v417
  %v419 = vrot.slane %v414, %v418
  %v420 = vlaneseq
  %v421 = vshrl.u32 %v420, 7
  %v422 = vsub.s32 1, %v421
  %v423 = vrot.slane %v414, %v422
  %v426 = vadd.f32 %v382, %v419
  %v427 = vadd.f32 %v383, %v423
  %v428 = vadd.f32 %v384, %v419
  %v429 = vadd.f32 %v385, %v423
  %v430 = vadd.f32 %v386, %v419
  %v431 = vadd.f32 %v387, %v423
  %v432 = vadd.f32 %v388, %v419
  %v433 = vadd.f32 %v389, %v423
  %v434 = vadd.f32 %v390, %v419
  %v435 = vadd.f32 %v391, %v423
  %v436 = vadd.f32 %v392, %v419
  %v437 = vadd.f32 %v393, %v423
  %v438 = vadd.f32 %v394, %v419
  %v439 = vadd.f32 %v395, %v423
  %v440 = vadd.f32 %v396, %v419
  %v441 = vadd.f32 %v397, %v423
  %v442 = vadd.f32 %v398, %v419
  %v443 = vadd.f32 %v399, %v423
  %v444 = vadd.f32 %v400, %v419
  %v445 = vadd.f32 %v401, %v423
  %v446 = vadd.f32 %v402, %v419
  %v447 = vadd.f32 %v403, %v423
  %v448 = vadd.f32 %v404, %v419
  %v449 = vadd.f32 %v405, %v423
  %v450 = vadd.f32 %v406, %v419
  %v451 = vadd.f32 %v407, %v423
  %v452 = vadd.f32 %v408, %v419
  %v453 = vadd.f32 %v409, %v423
  %v454 = vadd.f32 %v410, %v419
  %v455 = vadd.f32 %v411, %v423
  %v456 = vadd.f32 %v412, %v419
  %v457 = vadd.f32 %v413, %v423
  %458 = vst [vmem:[%s4] sm:$0xff] %v426
  %459 = vst [vmem:[%s4 + $0x8] sm:$0xff] %v427
  %460 = vst [vmem:[%s4 + $0x10] sm:$0xff] %v428
  %461 = vst [vmem:[%s4 + $0x18] sm:$0xff] %v429
  %462 = vst [vmem:[%s4 + $0x20] sm:$0xff] %v430
  %463 = vst [vmem:[%s4 + $0x28] sm:$0xff] %v431
  %464 = vst [vmem:[%s4 + $0x30] sm:$0xff] %v432
  %465 = vst [vmem:[%s4 + $0x38] sm:$0xff] %v433
  %466 = vst [vmem:[%s4 + $0x40] sm:$0xff] %v434
  %467 = vst [vmem:[%s4 + $0x48] sm:$0xff] %v435
  %468 = vst [vmem:[%s4 + $0x50] sm:$0xff] %v436
  %469 = vst [vmem:[%s4 + $0x58] sm:$0xff] %v437
  %470 = vst [vmem:[%s4 + $0x60] sm:$0xff] %v438
  %471 = vst [vmem:[%s4 + $0x68] sm:$0xff] %v439
  %472 = vst [vmem:[%s4 + $0x70] sm:$0xff] %v440
  %473 = vst [vmem:[%s4 + $0x78] sm:$0xff] %v441
  %474 = vst [vmem:[%s4 + $0x80] sm:$0xff] %v442
  %475 = vst [vmem:[%s4 + $0x88] sm:$0xff] %v443
  %476 = vst [vmem:[%s4 + $0x90] sm:$0xff] %v444
  %477 = vst [vmem:[%s4 + $0x98] sm:$0xff] %v445
  %478 = vst [vmem:[%s4 + $0xa0] sm:$0xff] %v446
  %479 = vst [vmem:[%s4 + $0xa8] sm:$0xff] %v447
  %480 = vst [vmem:[%s4 + $0xb0] sm:$0xff] %v448
  %481 = vst [vmem:[%s4 + $0xb8] sm:$0xff] %v449
  %482 = vst [vmem:[%s4 + $0xc0] sm:$0xff] %v450
  %483 = vst [vmem:[%s4 + $0xc8] sm:$0xff] %v451
  %484 = vst [vmem:[%s4 + $0xd0] sm:$0xff] %v452
  %485 = vst [vmem:[%s4 + $0xd8] sm:$0xff] %v453
  %486 = vst [vmem:[%s4 + $0xe0] sm:$0xff] %v454
  %487 = vst [vmem:[%s4 + $0xe8] sm:$0xff] %v455
  %488 = vst [vmem:[%s4 + $0xf0] sm:$0xff] %v456
  %489 = vst [vmem:[%s4 + $0xf8] sm:$0xff] %v457
  // Predicated region
  $region18: #{fwd.33} parent=0 // pred_check
    _
  $region19: #{fwd.33} parent=0 // pred_check_branch
    %491 = sbr.rel (0) target = $region21
  $region20: #{fwd.33} parent=0 // pred_region
    _
  $region21: #{fwd.33} parent=0 // pred_fallthru
    _
  // Predicated region
  $region22: #{fwd.33} parent=0 // pred_check
    _
  $region23: #{fwd.33} parent=0 // pred_check_branch
    %493 = sbr.rel (0) target = $region25
  $region24: #{fwd.33} parent=0 // pred_region
    _
  $region25: #{fwd.33} parent=0 // pred_fallthru
    _

// kernel: fwd.35
$region0: #{fwd.35}
  #allocation0 [shape = 'u32[]', space=smem, size = 0x4, offset = 0x4, fixed_abs, tag = 'smem constant byte address 0x4 - core index']
  #allocation1 [shape = 'u32[144,128]{1,0:T(1,128)}', space=vmem, size = 0x12000, scoped, tag = 'internal scratch']
  #allocation2 [shape = 'f32[64,256]{1,0:T(8,128)}', space=vmem, size = 0x10000, scoped, tag = 'scratch operand']
  %s0 = inlined_call_operand.vmem [shape: bf16[64,256], index: 0, kind: input, shape index: {}]
  %s1 = inlined_call_operand.vmem [shape: bf16[256,256], index: 1, kind: input, shape index: {}]
  %s2 = inlined_call_operand.vmem [shape: f32[1,256], index: 2, kind: input, shape index: {}]
  %s3 = inlined_call_operand.vmem [shape: f32[64,256], index: 3, kind: output, shape index: {}]
  %s4 = sld [smem:[#allocation0]]
  $region30: #{fwd.35} parent=0
    _
  %s6 = ssub.s32 1, %s4
  %s7 = scalar_select 0, %s6, %s4
  // Predicated region
  $region2: #{fwd.35} parent=0 // pred_check
    _
  $region3: #{fwd.35} parent=0 // pred_check_branch
    %9 = sbr.rel (0) target = $region5
  $region4: #{fwd.35} parent=0 // pred_region
    _
  $region5: #{fwd.35} parent=0 // pred_fallthru
    _
  // Predicated region
  $region6: #{fwd.35} parent=0 // pred_check
    _
  $region7: #{fwd.35} parent=0 // pred_check_branch
    %11 = sbr.rel (0) target = $region9
  $region8: #{fwd.35} parent=0 // pred_region
    _
  $region9: #{fwd.35} parent=0 // pred_fallthru
    _
  // Predicated region
  $region10: #{fwd.35} parent=0 // pred_check
    _
  $region11: #{fwd.35} parent=0 // pred_check_branch
    %13 = sbr.rel (0) target = $region13
  $region12: #{fwd.35} parent=0 // pred_region
    _
  $region13: #{fwd.35} parent=0 // pred_fallthru
    _
  %p14 = scmp.eq.s32.totalorder 0, 0
  // Predicated region
  $region14: #{fwd.35} parent=0 // pred_check
    %p15 = pneg %p14
  $region15: #{fwd.35} parent=0 // pred_check_branch
    %17 = sbr.rel (%p15) target = $region17
  $region16: #{fwd.35} parent=0 // pred_region
    %18 = vst [vmem:[#allocation2] sm:$0xff] 0.0
    %19 = vst [vmem:[#allocation2 + $0x8] sm:$0xff] 0.0
    %20 = vst [vmem:[#allocation2 + $0x10] sm:$0xff] 0.0
    %21 = vst [vmem:[#allocation2 + $0x18] sm:$0xff] 0.0
    %22 = vst [vmem:[#allocation2 + $0x20] sm:$0xff] 0.0
    %23 = vst [vmem:[#allocation2 + $0x28] sm:$0xff] 0.0
    %24 = vst [vmem:[#allocation2 + $0x30] sm:$0xff] 0.0
    %25 = vst [vmem:[#allocation2 + $0x38] sm:$0xff] 0.0
    %26 = vst [vmem:[#allocation2 + $0x40] sm:$0xff] 0.0
    %27 = vst [vmem:[#allocation2 + $0x48] sm:$0xff] 0.0
    %28 = vst [vmem:[#allocation2 + $0x50] sm:$0xff] 0.0
    %29 = vst [vmem:[#allocation2 + $0x58] sm:$0xff] 0.0
    %30 = vst [vmem:[#allocation2 + $0x60] sm:$0xff] 0.0
    %31 = vst [vmem:[#allocation2 + $0x68] sm:$0xff] 0.0
    %32 = vst [vmem:[#allocation2 + $0x70] sm:$0xff] 0.0
    %33 = vst [vmem:[#allocation2 + $0x78] sm:$0xff] 0.0
  $region17: #{fwd.35} parent=0 // pred_fallthru
    _
  %v34 = vld [vmem:[#allocation2] sm:$0xff]
  %v35 = vld [vmem:[#allocation2 + $0x8] sm:$0xff]
  %v36 = vld [vmem:[#allocation2 + $0x10] sm:$0xff]
  %v37 = vld [vmem:[#allocation2 + $0x18] sm:$0xff]
  %v38 = vld [vmem:[#allocation2 + $0x20] sm:$0xff]
  %v39 = vld [vmem:[#allocation2 + $0x28] sm:$0xff]
  %v40 = vld [vmem:[#allocation2 + $0x30] sm:$0xff]
  %v41 = vld [vmem:[#allocation2 + $0x38] sm:$0xff]
  %v42 = vld [vmem:[#allocation2 + $0x40] sm:$0xff]
  %v43 = vld [vmem:[#allocation2 + $0x48] sm:$0xff]
  %v44 = vld [vmem:[#allocation2 + $0x50] sm:$0xff]
  %v45 = vld [vmem:[#allocation2 + $0x58] sm:$0xff]
  %v46 = vld [vmem:[#allocation2 + $0x60] sm:$0xff]
  %v47 = vld [vmem:[#allocation2 + $0x68] sm:$0xff]
  %v48 = vld [vmem:[#allocation2 + $0x70] sm:$0xff]
  %v49 = vld [vmem:[#allocation2 + $0x78] sm:$0xff]
  %v50 = vld [vmem:[%s0] sm:$0xff]
  %v51 = vld [vmem:[%s0 + $0x8] sm:$0xff]
  %v52 = vld [vmem:[%s0 + $0x10] sm:$0xff]
  %v53 = vld [vmem:[%s0 + $0x18] sm:$0xff]
  %v54 = vld [vmem:[%s0 + $0x20] sm:$0xff]
  %v55 = vld [vmem:[%s0 + $0x28] sm:$0xff]
  %v56 = vld [vmem:[%s0 + $0x30] sm:$0xff]
  %v57 = vld [vmem:[%s0 + $0x38] sm:$0xff]
  %v58 = vld [vmem:[%s1] sm:$0xff]
  %v59 = vld [vmem:[%s1 + $0x8] sm:$0xff]
  %v60 = vld [vmem:[%s1 + $0x10] sm:$0xff]
  %v61 = vld [vmem:[%s1 + $0x18] sm:$0xff]
  %v62 = vld [vmem:[%s1 + $0x20] sm:$0xff]
  %v63 = vld [vmem:[%s1 + $0x28] sm:$0xff]
  %v64 = vld [vmem:[%s1 + $0x30] sm:$0xff]
  %v65 = vld [vmem:[%s1 + $0x38] sm:$0xff]
  %v66 = vld [vmem:[%s1 + $0x40] sm:$0xff]
  %v67 = vld [vmem:[%s1 + $0x48] sm:$0xff]
  %v68 = vld [vmem:[%s1 + $0x50] sm:$0xff]
  %v69 = vld [vmem:[%s1 + $0x58] sm:$0xff]
  %v70 = vld [vmem:[%s1 + $0x60] sm:$0xff]
  %v71 = vld [vmem:[%s1 + $0x68] sm:$0xff]
  %v72 = vld [vmem:[%s1 + $0x70] sm:$0xff]
  %v73 = vld [vmem:[%s1 + $0x78] sm:$0xff]
  %v74 = vld [vmem:[%s1 + $0x80] sm:$0xff]
  %v75 = vld [vmem:[%s1 + $0x88] sm:$0xff]
  %v76 = vld [vmem:[%s1 + $0x90] sm:$0xff]
  %v77 = vld [vmem:[%s1 + $0x98] sm:$0xff]
  %v78 = vld [vmem:[%s1 + $0xa0] sm:$0xff]
  %v79 = vld [vmem:[%s1 + $0xa8] sm:$0xff]
  %v80 = vld [vmem:[%s1 + $0xb0] sm:$0xff]
  %v81 = vld [vmem:[%s1 + $0xb8] sm:$0xff]
  %v82 = vld [vmem:[%s1 + $0xc0] sm:$0xff]
  %v83 = vld [vmem:[%s1 + $0xc8] sm:$0xff]
  %v84 = vld [vmem:[%s1 + $0xd0] sm:$0xff]
  %v85 = vld [vmem:[%s1 + $0xd8] sm:$0xff]
  %v86 = vld [vmem:[%s1 + $0xe0] sm:$0xff]
  %v87 = vld [vmem:[%s1 + $0xe8] sm:$0xff]
  %v88 = vld [vmem:[%s1 + $0xf0] sm:$0xff]
  %v89 = vld [vmem:[%s1 + $0xf8] sm:$0xff]
  %v98 = vunpack.c.l.b16 %v50
  %v99 = vunpack.c.h.b16 %v50
  %v100 = vunpack.c.l.b16 %v51
  %v101 = vunpack.c.h.b16 %v51
  %v102 = vunpack.c.l.b16 %v52
  %v103 = vunpack.c.h.b16 %v52
  %v104 = vunpack.c.l.b16 %v53
  %v105 = vunpack.c.h.b16 %v53
  %v106 = vunpack.c.l.b16 %v54
  %v107 = vunpack.c.h.b16 %v54
  %v108 = vunpack.c.l.b16 %v55
  %v109 = vunpack.c.h.b16 %v55
  %v110 = vunpack.c.l.b16 %v56
  %v111 = vunpack.c.h.b16 %v56
  %v112 = vunpack.c.l.b16 %v57
  %v113 = vunpack.c.h.b16 %v57
  %v114 = vpack.c.b16 %v100, %v98
  %v115 = vpack.c.b16 %v101, %v99
  %v116 = vpack.c.b16 %v104, %v102
  %v117 = vpack.c.b16 %v105, %v103
  %v118 = vpack.c.b16 %v108, %v106
  %v119 = vpack.c.b16 %v109, %v107
  %v120 = vpack.c.b16 %v112, %v110
  %v121 = vpack.c.b16 %v113, %v111
  %v162 = vunpack.c.l.b16 %v58
  %v163 = vunpack.c.h.b16 %v58
  %v164 = vunpack.c.l.b16 %v59
  %v165 = vunpack.c.h.b16 %v59
  %v166 = vunpack.c.l.b16 %v60
  %v167 = vunpack.c.h.b16 %v60
  %v168 = vunpack.c.l.b16 %v61
  %v169 = vunpack.c.h.b16 %v61
  %v170 = vunpack.c.l.b16 %v62
  %v171 = vunpack.c.h.b16 %v62
  %v172 = vunpack.c.l.b16 %v63
  %v173 = vunpack.c.h.b16 %v63
  %v174 = vunpack.c.l.b16 %v64
  %v175 = vunpack.c.h.b16 %v64
  %v176 = vunpack.c.l.b16 %v65
  %v177 = vunpack.c.h.b16 %v65
  %v178 = vunpack.c.l.b16 %v66
  %v179 = vunpack.c.h.b16 %v66
  %v180 = vunpack.c.l.b16 %v67
  %v181 = vunpack.c.h.b16 %v67
  %v182 = vunpack.c.l.b16 %v68
  %v183 = vunpack.c.h.b16 %v68
  %v184 = vunpack.c.l.b16 %v69
  %v185 = vunpack.c.h.b16 %v69
  %v186 = vunpack.c.l.b16 %v70
  %v187 = vunpack.c.h.b16 %v70
  %v188 = vunpack.c.l.b16 %v71
  %v189 = vunpack.c.h.b16 %v71
  %v190 = vunpack.c.l.b16 %v72
  %v191 = vunpack.c.h.b16 %v72
  %v192 = vunpack.c.l.b16 %v73
  %v193 = vunpack.c.h.b16 %v73
  %v194 = vunpack.c.l.b16 %v74
  %v195 = vunpack.c.h.b16 %v74
  %v196 = vunpack.c.l.b16 %v75
  %v197 = vunpack.c.h.b16 %v75
  %v198 = vunpack.c.l.b16 %v76
  %v199 = vunpack.c.h.b16 %v76
  %v200 = vunpack.c.l.b16 %v77
  %v201 = vunpack.c.h.b16 %v77
  %v202 = vunpack.c.l.b16 %v78
  %v203 = vunpack.c.h.b16 %v78
  %v204 = vunpack.c.l.b16 %v79
  %v205 = vunpack.c.h.b16 %v79
  %v206 = vunpack.c.l.b16 %v80
  %v207 = vunpack.c.h.b16 %v80
  %v208 = vunpack.c.l.b16 %v81
  %v209 = vunpack.c.h.b16 %v81
  %v210 = vunpack.c.l.b16 %v82
  %v211 = vunpack.c.h.b16 %v82
  %v212 = vunpack.c.l.b16 %v83
  %v213 = vunpack.c.h.b16 %v83
  %v214 = vunpack.c.l.b16 %v84
  %v215 = vunpack.c.h.b16 %v84
  %v216 = vunpack.c.l.b16 %v85
  %v217 = vunpack.c.h.b16 %v85
  %v218 = vunpack.c.l.b16 %v86
  %v219 = vunpack.c.h.b16 %v86
  %v220 = vunpack.c.l.b16 %v87
  %v221 = vunpack.c.h.b16 %v87
  %v222 = vunpack.c.l.b16 %v88
  %v223 = vunpack.c.h.b16 %v88
  %v224 = vunpack.c.l.b16 %v89
  %v225 = vunpack.c.h.b16 %v89
  %v226 = vpack.c.b16 %v164, %v162
  %v227 = vpack.c.b16 %v165, %v163
  %v228 = vpack.c.b16 %v168, %v166
  %v229 = vpack.c.b16 %v169, %v167
  %v230 = vpack.c.b16 %v172, %v170
  %v231 = vpack.c.b16 %v173, %v171
  %v232 = vpack.c.b16 %v176, %v174
  %v233 = vpack.c.b16 %v177, %v175
  %v234 = vpack.c.b16 %v180, %v178
  %v235 = vpack.c.b16 %v181, %v179
  %v236 = vpack.c.b16 %v184, %v182
  %v237 = vpack.c.b16 %v185, %v183
  %v238 = vpack.c.b16 %v188, %v186
  %v239 = vpack.c.b16 %v189, %v187
  %v240 = vpack.c.b16 %v192, %v190
  %v241 = vpack.c.b16 %v193, %v191
  %v242 = vpack.c.b16 %v196, %v194
  %v243 = vpack.c.b16 %v197, %v195
  %v244 = vpack.c.b16 %v200, %v198
  %v245 = vpack.c.b16 %v201, %v199
  %v246 = vpack.c.b16 %v204, %v202
  %v247 = vpack.c.b16 %v205, %v203
  %v248 = vpack.c.b16 %v208, %v206
  %v249 = vpack.c.b16 %v209, %v207
  %v250 = vpack.c.b16 %v212, %v210
  %v251 = vpack.c.b16 %v213, %v211
  %v252 = vpack.c.b16 %v216, %v214
  %v253 = vpack.c.b16 %v217, %v215
  %v254 = vpack.c.b16 %v220, %v218
  %v255 = vpack.c.b16 %v221, %v219
  %v256 = vpack.c.b16 %v224, %v222
  %v257 = vpack.c.b16 %v225, %v223
  %290 = vmatprep.subr.bf16.mxu0 %v227
  %291 = vmatpush1.bf16.msra.mxu0 %v226
  %292 = vmatprep.subr.bf16.mxu0 %v229
  %293 = vmatpush1.bf16.msra.mxu0 %v228
  %294 = vmatprep.subr.bf16.mxu0 %v231
  %295 = vmatpush1.bf16.msra.mxu0 %v230
  %296 = vmatprep.subr.bf16.mxu0 %v233
  %297 = vmatpush1.bf16.msra.mxu0 %v232
  %298 = vmatprep.subr.bf16.mxu0 %v235
  %299 = vmatpush1.bf16.msra.mxu0 %v234
  %300 = vmatprep.subr.bf16.mxu0 %v237
  %301 = vmatpush1.bf16.msra.mxu0 %v236
  %302 = vmatprep.subr.bf16.mxu0 %v239
  %303 = vmatpush1.bf16.msra.mxu0 %v238
  %304 = vmatprep.subr.bf16.mxu0 %v241
  %305 = vmatpush1.bf16.msra.mxu0 %v240
  %306 = vmatprep.subr.bf16.mxu0 %v243
  %307 = vmatpush1.bf16.msra.mxu0 %v242
  %308 = vmatprep.subr.bf16.mxu0 %v245
  %309 = vmatpush1.bf16.msra.mxu0 %v244
  %310 = vmatprep.subr.bf16.mxu0 %v247
  %311 = vmatpush1.bf16.msra.mxu0 %v246
  %312 = vmatprep.subr.bf16.mxu0 %v249
  %313 = vmatpush1.bf16.msra.mxu0 %v248
  %314 = vmatprep.subr.bf16.mxu0 %v251
  %315 = vmatpush1.bf16.msra.mxu0 %v250
  %316 = vmatprep.subr.bf16.mxu0 %v253
  %317 = vmatpush1.bf16.msra.mxu0 %v252
  %318 = vmatprep.subr.bf16.mxu0 %v255
  %319 = vmatpush1.bf16.msra.mxu0 %v254
  %320 = vmatprep.subr.bf16.mxu0 %v257
  %321 = vmatpush1.bf16.msra.mxu0 %v256
  %322 = vmatprep.mubr.bf16.mxu0 %v115
  %323 = vmatmul.mubr.bf16.gmra.mrb[0].mxu0 %v114
  %v324 = vpop.f32.mrb[0].mxu0
  %v325 = vadd.f32 0.0, %v324
  %v326 = vpop.f32.mrb[0].mxu0
  %v327 = vadd.f32 0.0, %v326
  %v328 = vpop.f32.mrb[0].mxu0
  %v329 = vadd.f32 0.0, %v328
  %v330 = vpop.f32.mrb[0].mxu0
  %v331 = vadd.f32 0.0, %v330
  %332 = vmatprep.mubr.bf16.mxu0 %v117
  %333 = vmatmul.mubr.bf16.gmra.mrb[0].mxu0 %v116
  %v334 = vpop.f32.mrb[0].mxu0
  %v335 = vadd.f32 0.0, %v334
  %v336 = vpop.f32.mrb[0].mxu0
  %v337 = vadd.f32 0.0, %v336
  %v338 = vpop.f32.mrb[0].mxu0
  %v339 = vadd.f32 0.0, %v338
  %v340 = vpop.f32.mrb[0].mxu0
  %v341 = vadd.f32 0.0, %v340
  %342 = vmatprep.mubr.bf16.mxu0 %v119
  %343 = vmatmul.mubr.bf16.gmra.mrb[0].mxu0 %v118
  %v344 = vpop.f32.mrb[0].mxu0
  %v345 = vadd.f32 0.0, %v344
  %v346 = vpop.f32.mrb[0].mxu0
  %v347 = vadd.f32 0.0, %v346
  %v348 = vpop.f32.mrb[0].mxu0
  %v349 = vadd.f32 0.0, %v348
  %v350 = vpop.f32.mrb[0].mxu0
  %v351 = vadd.f32 0.0, %v350
  %352 = vmatprep.mubr.bf16.mxu0 %v121
  %353 = vmatmul.mubr.bf16.gmra.mrb[0].mxu0 %v120
  %v354 = vpop.f32.mrb[0].mxu0
  %v355 = vadd.f32 0.0, %v354
  %v356 = vpop.f32.mrb[0].mxu0
  %v357 = vadd.f32 0.0, %v356
  %v358 = vpop.f32.mrb[0].mxu0
  %v359 = vadd.f32 0.0, %v358
  %v360 = vpop.f32.mrb[0].mxu0
  %v361 = vadd.f32 0.0, %v360
  %362 = vdwg.mxu0
  %v363 = vadd.f32 %v34, %v325
  %v364 = vadd.f32 %v35, %v327
  %v365 = vadd.f32 %v36, %v329
  %v366 = vadd.f32 %v37, %v331
  %v367 = vadd.f32 %v38, %v335
  %v368 = vadd.f32 %v39, %v337
  %v369 = vadd.f32 %v40, %v339
  %v370 = vadd.f32 %v41, %v341
  %v371 = vadd.f32 %v42, %v345
  %v372 = vadd.f32 %v43, %v347
  %v373 = vadd.f32 %v44, %v349
  %v374 = vadd.f32 %v45, %v351
  %v375 = vadd.f32 %v46, %v355
  %v376 = vadd.f32 %v47, %v357
  %v377 = vadd.f32 %v48, %v359
  %v378 = vadd.f32 %v49, %v361
  %379 = vst [vmem:[#allocation2] sm:$0xff] %v363
  %380 = vst [vmem:[#allocation2 + $0x8] sm:$0xff] %v364
  %381 = vst [vmem:[#allocation2 + $0x10] sm:$0xff] %v365
  %382 = vst [vmem:[#allocation2 + $0x18] sm:$0xff] %v366
  %383 = vst [vmem:[#allocation2 + $0x20] sm:$0xff] %v367
  %384 = vst [vmem:[#allocation2 + $0x28] sm:$0xff] %v368
  %385 = vst [vmem:[#allocation2 + $0x30] sm:$0xff] %v369
  %386 = vst [vmem:[#allocation2 + $0x38] sm:$0xff] %v370
  %387 = vst [vmem:[#allocation2 + $0x40] sm:$0xff] %v371
  %388 = vst [vmem:[#allocation2 + $0x48] sm:$0xff] %v372
  %389 = vst [vmem:[#allocation2 + $0x50] sm:$0xff] %v373
  %390 = vst [vmem:[#allocation2 + $0x58] sm:$0xff] %v374
  %391 = vst [vmem:[#allocation2 + $0x60] sm:$0xff] %v375
  %392 = vst [vmem:[#allocation2 + $0x68] sm:$0xff] %v376
  %393 = vst [vmem:[#allocation2 + $0x70] sm:$0xff] %v377
  %394 = vst [vmem:[#allocation2 + $0x78] sm:$0xff] %v378
  // Predicated region
  $region18: #{fwd.35} parent=0 // pred_check
    %p395 = pneg %p14
  $region19: #{fwd.35} parent=0 // pred_check_branch
    %397 = sbr.rel (%p395) target = $region21
  $region20: #{fwd.35} parent=0 // pred_region
    %v398 = vld [vmem:[#allocation2] sm:$0xff]
    %v399 = vld [vmem:[#allocation2 + $0x8] sm:$0xff]
    %v400 = vld [vmem:[#allocation2 + $0x10] sm:$0xff]
    %v401 = vld [vmem:[#allocation2 + $0x18] sm:$0xff]
    %v402 = vld [vmem:[#allocation2 + $0x20] sm:$0xff]
    %v403 = vld [vmem:[#allocation2 + $0x28] sm:$0xff]
    %v404 = vld [vmem:[#allocation2 + $0x30] sm:$0xff]
    %v405 = vld [vmem:[#allocation2 + $0x38] sm:$0xff]
    %v406 = vld [vmem:[#allocation2 + $0x40] sm:$0xff]
    %v407 = vld [vmem:[#allocation2 + $0x48] sm:$0xff]
    %v408 = vld [vmem:[#allocation2 + $0x50] sm:$0xff]
    %v409 = vld [vmem:[#allocation2 + $0x58] sm:$0xff]
    %v410 = vld [vmem:[#allocation2 + $0x60] sm:$0xff]
    %v411 = vld [vmem:[#allocation2 + $0x68] sm:$0xff]
    %v412 = vld [vmem:[#allocation2 + $0x70] sm:$0xff]
    %v413 = vld [vmem:[#allocation2 + $0x78] sm:$0xff]
    %v414 = vld [vmem:[%s2] sm:$0x3]
    %v416 = vlaneseq
    %v417 = vshrl.u32 %v416, 7
    %v418 = vsub.s32 0, %v417
    %v419 = vrot.slane %v414, %v418
    %v420 = vlaneseq
    %v421 = vshrl.u32 %v420, 7
    %v422 = vsub.s32 1, %v421
    %v423 = vrot.slane %v414, %v422
    %v426 = vadd.f32 %v398, %v419
    %v427 = vadd.f32 %v399, %v423
    %v428 = vadd.f32 %v400, %v419
    %v429 = vadd.f32 %v401, %v423
    %v430 = vadd.f32 %v402, %v419
    %v431 = vadd.f32 %v403, %v423
    %v432 = vadd.f32 %v404, %v419
    %v433 = vadd.f32 %v405, %v423
    %v434 = vadd.f32 %v406, %v419
    %v435 = vadd.f32 %v407, %v423
    %v436 = vadd.f32 %v408, %v419
    %v437 = vadd.f32 %v409, %v423
    %v438 = vadd.f32 %v410, %v419
    %v439 = vadd.f32 %v411, %v423
    %v440 = vadd.f32 %v412, %v419
    %v441 = vadd.f32 %v413, %v423
    %442 = vst [vmem:[%s3] sm:$0xff] %v426
    %443 = vst [vmem:[%s3 + $0x8] sm:$0xff] %v427
    %444 = vst [vmem:[%s3 + $0x10] sm:$0xff] %v428
    %445 = vst [vmem:[%s3 + $0x18] sm:$0xff] %v429
    %446 = vst [vmem:[%s3 + $0x20] sm:$0xff] %v430
    %447 = vst [vmem:[%s3 + $0x28] sm:$0xff] %v431
    %448 = vst [vmem:[%s3 + $0x30] sm:$0xff] %v432
    %449 = vst [vmem:[%s3 + $0x38] sm:$0xff] %v433
    %450 = vst [vmem:[%s3 + $0x40] sm:$0xff] %v434
    %451 = vst [vmem:[%s3 + $0x48] sm:$0xff] %v435
    %452 = vst [vmem:[%s3 + $0x50] sm:$0xff] %v436
    %453 = vst [vmem:[%s3 + $0x58] sm:$0xff] %v437
    %454 = vst [vmem:[%s3 + $0x60] sm:$0xff] %v438
    %455 = vst [vmem:[%s3 + $0x68] sm:$0xff] %v439
    %456 = vst [vmem:[%s3 + $0x70] sm:$0xff] %v440
    %457 = vst [vmem:[%s3 + $0x78] sm:$0xff] %v441
  $region21: #{fwd.35} parent=0 // pred_fallthru
    _
  // Predicated region
  $region22: #{fwd.35} parent=0 // pred_check
    _
  $region23: #{fwd.35} parent=0 // pred_check_branch
    %459 = sbr.rel (0) target = $region25
  $region24: #{fwd.35} parent=0 // pred_region
    _
  $region25: #{fwd.35} parent=0 // pred_fallthru
    _
  // Predicated region
  $region26: #{fwd.35} parent=0 // pred_check
    _
  $region27: #{fwd.35} parent=0 // pred_check_branch
    %461 = sbr.rel (0) target = $region29
  $region28: #{fwd.35} parent=0 // pred_region
    _
  $region29: #{fwd.35} parent=0 // pred_fallthru
    _

// kernel: fwd.37
$region0: #{fwd.37}
  #allocation0 [shape = 'u32[]', space=smem, size = 0x4, offset = 0x4, fixed_abs, tag = 'smem constant byte address 0x4 - core index']
  #allocation1 [shape = 'u32[144,128]{1,0:T(1,128)}', space=vmem, size = 0x12000, scoped, tag = 'internal scratch']
  %s0 = inlined_call_operand.vmem [shape: bf16[2,8,64,32], index: 0, kind: input, shape index: {}]
  %s1 = inlined_call_operand.vmem [shape: bf16[2,8,32,32], index: 1, kind: input, shape index: {}]
  %s2 = inlined_call_operand.vmem [shape: bf16[2,8,32,32], index: 2, kind: input, shape index: {}]
  %s3 = inlined_call_operand.vmem [shape: f32[2,1,32], index: 3, kind: input, shape index: {}]
  %s4 = inlined_call_operand.vmem [shape: f32[2,8,64,32], index: 4, kind: output, shape index: {}]
  %s5 = sld [smem:[#allocation0]]
  $region49: #{fwd.37} parent=0
    _
  %s7 = ssub.s32 1, %s5
  %s8 = scalar_select 0, %s7, %s5
  loop: start=0, step=1, limit=18
  $region2: #{fwd.37} parent=0 // loop_pre_header
    _
  $region3: #{fwd.37} parent=0 // loop_header
    %s10 = sphi 0, %s14
    %p11 = scmp.ge.s32.totalorder %s10, 18
    %s17 = sphi 0, %s29
    %s18 = sphi 0, %s25
    %s19 = sphi 0, %s17
    %s20 = sphi 0, %s18
    %s21 = sphi 0, %s19
    %s22 = sphi 0, %s20
    %s34 = sphi 0, %s36
    %s37 = sphi 0, %s34
    %s38 = sphi 0, %s37
    %s54 = sphi 0, %s38
    %s62 = sphi 0, %s64
    %s65 = sphi 0, %s62
    %s66 = sphi 0, %s65
    %s82 = sphi 0, %s66
    %s90 = sphi 0, %s92
    %s93 = sphi 0, %s90
    %s94 = sphi 0, %s93
    %s110 = sphi 0, %s94
    %s116 = sphi 0, %s118
    %s119 = sphi 0, %s116
    %s120 = sphi 0, %s119
    %s136 = sphi 0, %s120
    %s144 = sphi 0, %s146
    %s147 = sphi 0, %s144
    %s148 = sphi 0, %s147
    %s164 = sphi 0, %s148
  $region4: #{fwd.37} parent=0 // loop_header_branch
    %13 = sbr.rel (%p11) target = $region8
  $region5: #{fwd.37} parent=0 // loop_body
    %s15 = ssub.s32 %s10, 1
    %s16 = ssub.s32 %s10, 2
    %s23 = sadd.s32 1, %s18
    %p24 = scmp.ge.s32.totalorder %s23, 8
    %s25 = scalar_select %p24, 0, %s23
    %s26 = sadd.s32 1, %s17
    %s27 = scalar_select %p24, %s26, %s17
    %p28 = scmp.ge.s32.totalorder %s27, 2
    %s29 = scalar_select %p28, 0, %s27
    %s30 = ssub.s32 %s17, %s29
    %s31 = ssub.s32 %s18, %s25
    %s32 = sor.u32 %s30, %s31
    %p33 = scmp.eq.s32.totalorder %s32, 0
    %s35 = sadd.s32 %s34, 1
    %s36 = scalar_select %p33, %s34, %s35
    %p39 = pneg %p33
    %p40 = scmp.eq.s32.totalorder %s10, 15
    %p41 = por %p39, %p40
    %p42 = scmp.ne.s32.totalorder %s34, %s37
    %p43 = scmp.eq.s32.totalorder %s10, 0
    %p44 = por %p42, %p43
    %p45 = scmp.ne.s32.totalorder %s34, %s37
    %p46 = scmp.eq.s32.totalorder %s15, 15
    %p47 = por %p45, %p46
    %p48 = scmp.ne.s32.totalorder %s37, %s38
    %p49 = scmp.eq.s32.totalorder %s15, 0
    %p50 = por %p48, %p49
    %p51 = scmp.ne.s32.totalorder %s37, %s38
    %p52 = scmp.eq.s32.totalorder %s16, 15
    %p53 = por %p51, %p52
    %p55 = scmp.ne.s32.totalorder %s38, %s54
    %p56 = scmp.eq.s32.totalorder %s16, 0
    %p57 = por %p55, %p56
    %s58 = ssub.s32 %s17, %s29
    %s59 = ssub.s32 %s18, %s25
    %s60 = sor.u32 %s58, %s59
    %p61 = scmp.eq.s32.totalorder %s60, 0
    %s63 = sadd.s32 %s62, 1
    %s64 = scalar_select %p61, %s62, %s63
    %p67 = pneg %p61
    %p68 = scmp.eq.s32.totalorder %s10, 15
    %p69 = por %p67, %p68
    %p70 = scmp.ne.s32.totalorder %s62, %s65
    %p71 = scmp.eq.s32.totalorder %s10, 0
    %p72 = por %p70, %p71
    %p73 = scmp.ne.s32.totalorder %s62, %s65
    %p74 = scmp.eq.s32.totalorder %s15, 15
    %p75 = por %p73, %p74
    %p76 = scmp.ne.s32.totalorder %s65, %s66
    %p77 = scmp.eq.s32.totalorder %s15, 0
    %p78 = por %p76, %p77
    %p79 = scmp.ne.s32.totalorder %s65, %s66
    %p80 = scmp.eq.s32.totalorder %s16, 15
    %p81 = por %p79, %p80
    %p83 = scmp.ne.s32.totalorder %s66, %s82
    %p84 = scmp.eq.s32.totalorder %s16, 0
    %p85 = por %p83, %p84
    %s86 = ssub.s32 %s17, %s29
    %s87 = ssub.s32 %s18, %s25
    %s88 = sor.u32 %s86, %s87
    %p89 = scmp.eq.s32.totalorder %s88, 0
    %s91 = sadd.s32 %s90, 1
    %s92 = scalar_select %p89, %s90, %s91
    %p95 = pneg %p89
    %p96 = scmp.eq.s32.totalorder %s10, 15
    %p97 = por %p95, %p96
    %p98 = scmp.ne.s32.totalorder %s90, %s93
    %p99 = scmp.eq.s32.totalorder %s10, 0
    %p100 = por %p98, %p99
    %p101 = scmp.ne.s32.totalorder %s90, %s93
    %p102 = scmp.eq.s32.totalorder %s15, 15
    %p103 = por %p101, %p102
    %p104 = scmp.ne.s32.totalorder %s93, %s94
    %p105 = scmp.eq.s32.totalorder %s15, 0
    %p106 = por %p104, %p105
    %p107 = scmp.ne.s32.totalorder %s93, %s94
    %p108 = scmp.eq.s32.totalorder %s16, 15
    %p109 = por %p107, %p108
    %p111 = scmp.ne.s32.totalorder %s94, %s110
    %p112 = scmp.eq.s32.totalorder %s16, 0
    %p113 = por %p111, %p112
    %s114 = ssub.s32 %s17, %s29
    %p115 = scmp.eq.s32.totalorder %s114, 0
    %s117 = sadd.s32 %s116, 1
    %s118 = scalar_select %p115, %s116, %s117
    %p121 = pneg %p115
    %p122 = scmp.eq.s32.totalorder %s10, 15
    %p123 = por %p121, %p122
    %p124 = scmp.ne.s32.totalorder %s116, %s119
    %p125 = scmp.eq.s32.totalorder %s10, 0
    %p126 = por %p124, %p125
    %p127 = scmp.ne.s32.totalorder %s116, %s119
    %p128 = scmp.eq.s32.totalorder %s15, 15
    %p129 = por %p127, %p128
    %p130 = scmp.ne.s32.totalorder %s119, %s120
    %p131 = scmp.eq.s32.totalorder %s15, 0
    %p132 = por %p130, %p131
    %p133 = scmp.ne.s32.totalorder %s119, %s120
    %p134 = scmp.eq.s32.totalorder %s16, 15
    %p135 = por %p133, %p134
    %p137 = scmp.ne.s32.totalorder %s120, %s136
    %p138 = scmp.eq.s32.totalorder %s16, 0
    %p139 = por %p137, %p138
    %s140 = ssub.s32 %s17, %s29
    %s141 = ssub.s32 %s18, %s25
    %s142 = sor.u32 %s140, %s141
    %p143 = scmp.eq.s32.totalorder %s142, 0
    %s145 = sadd.s32 %s144, 1
    %s146 = scalar_select %p143, %s144, %s145
    %p149 = pneg %p143
    %p150 = scmp.eq.s32.totalorder %s10, 15
    %p151 = por %p149, %p150
    %p152 = scmp.ne.s32.totalorder %s144, %s147
    %p153 = scmp.eq.s32.totalorder %s10, 0
    %p154 = por %p152, %p153
    %p155 = scmp.ne.s32.totalorder %s144, %s147
    %p156 = scmp.eq.s32.totalorder %s15, 15
    %p157 = por %p155, %p156
    %p158 = scmp.ne.s32.totalorder %s147, %s148
    %p159 = scmp.eq.s32.totalorder %s15, 0
    %p160 = por %p158, %p159
    %p161 = scmp.ne.s32.totalorder %s147, %s148
    %p162 = scmp.eq.s32.totalorder %s16, 15
    %p163 = por %p161, %p162
    %p165 = scmp.ne.s32.totalorder %s148, %s164
    %p166 = scmp.eq.s32.totalorder %s16, 0
    %p167 = por %p165, %p166
    %p168 = scmp.le.s32.totalorder 1, %s10
    %p169 = scmp.lt.s32.totalorder %s10, 17
    %p170 = pnand %p168, %p169
    %p171 = pneg %p170
    // Predicated region
    $region9: #{fwd.37} parent=5 // pred_check
      _
    $region10: #{fwd.37} parent=5 // pred_check_branch
      %173 = sbr.rel (%p170) target = $region12
    $region11: #{fwd.37} parent=5 // pred_region
      %s174 = ssub.s32 %s10, 1
    $region12: #{fwd.37} parent=5 // pred_fallthru
      _
    %p175 = scmp.lt.s32.totalorder %s10, 16
    // Predicated region
    $region13: #{fwd.37} parent=5 // pred_check
      %p176 = pneg %p175
    $region14: #{fwd.37} parent=5 // pred_check_branch
      %178 = sbr.rel (%p176) target = $region16
    $region15: #{fwd.37} parent=5 // pred_region
      // Predicated region
      $region17: #{fwd.37} parent=15 // pred_check
        %p179 = pneg %p44
      $region18: #{fwd.37} parent=15 // pred_check_branch
        %181 = sbr.rel (%p179) target = $region20
      $region19: #{fwd.37} parent=15 // pred_region
        %p182 = scmp.lt.s32.totalorder %s17, 1
        %s183 = scalar_select %p182, %s17, 1
        %p184 = scmp.lt.s32.totalorder %s18, 7
        %s185 = scalar_select %p184, %s18, 7
        %s186 = smul.addr %s185, 8
        %s187 = smul.addr %s183, 64
        %s188 = sadd.s32 %s186, %s187
        %s189 = smul.addr %s188, 4
        %s190 = scalar_lea.vmem %s0, %s189
      $region20: #{fwd.37} parent=15 // pred_fallthru
        _
      // Predicated region
      $region21: #{fwd.37} parent=15 // pred_check
        %p191 = pneg %p72
      $region22: #{fwd.37} parent=15 // pred_check_branch
        %193 = sbr.rel (%p191) target = $region24
      $region23: #{fwd.37} parent=15 // pred_region
        %p194 = scmp.lt.s32.totalorder %s17, 1
        %s195 = scalar_select %p194, %s17, 1
        %p196 = scmp.lt.s32.totalorder %s18, 7
        %s197 = scalar_select %p196, %s18, 7
        %s198 = smul.addr %s197, 4
        %s199 = smul.addr %s195, 32
        %s200 = sadd.s32 %s198, %s199
        %s201 = smul.addr %s200, 4
        %s202 = scalar_lea.vmem %s1, %s201
      $region24: #{fwd.37} parent=15 // pred_fallthru
        _
      // Predicated region
      $region25: #{fwd.37} parent=15 // pred_check
        %p203 = pneg %p100
      $region26: #{fwd.37} parent=15 // pred_check_branch
        %205 = sbr.rel (%p203) target = $region28
      $region27: #{fwd.37} parent=15 // pred_region
        %p206 = scmp.lt.s32.totalorder %s17, 1
        %s207 = scalar_select %p206, %s17, 1
        %p208 = scmp.lt.s32.totalorder %s18, 7
        %s209 = scalar_select %p208, %s18, 7
        %s210 = smul.addr %s209, 4
        %s211 = smul.addr %s207, 32
        %s212 = sadd.s32 %s210, %s211
        %s213 = smul.addr %s212, 4
        %s214 = scalar_lea.vmem %s2, %s213
      $region28: #{fwd.37} parent=15 // pred_fallthru
        _
      // Predicated region
      $region29: #{fwd.37} parent=15 // pred_check
        %p215 = pneg %p126
      $region30: #{fwd.37} parent=15 // pred_check_branch
        %217 = sbr.rel (%p215) target = $region32
      $region31: #{fwd.37} parent=15 // pred_region
        %p218 = scmp.lt.s32.totalorder %s17, 1
        %s219 = scalar_select %p218, %s17, 1
        %s220 = scalar_lea.vmem %s3, %s219
      $region32: #{fwd.37} parent=15 // pred_fallthru
        _
    $region16: #{fwd.37} parent=5 // pred_fallthru
      _
    %p221 = scmp.le.s32.totalorder 1, %s10
    %p222 = scmp.lt.s32.totalorder %s10, 17
    %p223 = pnand %p221, %p222
    %p224 = pneg %p223
    // Predicated region
    $region33: #{fwd.37} parent=5 // pred_check
      _
    $region34: #{fwd.37} parent=5 // pred_check_branch
      %226 = sbr.rel (%p223) target = $region36
    $region35: #{fwd.37} parent=5 // pred_region
      %s227 = ssub.s32 %s10, 1
      %p228 = scmp.lt.s32.totalorder %s19, 1
      %s229 = scalar_select %p228, %s19, 1
      %p230 = scmp.lt.s32.totalorder %s20, 7
      %s231 = scalar_select %p230, %s20, 7
      %s232 = smul.addr %s231, 8
      %s233 = smul.addr %s229, 64
      %s234 = sadd.s32 %s232, %s233
      %s235 = smul.addr %s234, 4
      %s236 = scalar_lea.vmem %s0, %s235
      %p237 = pneg %p50
      %p238 = pneg %p47
      %p239 = scmp.lt.s32.totalorder %s19, 1
      %s240 = scalar_select %p239, %s19, 1
      %p241 = scmp.lt.s32.totalorder %s20, 7
      %s242 = scalar_select %p241, %s20, 7
      %s243 = smul.addr %s242, 4
      %s244 = smul.addr %s240, 32
      %s245 = sadd.s32 %s243, %s244
      %s246 = smul.addr %s245, 4
      %s247 = scalar_lea.vmem %s1, %s246
      %p248 = pneg %p78
      %p249 = pneg %p75
      %p250 = scmp.lt.s32.totalorder %s19, 1
      %s251 = scalar_select %p250, %s19, 1
      %p252 = scmp.lt.s32.totalorder %s20, 7
      %s253 = scalar_select %p252, %s20, 7
      %s254 = smul.addr %s253, 4
      %s255 = smul.addr %s251, 32
      %s256 = sadd.s32 %s254, %s255
      %s257 = smul.addr %s256, 4
      %s258 = scalar_lea.vmem %s2, %s257
      %p259 = pneg %p106
      %p260 = pneg %p103
      %p261 = scmp.lt.s32.totalorder %s19, 1
      %s262 = scalar_select %p261, %s19, 1
      %s263 = scalar_lea.vmem %s3, %s262
      %p264 = pneg %p132
      %p265 = pneg %p129
      %p266 = pneg %p160
      %p267 = pneg %p157
      %p268 = scmp.lt.s32.totalorder %s19, 1
      %s269 = scalar_select %p268, %s19, 1
      %p270 = scmp.lt.s32.totalorder %s20, 7
      %s271 = scalar_select %p270, %s20, 7
      %s272 = smul.addr %s271, 8
      %s273 = smul.addr %s269, 64
      %s274 = sadd.s32 %s272, %s273
      %s275 = smul.addr %s274, 8
      %s276 = scalar_lea.vmem %s4, %s275
      %p277 = scmp.lt.s32.totalorder %s19, 1
      %s278 = scalar_select %p277, %s19, 1
      %p279 = scmp.lt.s32.totalorder %s20, 7
      %s280 = scalar_select %p279, %s20, 7
      %s281 = smul.addr %s280, 8
      %s282 = smul.addr %s278, 64
      %s283 = sadd.s32 %s281, %s282
      %s284 = smul.addr %s283, 4
      %s285 = scalar_lea.vmem %s0, %s284
      %p286 = scmp.lt.s32.totalorder %s19, 1
      %s287 = scalar_select %p286, %s19, 1
      %p288 = scmp.lt.s32.totalorder %s20, 7
      %s289 = scalar_select %p288, %s20, 7
      %s290 = smul.addr %s289, 4
      %s291 = smul.addr %s287, 32
      %s292 = sadd.s32 %s290, %s291
      %s293 = smul.addr %s292, 4
      %s294 = scalar_lea.vmem %s1, %s293
      %p295 = scmp.lt.s32.totalorder %s19, 1
      %s296 = scalar_select %p295, %s19, 1
      %p297 = scmp.lt.s32.totalorder %s20, 7
      %s298 = scalar_select %p297, %s20, 7
      %s299 = smul.addr %s298, 4
      %s300 = smul.addr %s296, 32
      %s301 = sadd.s32 %s299, %s300
      %s302 = smul.addr %s301, 4
      %s303 = scalar_lea.vmem %s2, %s302
      %p304 = scmp.lt.s32.totalorder %s19, 1
      %s305 = scalar_select %p304, %s19, 1
      %s306 = scalar_lea.vmem %s3, %s305
      %p307 = scmp.lt.s32.totalorder %s19, 1
      %s308 = scalar_select %p307, %s19, 1
      %p309 = scmp.lt.s32.totalorder %s20, 7
      %s310 = scalar_select %p309, %s20, 7
      %s311 = smul.addr %s310, 8
      %s312 = smul.addr %s308, 64
      %s313 = sadd.s32 %s311, %s312
      %s314 = smul.addr %s313, 8
      %s315 = scalar_lea.vmem %s4, %s314
      %v317 = vld [vmem:[%s285] sm:$0xf]
      %v318 = vld [vmem:[%s285 + $0x4] sm:$0xf]
      %v319 = vld [vmem:[%s285 + $0x8] sm:$0xf]
      %v320 = vld [vmem:[%s285 + $0xc] sm:$0xf]
      %v321 = vld [vmem:[%s285 + $0x10] sm:$0xf]
      %v322 = vld [vmem:[%s285 + $0x14] sm:$0xf]
      %v323 = vld [vmem:[%s285 + $0x18] sm:$0xf]
      %v324 = vld [vmem:[%s285 + $0x1c] sm:$0xf]
      %v325 = vld [vmem:[%s294] sm:$0xf]
      %v326 = vld [vmem:[%s294 + $0x4] sm:$0xf]
      %v327 = vld [vmem:[%s294 + $0x8] sm:$0xf]
      %v328 = vld [vmem:[%s294 + $0xc] sm:$0xf]
      %v329 = vld [vmem:[%s303] sm:$0xf]
      %v330 = vld [vmem:[%s303 + $0x4] sm:$0xf]
      %v331 = vld [vmem:[%s303 + $0x8] sm:$0xf]
      %v332 = vld [vmem:[%s303 + $0xc] sm:$0xf]
      %v341 = vunpack.c.l.b16 %v317
      %v342 = vunpack.c.l.b16 %v318
      %v343 = vunpack.c.l.b16 %v319
      %v344 = vunpack.c.l.b16 %v320
      %v345 = vunpack.c.l.b16 %v321
      %v346 = vunpack.c.l.b16 %v322
      %v347 = vunpack.c.l.b16 %v323
      %v348 = vunpack.c.l.b16 %v324
      %v349 = vpack.c.b16 %v342, %v341
      %v350 = vpack.c.b16 %v344, %v343
      %v351 = vpack.c.b16 %v346, %v345
      %v352 = vpack.c.b16 %v348, %v347
      %v357 = vunpack.c.l.b16 %v325
      %v358 = vunpack.c.l.b16 %v326
      %v359 = vunpack.c.l.b16 %v327
      %v360 = vunpack.c.l.b16 %v328
      %v361 = vpack.c.b16 %v358, %v357
      %v362 = vpack.c.b16 %v360, %v359
      %vm363 = vcmask 261120
      %v365 = vsel %vm363, %v349, 0
      %v368 = vsel %vm363, %v350, 0
      %v371 = vsel %vm363, %v351, 0
      %v374 = vsel %vm363, %v352, 0
      %v377 = vsel %vm363, %v361, 0
      %v380 = vsel %vm363, %v362, 0
      %382 = vmatprep.subr.bf16.mxu0 0
      %383 = vmatpush1.bf16.xpose.msra.mxu0 %v377
      %384 = vmatprep.subr.bf16.mxu0 0
      %385 = vmatpush1.bf16.xpose.msra.mxu0 %v380
      %386 = vmatprep.subr.bf16.mxu0 0
      %387 = vmatpush1.bf16.xpose.msra.mxu0 0
      %388 = vmatprep.subr.bf16.mxu0 0
      %389 = vmatpush1.bf16.xpose.msra.mxu0 0
      %390 = vmatprep.subr.bf16.mxu0 0
      %391 = vmatpush1.bf16.xpose.msra.mxu0 0
      %392 = vmatprep.subr.bf16.mxu0 0
      %393 = vmatpush1.bf16.xpose.msra.mxu0 0
      %394 = vmatprep.subr.bf16.mxu0 0
      %395 = vmatpush1.bf16.xpose.msra.mxu0 0
      %396 = vmatprep.subr.bf16.mxu0 0
      %397 = vmatpush1.bf16.xpose.msra.mxu0 0
      %398 = vmatprep.subr.bf16.mxu0 0
      %399 = vmatpush1.bf16.xpose.msra.mxu0 0
      %400 = vmatprep.subr.bf16.mxu0 0
      %401 = vmatpush1.bf16.xpose.msra.mxu0 0
      %402 = vmatprep.subr.bf16.mxu0 0
      %403 = vmatpush1.bf16.xpose.msra.mxu0 0
      %404 = vmatprep.subr.bf16.mxu0 0
      %405 = vmatpush1.bf16.xpose.msra.mxu0 0
      %406 = vmatprep.subr.bf16.mxu0 0
      %407 = vmatpush1.bf16.xpose.msra.mxu0 0
      %408 = vmatprep.subr.bf16.mxu0 0
      %409 = vmatpush1.bf16.xpose.msra.mxu0 0
      %410 = vmatprep.subr.bf16.mxu0 0
      %411 = vmatpush1.bf16.xpose.msra.mxu0 0
      %412 = vmatprep.subr.bf16.mxu0 0
      %413 = vmatpush1.bf16.xpose.msra.mxu0 0
      %414 = vmatprep.mubr.bf16.mxu0 0
      %415 = vmatmul.mubr.bf16.gmra.mrb[0].mxu0 %v365
      %v416 = vpop.f32.mrb[0].mxu0
      %v417 = vadd.f32 0.0, %v416
      %v418 = vpop.f32.mrb[0].mxu0
      %v419 = vpop.f32.mrb[0].mxu0
      %v420 = vadd.f32 0.0, %v419
      %v421 = vpop.f32.mrb[0].mxu0
      %422 = vmatprep.mubr.bf16.mxu0 0
      %423 = vmatmul.mubr.bf16.gmra.mrb[0].mxu0 %v368
      %v424 = vpop.f32.mrb[0].mxu0
      %v425 = vadd.f32 0.0, %v424
      %v426 = vpop.f32.mrb[0].mxu0
      %v427 = vpop.f32.mrb[0].mxu0
      %v428 = vadd.f32 0.0, %v427
      %v429 = vpop.f32.mrb[0].mxu0
      %430 = vmatprep.mubr.bf16.mxu0 0
      %431 = vmatmul.mubr.bf16.gmra.mrb[0].mxu0 %v371
      %v432 = vpop.f32.mrb[0].mxu0
      %v433 = vadd.f32 0.0, %v432
      %v434 = vpop.f32.mrb[0].mxu0
      %v435 = vpop.f32.mrb[0].mxu0
      %v436 = vadd.f32 0.0, %v435
      %v437 = vpop.f32.mrb[0].mxu0
      %438 = vmatprep.mubr.bf16.mxu0 0
      %439 = vmatmul.mubr.bf16.gmra.mrb[0].mxu0 %v374
      %v440 = vpop.f32.mrb[0].mxu0
      %v441 = vadd.f32 0.0, %v440
      %v442 = vpop.f32.mrb[0].mxu0
      %v443 = vpop.f32.mrb[0].mxu0
      %v444 = vadd.f32 0.0, %v443
      %v445 = vpop.f32.mrb[0].mxu0
      %446 = vdwg.mxu0
      %v447 = vmul.f32 %v417, 0.17677669
      %v448 = vmul.f32 %v420, 0.17677669
      %v449 = vmul.f32 %v425, 0.17677669
      %v450 = vmul.f32 %v428, 0.17677669
      %v451 = vmul.f32 %v433, 0.17677669
      %v452 = vmul.f32 %v436, 0.17677669
      %v453 = vmul.f32 %v441, 0.17677669
      %v454 = vmul.f32 %v444, 0.17677669
      %v455 = vld [vmem:[%s306] sm:$0x1]
      %v457 = vlaneseq
      %v458 = vshrl.u32 %v457, 7
      %v459 = vsub.s32 0, %v458
      %v460 = vrot.slane %v455, %v459
      %v462 = vadd.f32 %v447, %v460
      %v463 = vadd.f32 %v448, %v460
      %v464 = vadd.f32 %v449, %v460
      %v465 = vadd.f32 %v450, %v460
      %v466 = vadd.f32 %v451, %v460
      %v467 = vadd.f32 %v452, %v460
      %v468 = vadd.f32 %v453, %v460
      %v469 = vadd.f32 %v454, %v460
      %v470 = vsel %vm363, %v462, -inf
      %471 = vmax.xlane.f32.xlu0 %v470
      %v472 = vpop.xlane.xlu0 %471
      %v473 = vsel %vm363, %v463, -inf
      %474 = vmax.xlane.f32.xlu0 %v473
      %v475 = vpop.xlane.xlu0 %474
      %v476 = vsel %vm363, %v464, -inf
      %477 = vmax.xlane.f32.xlu0 %v476
      %v478 = vpop.xlane.xlu0 %477
      %v479 = vsel %vm363, %v465, -inf
      %480 = vmax.xlane.f32.xlu0 %v479
      %v481 = vpop.xlane.xlu0 %480
      %v482 = vsel %vm363, %v466, -inf
      %483 = vmax.xlane.f32.xlu0 %v482
      %v484 = vpop.xlane.xlu0 %483
      %v485 = vsel %vm363, %v467, -inf
      %486 = vmax.xlane.f32.xlu0 %v485
      %v487 = vpop.xlane.xlu0 %486
      %v488 = vsel %vm363, %v468, -inf
      %489 = vmax.xlane.f32.xlu0 %v488
      %v490 = vpop.xlane.xlu0 %489
      %v491 = vsel %vm363, %v469, -inf
      %492 = vmax.xlane.f32.xlu0 %v491
      %v493 = vpop.xlane.xlu0 %492
      %v494 = vsub.f32 %v462, %v472
      %v495 = vsub.f32 %v463, %v475
      %v496 = vsub.f32 %v464, %v478
      %v497 = vsub.f32 %v465, %v481
      %v498 = vsub.f32 %v466, %v484
      %v499 = vsub.f32 %v467, %v487
      %v500 = vsub.f32 %v468, %v490
      %v501 = vsub.f32 %v469, %v493
      %v502 = vmul.f32 %v494, 1.442695
      %v503 = vpow.pop %v502
      %v504 = vmul.f32 %v495, 1.442695
      %v505 = vpow.pop %v504
      %v506 = vmul.f32 %v496, 1.442695
      %v507 = vpow.pop %v506
      %v508 = vmul.f32 %v497, 1.442695
      %v509 = vpow.pop %v508
      %v510 = vmul.f32 %v498, 1.442695
      %v511 = vpow.pop %v510
      %v512 = vmul.f32 %v499, 1.442695
      %v513 = vpow.pop %v512
      %v514 = vmul.f32 %v500, 1.442695
      %v515 = vpow.pop %v514
      %v516 = vmul.f32 %v501, 1.442695
      %v517 = vpow.pop %v516
      %v518 = vsel %vm363, %v503, 0.0
      %519 = vadd.xlane.f32.xlu0 %v518
      %v520 = vpop.xlane.xlu0 %519
      %v521 = vsel %vm363, %v505, 0.0
      %522 = vadd.xlane.f32.xlu0 %v521
      %v523 = vpop.xlane.xlu0 %522
      %v524 = vsel %vm363, %v507, 0.0
      %525 = vadd.xlane.f32.xlu0 %v524
      %v526 = vpop.xlane.xlu0 %525
      %v527 = vsel %vm363, %v509, 0.0
      %528 = vadd.xlane.f32.xlu0 %v527
      %v529 = vpop.xlane.xlu0 %528
      %v530 = vsel %vm363, %v511, 0.0
      %531 = vadd.xlane.f32.xlu0 %v530
      %v532 = vpop.xlane.xlu0 %531
      %v533 = vsel %vm363, %v513, 0.0
      %534 = vadd.xlane.f32.xlu0 %v533
      %v535 = vpop.xlane.xlu0 %534
      %v536 = vsel %vm363, %v515, 0.0
      %537 = vadd.xlane.f32.xlu0 %v536
      %v538 = vpop.xlane.xlu0 %537
      %v539 = vsel %vm363, %v517, 0.0
      %540 = vadd.xlane.f32.xlu0 %v539
      %v541 = vpop.xlane.xlu0 %540
      %v542 = vrcp.pop %v520
      %v543 = vrcp.pop %v523
      %v544 = vrcp.pop %v526
      %v545 = vrcp.pop %v529
      %v546 = vrcp.pop %v532
      %v547 = vrcp.pop %v535
      %v548 = vrcp.pop %v538
      %v549 = vrcp.pop %v541
      %v550 = vmul.f32 %v503, %v542
      %v551 = vmul.f32 %v505, %v543
      %v552 = vmul.f32 %v507, %v544
      %v553 = vmul.f32 %v509, %v545
      %v554 = vmul.f32 %v511, %v546
      %v555 = vmul.f32 %v513, %v547
      %v556 = vmul.f32 %v515, %v548
      %v557 = vmul.f32 %v517, %v549
      %v558 = vpack.c.bf16 %v551, %v550
      %v559 = vpack.c.bf16 %v553, %v552
      %v560 = vpack.c.bf16 %v555, %v554
      %v561 = vpack.c.bf16 %v557, %v556
      %v566 = vunpack.c.l.b16 %v329
      %v567 = vunpack.c.l.b16 %v330
      %v568 = vunpack.c.l.b16 %v331
      %v569 = vunpack.c.l.b16 %v332
      %v570 = vpack.c.b16 %v567, %v566
      %v571 = vpack.c.b16 %v569, %v568
      %v575 = vsel %vm363, %v558, 0
      %v578 = vsel %vm363, %v559, 0
      %v581 = vsel %vm363, %v560, 0
      %v584 = vsel %vm363, %v561, 0
      %586 = vmatprep.subr.bf16.mxu0 0
      %587 = vmatpush1.bf16.msra.mxu0 %v570
      %588 = vmatprep.subr.bf16.mxu0 0
      %589 = vmatpush1.bf16.msra.mxu0 %v571
      %590 = vmatprep.subr.bf16.mxu0 0
      %591 = vmatpush1.bf16.msra.mxu0 0
      %592 = vmatprep.subr.bf16.mxu0 0
      %593 = vmatpush1.bf16.msra.mxu0 0
      %594 = vmatprep.subr.bf16.mxu0 0
      %595 = vmatpush1.bf16.msra.mxu0 0
      %596 = vmatprep.subr.bf16.mxu0 0
      %597 = vmatpush1.bf16.msra.mxu0 0
      %598 = vmatprep.subr.bf16.mxu0 0
      %599 = vmatpush1.bf16.msra.mxu0 0
      %600 = vmatprep.subr.bf16.mxu0 0
      %601 = vmatpush1.bf16.msra.mxu0 0
      %602 = vmatprep.subr.bf16.mxu0 0
      %603 = vmatpush1.bf16.msra.mxu0 0
      %604 = vmatprep.subr.bf16.mxu0 0
      %605 = vmatpush1.bf16.msra.mxu0 0
      %606 = vmatprep.subr.bf16.mxu0 0
      %607 = vmatpush1.bf16.msra.mxu0 0
      %608 = vmatprep.subr.bf16.mxu0 0
      %609 = vmatpush1.bf16.msra.mxu0 0
      %610 = vmatprep.subr.bf16.mxu0 0
      %611 = vmatpush1.bf16.msra.mxu0 0
      %612 = vmatprep.subr.bf16.mxu0 0
      %613 = vmatpush1.bf16.msra.mxu0 0
      %614 = vmatprep.subr.bf16.mxu0 0
      %615 = vmatpush1.bf16.msra.mxu0 0
      %616 = vmatprep.subr.bf16.mxu0 0
      %617 = vmatpush1.bf16.msra.mxu0 0
      %618 = vmatprep.mubr.bf16.mxu0 0
      %619 = vmatmul.mubr.bf16.gmra.mrb[0].mxu0 %v575
      %v620 = vpop.f32.mrb[0].mxu0
      %v621 = vadd.f32 0.0, %v620
      %v622 = vpop.f32.mrb[0].mxu0
      %v623 = vpop.f32.mrb[0].mxu0
      %v624 = vadd.f32 0.0, %v623
      %v625 = vpop.f32.mrb[0].mxu0
      %626 = vmatprep.mubr.bf16.mxu0 0
      %627 = vmatmul.mubr.bf16.gmra.mrb[0].mxu0 %v578
      %v628 = vpop.f32.mrb[0].mxu0
      %v629 = vadd.f32 0.0, %v628
      %v630 = vpop.f32.mrb[0].mxu0
      %v631 = vpop.f32.mrb[0].mxu0
      %v632 = vadd.f32 0.0, %v631
      %v633 = vpop.f32.mrb[0].mxu0
      %634 = vmatprep.mubr.bf16.mxu0 0
      %635 = vmatmul.mubr.bf16.gmra.mrb[0].mxu0 %v581
      %v636 = vpop.f32.mrb[0].mxu0
      %v637 = vadd.f32 0.0, %v636
      %v638 = vpop.f32.mrb[0].mxu0
      %v639 = vpop.f32.mrb[0].mxu0
      %v640 = vadd.f32 0.0, %v639
      %v641 = vpop.f32.mrb[0].mxu0
      %642 = vmatprep.mubr.bf16.mxu0 0
      %643 = vmatmul.mubr.bf16.gmra.mrb[0].mxu0 %v584
      %v644 = vpop.f32.mrb[0].mxu0
      %v645 = vadd.f32 0.0, %v644
      %v646 = vpop.f32.mrb[0].mxu0
      %v647 = vpop.f32.mrb[0].mxu0
      %v648 = vadd.f32 0.0, %v647
      %v649 = vpop.f32.mrb[0].mxu0
      %650 = vdwg.mxu0
      %651 = vst.msk [vmem:[%s315] sm:$0xff] %vm363, %v621
      %652 = vst.msk [vmem:[%s315 + $0x8] sm:$0xff] %vm363, %v624
      %653 = vst.msk [vmem:[%s315 + $0x10] sm:$0xff] %vm363, %v629
      %654 = vst.msk [vmem:[%s315 + $0x18] sm:$0xff] %vm363, %v632
      %655 = vst.msk [vmem:[%s315 + $0x20] sm:$0xff] %vm363, %v637
      %656 = vst.msk [vmem:[%s315 + $0x28] sm:$0xff] %vm363, %v640
      %657 = vst.msk [vmem:[%s315 + $0x30] sm:$0xff] %vm363, %v645
      %658 = vst.msk [vmem:[%s315 + $0x38] sm:$0xff] %vm363, %v648
      %p659 = scmp.lt.s32.totalorder %s19, 1
      %s660 = scalar_select %p659, %s19, 1
      %p661 = scmp.lt.s32.totalorder %s20, 7
      %s662 = scalar_select %p661, %s20, 7
      %s663 = smul.addr %s662, 8
      %s664 = smul.addr %s660, 64
      %s665 = sadd.s32 %s663, %s664
      %s666 = smul.addr %s665, 8
      %s667 = scalar_lea.vmem %s4, %s666
      // Predicated region
      $region37: #{fwd.37} parent=35 // pred_check
        %p668 = pneg %p157
      $region38: #{fwd.37} parent=35 // pred_check_branch
        %670 = sbr.rel (%p668) target = $region40
      $region39: #{fwd.37} parent=35 // pred_region
        _
      $region40: #{fwd.37} parent=35 // pred_fallthru
        _
    $region36: #{fwd.37} parent=5 // pred_fallthru
      _
    %p671 = scmp.le.s32.totalorder 2, %s10
    // Predicated region
    $region41: #{fwd.37} parent=5 // pred_check
      %p672 = pneg %p671
    $region42: #{fwd.37} parent=5 // pred_check_branch
      %674 = sbr.rel (%p672) target = $region44
    $region43: #{fwd.37} parent=5 // pred_region
      %s675 = ssub.s32 %s10, 2
      // Predicated region
      $region45: #{fwd.37} parent=43 // pred_check
        %p676 = pneg %p163
      $region46: #{fwd.37} parent=43 // pred_check_branch
        %678 = sbr.rel (%p676) target = $region48
      $region47: #{fwd.37} parent=43 // pred_region
        %p679 = scmp.lt.s32.totalorder %s21, 1
        %s680 = scalar_select %p679, %s21, 1
        %p681 = scmp.lt.s32.totalorder %s22, 7
        %s682 = scalar_select %p681, %s22, 7
        %s683 = smul.addr %s682, 8
        %s684 = smul.addr %s680, 64
        %s685 = sadd.s32 %s683, %s684
        %s686 = smul.addr %s685, 8
        %s687 = scalar_lea.vmem %s4, %s686
      $region48: #{fwd.37} parent=43 // pred_fallthru
        _
    $region44: #{fwd.37} parent=5 // pred_fallthru
      _
  $region6: #{fwd.37} parent=0 // loop_footer
    %s14 = sadd.s32 1, %s10
  $region7: #{fwd.37} parent=0 // loop_footer_branch
    %9 = sbr.rel target = $region3
  $region8: #{fwd.37} parent=0 // loop_exit
    _

// kernel: fwd.57
$region0: #{fwd.57}
  #allocation0 [shape = 'u32[]', space=smem, size = 0x4, offset = 0x4, fixed_abs, tag = 'smem constant byte address 0x4 - core index']
  #allocation1 [shape = 'u32[144,128]{1,0:T(1,128)}', space=vmem, size = 0x12000, scoped, tag = 'internal scratch']
  %s0 = inlined_call_operand.vmem [shape: f32[128,256], index: 0, kind: input, shape index: {}]
  %s1 = inlined_call_operand.vmem [shape: f32[1,256], index: 1, kind: input, shape index: {}]
  %s2 = inlined_call_operand.vmem [shape: f32[1,256], index: 2, kind: input, shape index: {}]
  %s3 = inlined_call_operand.vmem [shape: f32[128,256], index: 3, kind: output, shape index: {}]
  %s4 = sld [smem:[#allocation0]]
  $region22: #{fwd.57} parent=0
    _
  %s6 = ssub.s32 1, %s4
  %s7 = scalar_select 0, %s6, %s4
  // Predicated region
  $region2: #{fwd.57} parent=0 // pred_check
    _
  $region3: #{fwd.57} parent=0 // pred_check_branch
    %9 = sbr.rel (0) target = $region5
  $region4: #{fwd.57} parent=0 // pred_region
    _
  $region5: #{fwd.57} parent=0 // pred_fallthru
    _
  // Predicated region
  $region6: #{fwd.57} parent=0 // pred_check
    _
  $region7: #{fwd.57} parent=0 // pred_check_branch
    %11 = sbr.rel (0) target = $region9
  $region8: #{fwd.57} parent=0 // pred_region
    _
  $region9: #{fwd.57} parent=0 // pred_fallthru
    _
  // Predicated region
  $region10: #{fwd.57} parent=0 // pred_check
    _
  $region11: #{fwd.57} parent=0 // pred_check_branch
    %13 = sbr.rel (0) target = $region13
  $region12: #{fwd.57} parent=0 // pred_region
    _
  $region13: #{fwd.57} parent=0 // pred_fallthru
    _
  %v14 = vld [vmem:[%s0] sm:$0xff]
  %v15 = vld [vmem:[%s0 + $0x8] sm:$0xff]
  %v16 = vld [vmem:[%s0 + $0x10] sm:$0xff]
  %v17 = vld [vmem:[%s0 + $0x18] sm:$0xff]
  %v18 = vld [vmem:[%s0 + $0x20] sm:$0xff]
  %v19 = vld [vmem:[%s0 + $0x28] sm:$0xff]
  %v20 = vld [vmem:[%s0 + $0x30] sm:$0xff]
  %v21 = vld [vmem:[%s0 + $0x38] sm:$0xff]
  %v22 = vld [vmem:[%s0 + $0x40] sm:$0xff]
  %v23 = vld [vmem:[%s0 + $0x48] sm:$0xff]
  %v24 = vld [vmem:[%s0 + $0x50] sm:$0xff]
  %v25 = vld [vmem:[%s0 + $0x58] sm:$0xff]
  %v26 = vld [vmem:[%s0 + $0x60] sm:$0xff]
  %v27 = vld [vmem:[%s0 + $0x68] sm:$0xff]
  %v28 = vld [vmem:[%s0 + $0x70] sm:$0xff]
  %v29 = vld [vmem:[%s0 + $0x78] sm:$0xff]
  %v30 = vld [vmem:[%s0 + $0x80] sm:$0xff]
  %v31 = vld [vmem:[%s0 + $0x88] sm:$0xff]
  %v32 = vld [vmem:[%s0 + $0x90] sm:$0xff]
  %v33 = vld [vmem:[%s0 + $0x98] sm:$0xff]
  %v34 = vld [vmem:[%s0 + $0xa0] sm:$0xff]
  %v35 = vld [vmem:[%s0 + $0xa8] sm:$0xff]
  %v36 = vld [vmem:[%s0 + $0xb0] sm:$0xff]
  %v37 = vld [vmem:[%s0 + $0xb8] sm:$0xff]
  %v38 = vld [vmem:[%s0 + $0xc0] sm:$0xff]
  %v39 = vld [vmem:[%s0 + $0xc8] sm:$0xff]
  %v40 = vld [vmem:[%s0 + $0xd0] sm:$0xff]
  %v41 = vld [vmem:[%s0 + $0xd8] sm:$0xff]
  %v42 = vld [vmem:[%s0 + $0xe0] sm:$0xff]
  %v43 = vld [vmem:[%s0 + $0xe8] sm:$0xff]
  %v44 = vld [vmem:[%s0 + $0xf0] sm:$0xff]
  %v45 = vld [vmem:[%s0 + $0xf8] sm:$0xff]
  %v46 = vadd.f32 %v14, %v15
  %47 = vadd.xlane.f32.xlu0 %v46
  %v48 = vpop.xlane.xlu0 %47
  %v49 = vadd.f32 %v16, %v17
  %50 = vadd.xlane.f32.xlu0 %v49
  %v51 = vpop.xlane.xlu0 %50
  %v52 = vadd.f32 %v18, %v19
  %53 = vadd.xlane.f32.xlu0 %v52
  %v54 = vpop.xlane.xlu0 %53
  %v55 = vadd.f32 %v20, %v21
  %56 = vadd.xlane.f32.xlu0 %v55
  %v57 = vpop.xlane.xlu0 %56
  %v58 = vadd.f32 %v22, %v23
  %59 = vadd.xlane.f32.xlu0 %v58
  %v60 = vpop.xlane.xlu0 %59
  %v61 = vadd.f32 %v24, %v25
  %62 = vadd.xlane.f32.xlu0 %v61
  %v63 = vpop.xlane.xlu0 %62
  %v64 = vadd.f32 %v26, %v27
  %65 = vadd.xlane.f32.xlu0 %v64
  %v66 = vpop.xlane.xlu0 %65
  %v67 = vadd.f32 %v28, %v29
  %68 = vadd.xlane.f32.xlu0 %v67
  %v69 = vpop.xlane.xlu0 %68
  %v70 = vadd.f32 %v30, %v31
  %71 = vadd.xlane.f32.xlu0 %v70
  %v72 = vpop.xlane.xlu0 %71
  %v73 = vadd.f32 %v32, %v33
  %74 = vadd.xlane.f32.xlu0 %v73
  %v75 = vpop.xlane.xlu0 %74
  %v76 = vadd.f32 %v34, %v35
  %77 = vadd.xlane.f32.xlu0 %v76
  %v78 = vpop.xlane.xlu0 %77
  %v79 = vadd.f32 %v36, %v37
  %80 = vadd.xlane.f32.xlu0 %v79
  %v81 = vpop.xlane.xlu0 %80
  %v82 = vadd.f32 %v38, %v39
  %83 = vadd.xlane.f32.xlu0 %v82
  %v84 = vpop.xlane.xlu0 %83
  %v85 = vadd.f32 %v40, %v41
  %86 = vadd.xlane.f32.xlu0 %v85
  %v87 = vpop.xlane.xlu0 %86
  %v88 = vadd.f32 %v42, %v43
  %89 = vadd.xlane.f32.xlu0 %v88
  %v90 = vpop.xlane.xlu0 %89
  %v91 = vadd.f32 %v44, %v45
  %92 = vadd.xlane.f32.xlu0 %v91
  %v93 = vpop.xlane.xlu0 %92
  %v94 = vrcp.pop 256.0
  %v95 = vmul.f32 %v48, %v94
  %v96 = vmul.f32 %v51, %v94
  %v97 = vmul.f32 %v54, %v94
  %v98 = vmul.f32 %v57, %v94
  %v99 = vmul.f32 %v60, %v94
  %v100 = vmul.f32 %v63, %v94
  %v101 = vmul.f32 %v66, %v94
  %v102 = vmul.f32 %v69, %v94
  %v103 = vmul.f32 %v72, %v94
  %v104 = vmul.f32 %v75, %v94
  %v105 = vmul.f32 %v78, %v94
  %v106 = vmul.f32 %v81, %v94
  %v107 = vmul.f32 %v84, %v94
  %v108 = vmul.f32 %v87, %v94
  %v109 = vmul.f32 %v90, %v94
  %v110 = vmul.f32 %v93, %v94
  %v111 = vsub.f32 %v14, %v95
  %v112 = vsub.f32 %v15, %v95
  %v113 = vsub.f32 %v16, %v96
  %v114 = vsub.f32 %v17, %v96
  %v115 = vsub.f32 %v18, %v97
  %v116 = vsub.f32 %v19, %v97
  %v117 = vsub.f32 %v20, %v98
  %v118 = vsub.f32 %v21, %v98
  %v119 = vsub.f32 %v22, %v99
  %v120 = vsub.f32 %v23, %v99
  %v121 = vsub.f32 %v24, %v100
  %v122 = vsub.f32 %v25, %v100
  %v123 = vsub.f32 %v26, %v101
  %v124 = vsub.f32 %v27, %v101
  %v125 = vsub.f32 %v28, %v102
  %v126 = vsub.f32 %v29, %v102
  %v127 = vsub.f32 %v30, %v103
  %v128 = vsub.f32 %v31, %v103
  %v129 = vsub.f32 %v32, %v104
  %v130 = vsub.f32 %v33, %v104
  %v131 = vsub.f32 %v34, %v105
  %v132 = vsub.f32 %v35, %v105
  %v133 = vsub.f32 %v36, %v106
  %v134 = vsub.f32 %v37, %v106
  %v135 = vsub.f32 %v38, %v107
  %v136 = vsub.f32 %v39, %v107
  %v137 = vsub.f32 %v40, %v108
  %v138 = vsub.f32 %v41, %v108
  %v139 = vsub.f32 %v42, %v109
  %v140 = vsub.f32 %v43, %v109
  %v141 = vsub.f32 %v44, %v110
  %v142 = vsub.f32 %v45, %v110
  %v143 = vmul.f32 %v111, %v111
  %v144 = vmul.f32 %v112, %v112
  %v145 = vmul.f32 %v113, %v113
  %v146 = vmul.f32 %v114, %v114
  %v147 = vmul.f32 %v115, %v115
  %v148 = vmul.f32 %v116, %v116
  %v149 = vmul.f32 %v117, %v117
  %v150 = vmul.f32 %v118, %v118
  %v151 = vmul.f32 %v119, %v119
  %v152 = vmul.f32 %v120, %v120
  %v153 = vmul.f32 %v121, %v121
  %v154 = vmul.f32 %v122, %v122
  %v155 = vmul.f32 %v123, %v123
  %v156 = vmul.f32 %v124, %v124
  %v157 = vmul.f32 %v125, %v125
  %v158 = vmul.f32 %v126, %v126
  %v159 = vmul.f32 %v127, %v127
  %v160 = vmul.f32 %v128, %v128
  %v161 = vmul.f32 %v129, %v129
  %v162 = vmul.f32 %v130, %v130
  %v163 = vmul.f32 %v131, %v131
  %v164 = vmul.f32 %v132, %v132
  %v165 = vmul.f32 %v133, %v133
  %v166 = vmul.f32 %v134, %v134
  %v167 = vmul.f32 %v135, %v135
  %v168 = vmul.f32 %v136, %v136
  %v169 = vmul.f32 %v137, %v137
  %v170 = vmul.f32 %v138, %v138
  %v171 = vmul.f32 %v139, %v139
  %v172 = vmul.f32 %v140, %v140
  %v173 = vmul.f32 %v141, %v141
  %v174 = vmul.f32 %v142, %v142
  %v175 = vadd.f32 %v143, %v144
  %176 = vadd.xlane.f32.xlu0 %v175
  %v177 = vpop.xlane.xlu0 %176
  %v178 = vadd.f32 %v145, %v146
  %179 = vadd.xlane.f32.xlu0 %v178
  %v180 = vpop.xlane.xlu0 %179
  %v181 = vadd.f32 %v147, %v148
  %182 = vadd.xlane.f32.xlu0 %v181
  %v183 = vpop.xlane.xlu0 %182
  %v184 = vadd.f32 %v149, %v150
  %185 = vadd.xlane.f32.xlu0 %v184
  %v186 = vpop.xlane.xlu0 %185
  %v187 = vadd.f32 %v151, %v152
  %188 = vadd.xlane.f32.xlu0 %v187
  %v189 = vpop.xlane.xlu0 %188
  %v190 = vadd.f32 %v153, %v154
  %191 = vadd.xlane.f32.xlu0 %v190
  %v192 = vpop.xlane.xlu0 %191
  %v193 = vadd.f32 %v155, %v156
  %194 = vadd.xlane.f32.xlu0 %v193
  %v195 = vpop.xlane.xlu0 %194
  %v196 = vadd.f32 %v157, %v158
  %197 = vadd.xlane.f32.xlu0 %v196
  %v198 = vpop.xlane.xlu0 %197
  %v199 = vadd.f32 %v159, %v160
  %200 = vadd.xlane.f32.xlu0 %v199
  %v201 = vpop.xlane.xlu0 %200
  %v202 = vadd.f32 %v161, %v162
  %203 = vadd.xlane.f32.xlu0 %v202
  %v204 = vpop.xlane.xlu0 %203
  %v205 = vadd.f32 %v163, %v164
  %206 = vadd.xlane.f32.xlu0 %v205
  %v207 = vpop.xlane.xlu0 %206
  %v208 = vadd.f32 %v165, %v166
  %209 = vadd.xlane.f32.xlu0 %v208
  %v210 = vpop.xlane.xlu0 %209
  %v211 = vadd.f32 %v167, %v168
  %212 = vadd.xlane.f32.xlu0 %v211
  %v213 = vpop.xlane.xlu0 %212
  %v214 = vadd.f32 %v169, %v170
  %215 = vadd.xlane.f32.xlu0 %v214
  %v216 = vpop.xlane.xlu0 %215
  %v217 = vadd.f32 %v171, %v172
  %218 = vadd.xlane.f32.xlu0 %v217
  %v219 = vpop.xlane.xlu0 %218
  %v220 = vadd.f32 %v173, %v174
  %221 = vadd.xlane.f32.xlu0 %v220
  %v222 = vpop.xlane.xlu0 %221
  %v223 = vmul.f32 %v177, %v94
  %v224 = vmul.f32 %v180, %v94
  %v225 = vmul.f32 %v183, %v94
  %v226 = vmul.f32 %v186, %v94
  %v227 = vmul.f32 %v189, %v94
  %v228 = vmul.f32 %v192, %v94
  %v229 = vmul.f32 %v195, %v94
  %v230 = vmul.f32 %v198, %v94
  %v231 = vmul.f32 %v201, %v94
  %v232 = vmul.f32 %v204, %v94
  %v233 = vmul.f32 %v207, %v94
  %v234 = vmul.f32 %v210, %v94
  %v235 = vmul.f32 %v213, %v94
  %v236 = vmul.f32 %v216, %v94
  %v237 = vmul.f32 %v219, %v94
  %v238 = vmul.f32 %v222, %v94
  %v239 = vadd.f32 %v223, 1e-05
  %v240 = vadd.f32 %v224, 1e-05
  %v241 = vadd.f32 %v225, 1e-05
  %v242 = vadd.f32 %v226, 1e-05
  %v243 = vadd.f32 %v227, 1e-05
  %v244 = vadd.f32 %v228, 1e-05
  %v245 = vadd.f32 %v229, 1e-05
  %v246 = vadd.f32 %v230, 1e-05
  %v247 = vadd.f32 %v231, 1e-05
  %v248 = vadd.f32 %v232, 1e-05
  %v249 = vadd.f32 %v233, 1e-05
  %v250 = vadd.f32 %v234, 1e-05
  %v251 = vadd.f32 %v235, 1e-05
  %v252 = vadd.f32 %v236, 1e-05
  %v253 = vadd.f32 %v237, 1e-05
  %v254 = vadd.f32 %v238, 1e-05
  %v255 = vrsqrt.pop %v239
  %v256 = vrsqrt.pop %v240
  %v257 = vrsqrt.pop %v241
  %v258 = vrsqrt.pop %v242
  %v259 = vrsqrt.pop %v243
  %v260 = vrsqrt.pop %v244
  %v261 = vrsqrt.pop %v245
  %v262 = vrsqrt.pop %v246
  %v263 = vrsqrt.pop %v247
  %v264 = vrsqrt.pop %v248
  %v265 = vrsqrt.pop %v249
  %v266 = vrsqrt.pop %v250
  %v267 = vrsqrt.pop %v251
  %v268 = vrsqrt.pop %v252
  %v269 = vrsqrt.pop %v253
  %v270 = vrsqrt.pop %v254
  %v271 = vmul.f32 %v111, %v255
  %v272 = vmul.f32 %v112, %v255
  %v273 = vmul.f32 %v113, %v256
  %v274 = vmul.f32 %v114, %v256
  %v275 = vmul.f32 %v115, %v257
  %v276 = vmul.f32 %v116, %v257
  %v277 = vmul.f32 %v117, %v258
  %v278 = vmul.f32 %v118, %v258
  %v279 = vmul.f32 %v119, %v259
  %v280 = vmul.f32 %v120, %v259
  %v281 = vmul.f32 %v121, %v260
  %v282 = vmul.f32 %v122, %v260
  %v283 = vmul.f32 %v123, %v261
  %v284 = vmul.f32 %v124, %v261
  %v285 = vmul.f32 %v125, %v262
  %v286 = vmul.f32 %v126, %v262
  %v287 = vmul.f32 %v127, %v263
  %v288 = vmul.f32 %v128, %v263
  %v289 = vmul.f32 %v129, %v264
  %v290 = vmul.f32 %v130, %v264
  %v291 = vmul.f32 %v131, %v265
  %v292 = vmul.f32 %v132, %v265
  %v293 = vmul.f32 %v133, %v266
  %v294 = vmul.f32 %v134, %v266
  %v295 = vmul.f32 %v135, %v267
  %v296 = vmul.f32 %v136, %v267
  %v297 = vmul.f32 %v137, %v268
  %v298 = vmul.f32 %v138, %v268
  %v299 = vmul.f32 %v139, %v269
  %v300 = vmul.f32 %v140, %v269
  %v301 = vmul.f32 %v141, %v270
  %v302 = vmul.f32 %v142, %v270
  %v303 = vld [vmem:[%s1] sm:$0x3]
  %v305 = vlaneseq
  %v306 = vshrl.u32 %v305, 7
  %v307 = vsub.s32 0, %v306
  %v308 = vrot.slane %v303, %v307
  %v309 = vlaneseq
  %v310 = vshrl.u32 %v309, 7
  %v311 = vsub.s32 1, %v310
  %v312 = vrot.slane %v303, %v311
  %v315 = vmul.f32 %v271, %v308
  %v316 = vmul.f32 %v272, %v312
  %v317 = vmul.f32 %v273, %v308
  %v318 = vmul.f32 %v274, %v312
  %v319 = vmul.f32 %v275, %v308
  %v320 = vmul.f32 %v276, %v312
  %v321 = vmul.f32 %v277, %v308
  %v322 = vmul.f32 %v278, %v312
  %v323 = vmul.f32 %v279, %v308
  %v324 = vmul.f32 %v280, %v312
  %v325 = vmul.f32 %v281, %v308
  %v326 = vmul.f32 %v282, %v312
  %v327 = vmul.f32 %v283, %v308
  %v328 = vmul.f32 %v284, %v312
  %v329 = vmul.f32 %v285, %v308
  %v330 = vmul.f32 %v286, %v312
  %v331 = vmul.f32 %v287, %v308
  %v332 = vmul.f32 %v288, %v312
  %v333 = vmul.f32 %v289, %v308
  %v334 = vmul.f32 %v290, %v312
  %v335 = vmul.f32 %v291, %v308
  %v336 = vmul.f32 %v292, %v312
  %v337 = vmul.f32 %v293, %v308
  %v338 = vmul.f32 %v294, %v312
  %v339 = vmul.f32 %v295, %v308
  %v340 = vmul.f32 %v296, %v312
  %v341 = vmul.f32 %v297, %v308
  %v342 = vmul.f32 %v298, %v312
  %v343 = vmul.f32 %v299, %v308
  %v344 = vmul.f32 %v300, %v312
  %v345 = vmul.f32 %v301, %v308
  %v346 = vmul.f32 %v302, %v312
  %v347 = vld [vmem:[%s2] sm:$0x3]
  %v349 = vlaneseq
  %v350 = vshrl.u32 %v349, 7
  %v351 = vsub.s32 0, %v350
  %v352 = vrot.slane %v347, %v351
  %v353 = vlaneseq
  %v354 = vshrl.u32 %v353, 7
  %v355 = vsub.s32 1, %v354
  %v356 = vrot.slane %v347, %v355
  %v359 = vadd.f32 %v315, %v352
  %v360 = vadd.f32 %v316, %v356
  %v361 = vadd.f32 %v317, %v352
  %v362 = vadd.f32 %v318, %v356
  %v363 = vadd.f32 %v319, %v352
  %v364 = vadd.f32 %v320, %v356
  %v365 = vadd.f32 %v321, %v352
  %v366 = vadd.f32 %v322, %v356
  %v367 = vadd.f32 %v323, %v352
  %v368 = vadd.f32 %v324, %v356
  %v369 = vadd.f32 %v325, %v352
  %v370 = vadd.f32 %v326, %v356
  %v371 = vadd.f32 %v327, %v352
  %v372 = vadd.f32 %v328, %v356
  %v373 = vadd.f32 %v329, %v352
  %v374 = vadd.f32 %v330, %v356
  %v375 = vadd.f32 %v331, %v352
  %v376 = vadd.f32 %v332, %v356
  %v377 = vadd.f32 %v333, %v352
  %v378 = vadd.f32 %v334, %v356
  %v379 = vadd.f32 %v335, %v352
  %v380 = vadd.f32 %v336, %v356
  %v381 = vadd.f32 %v337, %v352
  %v382 = vadd.f32 %v338, %v356
  %v383 = vadd.f32 %v339, %v352
  %v384 = vadd.f32 %v340, %v356
  %v385 = vadd.f32 %v341, %v352
  %v386 = vadd.f32 %v342, %v356
  %v387 = vadd.f32 %v343, %v352
  %v388 = vadd.f32 %v344, %v356
  %v389 = vadd.f32 %v345, %v352
  %v390 = vadd.f32 %v346, %v356
  %391 = vst [vmem:[%s3] sm:$0xff] %v359
  %392 = vst [vmem:[%s3 + $0x8] sm:$0xff] %v360
  %393 = vst [vmem:[%s3 + $0x10] sm:$0xff] %v361
  %394 = vst [vmem:[%s3 + $0x18] sm:$0xff] %v362
  %395 = vst [vmem:[%s3 + $0x20] sm:$0xff] %v363
  %396 = vst [vmem:[%s3 + $0x28] sm:$0xff] %v364
  %397 = vst [vmem:[%s3 + $0x30] sm:$0xff] %v365
  %398 = vst [vmem:[%s3 + $0x38] sm:$0xff] %v366
  %399 = vst [vmem:[%s3 + $0x40] sm:$0xff] %v367
  %400 = vst [vmem:[%s3 + $0x48] sm:$0xff] %v368
  %401 = vst [vmem:[%s3 + $0x50] sm:$0xff] %v369
  %402 = vst [vmem:[%s3 + $0x58] sm:$0xff] %v370
  %403 = vst [vmem:[%s3 + $0x60] sm:$0xff] %v371
  %404 = vst [vmem:[%s3 + $0x68] sm:$0xff] %v372
  %405 = vst [vmem:[%s3 + $0x70] sm:$0xff] %v373
  %406 = vst [vmem:[%s3 + $0x78] sm:$0xff] %v374
  %407 = vst [vmem:[%s3 + $0x80] sm:$0xff] %v375
  %408 = vst [vmem:[%s3 + $0x88] sm:$0xff] %v376
  %409 = vst [vmem:[%s3 + $0x90] sm:$0xff] %v377
  %410 = vst [vmem:[%s3 + $0x98] sm:$0xff] %v378
  %411 = vst [vmem:[%s3 + $0xa0] sm:$0xff] %v379
  %412 = vst [vmem:[%s3 + $0xa8] sm:$0xff] %v380
  %413 = vst [vmem:[%s3 + $0xb0] sm:$0xff] %v381
  %414 = vst [vmem:[%s3 + $0xb8] sm:$0xff] %v382
  %415 = vst [vmem:[%s3 + $0xc0] sm:$0xff] %v383
  %416 = vst [vmem:[%s3 + $0xc8] sm:$0xff] %v384
  %417 = vst [vmem:[%s3 + $0xd0] sm:$0xff] %v385
  %418 = vst [vmem:[%s3 + $0xd8] sm:$0xff] %v386
  %419 = vst [vmem:[%s3 + $0xe0] sm:$0xff] %v387
  %420 = vst [vmem:[%s3 + $0xe8] sm:$0xff] %v388
  %421 = vst [vmem:[%s3 + $0xf0] sm:$0xff] %v389
  %422 = vst [vmem:[%s3 + $0xf8] sm:$0xff] %v390
  // Predicated region
  $region14: #{fwd.57} parent=0 // pred_check
    _
  $region15: #{fwd.57} parent=0 // pred_check_branch
    %424 = sbr.rel (0) target = $region17
  $region16: #{fwd.57} parent=0 // pred_region
    _
  $region17: #{fwd.57} parent=0 // pred_fallthru
    _
  // Predicated region
  $region18: #{fwd.57} parent=0 // pred_check
    _
  $region19: #{fwd.57} parent=0 // pred_check_branch
    %426 = sbr.rel (0) target = $region21
  $region20: #{fwd.57} parent=0 // pred_region
    _
  $region21: #{fwd.57} parent=0 // pred_fallthru
    _

// kernel: fwd.40
$region0: #{fwd.40}
  #allocation0 [shape = 'u32[]', space=smem, size = 0x4, offset = 0x4, fixed_abs, tag = 'smem constant byte address 0x4 - core index']
  #allocation1 [shape = 'u32[144,128]{1,0:T(1,128)}', space=vmem, size = 0x12000, scoped, tag = 'internal scratch']
  #allocation2 [shape = 'f32[128,512]{1,0:T(8,128)}', space=vmem, size = 0x40000, scoped, tag = 'scratch operand']
  %s0 = inlined_call_operand.vmem [shape: bf16[128,256], index: 0, kind: input, shape index: {}]
  %s1 = inlined_call_operand.vmem [shape: bf16[256,512], index: 1, kind: input, shape index: {}]
  %s2 = inlined_call_operand.vmem [shape: f32[1,512], index: 2, kind: input, shape index: {}]
  %s3 = inlined_call_operand.vmem [shape: f32[128,512], index: 3, kind: output, shape index: {}]
  %s4 = sld [smem:[#allocation0]]
  $region30: #{fwd.40} parent=0
    _
  %s6 = ssub.s32 1, %s4
  %s7 = scalar_select 0, %s6, %s4
  // Predicated region
  $region2: #{fwd.40} parent=0 // pred_check
    _
  $region3: #{fwd.40} parent=0 // pred_check_branch
    %9 = sbr.rel (0) target = $region5
  $region4: #{fwd.40} parent=0 // pred_region
    _
  $region5: #{fwd.40} parent=0 // pred_fallthru
    _
  // Predicated region
  $region6: #{fwd.40} parent=0 // pred_check
    _
  $region7: #{fwd.40} parent=0 // pred_check_branch
    %11 = sbr.rel (0) target = $region9
  $region8: #{fwd.40} parent=0 // pred_region
    _
  $region9: #{fwd.40} parent=0 // pred_fallthru
    _
  // Predicated region
  $region10: #{fwd.40} parent=0 // pred_check
    _
  $region11: #{fwd.40} parent=0 // pred_check_branch
    %13 = sbr.rel (0) target = $region13
  $region12: #{fwd.40} parent=0 // pred_region
    _
  $region13: #{fwd.40} parent=0 // pred_fallthru
    _
  %p14 = scmp.eq.s32.totalorder 0, 0
  // Predicated region
  $region14: #{fwd.40} parent=0 // pred_check
    %p15 = pneg %p14
  $region15: #{fwd.40} parent=0 // pred_check_branch
    %17 = sbr.rel (%p15) target = $region17
  $region16: #{fwd.40} parent=0 // pred_region
    %18 = vst [vmem:[#allocation2] sm:$0xff] 0.0
    %19 = vst [vmem:[#allocation2 + $0x8] sm:$0xff] 0.0
    %20 = vst [vmem:[#allocation2 + $0x10] sm:$0xff] 0.0
    %21 = vst [vmem:[#allocation2 + $0x18] sm:$0xff] 0.0
    %22 = vst [vmem:[#allocation2 + $0x20] sm:$0xff] 0.0
    %23 = vst [vmem:[#allocation2 + $0x28] sm:$0xff] 0.0
    %24 = vst [vmem:[#allocation2 + $0x30] sm:$0xff] 0.0
    %25 = vst [vmem:[#allocation2 + $0x38] sm:$0xff] 0.0
    %26 = vst [vmem:[#allocation2 + $0x40] sm:$0xff] 0.0
    %27 = vst [vmem:[#allocation2 + $0x48] sm:$0xff] 0.0
    %28 = vst [vmem:[#allocation2 + $0x50] sm:$0xff] 0.0
    %29 = vst [vmem:[#allocation2 + $0x58] sm:$0xff] 0.0
    %30 = vst [vmem:[#allocation2 + $0x60] sm:$0xff] 0.0
    %31 = vst [vmem:[#allocation2 + $0x68] sm:$0xff] 0.0
    %32 = vst [vmem:[#allocation2 + $0x70] sm:$0xff] 0.0
    %33 = vst [vmem:[#allocation2 + $0x78] sm:$0xff] 0.0
    %34 = vst [vmem:[#allocation2 + $0x80] sm:$0xff] 0.0
    %35 = vst [vmem:[#allocation2 + $0x88] sm:$0xff] 0.0
    %36 = vst [vmem:[#allocation2 + $0x90] sm:$0xff] 0.0
    %37 = vst [vmem:[#allocation2 + $0x98] sm:$0xff] 0.0
    %38 = vst [vmem:[#allocation2 + $0xa0] sm:$0xff] 0.0
    %39 = vst [vmem:[#allocation2 + $0xa8] sm:$0xff] 0.0
    %40 = vst [vmem:[#allocation2 + $0xb0] sm:$0xff] 0.0
    %41 = vst [vmem:[#allocation2 + $0xb8] sm:$0xff] 0.0
    %42 = vst [vmem:[#allocation2 + $0xc0] sm:$0xff] 0.0
    %43 = vst [vmem:[#allocation2 + $0xc8] sm:$0xff] 0.0
    %44 = vst [vmem:[#allocation2 + $0xd0] sm:$0xff] 0.0
    %45 = vst [vmem:[#allocation2 + $0xd8] sm:$0xff] 0.0
    %46 = vst [vmem:[#allocation2 + $0xe0] sm:$0xff] 0.0
    %47 = vst [vmem:[#allocation2 + $0xe8] sm:$0xff] 0.0
    %48 = vst [vmem:[#allocation2 + $0xf0] sm:$0xff] 0.0
    %49 = vst [vmem:[#allocation2 + $0xf8] sm:$0xff] 0.0
    %50 = vst [vmem:[#allocation2 + $0x100] sm:$0xff] 0.0
    %51 = vst [vmem:[#allocation2 + $0x108] sm:$0xff] 0.0
    %52 = vst [vmem:[#allocation2 + $0x110] sm:$0xff] 0.0
    %53 = vst [vmem:[#allocation2 + $0x118] sm:$0xff] 0.0
    %54 = vst [vmem:[#allocation2 + $0x120] sm:$0xff] 0.0
    %55 = vst [vmem:[#allocation2 + $0x128] sm:$0xff] 0.0
    %56 = vst [vmem:[#allocation2 + $0x130] sm:$0xff] 0.0
    %57 = vst [vmem:[#allocation2 + $0x138] sm:$0xff] 0.0
    %58 = vst [vmem:[#allocation2 + $0x140] sm:$0xff] 0.0
    %59 = vst [vmem:[#allocation2 + $0x148] sm:$0xff] 0.0
    %60 = vst [vmem:[#allocation2 + $0x150] sm:$0xff] 0.0
    %61 = vst [vmem:[#allocation2 + $0x158] sm:$0xff] 0.0
    %62 = vst [vmem:[#allocation2 + $0x160] sm:$0xff] 0.0
    %63 = vst [vmem:[#allocation2 + $0x168] sm:$0xff] 0.0
    %64 = vst [vmem:[#allocation2 + $0x170] sm:$0xff] 0.0
    %65 = vst [vmem:[#allocation2 + $0x178] sm:$0xff] 0.0
    %66 = vst [vmem:[#allocation2 + $0x180] sm:$0xff] 0.0
    %67 = vst [vmem:[#allocation2 + $0x188] sm:$0xff] 0.0
    %68 = vst [vmem:[#allocation2 + $0x190] sm:$0xff] 0.0
    %69 = vst [vmem:[#allocation2 + $0x198] sm:$0xff] 0.0
    %70 = vst [vmem:[#allocation2 + $0x1a0] sm:$0xff] 0.0
    %71 = vst [vmem:[#allocation2 + $0x1a8] sm:$0xff] 0.0
    %72 = vst [vmem:[#allocation2 + $0x1b0] sm:$0xff] 0.0
    %73 = vst [vmem:[#allocation2 + $0x1b8] sm:$0xff] 0.0
    %74 = vst [vmem:[#allocation2 + $0x1c0] sm:$0xff] 0.0
    %75 = vst [vmem:[#allocation2 + $0x1c8] sm:$0xff] 0.0
    %76 = vst [vmem:[#allocation2 + $0x1d0] sm:$0xff] 0.0
    %77 = vst [vmem:[#allocation2 + $0x1d8] sm:$0xff] 0.0
    %78 = vst [vmem:[#allocation2 + $0x1e0] sm:$0xff] 0.0
    %79 = vst [vmem:[#allocation2 + $0x1e8] sm:$0xff] 0.0
    %80 = vst [vmem:[#allocation2 + $0x1f0] sm:$0xff] 0.0
    %81 = vst [vmem:[#allocation2 + $0x1f8] sm:$0xff] 0.0
  $region17: #{fwd.40} parent=0 // pred_fallthru
    _
  %v82 = vld [vmem:[#allocation2] sm:$0xff]
  %v83 = vld [vmem:[#allocation2 + $0x8] sm:$0xff]
  %v84 = vld [vmem:[#allocation2 + $0x10] sm:$0xff]
  %v85 = vld [vmem:[#allocation2 + $0x18] sm:$0xff]
  %v86 = vld [vmem:[#allocation2 + $0x20] sm:$0xff]
  %v87 = vld [vmem:[#allocation2 + $0x28] sm:$0xff]
  %v88 = vld [vmem:[#allocation2 + $0x30] sm:$0xff]
  %v89 = vld [vmem:[#allocation2 + $0x38] sm:$0xff]
  %v90 = vld [vmem:[#allocation2 + $0x40] sm:$0xff]
  %v91 = vld [vmem:[#allocation2 + $0x48] sm:$0xff]
  %v92 = vld [vmem:[#allocation2 + $0x50] sm:$0xff]
  %v93 = vld [vmem:[#allocation2 + $0x58] sm:$0xff]
  %v94 = vld [vmem:[#allocation2 + $0x60] sm:$0xff]
  %v95 = vld [vmem:[#allocation2 + $0x68] sm:$0xff]
  %v96 = vld [vmem:[#allocation2 + $0x70] sm:$0xff]
  %v97 = vld [vmem:[#allocation2 + $0x78] sm:$0xff]
  %v98 = vld [vmem:[#allocation2 + $0x80] sm:$0xff]
  %v99 = vld [vmem:[#allocation2 + $0x88] sm:$0xff]
  %v100 = vld [vmem:[#allocation2 + $0x90] sm:$0xff]
  %v101 = vld [vmem:[#allocation2 + $0x98] sm:$0xff]
  %v102 = vld [vmem:[#allocation2 + $0xa0] sm:$0xff]
  %v103 = vld [vmem:[#allocation2 + $0xa8] sm:$0xff]
  %v104 = vld [vmem:[#allocation2 + $0xb0] sm:$0xff]
  %v105 = vld [vmem:[#allocation2 + $0xb8] sm:$0xff]
  %v106 = vld [vmem:[#allocation2 + $0xc0] sm:$0xff]
  %v107 = vld [vmem:[#allocation2 + $0xc8] sm:$0xff]
  %v108 = vld [vmem:[#allocation2 + $0xd0] sm:$0xff]
  %v109 = vld [vmem:[#allocation2 + $0xd8] sm:$0xff]
  %v110 = vld [vmem:[#allocation2 + $0xe0] sm:$0xff]
  %v111 = vld [vmem:[#allocation2 + $0xe8] sm:$0xff]
  %v112 = vld [vmem:[#allocation2 + $0xf0] sm:$0xff]
  %v113 = vld [vmem:[#allocation2 + $0xf8] sm:$0xff]
  %v114 = vld [vmem:[#allocation2 + $0x100] sm:$0xff]
  %v115 = vld [vmem:[#allocation2 + $0x108] sm:$0xff]
  %v116 = vld [vmem:[#allocation2 + $0x110] sm:$0xff]
  %v117 = vld [vmem:[#allocation2 + $0x118] sm:$0xff]
  %v118 = vld [vmem:[#allocation2 + $0x120] sm:$0xff]
  %v119 = vld [vmem:[#allocation2 + $0x128] sm:$0xff]
  %v120 = vld [vmem:[#allocation2 + $0x130] sm:$0xff]
  %v121 = vld [vmem:[#allocation2 + $0x138] sm:$0xff]
  %v122 = vld [vmem:[#allocation2 + $0x140] sm:$0xff]
  %v123 = vld [vmem:[#allocation2 + $0x148] sm:$0xff]
  %v124 = vld [vmem:[#allocation2 + $0x150] sm:$0xff]
  %v125 = vld [vmem:[#allocation2 + $0x158] sm:$0xff]
  %v126 = vld [vmem:[#allocation2 + $0x160] sm:$0xff]
  %v127 = vld [vmem:[#allocation2 + $0x168] sm:$0xff]
  %v128 = vld [vmem:[#allocation2 + $0x170] sm:$0xff]
  %v129 = vld [vmem:[#allocation2 + $0x178] sm:$0xff]
  %v130 = vld [vmem:[#allocation2 + $0x180] sm:$0xff]
  %v131 = vld [vmem:[#allocation2 + $0x188] sm:$0xff]
  %v132 = vld [vmem:[#allocation2 + $0x190] sm:$0xff]
  %v133 = vld [vmem:[#allocation2 + $0x198] sm:$0xff]
  %v134 = vld [vmem:[#allocation2 + $0x1a0] sm:$0xff]
  %v135 = vld [vmem:[#allocation2 + $0x1a8] sm:$0xff]
  %v136 = vld [vmem:[#allocation2 + $0x1b0] sm:$0xff]
  %v137 = vld [vmem:[#allocation2 + $0x1b8] sm:$0xff]
  %v138 = vld [vmem:[#allocation2 + $0x1c0] sm:$0xff]
  %v139 = vld [vmem:[#allocation2 + $0x1c8] sm:$0xff]
  %v140 = vld [vmem:[#allocation2 + $0x1d0] sm:$0xff]
  %v141 = vld [vmem:[#allocation2 + $0x1d8] sm:$0xff]
  %v142 = vld [vmem:[#allocation2 + $0x1e0] sm:$0xff]
  %v143 = vld [vmem:[#allocation2 + $0x1e8] sm:$0xff]
  %v144 = vld [vmem:[#allocation2 + $0x1f0] sm:$0xff]
  %v145 = vld [vmem:[#allocation2 + $0x1f8] sm:$0xff]
  %v146 = vld [vmem:[%s0] sm:$0xff]
  %v147 = vld [vmem:[%s0 + $0x8] sm:$0xff]
  %v148 = vld [vmem:[%s0 + $0x10] sm:$0xff]
  %v149 = vld [vmem:[%s0 + $0x18] sm:$0xff]
  %v150 = vld [vmem:[%s0 + $0x20] sm:$0xff]
  %v151 = vld [vmem:[%s0 + $0x28] sm:$0xff]
  %v152 = vld [vmem:[%s0 + $0x30] sm:$0xff]
  %v153 = vld [vmem:[%s0 + $0x38] sm:$0xff]
  %v154 = vld [vmem:[%s0 + $0x40] sm:$0xff]
  %v155 = vld [vmem:[%s0 + $0x48] sm:$0xff]
  %v156 = vld [vmem:[%s0 + $0x50] sm:$0xff]
  %v157 = vld [vmem:[%s0 + $0x58] sm:$0xff]
  %v158 = vld [vmem:[%s0 + $0x60] sm:$0xff]
  %v159 = vld [vmem:[%s0 + $0x68] sm:$0xff]
  %v160 = vld [vmem:[%s0 + $0x70] sm:$0xff]
  %v161 = vld [vmem:[%s0 + $0x78] sm:$0xff]
  %v162 = vld [vmem:[%s1] sm:$0xff]
  %v163 = vld [vmem:[%s1 + $0x8] sm:$0xff]
  %v164 = vld [vmem:[%s1 + $0x10] sm:$0xff]
  %v165 = vld [vmem:[%s1 + $0x18] sm:$0xff]
  %v166 = vld [vmem:[%s1 + $0x20] sm:$0xff]
  %v167 = vld [vmem:[%s1 + $0x28] sm:$0xff]
  %v168 = vld [vmem:[%s1 + $0x30] sm:$0xff]
  %v169 = vld [vmem:[%s1 + $0x38] sm:$0xff]
  %v170 = vld [vmem:[%s1 + $0x40] sm:$0xff]
  %v171 = vld [vmem:[%s1 + $0x48] sm:$0xff]
  %v172 = vld [vmem:[%s1 + $0x50] sm:$0xff]
  %v173 = vld [vmem:[%s1 + $0x58] sm:$0xff]
  %v174 = vld [vmem:[%s1 + $0x60] sm:$0xff]
  %v175 = vld [vmem:[%s1 + $0x68] sm:$0xff]
  %v176 = vld [vmem:[%s1 + $0x70] sm:$0xff]
  %v177 = vld [vmem:[%s1 + $0x78] sm:$0xff]
  %v178 = vld [vmem:[%s1 + $0x80] sm:$0xff]
  %v179 = vld [vmem:[%s1 + $0x88] sm:$0xff]
  %v180 = vld [vmem:[%s1 + $0x90] sm:$0xff]
  %v181 = vld [vmem:[%s1 + $0x98] sm:$0xff]
  %v182 = vld [vmem:[%s1 + $0xa0] sm:$0xff]
  %v183 = vld [vmem:[%s1 + $0xa8] sm:$0xff]
  %v184 = vld [vmem:[%s1 + $0xb0] sm:$0xff]
  %v185 = vld [vmem:[%s1 + $0xb8] sm:$0xff]
  %v186 = vld [vmem:[%s1 + $0xc0] sm:$0xff]
  %v187 = vld [vmem:[%s1 + $0xc8] sm:$0xff]
  %v188 = vld [vmem:[%s1 + $0xd0] sm:$0xff]
  %v189 = vld [vmem:[%s1 + $0xd8] sm:$0xff]
  %v190 = vld [vmem:[%s1 + $0xe0] sm:$0xff]
  %v191 = vld [vmem:[%s1 + $0xe8] sm:$0xff]
  %v192 = vld [vmem:[%s1 + $0xf0] sm:$0xff]
  %v193 = vld [vmem:[%s1 + $0xf8] sm:$0xff]
  %v194 = vld [vmem:[%s1 + $0x100] sm:$0xff]
  %v195 = vld [vmem:[%s1 + $0x108] sm:$0xff]
  %v196 = vld [vmem:[%s1 + $0x110] sm:$0xff]
  %v197 = vld [vmem:[%s1 + $0x118] sm:$0xff]
  %v198 = vld [vmem:[%s1 + $0x120] sm:$0xff]
  %v199 = vld [vmem:[%s1 + $0x128] sm:$0xff]
  %v200 = vld [vmem:[%s1 + $0x130] sm:$0xff]
  %v201 = vld [vmem:[%s1 + $0x138] sm:$0xff]
  %v202 = vld [vmem:[%s1 + $0x140] sm:$0xff]
  %v203 = vld [vmem:[%s1 + $0x148] sm:$0xff]
  %v204 = vld [vmem:[%s1 + $0x150] sm:$0xff]
  %v205 = vld [vmem:[%s1 + $0x158] sm:$0xff]
  %v206 = vld [vmem:[%s1 + $0x160] sm:$0xff]
  %v207 = vld [vmem:[%s1 + $0x168] sm:$0xff]
  %v208 = vld [vmem:[%s1 + $0x170] sm:$0xff]
  %v209 = vld [vmem:[%s1 + $0x178] sm:$0xff]
  %v210 = vld [vmem:[%s1 + $0x180] sm:$0xff]
  %v211 = vld [vmem:[%s1 + $0x188] sm:$0xff]
  %v212 = vld [vmem:[%s1 + $0x190] sm:$0xff]
  %v213 = vld [vmem:[%s1 + $0x198] sm:$0xff]
  %v214 = vld [vmem:[%s1 + $0x1a0] sm:$0xff]
  %v215 = vld [vmem:[%s1 + $0x1a8] sm:$0xff]
  %v216 = vld [vmem:[%s1 + $0x1b0] sm:$0xff]
  %v217 = vld [vmem:[%s1 + $0x1b8] sm:$0xff]
  %v218 = vld [vmem:[%s1 + $0x1c0] sm:$0xff]
  %v219 = vld [vmem:[%s1 + $0x1c8] sm:$0xff]
  %v220 = vld [vmem:[%s1 + $0x1d0] sm:$0xff]
  %v221 = vld [vmem:[%s1 + $0x1d8] sm:$0xff]
  %v222 = vld [vmem:[%s1 + $0x1e0] sm:$0xff]
  %v223 = vld [vmem:[%s1 + $0x1e8] sm:$0xff]
  %v224 = vld [vmem:[%s1 + $0x1f0] sm:$0xff]
  %v225 = vld [vmem:[%s1 + $0x1f8] sm:$0xff]
  %v242 = vunpack.c.l.b16 %v146
  %v243 = vunpack.c.h.b16 %v146
  %v244 = vunpack.c.l.b16 %v147
  %v245 = vunpack.c.h.b16 %v147
  %v246 = vunpack.c.l.b16 %v148
  %v247 = vunpack.c.h.b16 %v148
  %v248 = vunpack.c.l.b16 %v149
  %v249 = vunpack.c.h.b16 %v149
  %v250 = vunpack.c.l.b16 %v150
  %v251 = vunpack.c.h.b16 %v150
  %v252 = vunpack.c.l.b16 %v151
  %v253 = vunpack.c.h.b16 %v151
  %v254 = vunpack.c.l.b16 %v152
  %v255 = vunpack.c.h.b16 %v152
  %v256 = vunpack.c.l.b16 %v153
  %v257 = vunpack.c.h.b16 %v153
  %v258 = vunpack.c.l.b16 %v154
  %v259 = vunpack.c.h.b16 %v154
  %v260 = vunpack.c.l.b16 %v155
  %v261 = vunpack.c.h.b16 %v155
  %v262 = vunpack.c.l.b16 %v156
  %v263 = vunpack.c.h.b16 %v156
  %v264 = vunpack.c.l.b16 %v157
  %v265 = vunpack.c.h.b16 %v157
  %v266 = vunpack.c.l.b16 %v158
  %v267 = vunpack.c.h.b16 %v158
  %v268 = vunpack.c.l.b16 %v159
  %v269 = vunpack.c.h.b16 %v159
  %v270 = vunpack.c.l.b16 %v160
  %v271 = vunpack.c.h.b16 %v160
  %v272 = vunpack.c.l.b16 %v161
  %v273 = vunpack.c.h.b16 %v161
  %v274 = vpack.c.b16 %v244, %v242
  %v275 = vpack.c.b16 %v245, %v243
  %v276 = vpack.c.b16 %v248, %v246
  %v277 = vpack.c.b16 %v249, %v247
  %v278 = vpack.c.b16 %v252, %v250
  %v279 = vpack.c.b16 %v253, %v251
  %v280 = vpack.c.b16 %v256, %v254
  %v281 = vpack.c.b16 %v257, %v255
  %v282 = vpack.c.b16 %v260, %v258
  %v283 = vpack.c.b16 %v261, %v259
  %v284 = vpack.c.b16 %v264, %v262
  %v285 = vpack.c.b16 %v265, %v263
  %v286 = vpack.c.b16 %v268, %v266
  %v287 = vpack.c.b16 %v269, %v267
  %v288 = vpack.c.b16 %v272, %v270
  %v289 = vpack.c.b16 %v273, %v271
  %v370 = vunpack.c.l.b16 %v162
  %v371 = vunpack.c.h.b16 %v162
  %v372 = vunpack.c.l.b16 %v163
  %v373 = vunpack.c.h.b16 %v163
  %v374 = vunpack.c.l.b16 %v164
  %v375 = vunpack.c.h.b16 %v164
  %v376 = vunpack.c.l.b16 %v165
  %v377 = vunpack.c.h.b16 %v165
  %v378 = vunpack.c.l.b16 %v166
  %v379 = vunpack.c.h.b16 %v166
  %v380 = vunpack.c.l.b16 %v167
  %v381 = vunpack.c.h.b16 %v167
  %v382 = vunpack.c.l.b16 %v168
  %v383 = vunpack.c.h.b16 %v168
  %v384 = vunpack.c.l.b16 %v169
  %v385 = vunpack.c.h.b16 %v169
  %v386 = vunpack.c.l.b16 %v170
  %v387 = vunpack.c.h.b16 %v170
  %v388 = vunpack.c.l.b16 %v171
  %v389 = vunpack.c.h.b16 %v171
  %v390 = vunpack.c.l.b16 %v172
  %v391 = vunpack.c.h.b16 %v172
  %v392 = vunpack.c.l.b16 %v173
  %v393 = vunpack.c.h.b16 %v173
  %v394 = vunpack.c.l.b16 %v174
  %v395 = vunpack.c.h.b16 %v174
  %v396 = vunpack.c.l.b16 %v175
  %v397 = vunpack.c.h.b16 %v175
  %v398 = vunpack.c.l.b16 %v176
  %v399 = vunpack.c.h.b16 %v176
  %v400 = vunpack.c.l.b16 %v177
  %v401 = vunpack.c.h.b16 %v177
  %v402 = vunpack.c.l.b16 %v178
  %v403 = vunpack.c.h.b16 %v178
  %v404 = vunpack.c.l.b16 %v179
  %v405 = vunpack.c.h.b16 %v179
  %v406 = vunpack.c.l.b16 %v180
  %v407 = vunpack.c.h.b16 %v180
  %v408 = vunpack.c.l.b16 %v181
  %v409 = vunpack.c.h.b16 %v181
  %v410 = vunpack.c.l.b16 %v182
  %v411 = vunpack.c.h.b16 %v182
  %v412 = vunpack.c.l.b16 %v183
  %v413 = vunpack.c.h.b16 %v183
  %v414 = vunpack.c.l.b16 %v184
  %v415 = vunpack.c.h.b16 %v184
  %v416 = vunpack.c.l.b16 %v185
  %v417 = vunpack.c.h.b16 %v185
  %v418 = vunpack.c.l.b16 %v186
  %v419 = vunpack.c.h.b16 %v186
  %v420 = vunpack.c.l.b16 %v187
  %v421 = vunpack.c.h.b16 %v187
  %v422 = vunpack.c.l.b16 %v188
  %v423 = vunpack.c.h.b16 %v188
  %v424 = vunpack.c.l.b16 %v189
  %v425 = vunpack.c.h.b16 %v189
  %v426 = vunpack.c.l.b16 %v190
  %v427 = vunpack.c.h.b16 %v190
  %v428 = vunpack.c.l.b16 %v191
  %v429 = vunpack.c.h.b16 %v191
  %v430 = vunpack.c.l.b16 %v192
  %v431 = vunpack.c.h.b16 %v192
  %v432 = vunpack.c.l.b16 %v193
  %v433 = vunpack.c.h.b16 %v193
  %v434 = vunpack.c.l.b16 %v194
  %v435 = vunpack.c.h.b16 %v194
  %v436 = vunpack.c.l.b16 %v195
  %v437 = vunpack.c.h.b16 %v195
  %v438 = vunpack.c.l.b16 %v196
  %v439 = vunpack.c.h.b16 %v196
  %v440 = vunpack.c.l.b16 %v197
  %v441 = vunpack.c.h.b16 %v197
  %v442 = vunpack.c.l.b16 %v198
  %v443 = vunpack.c.h.b16 %v198
  %v444 = vunpack.c.l.b16 %v199
  %v445 = vunpack.c.h.b16 %v199
  %v446 = vunpack.c.l.b16 %v200
  %v447 = vunpack.c.h.b16 %v200
  %v448 = vunpack.c.l.b16 %v201
  %v449 = vunpack.c.h.b16 %v201
  %v450 = vunpack.c.l.b16 %v202
  %v451 = vunpack.c.h.b16 %v202
  %v452 = vunpack.c.l.b16 %v203
  %v453 = vunpack.c.h.b16 %v203
  %v454 = vunpack.c.l.b16 %v204
  %v455 = vunpack.c.h.b16 %v204
  %v456 = vunpack.c.l.b16 %v205
  %v457 = vunpack.c.h.b16 %v205
  %v458 = vunpack.c.l.b16 %v206
  %v459 = vunpack.c.h.b16 %v206
  %v460 = vunpack.c.l.b16 %v207
  %v461 = vunpack.c.h.b16 %v207
  %v462 = vunpack.c.l.b16 %v208
  %v463 = vunpack.c.h.b16 %v208
  %v464 = vunpack.c.l.b16 %v209
  %v465 = vunpack.c.h.b16 %v209
  %v466 = vunpack.c.l.b16 %v210
  %v467 = vunpack.c.h.b16 %v210
  %v468 = vunpack.c.l.b16 %v211
  %v469 = vunpack.c.h.b16 %v211
  %v470 = vunpack.c.l.b16 %v212
  %v471 = vunpack.c.h.b16 %v212
  %v472 = vunpack.c.l.b16 %v213
  %v473 = vunpack.c.h.b16 %v213
  %v474 = vunpack.c.l.b16 %v214
  %v475 = vunpack.c.h.b16 %v214
  %v476 = vunpack.c.l.b16 %v215
  %v477 = vunpack.c.h.b16 %v215
  %v478 = vunpack.c.l.b16 %v216
  %v479 = vunpack.c.h.b16 %v216
  %v480 = vunpack.c.l.b16 %v217
  %v481 = vunpack.c.h.b16 %v217
  %v482 = vunpack.c.l.b16 %v218
  %v483 = vunpack.c.h.b16 %v218
  %v484 = vunpack.c.l.b16 %v219
  %v485 = vunpack.c.h.b16 %v219
  %v486 = vunpack.c.l.b16 %v220
  %v487 = vunpack.c.h.b16 %v220
  %v488 = vunpack.c.l.b16 %v221
  %v489 = vunpack.c.h.b16 %v221
  %v490 = vunpack.c.l.b16 %v222
  %v491 = vunpack.c.h.b16 %v222
  %v492 = vunpack.c.l.b16 %v223
  %v493 = vunpack.c.h.b16 %v223
  %v494 = vunpack.c.l.b16 %v224
  %v495 = vunpack.c.h.b16 %v224
  %v496 = vunpack.c.l.b16 %v225
  %v497 = vunpack.c.h.b16 %v225
  %v498 = vpack.c.b16 %v374, %v370
  %v499 = vpack.c.b16 %v375, %v371
  %v500 = vpack.c.b16 %v376, %v372
  %v501 = vpack.c.b16 %v377, %v373
  %v502 = vpack.c.b16 %v382, %v378
  %v503 = vpack.c.b16 %v383, %v379
  %v504 = vpack.c.b16 %v384, %v380
  %v505 = vpack.c.b16 %v385, %v381
  %v506 = vpack.c.b16 %v390, %v386
  %v507 = vpack.c.b16 %v391, %v387
  %v508 = vpack.c.b16 %v392, %v388
  %v509 = vpack.c.b16 %v393, %v389
  %v510 = vpack.c.b16 %v398, %v394
  %v511 = vpack.c.b16 %v399, %v395
  %v512 = vpack.c.b16 %v400, %v396
  %v513 = vpack.c.b16 %v401, %v397
  %v514 = vpack.c.b16 %v406, %v402
  %v515 = vpack.c.b16 %v407, %v403
  %v516 = vpack.c.b16 %v408, %v404
  %v517 = vpack.c.b16 %v409, %v405
  %v518 = vpack.c.b16 %v414, %v410
  %v519 = vpack.c.b16 %v415, %v411
  %v520 = vpack.c.b16 %v416, %v412
  %v521 = vpack.c.b16 %v417, %v413
  %v522 = vpack.c.b16 %v422, %v418
  %v523 = vpack.c.b16 %v423, %v419
  %v524 = vpack.c.b16 %v424, %v420
  %v525 = vpack.c.b16 %v425, %v421
  %v526 = vpack.c.b16 %v430, %v426
  %v527 = vpack.c.b16 %v431, %v427
  %v528 = vpack.c.b16 %v432, %v428
  %v529 = vpack.c.b16 %v433, %v429
  %v530 = vpack.c.b16 %v438, %v434
  %v531 = vpack.c.b16 %v439, %v435
  %v532 = vpack.c.b16 %v440, %v436
  %v533 = vpack.c.b16 %v441, %v437
  %v534 = vpack.c.b16 %v446, %v442
  %v535 = vpack.c.b16 %v447, %v443
  %v536 = vpack.c.b16 %v448, %v444
  %v537 = vpack.c.b16 %v449, %v445
  %v538 = vpack.c.b16 %v454, %v450
  %v539 = vpack.c.b16 %v455, %v451
  %v540 = vpack.c.b16 %v456, %v452
  %v541 = vpack.c.b16 %v457, %v453
  %v542 = vpack.c.b16 %v462, %v458
  %v543 = vpack.c.b16 %v463, %v459
  %v544 = vpack.c.b16 %v464, %v460
  %v545 = vpack.c.b16 %v465, %v461
  %v546 = vpack.c.b16 %v470, %v466
  %v547 = vpack.c.b16 %v471, %v467
  %v548 = vpack.c.b16 %v472, %v468
  %v549 = vpack.c.b16 %v473, %v469
  %v550 = vpack.c.b16 %v478, %v474
  %v551 = vpack.c.b16 %v479, %v475
  %v552 = vpack.c.b16 %v480, %v476
  %v553 = vpack.c.b16 %v481, %v477
  %v554 = vpack.c.b16 %v486, %v482
  %v555 = vpack.c.b16 %v487, %v483
  %v556 = vpack.c.b16 %v488, %v484
  %v557 = vpack.c.b16 %v489, %v485
  %v558 = vpack.c.b16 %v494, %v490
  %v559 = vpack.c.b16 %v495, %v491
  %v560 = vpack.c.b16 %v496, %v492
  %v561 = vpack.c.b16 %v497, %v493
  %626 = vmatprep.subr.bf16.mxu0 %v499
  %627 = vmatpush1.bf16.msra.mxu0 %v498
  %628 = vmatprep.subr.bf16.mxu0 %v503
  %629 = vmatpush1.bf16.msra.mxu0 %v502
  %630 = vmatprep.subr.bf16.mxu0 %v507
  %631 = vmatpush1.bf16.msra.mxu0 %v506
  %632 = vmatprep.subr.bf16.mxu0 %v511
  %633 = vmatpush1.bf16.msra.mxu0 %v510
  %634 = vmatprep.subr.bf16.mxu0 %v515
  %635 = vmatpush1.bf16.msra.mxu0 %v514
  %636 = vmatprep.subr.bf16.mxu0 %v519
  %637 = vmatpush1.bf16.msra.mxu0 %v518
  %638 = vmatprep.subr.bf16.mxu0 %v523
  %639 = vmatpush1.bf16.msra.mxu0 %v522
  %640 = vmatprep.subr.bf16.mxu0 %v527
  %641 = vmatpush1.bf16.msra.mxu0 %v526
  %642 = vmatprep.subr.bf16.mxu0 %v531
  %643 = vmatpush1.bf16.msra.mxu0 %v530
  %644 = vmatprep.subr.bf16.mxu0 %v535
  %645 = vmatpush1.bf16.msra.mxu0 %v534
  %646 = vmatprep.subr.bf16.mxu0 %v539
  %647 = vmatpush1.bf16.msra.mxu0 %v538
  %648 = vmatprep.subr.bf16.mxu0 %v543
  %649 = vmatpush1.bf16.msra.mxu0 %v542
  %650 = vmatprep.subr.bf16.mxu0 %v547
  %651 = vmatpush1.bf16.msra.mxu0 %v546
  %652 = vmatprep.subr.bf16.mxu0 %v551
  %653 = vmatpush1.bf16.msra.mxu0 %v550
  %654 = vmatprep.subr.bf16.mxu0 %v555
  %655 = vmatpush1.bf16.msra.mxu0 %v554
  %656 = vmatprep.subr.bf16.mxu0 %v559
  %657 = vmatpush1.bf16.msra.mxu0 %v558
  %658 = vmatprep.mubr.bf16.mxu0 %v275
  %659 = vmatmul.mubr.bf16.gmra.mrb[0].mxu0 %v274
  %v660 = vpop.f32.mrb[0].mxu0
  %v661 = vadd.f32 0.0, %v660
  %v662 = vpop.f32.mrb[0].mxu0
  %v663 = vadd.f32 0.0, %v662
  %v664 = vpop.f32.mrb[0].mxu0
  %v665 = vadd.f32 0.0, %v664
  %v666 = vpop.f32.mrb[0].mxu0
  %v667 = vadd.f32 0.0, %v666
  %668 = vmatprep.mubr.bf16.mxu0 %v277
  %669 = vmatmul.mubr.bf16.gmra.mrb[0].mxu0 %v276
  %v670 = vpop.f32.mrb[0].mxu0
  %v671 = vadd.f32 0.0, %v670
  %v672 = vpop.f32.mrb[0].mxu0
  %v673 = vadd.f32 0.0, %v672
  %v674 = vpop.f32.mrb[0].mxu0
  %v675 = vadd.f32 0.0, %v674
  %v676 = vpop.f32.mrb[0].mxu0
  %v677 = vadd.f32 0.0, %v676
  %678 = vmatprep.mubr.bf16.mxu0 %v279
  %679 = vmatmul.mubr.bf16.gmra.mrb[0].mxu0 %v278
  %v680 = vpop.f32.mrb[0].mxu0
  %v681 = vadd.f32 0.0, %v680
  %v682 = vpop.f32.mrb[0].mxu0
  %v683 = vadd.f32 0.0, %v682
  %v684 = vpop.f32.mrb[0].mxu0
  %v685 = vadd.f32 0.0, %v684
  %v686 = vpop.f32.mrb[0].mxu0
  %v687 = vadd.f32 0.0, %v686
  %688 = vmatprep.mubr.bf16.mxu0 %v281
  %689 = vmatmul.mubr.bf16.gmra.mrb[0].mxu0 %v280
  %v690 = vpop.f32.mrb[0].mxu0
  %v691 = vadd.f32 0.0, %v690
  %v692 = vpop.f32.mrb[0].mxu0
  %v693 = vadd.f32 0.0, %v692
  %v694 = vpop.f32.mrb[0].mxu0
  %v695 = vadd.f32 0.0, %v694
  %v696 = vpop.f32.mrb[0].mxu0
  %v697 = vadd.f32 0.0, %v696
  %698 = vmatprep.mubr.bf16.mxu0 %v283
  %699 = vmatmul.mubr.bf16.gmra.mrb[0].mxu0 %v282
  %v700 = vpop.f32.mrb[0].mxu0
  %v701 = vadd.f32 0.0, %v700
  %v702 = vpop.f32.mrb[0].mxu0
  %v703 = vadd.f32 0.0, %v702
  %v704 = vpop.f32.mrb[0].mxu0
  %v705 = vadd.f32 0.0, %v704
  %v706 = vpop.f32.mrb[0].mxu0
  %v707 = vadd.f32 0.0, %v706
  %708 = vmatprep.mubr.bf16.mxu0 %v285
  %709 = vmatmul.mubr.bf16.gmra.mrb[0].mxu0 %v284
  %v710 = vpop.f32.mrb[0].mxu0
  %v711 = vadd.f32 0.0, %v710
  %v712 = vpop.f32.mrb[0].mxu0
  %v713 = vadd.f32 0.0, %v712
  %v714 = vpop.f32.mrb[0].mxu0
  %v715 = vadd.f32 0.0, %v714
  %v716 = vpop.f32.mrb[0].mxu0
  %v717 = vadd.f32 0.0, %v716
  %718 = vmatprep.mubr.bf16.mxu0 %v287
  %719 = vmatmul.mubr.bf16.gmra.mrb[0].mxu0 %v286
  %v720 = vpop.f32.mrb[0].mxu0
  %v721 = vadd.f32 0.0, %v720
  %v722 = vpop.f32.mrb[0].mxu0
  %v723 = vadd.f32 0.0, %v722
  %v724 = vpop.f32.mrb[0].mxu0
  %v725 = vadd.f32 0.0, %v724
  %v726 = vpop.f32.mrb[0].mxu0
  %v727 = vadd.f32 0.0, %v726
  %728 = vmatprep.mubr.bf16.mxu0 %v289
  %729 = vmatmul.mubr.bf16.gmra.mrb[0].mxu0 %v288
  %v730 = vpop.f32.mrb[0].mxu0
  %v731 = vadd.f32 0.0, %v730
  %v732 = vpop.f32.mrb[0].mxu0
  %v733 = vadd.f32 0.0, %v732
  %v734 = vpop.f32.mrb[0].mxu0
  %v735 = vadd.f32 0.0, %v734
  %v736 = vpop.f32.mrb[0].mxu0
  %v737 = vadd.f32 0.0, %v736
  %738 = vdwg.mxu0
  %739 = vmatprep.subr.bf16.mxu0 %v501
  %740 = vmatpush1.bf16.msra.mxu0 %v500
  %741 = vmatprep.subr.bf16.mxu0 %v505
  %742 = vmatpush1.bf16.msra.mxu0 %v504
  %743 = vmatprep.subr.bf16.mxu0 %v509
  %744 = vmatpush1.bf16.msra.mxu0 %v508
  %745 = vmatprep.subr.bf16.mxu0 %v513
  %746 = vmatpush1.bf16.msra.mxu0 %v512
  %747 = vmatprep.subr.bf16.mxu0 %v517
  %748 = vmatpush1.bf16.msra.mxu0 %v516
  %749 = vmatprep.subr.bf16.mxu0 %v521
  %750 = vmatpush1.bf16.msra.mxu0 %v520
  %751 = vmatprep.subr.bf16.mxu0 %v525
  %752 = vmatpush1.bf16.msra.mxu0 %v524
  %753 = vmatprep.subr.bf16.mxu0 %v529
  %754 = vmatpush1.bf16.msra.mxu0 %v528
  %755 = vmatprep.subr.bf16.mxu0 %v533
  %756 = vmatpush1.bf16.msra.mxu0 %v532
  %757 = vmatprep.subr.bf16.mxu0 %v537
  %758 = vmatpush1.bf16.msra.mxu0 %v536
  %759 = vmatprep.subr.bf16.mxu0 %v541
  %760 = vmatpush1.bf16.msra.mxu0 %v540
  %761 = vmatprep.subr.bf16.mxu0 %v545
  %762 = vmatpush1.bf16.msra.mxu0 %v544
  %763 = vmatprep.subr.bf16.mxu0 %v549
  %764 = vmatpush1.bf16.msra.mxu0 %v548
  %765 = vmatprep.subr.bf16.mxu0 %v553
  %766 = vmatpush1.bf16.msra.mxu0 %v552
  %767 = vmatprep.subr.bf16.mxu0 %v557
  %768 = vmatpush1.bf16.msra.mxu0 %v556
  %769 = vmatprep.subr.bf16.mxu0 %v561
  %770 = vmatpush1.bf16.msra.mxu0 %v560
  %771 = vmatprep.mubr.bf16.mxu0 %v275
  %772 = vmatmul.mubr.bf16.gmra.mrb[0].mxu0 %v274
  %v773 = vpop.f32.mrb[0].mxu0
  %v774 = vadd.f32 0.0, %v773
  %v775 = vpop.f32.mrb[0].mxu0
  %v776 = vadd.f32 0.0, %v775
  %v777 = vpop.f32.mrb[0].mxu0
  %v778 = vadd.f32 0.0, %v777
  %v779 = vpop.f32.mrb[0].mxu0
  %v780 = vadd.f32 0.0, %v779
  %781 = vmatprep.mubr.bf16.mxu0 %v277
  %782 = vmatmul.mubr.bf16.gmra.mrb[0].mxu0 %v276
  %v783 = vpop.f32.mrb[0].mxu0
  %v784 = vadd.f32 0.0, %v783
  %v785 = vpop.f32.mrb[0].mxu0
  %v786 = vadd.f32 0.0, %v785
  %v787 = vpop.f32.mrb[0].mxu0
  %v788 = vadd.f32 0.0, %v787
  %v789 = vpop.f32.mrb[0].mxu0
  %v790 = vadd.f32 0.0, %v789
  %791 = vmatprep.mubr.bf16.mxu0 %v279
  %792 = vmatmul.mubr.bf16.gmra.mrb[0].mxu0 %v278
  %v793 = vpop.f32.mrb[0].mxu0
  %v794 = vadd.f32 0.0, %v793
  %v795 = vpop.f32.mrb[0].mxu0
  %v796 = vadd.f32 0.0, %v795
  %v797 = vpop.f32.mrb[0].mxu0
  %v798 = vadd.f32 0.0, %v797
  %v799 = vpop.f32.mrb[0].mxu0
  %v800 = vadd.f32 0.0, %v799
  %801 = vmatprep.mubr.bf16.mxu0 %v281
  %802 = vmatmul.mubr.bf16.gmra.mrb[0].mxu0 %v280
  %v803 = vpop.f32.mrb[0].mxu0
  %v804 = vadd.f32 0.0, %v803
  %v805 = vpop.f32.mrb[0].mxu0
  %v806 = vadd.f32 0.0, %v805
  %v807 = vpop.f32.mrb[0].mxu0
  %v808 = vadd.f32 0.0, %v807
  %v809 = vpop.f32.mrb[0].mxu0
  %v810 = vadd.f32 0.0, %v809
  %811 = vmatprep.mubr.bf16.mxu0 %v283
  %812 = vmatmul.mubr.bf16.gmra.mrb[0].mxu0 %v282
  %v813 = vpop.f32.mrb[0].mxu0
  %v814 = vadd.f32 0.0, %v813
  %v815 = vpop.f32.mrb[0].mxu0
  %v816 = vadd.f32 0.0, %v815
  %v817 = vpop.f32.mrb[0].mxu0
  %v818 = vadd.f32 0.0, %v817
  %v819 = vpop.f32.mrb[0].mxu0
  %v820 = vadd.f32 0.0, %v819
  %821 = vmatprep.mubr.bf16.mxu0 %v285
  %822 = vmatmul.mubr.bf16.gmra.mrb[0].mxu0 %v284
  %v823 = vpop.f32.mrb[0].mxu0
  %v824 = vadd.f32 0.0, %v823
  %v825 = vpop.f32.mrb[0].mxu0
  %v826 = vadd.f32 0.0, %v825
  %v827 = vpop.f32.mrb[0].mxu0
  %v828 = vadd.f32 0.0, %v827
  %v829 = vpop.f32.mrb[0].mxu0
  %v830 = vadd.f32 0.0, %v829
  %831 = vmatprep.mubr.bf16.mxu0 %v287
  %832 = vmatmul.mubr.bf16.gmra.mrb[0].mxu0 %v286
  %v833 = vpop.f32.mrb[0].mxu0
  %v834 = vadd.f32 0.0, %v833
  %v835 = vpop.f32.mrb[0].mxu0
  %v836 = vadd.f32 0.0, %v835
  %v837 = vpop.f32.mrb[0].mxu0
  %v838 = vadd.f32 0.0, %v837
  %v839 = vpop.f32.mrb[0].mxu0
  %v840 = vadd.f32 0.0, %v839
  %841 = vmatprep.mubr.bf16.mxu0 %v289
  %842 = vmatmul.mubr.bf16.gmra.mrb[0].mxu0 %v288
  %v843 = vpop.f32.mrb[0].mxu0
  %v844 = vadd.f32 0.0, %v843
  %v845 = vpop.f32.mrb[0].mxu0
  %v846 = vadd.f32 0.0, %v845
  %v847 = vpop.f32.mrb[0].mxu0
  %v848 = vadd.f32 0.0, %v847
  %v849 = vpop.f32.mrb[0].mxu0
  %v850 = vadd.f32 0.0, %v849
  %851 = vdwg.mxu0
  %v852 = vadd.f32 %v82, %v661
  %v853 = vadd.f32 %v83, %v663
  %v854 = vadd.f32 %v84, %v774
  %v855 = vadd.f32 %v85, %v776
  %v856 = vadd.f32 %v86, %v665
  %v857 = vadd.f32 %v87, %v667
  %v858 = vadd.f32 %v88, %v778
  %v859 = vadd.f32 %v89, %v780
  %v860 = vadd.f32 %v90, %v671
  %v861 = vadd.f32 %v91, %v673
  %v862 = vadd.f32 %v92, %v784
  %v863 = vadd.f32 %v93, %v786
  %v864 = vadd.f32 %v94, %v675
  %v865 = vadd.f32 %v95, %v677
  %v866 = vadd.f32 %v96, %v788
  %v867 = vadd.f32 %v97, %v790
  %v868 = vadd.f32 %v98, %v681
  %v869 = vadd.f32 %v99, %v683
  %v870 = vadd.f32 %v100, %v794
  %v871 = vadd.f32 %v101, %v796
  %v872 = vadd.f32 %v102, %v685
  %v873 = vadd.f32 %v103, %v687
  %v874 = vadd.f32 %v104, %v798
  %v875 = vadd.f32 %v105, %v800
  %v876 = vadd.f32 %v106, %v691
  %v877 = vadd.f32 %v107, %v693
  %v878 = vadd.f32 %v108, %v804
  %v879 = vadd.f32 %v109, %v806
  %v880 = vadd.f32 %v110, %v695
  %v881 = vadd.f32 %v111, %v697
  %v882 = vadd.f32 %v112, %v808
  %v883 = vadd.f32 %v113, %v810
  %v884 = vadd.f32 %v114, %v701
  %v885 = vadd.f32 %v115, %v703
  %v886 = vadd.f32 %v116, %v814
  %v887 = vadd.f32 %v117, %v816
  %v888 = vadd.f32 %v118, %v705
  %v889 = vadd.f32 %v119, %v707
  %v890 = vadd.f32 %v120, %v818
  %v891 = vadd.f32 %v121, %v820
  %v892 = vadd.f32 %v122, %v711
  %v893 = vadd.f32 %v123, %v713
  %v894 = vadd.f32 %v124, %v824
  %v895 = vadd.f32 %v125, %v826
  %v896 = vadd.f32 %v126, %v715
  %v897 = vadd.f32 %v127, %v717
  %v898 = vadd.f32 %v128, %v828
  %v899 = vadd.f32 %v129, %v830
  %v900 = vadd.f32 %v130, %v721
  %v901 = vadd.f32 %v131, %v723
  %v902 = vadd.f32 %v132, %v834
  %v903 = vadd.f32 %v133, %v836
  %v904 = vadd.f32 %v134, %v725
  %v905 = vadd.f32 %v135, %v727
  %v906 = vadd.f32 %v136, %v838
  %v907 = vadd.f32 %v137, %v840
  %v908 = vadd.f32 %v138, %v731
  %v909 = vadd.f32 %v139, %v733
  %v910 = vadd.f32 %v140, %v844
  %v911 = vadd.f32 %v141, %v846
  %v912 = vadd.f32 %v142, %v735
  %v913 = vadd.f32 %v143, %v737
  %v914 = vadd.f32 %v144, %v848
  %v915 = vadd.f32 %v145, %v850
  %916 = vst [vmem:[#allocation2] sm:$0xff] %v852
  %917 = vst [vmem:[#allocation2 + $0x8] sm:$0xff] %v853
  %918 = vst [vmem:[#allocation2 + $0x10] sm:$0xff] %v854
  %919 = vst [vmem:[#allocation2 + $0x18] sm:$0xff] %v855
  %920 = vst [vmem:[#allocation2 + $0x20] sm:$0xff] %v856
  %921 = vst [vmem:[#allocation2 + $0x28] sm:$0xff] %v857
  %922 = vst [vmem:[#allocation2 + $0x30] sm:$0xff] %v858
  %923 = vst [vmem:[#allocation2 + $0x38] sm:$0xff] %v859
  %924 = vst [vmem:[#allocation2 + $0x40] sm:$0xff] %v860
  %925 = vst [vmem:[#allocation2 + $0x48] sm:$0xff] %v861
  %926 = vst [vmem:[#allocation2 + $0x50] sm:$0xff] %v862
  %927 = vst [vmem:[#allocation2 + $0x58] sm:$0xff] %v863
  %928 = vst [vmem:[#allocation2 + $0x60] sm:$0xff] %v864
  %929 = vst [vmem:[#allocation2 + $0x68] sm:$0xff] %v865
  %930 = vst [vmem:[#allocation2 + $0x70] sm:$0xff] %v866
  %931 = vst [vmem:[#allocation2 + $0x78] sm:$0xff] %v867
  %932 = vst [vmem:[#allocation2 + $0x80] sm:$0xff] %v868
  %933 = vst [vmem:[#allocation2 + $0x88] sm:$0xff] %v869
  %934 = vst [vmem:[#allocation2 + $0x90] sm:$0xff] %v870
  %935 = vst [vmem:[#allocation2 + $0x98] sm:$0xff] %v871
  %936 = vst [vmem:[#allocation2 + $0xa0] sm:$0xff] %v872
  %937 = vst [vmem:[#allocation2 + $0xa8] sm:$0xff] %v873
  %938 = vst [vmem:[#allocation2 + $0xb0] sm:$0xff] %v874
  %939 = vst [vmem:[#allocation2 + $0xb8] sm:$0xff] %v875
  %940 = vst [vmem:[#allocation2 + $0xc0] sm:$0xff] %v876
  %941 = vst [vmem:[#allocation2 + $0xc8] sm:$0xff] %v877
  %942 = vst [vmem:[#allocation2 + $0xd0] sm:$0xff] %v878
  %943 = vst [vmem:[#allocation2 + $0xd8] sm:$0xff] %v879
  %944 = vst [vmem:[#allocation2 + $0xe0] sm:$0xff] %v880
  %945 = vst [vmem:[#allocation2 + $0xe8] sm:$0xff] %v881
  %946 = vst [vmem:[#allocation2 + $0xf0] sm:$0xff] %v882
  %947 = vst [vmem:[#allocation2 + $0xf8] sm:$0xff] %v883
  %948 = vst [vmem:[#allocation2 + $0x100] sm:$0xff] %v884
  %949 = vst [vmem:[#allocation2 + $0x108] sm:$0xff] %v885
  %950 = vst [vmem:[#allocation2 + $0x110] sm:$0xff] %v886
  %951 = vst [vmem:[#allocation2 + $0x118] sm:$0xff] %v887
  %952 = vst [vmem:[#allocation2 + $0x120] sm:$0xff] %v888
  %953 = vst [vmem:[#allocation2 + $0x128] sm:$0xff] %v889
  %954 = vst [vmem:[#allocation2 + $0x130] sm:$0xff] %v890
  %955 = vst [vmem:[#allocation2 + $0x138] sm:$0xff] %v891
  %956 = vst [vmem:[#allocation2 + $0x140] sm:$0xff] %v892
  %957 = vst [vmem:[#allocation2 + $0x148] sm:$0xff] %v893
  %958 = vst [vmem:[#allocation2 + $0x150] sm:$0xff] %v894
  %959 = vst [vmem:[#allocation2 + $0x158] sm:$0xff] %v895
  %960 = vst [vmem:[#allocation2 + $0x160] sm:$0xff] %v896
  %961 = vst [vmem:[#allocation2 + $0x168] sm:$0xff] %v897
  %962 = vst [vmem:[#allocation2 + $0x170] sm:$0xff] %v898
  %963 = vst [vmem:[#allocation2 + $0x178] sm:$0xff] %v899
  %964 = vst [vmem:[#allocation2 + $0x180] sm:$0xff] %v900
  %965 = vst [vmem:[#allocation2 + $0x188] sm:$0xff] %v901
  %966 = vst [vmem:[#allocation2 + $0x190] sm:$0xff] %v902
  %967 = vst [vmem:[#allocation2 + $0x198] sm:$0xff] %v903
  %968 = vst [vmem:[#allocation2 + $0x1a0] sm:$0xff] %v904
  %969 = vst [vmem:[#allocation2 + $0x1a8] sm:$0xff] %v905
  %970 = vst [vmem:[#allocation2 + $0x1b0] sm:$0xff] %v906
  %971 = vst [vmem:[#allocation2 + $0x1b8] sm:$0xff] %v907
  %972 = vst [vmem:[#allocation2 + $0x1c0] sm:$0xff] %v908
  %973 = vst [vmem:[#allocation2 + $0x1c8] sm:$0xff] %v909
  %974 = vst [vmem:[#allocation2 + $0x1d0] sm:$0xff] %v910
  %975 = vst [vmem:[#allocation2 + $0x1d8] sm:$0xff] %v911
  %976 = vst [vmem:[#allocation2 + $0x1e0] sm:$0xff] %v912
  %977 = vst [vmem:[#allocation2 + $0x1e8] sm:$0xff] %v913
  %978 = vst [vmem:[#allocation2 + $0x1f0] sm:$0xff] %v914
  %979 = vst [vmem:[#allocation2 + $0x1f8] sm:$0xff] %v915
  // Predicated region
  $region18: #{fwd.40} parent=0 // pred_check
    %p980 = pneg %p14
  $region19: #{fwd.40} parent=0 // pred_check_branch
    %982 = sbr.rel (%p980) target = $region21
  $region20: #{fwd.40} parent=0 // pred_region
    %v983 = vld [vmem:[#allocation2] sm:$0xff]
    %v984 = vld [vmem:[#allocation2 + $0x8] sm:$0xff]
    %v985 = vld [vmem:[#allocation2 + $0x10] sm:$0xff]
    %v986 = vld [vmem:[#allocation2 + $0x18] sm:$0xff]
    %v987 = vld [vmem:[#allocation2 + $0x20] sm:$0xff]
    %v988 = vld [vmem:[#allocation2 + $0x28] sm:$0xff]
    %v989 = vld [vmem:[#allocation2 + $0x30] sm:$0xff]
    %v990 = vld [vmem:[#allocation2 + $0x38] sm:$0xff]
    %v991 = vld [vmem:[#allocation2 + $0x40] sm:$0xff]
    %v992 = vld [vmem:[#allocation2 + $0x48] sm:$0xff]
    %v993 = vld [vmem:[#allocation2 + $0x50] sm:$0xff]
    %v994 = vld [vmem:[#allocation2 + $0x58] sm:$0xff]
    %v995 = vld [vmem:[#allocation2 + $0x60] sm:$0xff]
    %v996 = vld [vmem:[#allocation2 + $0x68] sm:$0xff]
    %v997 = vld [vmem:[#allocation2 + $0x70] sm:$0xff]
    %v998 = vld [vmem:[#allocation2 + $0x78] sm:$0xff]
    %v999 = vld [vmem:[#allocation2 + $0x80] sm:$0xff]
    %v1000 = vld [vmem:[#allocation2 + $0x88] sm:$0xff]
    %v1001 = vld [vmem:[#allocation2 + $0x90] sm:$0xff]
    %v1002 = vld [vmem:[#allocation2 + $0x98] sm:$0xff]
    %v1003 = vld [vmem:[#allocation2 + $0xa0] sm:$0xff]
    %v1004 = vld [vmem:[#allocation2 + $0xa8] sm:$0xff]
    %v1005 = vld [vmem:[#allocation2 + $0xb0] sm:$0xff]
    %v1006 = vld [vmem:[#allocation2 + $0xb8] sm:$0xff]
    %v1007 = vld [vmem:[#allocation2 + $0xc0] sm:$0xff]
    %v1008 = vld [vmem:[#allocation2 + $0xc8] sm:$0xff]
    %v1009 = vld [vmem:[#allocation2 + $0xd0] sm:$0xff]
    %v1010 = vld [vmem:[#allocation2 + $0xd8] sm:$0xff]
    %v1011 = vld [vmem:[#allocation2 + $0xe0] sm:$0xff]
    %v1012 = vld [vmem:[#allocation2 + $0xe8] sm:$0xff]
    %v1013 = vld [vmem:[#allocation2 + $0xf0] sm:$0xff]
    %v1014 = vld [vmem:[#allocation2 + $0xf8] sm:$0xff]
    %v1015 = vld [vmem:[#allocation2 + $0x100] sm:$0xff]
    %v1016 = vld [vmem:[#allocation2 + $0x108] sm:$0xff]
    %v1017 = vld [vmem:[#allocation2 + $0x110] sm:$0xff]
    %v1018 = vld [vmem:[#allocation2 + $0x118] sm:$0xff]
    %v1019 = vld [vmem:[#allocation2 + $0x120] sm:$0xff]
    %v1020 = vld [vmem:[#allocation2 + $0x128] sm:$0xff]
    %v1021 = vld [vmem:[#allocation2 + $0x130] sm:$0xff]
    %v1022 = vld [vmem:[#allocation2 + $0x138] sm:$0xff]
    %v1023 = vld [vmem:[#allocation2 + $0x140] sm:$0xff]
    %v1024 = vld [vmem:[#allocation2 + $0x148] sm:$0xff]
    %v1025 = vld [vmem:[#allocation2 + $0x150] sm:$0xff]
    %v1026 = vld [vmem:[#allocation2 + $0x158] sm:$0xff]
    %v1027 = vld [vmem:[#allocation2 + $0x160] sm:$0xff]
    %v1028 = vld [vmem:[#allocation2 + $0x168] sm:$0xff]
    %v1029 = vld [vmem:[#allocation2 + $0x170] sm:$0xff]
    %v1030 = vld [vmem:[#allocation2 + $0x178] sm:$0xff]
    %v1031 = vld [vmem:[#allocation2 + $0x180] sm:$0xff]
    %v1032 = vld [vmem:[#allocation2 + $0x188] sm:$0xff]
    %v1033 = vld [vmem:[#allocation2 + $0x190] sm:$0xff]
    %v1034 = vld [vmem:[#allocation2 + $0x198] sm:$0xff]
    %v1035 = vld [vmem:[#allocation2 + $0x1a0] sm:$0xff]
    %v1036 = vld [vmem:[#allocation2 + $0x1a8] sm:$0xff]
    %v1037 = vld [vmem:[#allocation2 + $0x1b0] sm:$0xff]
    %v1038 = vld [vmem:[#allocation2 + $0x1b8] sm:$0xff]
    %v1039 = vld [vmem:[#allocation2 + $0x1c0] sm:$0xff]
    %v1040 = vld [vmem:[#allocation2 + $0x1c8] sm:$0xff]
    %v1041 = vld [vmem:[#allocation2 + $0x1d0] sm:$0xff]
    %v1042 = vld [vmem:[#allocation2 + $0x1d8] sm:$0xff]
    %v1043 = vld [vmem:[#allocation2 + $0x1e0] sm:$0xff]
    %v1044 = vld [vmem:[#allocation2 + $0x1e8] sm:$0xff]
    %v1045 = vld [vmem:[#allocation2 + $0x1f0] sm:$0xff]
    %v1046 = vld [vmem:[#allocation2 + $0x1f8] sm:$0xff]
    %v1047 = vld [vmem:[%s2] sm:$0xf]
    %v1049 = vlaneseq
    %v1050 = vshrl.u32 %v1049, 7
    %v1051 = vsub.s32 0, %v1050
    %v1052 = vrot.slane %v1047, %v1051
    %v1053 = vlaneseq
    %v1054 = vshrl.u32 %v1053, 7
    %v1055 = vsub.s32 1, %v1054
    %v1056 = vrot.slane %v1047, %v1055
    %v1057 = vlaneseq
    %v1058 = vshrl.u32 %v1057, 7
    %v1059 = vsub.s32 2, %v1058
    %v1060 = vrot.slane %v1047, %v1059
    %v1061 = vlaneseq
    %v1062 = vshrl.u32 %v1061, 7
    %v1063 = vsub.s32 3, %v1062
    %v1064 = vrot.slane %v1047, %v1063
    %v1069 = vadd.f32 %v983, %v1052
    %v1070 = vadd.f32 %v984, %v1056
    %v1071 = vadd.f32 %v985, %v1060
    %v1072 = vadd.f32 %v986, %v1064
    %v1073 = vadd.f32 %v987, %v1052
    %v1074 = vadd.f32 %v988, %v1056
    %v1075 = vadd.f32 %v989, %v1060
    %v1076 = vadd.f32 %v990, %v1064
    %v1077 = vadd.f32 %v991, %v1052
    %v1078 = vadd.f32 %v992, %v1056
    %v1079 = vadd.f32 %v993, %v1060
    %v1080 = vadd.f32 %v994, %v1064
    %v1081 = vadd.f32 %v995, %v1052
    %v1082 = vadd.f32 %v996, %v1056
    %v1083 = vadd.f32 %v997, %v1060
    %v1084 = vadd.f32 %v998, %v1064
    %v1085 = vadd.f32 %v999, %v1052
    %v1086 = vadd.f32 %v1000, %v1056
    %v1087 = vadd.f32 %v1001, %v1060
    %v1088 = vadd.f32 %v1002, %v1064
    %v1089 = vadd.f32 %v1003, %v1052
    %v1090 = vadd.f32 %v1004, %v1056
    %v1091 = vadd.f32 %v1005, %v1060
    %v1092 = vadd.f32 %v1006, %v1064
    %v1093 = vadd.f32 %v1007, %v1052
    %v1094 = vadd.f32 %v1008, %v1056
    %v1095 = vadd.f32 %v1009, %v1060
    %v1096 = vadd.f32 %v1010, %v1064
    %v1097 = vadd.f32 %v1011, %v1052
    %v1098 = vadd.f32 %v1012, %v1056
    %v1099 = vadd.f32 %v1013, %v1060
    %v1100 = vadd.f32 %v1014, %v1064
    %v1101 = vadd.f32 %v1015, %v1052
    %v1102 = vadd.f32 %v1016, %v1056
    %v1103 = vadd.f32 %v1017, %v1060
    %v1104 = vadd.f32 %v1018, %v1064
    %v1105 = vadd.f32 %v1019, %v1052
    %v1106 = vadd.f32 %v1020, %v1056
    %v1107 = vadd.f32 %v1021, %v1060
    %v1108 = vadd.f32 %v1022, %v1064
    %v1109 = vadd.f32 %v1023, %v1052
    %v1110 = vadd.f32 %v1024, %v1056
    %v1111 = vadd.f32 %v1025, %v1060
    %v1112 = vadd.f32 %v1026, %v1064
    %v1113 = vadd.f32 %v1027, %v1052
    %v1114 = vadd.f32 %v1028, %v1056
    %v1115 = vadd.f32 %v1029, %v1060
    %v1116 = vadd.f32 %v1030, %v1064
    %v1117 = vadd.f32 %v1031, %v1052
    %v1118 = vadd.f32 %v1032, %v1056
    %v1119 = vadd.f32 %v1033, %v1060
    %v1120 = vadd.f32 %v1034, %v1064
    %v1121 = vadd.f32 %v1035, %v1052
    %v1122 = vadd.f32 %v1036, %v1056
    %v1123 = vadd.f32 %v1037, %v1060
    %v1124 = vadd.f32 %v1038, %v1064
    %v1125 = vadd.f32 %v1039, %v1052
    %v1126 = vadd.f32 %v1040, %v1056
    %v1127 = vadd.f32 %v1041, %v1060
    %v1128 = vadd.f32 %v1042, %v1064
    %v1129 = vadd.f32 %v1043, %v1052
    %v1130 = vadd.f32 %v1044, %v1056
    %v1131 = vadd.f32 %v1045, %v1060
    %v1132 = vadd.f32 %v1046, %v1064
    %v1133 = vmax.f32 %v1069, 0.0
    %v1134 = vmax.f32 %v1070, 0.0
    %v1135 = vmax.f32 %v1071, 0.0
    %v1136 = vmax.f32 %v1072, 0.0
    %v1137 = vmax.f32 %v1073, 0.0
    %v1138 = vmax.f32 %v1074, 0.0
    %v1139 = vmax.f32 %v1075, 0.0
    %v1140 = vmax.f32 %v1076, 0.0
    %v1141 = vmax.f32 %v1077, 0.0
    %v1142 = vmax.f32 %v1078, 0.0
    %v1143 = vmax.f32 %v1079, 0.0
    %v1144 = vmax.f32 %v1080, 0.0
    %v1145 = vmax.f32 %v1081, 0.0
    %v1146 = vmax.f32 %v1082, 0.0
    %v1147 = vmax.f32 %v1083, 0.0
    %v1148 = vmax.f32 %v1084, 0.0
    %v1149 = vmax.f32 %v1085, 0.0
    %v1150 = vmax.f32 %v1086, 0.0
    %v1151 = vmax.f32 %v1087, 0.0
    %v1152 = vmax.f32 %v1088, 0.0
    %v1153 = vmax.f32 %v1089, 0.0
    %v1154 = vmax.f32 %v1090, 0.0
    %v1155 = vmax.f32 %v1091, 0.0
    %v1156 = vmax.f32 %v1092, 0.0
    %v1157 = vmax.f32 %v1093, 0.0
    %v1158 = vmax.f32 %v1094, 0.0
    %v1159 = vmax.f32 %v1095, 0.0
    %v1160 = vmax.f32 %v1096, 0.0
    %v1161 = vmax.f32 %v1097, 0.0
    %v1162 = vmax.f32 %v1098, 0.0
    %v1163 = vmax.f32 %v1099, 0.0
    %v1164 = vmax.f32 %v1100, 0.0
    %v1165 = vmax.f32 %v1101, 0.0
    %v1166 = vmax.f32 %v1102, 0.0
    %v1167 = vmax.f32 %v1103, 0.0
    %v1168 = vmax.f32 %v1104, 0.0
    %v1169 = vmax.f32 %v1105, 0.0
    %v1170 = vmax.f32 %v1106, 0.0
    %v1171 = vmax.f32 %v1107, 0.0
    %v1172 = vmax.f32 %v1108, 0.0
    %v1173 = vmax.f32 %v1109, 0.0
    %v1174 = vmax.f32 %v1110, 0.0
    %v1175 = vmax.f32 %v1111, 0.0
    %v1176 = vmax.f32 %v1112, 0.0
    %v1177 = vmax.f32 %v1113, 0.0
    %v1178 = vmax.f32 %v1114, 0.0
    %v1179 = vmax.f32 %v1115, 0.0
    %v1180 = vmax.f32 %v1116, 0.0
    %v1181 = vmax.f32 %v1117, 0.0
    %v1182 = vmax.f32 %v1118, 0.0
    %v1183 = vmax.f32 %v1119, 0.0
    %v1184 = vmax.f32 %v1120, 0.0
    %v1185 = vmax.f32 %v1121, 0.0
    %v1186 = vmax.f32 %v1122, 0.0
    %v1187 = vmax.f32 %v1123, 0.0
    %v1188 = vmax.f32 %v1124, 0.0
    %v1189 = vmax.f32 %v1125, 0.0
    %v1190 = vmax.f32 %v1126, 0.0
    %v1191 = vmax.f32 %v1127, 0.0
    %v1192 = vmax.f32 %v1128, 0.0
    %v1193 = vmax.f32 %v1129, 0.0
    %v1194 = vmax.f32 %v1130, 0.0
    %v1195 = vmax.f32 %v1131, 0.0
    %v1196 = vmax.f32 %v1132, 0.0
    %1197 = vst [vmem:[%s3] sm:$0xff] %v1133
    %1198 = vst [vmem:[%s3 + $0x8] sm:$0xff] %v1134
    %1199 = vst [vmem:[%s3 + $0x10] sm:$0xff] %v1135
    %1200 = vst [vmem:[%s3 + $0x18] sm:$0xff] %v1136
    %1201 = vst [vmem:[%s3 + $0x20] sm:$0xff] %v1137
    %1202 = vst [vmem:[%s3 + $0x28] sm:$0xff] %v1138
    %1203 = vst [vmem:[%s3 + $0x30] sm:$0xff] %v1139
    %1204 = vst [vmem:[%s3 + $0x38] sm:$0xff] %v1140
    %1205 = vst [vmem:[%s3 + $0x40] sm:$0xff] %v1141
    %1206 = vst [vmem:[%s3 + $0x48] sm:$0xff] %v1142
    %1207 = vst [vmem:[%s3 + $0x50] sm:$0xff] %v1143
    %1208 = vst [vmem:[%s3 + $0x58] sm:$0xff] %v1144
    %1209 = vst [vmem:[%s3 + $0x60] sm:$0xff] %v1145
    %1210 = vst [vmem:[%s3 + $0x68] sm:$0xff] %v1146
    %1211 = vst [vmem:[%s3 + $0x70] sm:$0xff] %v1147
    %1212 = vst [vmem:[%s3 + $0x78] sm:$0xff] %v1148
    %1213 = vst [vmem:[%s3 + $0x80] sm:$0xff] %v1149
    %1214 = vst [vmem:[%s3 + $0x88] sm:$0xff] %v1150
    %1215 = vst [vmem:[%s3 + $0x90] sm:$0xff] %v1151
    %1216 = vst [vmem:[%s3 + $0x98] sm:$0xff] %v1152
    %1217 = vst [vmem:[%s3 + $0xa0] sm:$0xff] %v1153
    %1218 = vst [vmem:[%s3 + $0xa8] sm:$0xff] %v1154
    %1219 = vst [vmem:[%s3 + $0xb0] sm:$0xff] %v1155
    %1220 = vst [vmem:[%s3 + $0xb8] sm:$0xff] %v1156
    %1221 = vst [vmem:[%s3 + $0xc0] sm:$0xff] %v1157
    %1222 = vst [vmem:[%s3 + $0xc8] sm:$0xff] %v1158
    %1223 = vst [vmem:[%s3 + $0xd0] sm:$0xff] %v1159
    %1224 = vst [vmem:[%s3 + $0xd8] sm:$0xff] %v1160
    %1225 = vst [vmem:[%s3 + $0xe0] sm:$0xff] %v1161
    %1226 = vst [vmem:[%s3 + $0xe8] sm:$0xff] %v1162
    %1227 = vst [vmem:[%s3 + $0xf0] sm:$0xff] %v1163
    %1228 = vst [vmem:[%s3 + $0xf8] sm:$0xff] %v1164
    %1229 = vst [vmem:[%s3 + $0x100] sm:$0xff] %v1165
    %1230 = vst [vmem:[%s3 + $0x108] sm:$0xff] %v1166
    %1231 = vst [vmem:[%s3 + $0x110] sm:$0xff] %v1167
    %1232 = vst [vmem:[%s3 + $0x118] sm:$0xff] %v1168
    %1233 = vst [vmem:[%s3 + $0x120] sm:$0xff] %v1169
    %1234 = vst [vmem:[%s3 + $0x128] sm:$0xff] %v1170
    %1235 = vst [vmem:[%s3 + $0x130] sm:$0xff] %v1171
    %1236 = vst [vmem:[%s3 + $0x138] sm:$0xff] %v1172
    %1237 = vst [vmem:[%s3 + $0x140] sm:$0xff] %v1173
    %1238 = vst [vmem:[%s3 + $0x148] sm:$0xff] %v1174
    %1239 = vst [vmem:[%s3 + $0x150] sm:$0xff] %v1175
    %1240 = vst [vmem:[%s3 + $0x158] sm:$0xff] %v1176
    %1241 = vst [vmem:[%s3 + $0x160] sm:$0xff] %v1177
    %1242 = vst [vmem:[%s3 + $0x168] sm:$0xff] %v1178
    %1243 = vst [vmem:[%s3 + $0x170] sm:$0xff] %v1179
    %1244 = vst [vmem:[%s3 + $0x178] sm:$0xff] %v1180
    %1245 = vst [vmem:[%s3 + $0x180] sm:$0xff] %v1181
    %1246 = vst [vmem:[%s3 + $0x188] sm:$0xff] %v1182
    %1247 = vst [vmem:[%s3 + $0x190] sm:$0xff] %v1183
    %1248 = vst [vmem:[%s3 + $0x198] sm:$0xff] %v1184
    %1249 = vst [vmem:[%s3 + $0x1a0] sm:$0xff] %v1185
    %1250 = vst [vmem:[%s3 + $0x1a8] sm:$0xff] %v1186
    %1251 = vst [vmem:[%s3 + $0x1b0] sm:$0xff] %v1187
    %1252 = vst [vmem:[%s3 + $0x1b8] sm:$0xff] %v1188
    %1253 = vst [vmem:[%s3 + $0x1c0] sm:$0xff] %v1189
    %1254 = vst [vmem:[%s3 + $0x1c8] sm:$0xff] %v1190
    %1255 = vst [vmem:[%s3 + $0x1d0] sm:$0xff] %v1191
    %1256 = vst [vmem:[%s3 + $0x1d8] sm:$0xff] %v1192
    %1257 = vst [vmem:[%s3 + $0x1e0] sm:$0xff] %v1193
    %1258 = vst [vmem:[%s3 + $0x1e8] sm:$0xff] %v1194
    %1259 = vst [vmem:[%s3 + $0x1f0] sm:$0xff] %v1195
    %1260 = vst [vmem:[%s3 + $0x1f8] sm:$0xff] %v1196
  $region21: #{fwd.40} parent=0 // pred_fallthru
    _
  // Predicated region
  $region22: #{fwd.40} parent=0 // pred_check
    _
  $region23: #{fwd.40} parent=0 // pred_check_branch
    %1262 = sbr.rel (0) target = $region25
  $region24: #{fwd.40} parent=0 // pred_region
    _
  $region25: #{fwd.40} parent=0 // pred_fallthru
    _
  // Predicated region
  $region26: #{fwd.40} parent=0 // pred_check
    _
  $region27: #{fwd.40} parent=0 // pred_check_branch
    %1264 = sbr.rel (0) target = $region29
  $region28: #{fwd.40} parent=0 // pred_region
    _
  $region29: #{fwd.40} parent=0 // pred_fallthru
    _

// kernel: fwd.41
$region0: #{fwd.41}
  #allocation0 [shape = 'u32[]', space=smem, size = 0x4, offset = 0x4, fixed_abs, tag = 'smem constant byte address 0x4 - core index']
  #allocation1 [shape = 'u32[144,128]{1,0:T(1,128)}', space=vmem, size = 0x12000, scoped, tag = 'internal scratch']
  #allocation2 [shape = 'f32[128,256]{1,0:T(8,128)}', space=vmem, size = 0x20000, scoped, tag = 'scratch operand']
  %s0 = inlined_call_operand.vmem [shape: bf16[128,512], index: 0, kind: input, shape index: {}]
  %s1 = inlined_call_operand.vmem [shape: bf16[512,256], index: 1, kind: input, shape index: {}]
  %s2 = inlined_call_operand.vmem [shape: f32[1,256], index: 2, kind: input, shape index: {}]
  %s3 = inlined_call_operand.vmem [shape: f32[128,256], index: 3, kind: output, shape index: {}]
  %s4 = sld [smem:[#allocation0]]
  $region30: #{fwd.41} parent=0
    _
  %s6 = ssub.s32 1, %s4
  %s7 = scalar_select 0, %s6, %s4
  // Predicated region
  $region2: #{fwd.41} parent=0 // pred_check
    _
  $region3: #{fwd.41} parent=0 // pred_check_branch
    %9 = sbr.rel (0) target = $region5
  $region4: #{fwd.41} parent=0 // pred_region
    _
  $region5: #{fwd.41} parent=0 // pred_fallthru
    _
  // Predicated region
  $region6: #{fwd.41} parent=0 // pred_check
    _
  $region7: #{fwd.41} parent=0 // pred_check_branch
    %11 = sbr.rel (0) target = $region9
  $region8: #{fwd.41} parent=0 // pred_region
    _
  $region9: #{fwd.41} parent=0 // pred_fallthru
    _
  // Predicated region
  $region10: #{fwd.41} parent=0 // pred_check
    _
  $region11: #{fwd.41} parent=0 // pred_check_branch
    %13 = sbr.rel (0) target = $region13
  $region12: #{fwd.41} parent=0 // pred_region
    _
  $region13: #{fwd.41} parent=0 // pred_fallthru
    _
  %p14 = scmp.eq.s32.totalorder 0, 0
  // Predicated region
  $region14: #{fwd.41} parent=0 // pred_check
    %p15 = pneg %p14
  $region15: #{fwd.41} parent=0 // pred_check_branch
    %17 = sbr.rel (%p15) target = $region17
  $region16: #{fwd.41} parent=0 // pred_region
    %18 = vst [vmem:[#allocation2] sm:$0xff] 0.0
    %19 = vst [vmem:[#allocation2 + $0x8] sm:$0xff] 0.0
    %20 = vst [vmem:[#allocation2 + $0x10] sm:$0xff] 0.0
    %21 = vst [vmem:[#allocation2 + $0x18] sm:$0xff] 0.0
    %22 = vst [vmem:[#allocation2 + $0x20] sm:$0xff] 0.0
    %23 = vst [vmem:[#allocation2 + $0x28] sm:$0xff] 0.0
    %24 = vst [vmem:[#allocation2 + $0x30] sm:$0xff] 0.0
    %25 = vst [vmem:[#allocation2 + $0x38] sm:$0xff] 0.0
    %26 = vst [vmem:[#allocation2 + $0x40] sm:$0xff] 0.0
    %27 = vst [vmem:[#allocation2 + $0x48] sm:$0xff] 0.0
    %28 = vst [vmem:[#allocation2 + $0x50] sm:$0xff] 0.0
    %29 = vst [vmem:[#allocation2 + $0x58] sm:$0xff] 0.0
    %30 = vst [vmem:[#allocation2 + $0x60] sm:$0xff] 0.0
    %31 = vst [vmem:[#allocation2 + $0x68] sm:$0xff] 0.0
    %32 = vst [vmem:[#allocation2 + $0x70] sm:$0xff] 0.0
    %33 = vst [vmem:[#allocation2 + $0x78] sm:$0xff] 0.0
    %34 = vst [vmem:[#allocation2 + $0x80] sm:$0xff] 0.0
    %35 = vst [vmem:[#allocation2 + $0x88] sm:$0xff] 0.0
    %36 = vst [vmem:[#allocation2 + $0x90] sm:$0xff] 0.0
    %37 = vst [vmem:[#allocation2 + $0x98] sm:$0xff] 0.0
    %38 = vst [vmem:[#allocation2 + $0xa0] sm:$0xff] 0.0
    %39 = vst [vmem:[#allocation2 + $0xa8] sm:$0xff] 0.0
    %40 = vst [vmem:[#allocation2 + $0xb0] sm:$0xff] 0.0
    %41 = vst [vmem:[#allocation2 + $0xb8] sm:$0xff] 0.0
    %42 = vst [vmem:[#allocation2 + $0xc0] sm:$0xff] 0.0
    %43 = vst [vmem:[#allocation2 + $0xc8] sm:$0xff] 0.0
    %44 = vst [vmem:[#allocation2 + $0xd0] sm:$0xff] 0.0
    %45 = vst [vmem:[#allocation2 + $0xd8] sm:$0xff] 0.0
    %46 = vst [vmem:[#allocation2 + $0xe0] sm:$0xff] 0.0
    %47 = vst [vmem:[#allocation2 + $0xe8] sm:$0xff] 0.0
    %48 = vst [vmem:[#allocation2 + $0xf0] sm:$0xff] 0.0
    %49 = vst [vmem:[#allocation2 + $0xf8] sm:$0xff] 0.0
  $region17: #{fwd.41} parent=0 // pred_fallthru
    _
  %v50 = vld [vmem:[#allocation2] sm:$0xff]
  %v51 = vld [vmem:[#allocation2 + $0x8] sm:$0xff]
  %v52 = vld [vmem:[#allocation2 + $0x10] sm:$0xff]
  %v53 = vld [vmem:[#allocation2 + $0x18] sm:$0xff]
  %v54 = vld [vmem:[#allocation2 + $0x20] sm:$0xff]
  %v55 = vld [vmem:[#allocation2 + $0x28] sm:$0xff]
  %v56 = vld [vmem:[#allocation2 + $0x30] sm:$0xff]
  %v57 = vld [vmem:[#allocation2 + $0x38] sm:$0xff]
  %v58 = vld [vmem:[#allocation2 + $0x40] sm:$0xff]
  %v59 = vld [vmem:[#allocation2 + $0x48] sm:$0xff]
  %v60 = vld [vmem:[#allocation2 + $0x50] sm:$0xff]
  %v61 = vld [vmem:[#allocation2 + $0x58] sm:$0xff]
  %v62 = vld [vmem:[#allocation2 + $0x60] sm:$0xff]
  %v63 = vld [vmem:[#allocation2 + $0x68] sm:$0xff]
  %v64 = vld [vmem:[#allocation2 + $0x70] sm:$0xff]
  %v65 = vld [vmem:[#allocation2 + $0x78] sm:$0xff]
  %v66 = vld [vmem:[#allocation2 + $0x80] sm:$0xff]
  %v67 = vld [vmem:[#allocation2 + $0x88] sm:$0xff]
  %v68 = vld [vmem:[#allocation2 + $0x90] sm:$0xff]
  %v69 = vld [vmem:[#allocation2 + $0x98] sm:$0xff]
  %v70 = vld [vmem:[#allocation2 + $0xa0] sm:$0xff]
  %v71 = vld [vmem:[#allocation2 + $0xa8] sm:$0xff]
  %v72 = vld [vmem:[#allocation2 + $0xb0] sm:$0xff]
  %v73 = vld [vmem:[#allocation2 + $0xb8] sm:$0xff]
  %v74 = vld [vmem:[#allocation2 + $0xc0] sm:$0xff]
  %v75 = vld [vmem:[#allocation2 + $0xc8] sm:$0xff]
  %v76 = vld [vmem:[#allocation2 + $0xd0] sm:$0xff]
  %v77 = vld [vmem:[#allocation2 + $0xd8] sm:$0xff]
  %v78 = vld [vmem:[#allocation2 + $0xe0] sm:$0xff]
  %v79 = vld [vmem:[#allocation2 + $0xe8] sm:$0xff]
  %v80 = vld [vmem:[#allocation2 + $0xf0] sm:$0xff]
  %v81 = vld [vmem:[#allocation2 + $0xf8] sm:$0xff]
  %v82 = vld [vmem:[%s0] sm:$0xff]
  %v83 = vld [vmem:[%s0 + $0x8] sm:$0xff]
  %v84 = vld [vmem:[%s0 + $0x10] sm:$0xff]
  %v85 = vld [vmem:[%s0 + $0x18] sm:$0xff]
  %v86 = vld [vmem:[%s0 + $0x20] sm:$0xff]
  %v87 = vld [vmem:[%s0 + $0x28] sm:$0xff]
  %v88 = vld [vmem:[%s0 + $0x30] sm:$0xff]
  %v89 = vld [vmem:[%s0 + $0x38] sm:$0xff]
  %v90 = vld [vmem:[%s0 + $0x40] sm:$0xff]
  %v91 = vld [vmem:[%s0 + $0x48] sm:$0xff]
  %v92 = vld [vmem:[%s0 + $0x50] sm:$0xff]
  %v93 = vld [vmem:[%s0 + $0x58] sm:$0xff]
  %v94 = vld [vmem:[%s0 + $0x60] sm:$0xff]
  %v95 = vld [vmem:[%s0 + $0x68] sm:$0xff]
  %v96 = vld [vmem:[%s0 + $0x70] sm:$0xff]
  %v97 = vld [vmem:[%s0 + $0x78] sm:$0xff]
  %v98 = vld [vmem:[%s0 + $0x80] sm:$0xff]
  %v99 = vld [vmem:[%s0 + $0x88] sm:$0xff]
  %v100 = vld [vmem:[%s0 + $0x90] sm:$0xff]
  %v101 = vld [vmem:[%s0 + $0x98] sm:$0xff]
  %v102 = vld [vmem:[%s0 + $0xa0] sm:$0xff]
  %v103 = vld [vmem:[%s0 + $0xa8] sm:$0xff]
  %v104 = vld [vmem:[%s0 + $0xb0] sm:$0xff]
  %v105 = vld [vmem:[%s0 + $0xb8] sm:$0xff]
  %v106 = vld [vmem:[%s0 + $0xc0] sm:$0xff]
  %v107 = vld [vmem:[%s0 + $0xc8] sm:$0xff]
  %v108 = vld [vmem:[%s0 + $0xd0] sm:$0xff]
  %v109 = vld [vmem:[%s0 + $0xd8] sm:$0xff]
  %v110 = vld [vmem:[%s0 + $0xe0] sm:$0xff]
  %v111 = vld [vmem:[%s0 + $0xe8] sm:$0xff]
  %v112 = vld [vmem:[%s0 + $0xf0] sm:$0xff]
  %v113 = vld [vmem:[%s0 + $0xf8] sm:$0xff]
  %v114 = vld [vmem:[%s1] sm:$0xff]
  %v115 = vld [vmem:[%s1 + $0x8] sm:$0xff]
  %v116 = vld [vmem:[%s1 + $0x10] sm:$0xff]
  %v117 = vld [vmem:[%s1 + $0x18] sm:$0xff]
  %v118 = vld [vmem:[%s1 + $0x20] sm:$0xff]
  %v119 = vld [vmem:[%s1 + $0x28] sm:$0xff]
  %v120 = vld [vmem:[%s1 + $0x30] sm:$0xff]
  %v121 = vld [vmem:[%s1 + $0x38] sm:$0xff]
  %v122 = vld [vmem:[%s1 + $0x40] sm:$0xff]
  %v123 = vld [vmem:[%s1 + $0x48] sm:$0xff]
  %v124 = vld [vmem:[%s1 + $0x50] sm:$0xff]
  %v125 = vld [vmem:[%s1 + $0x58] sm:$0xff]
  %v126 = vld [vmem:[%s1 + $0x60] sm:$0xff]
  %v127 = vld [vmem:[%s1 + $0x68] sm:$0xff]
  %v128 = vld [vmem:[%s1 + $0x70] sm:$0xff]
  %v129 = vld [vmem:[%s1 + $0x78] sm:$0xff]
  %v130 = vld [vmem:[%s1 + $0x80] sm:$0xff]
  %v131 = vld [vmem:[%s1 + $0x88] sm:$0xff]
  %v132 = vld [vmem:[%s1 + $0x90] sm:$0xff]
  %v133 = vld [vmem:[%s1 + $0x98] sm:$0xff]
  %v134 = vld [vmem:[%s1 + $0xa0] sm:$0xff]
  %v135 = vld [vmem:[%s1 + $0xa8] sm:$0xff]
  %v136 = vld [vmem:[%s1 + $0xb0] sm:$0xff]
  %v137 = vld [vmem:[%s1 + $0xb8] sm:$0xff]
  %v138 = vld [vmem:[%s1 + $0xc0] sm:$0xff]
  %v139 = vld [vmem:[%s1 + $0xc8] sm:$0xff]
  %v140 = vld [vmem:[%s1 + $0xd0] sm:$0xff]
  %v141 = vld [vmem:[%s1 + $0xd8] sm:$0xff]
  %v142 = vld [vmem:[%s1 + $0xe0] sm:$0xff]
  %v143 = vld [vmem:[%s1 + $0xe8] sm:$0xff]
  %v144 = vld [vmem:[%s1 + $0xf0] sm:$0xff]
  %v145 = vld [vmem:[%s1 + $0xf8] sm:$0xff]
  %v146 = vld [vmem:[%s1 + $0x100] sm:$0xff]
  %v147 = vld [vmem:[%s1 + $0x108] sm:$0xff]
  %v148 = vld [vmem:[%s1 + $0x110] sm:$0xff]
  %v149 = vld [vmem:[%s1 + $0x118] sm:$0xff]
  %v150 = vld [vmem:[%s1 + $0x120] sm:$0xff]
  %v151 = vld [vmem:[%s1 + $0x128] sm:$0xff]
  %v152 = vld [vmem:[%s1 + $0x130] sm:$0xff]
  %v153 = vld [vmem:[%s1 + $0x138] sm:$0xff]
  %v154 = vld [vmem:[%s1 + $0x140] sm:$0xff]
  %v155 = vld [vmem:[%s1 + $0x148] sm:$0xff]
  %v156 = vld [vmem:[%s1 + $0x150] sm:$0xff]
  %v157 = vld [vmem:[%s1 + $0x158] sm:$0xff]
  %v158 = vld [vmem:[%s1 + $0x160] sm:$0xff]
  %v159 = vld [vmem:[%s1 + $0x168] sm:$0xff]
  %v160 = vld [vmem:[%s1 + $0x170] sm:$0xff]
  %v161 = vld [vmem:[%s1 + $0x178] sm:$0xff]
  %v162 = vld [vmem:[%s1 + $0x180] sm:$0xff]
  %v163 = vld [vmem:[%s1 + $0x188] sm:$0xff]
  %v164 = vld [vmem:[%s1 + $0x190] sm:$0xff]
  %v165 = vld [vmem:[%s1 + $0x198] sm:$0xff]
  %v166 = vld [vmem:[%s1 + $0x1a0] sm:$0xff]
  %v167 = vld [vmem:[%s1 + $0x1a8] sm:$0xff]
  %v168 = vld [vmem:[%s1 + $0x1b0] sm:$0xff]
  %v169 = vld [vmem:[%s1 + $0x1b8] sm:$0xff]
  %v170 = vld [vmem:[%s1 + $0x1c0] sm:$0xff]
  %v171 = vld [vmem:[%s1 + $0x1c8] sm:$0xff]
  %v172 = vld [vmem:[%s1 + $0x1d0] sm:$0xff]
  %v173 = vld [vmem:[%s1 + $0x1d8] sm:$0xff]
  %v174 = vld [vmem:[%s1 + $0x1e0] sm:$0xff]
  %v175 = vld [vmem:[%s1 + $0x1e8] sm:$0xff]
  %v176 = vld [vmem:[%s1 + $0x1f0] sm:$0xff]
  %v177 = vld [vmem:[%s1 + $0x1f8] sm:$0xff]
  %v210 = vunpack.c.l.b16 %v82
  %v211 = vunpack.c.h.b16 %v82
  %v212 = vunpack.c.l.b16 %v83
  %v213 = vunpack.c.h.b16 %v83
  %v214 = vunpack.c.l.b16 %v84
  %v215 = vunpack.c.h.b16 %v84
  %v216 = vunpack.c.l.b16 %v85
  %v217 = vunpack.c.h.b16 %v85
  %v218 = vunpack.c.l.b16 %v86
  %v219 = vunpack.c.h.b16 %v86
  %v220 = vunpack.c.l.b16 %v87
  %v221 = vunpack.c.h.b16 %v87
  %v222 = vunpack.c.l.b16 %v88
  %v223 = vunpack.c.h.b16 %v88
  %v224 = vunpack.c.l.b16 %v89
  %v225 = vunpack.c.h.b16 %v89
  %v226 = vunpack.c.l.b16 %v90
  %v227 = vunpack.c.h.b16 %v90
  %v228 = vunpack.c.l.b16 %v91
  %v229 = vunpack.c.h.b16 %v91
  %v230 = vunpack.c.l.b16 %v92
  %v231 = vunpack.c.h.b16 %v92
  %v232 = vunpack.c.l.b16 %v93
  %v233 = vunpack.c.h.b16 %v93
  %v234 = vunpack.c.l.b16 %v94
  %v235 = vunpack.c.h.b16 %v94
  %v236 = vunpack.c.l.b16 %v95
  %v237 = vunpack.c.h.b16 %v95
  %v238 = vunpack.c.l.b16 %v96
  %v239 = vunpack.c.h.b16 %v96
  %v240 = vunpack.c.l.b16 %v97
  %v241 = vunpack.c.h.b16 %v97
  %v242 = vunpack.c.l.b16 %v98
  %v243 = vunpack.c.h.b16 %v98
  %v244 = vunpack.c.l.b16 %v99
  %v245 = vunpack.c.h.b16 %v99
  %v246 = vunpack.c.l.b16 %v100
  %v247 = vunpack.c.h.b16 %v100
  %v248 = vunpack.c.l.b16 %v101
  %v249 = vunpack.c.h.b16 %v101
  %v250 = vunpack.c.l.b16 %v102
  %v251 = vunpack.c.h.b16 %v102
  %v252 = vunpack.c.l.b16 %v103
  %v253 = vunpack.c.h.b16 %v103
  %v254 = vunpack.c.l.b16 %v104
  %v255 = vunpack.c.h.b16 %v104
  %v256 = vunpack.c.l.b16 %v105
  %v257 = vunpack.c.h.b16 %v105
  %v258 = vunpack.c.l.b16 %v106
  %v259 = vunpack.c.h.b16 %v106
  %v260 = vunpack.c.l.b16 %v107
  %v261 = vunpack.c.h.b16 %v107
  %v262 = vunpack.c.l.b16 %v108
  %v263 = vunpack.c.h.b16 %v108
  %v264 = vunpack.c.l.b16 %v109
  %v265 = vunpack.c.h.b16 %v109
  %v266 = vunpack.c.l.b16 %v110
  %v267 = vunpack.c.h.b16 %v110
  %v268 = vunpack.c.l.b16 %v111
  %v269 = vunpack.c.h.b16 %v111
  %v270 = vunpack.c.l.b16 %v112
  %v271 = vunpack.c.h.b16 %v112
  %v272 = vunpack.c.l.b16 %v113
  %v273 = vunpack.c.h.b16 %v113
  %v274 = vpack.c.b16 %v214, %v210
  %v275 = vpack.c.b16 %v215, %v211
  %v276 = vpack.c.b16 %v216, %v212
  %v277 = vpack.c.b16 %v217, %v213
  %v278 = vpack.c.b16 %v222, %v218
  %v279 = vpack.c.b16 %v223, %v219
  %v280 = vpack.c.b16 %v224, %v220
  %v281 = vpack.c.b16 %v225, %v221
  %v282 = vpack.c.b16 %v230, %v226
  %v283 = vpack.c.b16 %v231, %v227
  %v284 = vpack.c.b16 %v232, %v228
  %v285 = vpack.c.b16 %v233, %v229
  %v286 = vpack.c.b16 %v238, %v234
  %v287 = vpack.c.b16 %v239, %v235
  %v288 = vpack.c.b16 %v240, %v236
  %v289 = vpack.c.b16 %v241, %v237
  %v290 = vpack.c.b16 %v246, %v242
  %v291 = vpack.c.b16 %v247, %v243
  %v292 = vpack.c.b16 %v248, %v244
  %v293 = vpack.c.b16 %v249, %v245
  %v294 = vpack.c.b16 %v254, %v250
  %v295 = vpack.c.b16 %v255, %v251
  %v296 = vpack.c.b16 %v256, %v252
  %v297 = vpack.c.b16 %v257, %v253
  %v298 = vpack.c.b16 %v262, %v258
  %v299 = vpack.c.b16 %v263, %v259
  %v300 = vpack.c.b16 %v264, %v260
  %v301 = vpack.c.b16 %v265, %v261
  %v302 = vpack.c.b16 %v270, %v266
  %v303 = vpack.c.b16 %v271, %v267
  %v304 = vpack.c.b16 %v272, %v268
  %v305 = vpack.c.b16 %v273, %v269
  %v402 = vunpack.c.l.b16 %v114
  %v403 = vunpack.c.h.b16 %v114
  %v404 = vunpack.c.l.b16 %v115
  %v405 = vunpack.c.h.b16 %v115
  %v406 = vunpack.c.l.b16 %v116
  %v407 = vunpack.c.h.b16 %v116
  %v408 = vunpack.c.l.b16 %v117
  %v409 = vunpack.c.h.b16 %v117
  %v410 = vunpack.c.l.b16 %v118
  %v411 = vunpack.c.h.b16 %v118
  %v412 = vunpack.c.l.b16 %v119
  %v413 = vunpack.c.h.b16 %v119
  %v414 = vunpack.c.l.b16 %v120
  %v415 = vunpack.c.h.b16 %v120
  %v416 = vunpack.c.l.b16 %v121
  %v417 = vunpack.c.h.b16 %v121
  %v418 = vunpack.c.l.b16 %v122
  %v419 = vunpack.c.h.b16 %v122
  %v420 = vunpack.c.l.b16 %v123
  %v421 = vunpack.c.h.b16 %v123
  %v422 = vunpack.c.l.b16 %v124
  %v423 = vunpack.c.h.b16 %v124
  %v424 = vunpack.c.l.b16 %v125
  %v425 = vunpack.c.h.b16 %v125
  %v426 = vunpack.c.l.b16 %v126
  %v427 = vunpack.c.h.b16 %v126
  %v428 = vunpack.c.l.b16 %v127
  %v429 = vunpack.c.h.b16 %v127
  %v430 = vunpack.c.l.b16 %v128
  %v431 = vunpack.c.h.b16 %v128
  %v432 = vunpack.c.l.b16 %v129
  %v433 = vunpack.c.h.b16 %v129
  %v434 = vunpack.c.l.b16 %v130
  %v435 = vunpack.c.h.b16 %v130
  %v436 = vunpack.c.l.b16 %v131
  %v437 = vunpack.c.h.b16 %v131
  %v438 = vunpack.c.l.b16 %v132
  %v439 = vunpack.c.h.b16 %v132
  %v440 = vunpack.c.l.b16 %v133
  %v441 = vunpack.c.h.b16 %v133
  %v442 = vunpack.c.l.b16 %v134
  %v443 = vunpack.c.h.b16 %v134
  %v444 = vunpack.c.l.b16 %v135
  %v445 = vunpack.c.h.b16 %v135
  %v446 = vunpack.c.l.b16 %v136
  %v447 = vunpack.c.h.b16 %v136
  %v448 = vunpack.c.l.b16 %v137
  %v449 = vunpack.c.h.b16 %v137
  %v450 = vunpack.c.l.b16 %v138
  %v451 = vunpack.c.h.b16 %v138
  %v452 = vunpack.c.l.b16 %v139
  %v453 = vunpack.c.h.b16 %v139
  %v454 = vunpack.c.l.b16 %v140
  %v455 = vunpack.c.h.b16 %v140
  %v456 = vunpack.c.l.b16 %v141
  %v457 = vunpack.c.h.b16 %v141
  %v458 = vunpack.c.l.b16 %v142
  %v459 = vunpack.c.h.b16 %v142
  %v460 = vunpack.c.l.b16 %v143
  %v461 = vunpack.c.h.b16 %v143
  %v462 = vunpack.c.l.b16 %v144
  %v463 = vunpack.c.h.b16 %v144
  %v464 = vunpack.c.l.b16 %v145
  %v465 = vunpack.c.h.b16 %v145
  %v466 = vunpack.c.l.b16 %v146
  %v467 = vunpack.c.h.b16 %v146
  %v468 = vunpack.c.l.b16 %v147
  %v469 = vunpack.c.h.b16 %v147
  %v470 = vunpack.c.l.b16 %v148
  %v471 = vunpack.c.h.b16 %v148
  %v472 = vunpack.c.l.b16 %v149
  %v473 = vunpack.c.h.b16 %v149
  %v474 = vunpack.c.l.b16 %v150
  %v475 = vunpack.c.h.b16 %v150
  %v476 = vunpack.c.l.b16 %v151
  %v477 = vunpack.c.h.b16 %v151
  %v478 = vunpack.c.l.b16 %v152
  %v479 = vunpack.c.h.b16 %v152
  %v480 = vunpack.c.l.b16 %v153
  %v481 = vunpack.c.h.b16 %v153
  %v482 = vunpack.c.l.b16 %v154
  %v483 = vunpack.c.h.b16 %v154
  %v484 = vunpack.c.l.b16 %v155
  %v485 = vunpack.c.h.b16 %v155
  %v486 = vunpack.c.l.b16 %v156
  %v487 = vunpack.c.h.b16 %v156
  %v488 = vunpack.c.l.b16 %v157
  %v489 = vunpack.c.h.b16 %v157
  %v490 = vunpack.c.l.b16 %v158
  %v491 = vunpack.c.h.b16 %v158
  %v492 = vunpack.c.l.b16 %v159
  %v493 = vunpack.c.h.b16 %v159
  %v494 = vunpack.c.l.b16 %v160
  %v495 = vunpack.c.h.b16 %v160
  %v496 = vunpack.c.l.b16 %v161
  %v497 = vunpack.c.h.b16 %v161
  %v498 = vunpack.c.l.b16 %v162
  %v499 = vunpack.c.h.b16 %v162
  %v500 = vunpack.c.l.b16 %v163
  %v501 = vunpack.c.h.b16 %v163
  %v502 = vunpack.c.l.b16 %v164
  %v503 = vunpack.c.h.b16 %v164
  %v504 = vunpack.c.l.b16 %v165
  %v505 = vunpack.c.h.b16 %v165
  %v506 = vunpack.c.l.b16 %v166
  %v507 = vunpack.c.h.b16 %v166
  %v508 = vunpack.c.l.b16 %v167
  %v509 = vunpack.c.h.b16 %v167
  %v510 = vunpack.c.l.b16 %v168
  %v511 = vunpack.c.h.b16 %v168
  %v512 = vunpack.c.l.b16 %v169
  %v513 = vunpack.c.h.b16 %v169
  %v514 = vunpack.c.l.b16 %v170
  %v515 = vunpack.c.h.b16 %v170
  %v516 = vunpack.c.l.b16 %v171
  %v517 = vunpack.c.h.b16 %v171
  %v518 = vunpack.c.l.b16 %v172
  %v519 = vunpack.c.h.b16 %v172
  %v520 = vunpack.c.l.b16 %v173
  %v521 = vunpack.c.h.b16 %v173
  %v522 = vunpack.c.l.b16 %v174
  %v523 = vunpack.c.h.b16 %v174
  %v524 = vunpack.c.l.b16 %v175
  %v525 = vunpack.c.h.b16 %v175
  %v526 = vunpack.c.l.b16 %v176
  %v527 = vunpack.c.h.b16 %v176
  %v528 = vunpack.c.l.b16 %v177
  %v529 = vunpack.c.h.b16 %v177
  %v530 = vpack.c.b16 %v404, %v402
  %v531 = vpack.c.b16 %v405, %v403
  %v532 = vpack.c.b16 %v408, %v406
  %v533 = vpack.c.b16 %v409, %v407
  %v534 = vpack.c.b16 %v412, %v410
  %v535 = vpack.c.b16 %v413, %v411
  %v536 = vpack.c.b16 %v416, %v414
  %v537 = vpack.c.b16 %v417, %v415
  %v538 = vpack.c.b16 %v420, %v418
  %v539 = vpack.c.b16 %v421, %v419
  %v540 = vpack.c.b16 %v424, %v422
  %v541 = vpack.c.b16 %v425, %v423
  %v542 = vpack.c.b16 %v428, %v426
  %v543 = vpack.c.b16 %v429, %v427
  %v544 = vpack.c.b16 %v432, %v430
  %v545 = vpack.c.b16 %v433, %v431
  %v546 = vpack.c.b16 %v436, %v434
  %v547 = vpack.c.b16 %v437, %v435
  %v548 = vpack.c.b16 %v440, %v438
  %v549 = vpack.c.b16 %v441, %v439
  %v550 = vpack.c.b16 %v444, %v442
  %v551 = vpack.c.b16 %v445, %v443
  %v552 = vpack.c.b16 %v448, %v446
  %v553 = vpack.c.b16 %v449, %v447
  %v554 = vpack.c.b16 %v452, %v450
  %v555 = vpack.c.b16 %v453, %v451
  %v556 = vpack.c.b16 %v456, %v454
  %v557 = vpack.c.b16 %v457, %v455
  %v558 = vpack.c.b16 %v460, %v458
  %v559 = vpack.c.b16 %v461, %v459
  %v560 = vpack.c.b16 %v464, %v462
  %v561 = vpack.c.b16 %v465, %v463
  %v562 = vpack.c.b16 %v468, %v466
  %v563 = vpack.c.b16 %v469, %v467
  %v564 = vpack.c.b16 %v472, %v470
  %v565 = vpack.c.b16 %v473, %v471
  %v566 = vpack.c.b16 %v476, %v474
  %v567 = vpack.c.b16 %v477, %v475
  %v568 = vpack.c.b16 %v480, %v478
  %v569 = vpack.c.b16 %v481, %v479
  %v570 = vpack.c.b16 %v484, %v482
  %v571 = vpack.c.b16 %v485, %v483
  %v572 = vpack.c.b16 %v488, %v486
  %v573 = vpack.c.b16 %v489, %v487
  %v574 = vpack.c.b16 %v492, %v490
  %v575 = vpack.c.b16 %v493, %v491
  %v576 = vpack.c.b16 %v496, %v494
  %v577 = vpack.c.b16 %v497, %v495
  %v578 = vpack.c.b16 %v500, %v498
  %v579 = vpack.c.b16 %v501, %v499
  %v580 = vpack.c.b16 %v504, %v502
  %v581 = vpack.c.b16 %v505, %v503
  %v582 = vpack.c.b16 %v508, %v506
  %v583 = vpack.c.b16 %v509, %v507
  %v584 = vpack.c.b16 %v512, %v510
  %v585 = vpack.c.b16 %v513, %v511
  %v586 = vpack.c.b16 %v516, %v514
  %v587 = vpack.c.b16 %v517, %v515
  %v588 = vpack.c.b16 %v520, %v518
  %v589 = vpack.c.b16 %v521, %v519
  %v590 = vpack.c.b16 %v524, %v522
  %v591 = vpack.c.b16 %v525, %v523
  %v592 = vpack.c.b16 %v528, %v526
  %v593 = vpack.c.b16 %v529, %v527
  %658 = vmatprep.subr.bf16.mxu0 %v531
  %659 = vmatpush1.bf16.msra.mxu0 %v530
  %660 = vmatprep.subr.bf16.mxu0 %v533
  %661 = vmatpush1.bf16.msra.mxu0 %v532
  %662 = vmatprep.subr.bf16.mxu0 %v535
  %663 = vmatpush1.bf16.msra.mxu0 %v534
  %664 = vmatprep.subr.bf16.mxu0 %v537
  %665 = vmatpush1.bf16.msra.mxu0 %v536
  %666 = vmatprep.subr.bf16.mxu0 %v539
  %667 = vmatpush1.bf16.msra.mxu0 %v538
  %668 = vmatprep.subr.bf16.mxu0 %v541
  %669 = vmatpush1.bf16.msra.mxu0 %v540
  %670 = vmatprep.subr.bf16.mxu0 %v543
  %671 = vmatpush1.bf16.msra.mxu0 %v542
  %672 = vmatprep.subr.bf16.mxu0 %v545
  %673 = vmatpush1.bf16.msra.mxu0 %v544
  %674 = vmatprep.subr.bf16.mxu0 %v547
  %675 = vmatpush1.bf16.msra.mxu0 %v546
  %676 = vmatprep.subr.bf16.mxu0 %v549
  %677 = vmatpush1.bf16.msra.mxu0 %v548
  %678 = vmatprep.subr.bf16.mxu0 %v551
  %679 = vmatpush1.bf16.msra.mxu0 %v550
  %680 = vmatprep.subr.bf16.mxu0 %v553
  %681 = vmatpush1.bf16.msra.mxu0 %v552
  %682 = vmatprep.subr.bf16.mxu0 %v555
  %683 = vmatpush1.bf16.msra.mxu0 %v554
  %684 = vmatprep.subr.bf16.mxu0 %v557
  %685 = vmatpush1.bf16.msra.mxu0 %v556
  %686 = vmatprep.subr.bf16.mxu0 %v559
  %687 = vmatpush1.bf16.msra.mxu0 %v558
  %688 = vmatprep.subr.bf16.mxu0 %v561
  %689 = vmatpush1.bf16.msra.mxu0 %v560
  %690 = vmatprep.mubr.bf16.mxu0 %v275
  %691 = vmatmul.mubr.bf16.gmra.mrb[0].mxu0 %v274
  %v692 = vpop.f32.mrb[0].mxu0
  %v693 = vadd.f32 0.0, %v692
  %v694 = vpop.f32.mrb[0].mxu0
  %v695 = vadd.f32 0.0, %v694
  %v696 = vpop.f32.mrb[0].mxu0
  %v697 = vadd.f32 0.0, %v696
  %v698 = vpop.f32.mrb[0].mxu0
  %v699 = vadd.f32 0.0, %v698
  %700 = vmatprep.mubr.bf16.mxu0 %v279
  %701 = vmatmul.mubr.bf16.gmra.mrb[0].mxu0 %v278
  %v702 = vpop.f32.mrb[0].mxu0
  %v703 = vadd.f32 0.0, %v702
  %v704 = vpop.f32.mrb[0].mxu0
  %v705 = vadd.f32 0.0, %v704
  %v706 = vpop.f32.mrb[0].mxu0
  %v707 = vadd.f32 0.0, %v706
  %v708 = vpop.f32.mrb[0].mxu0
  %v709 = vadd.f32 0.0, %v708
  %710 = vmatprep.mubr.bf16.mxu0 %v283
  %711 = vmatmul.mubr.bf16.gmra.mrb[0].mxu0 %v282
  %v712 = vpop.f32.mrb[0].mxu0
  %v713 = vadd.f32 0.0, %v712
  %v714 = vpop.f32.mrb[0].mxu0
  %v715 = vadd.f32 0.0, %v714
  %v716 = vpop.f32.mrb[0].mxu0
  %v717 = vadd.f32 0.0, %v716
  %v718 = vpop.f32.mrb[0].mxu0
  %v719 = vadd.f32 0.0, %v718
  %720 = vmatprep.mubr.bf16.mxu0 %v287
  %721 = vmatmul.mubr.bf16.gmra.mrb[0].mxu0 %v286
  %v722 = vpop.f32.mrb[0].mxu0
  %v723 = vadd.f32 0.0, %v722
  %v724 = vpop.f32.mrb[0].mxu0
  %v725 = vadd.f32 0.0, %v724
  %v726 = vpop.f32.mrb[0].mxu0
  %v727 = vadd.f32 0.0, %v726
  %v728 = vpop.f32.mrb[0].mxu0
  %v729 = vadd.f32 0.0, %v728
  %730 = vmatprep.mubr.bf16.mxu0 %v291
  %731 = vmatmul.mubr.bf16.gmra.mrb[0].mxu0 %v290
  %v732 = vpop.f32.mrb[0].mxu0
  %v733 = vadd.f32 0.0, %v732
  %v734 = vpop.f32.mrb[0].mxu0
  %v735 = vadd.f32 0.0, %v734
  %v736 = vpop.f32.mrb[0].mxu0
  %v737 = vadd.f32 0.0, %v736
  %v738 = vpop.f32.mrb[0].mxu0
  %v739 = vadd.f32 0.0, %v738
  %740 = vmatprep.mubr.bf16.mxu0 %v295
  %741 = vmatmul.mubr.bf16.gmra.mrb[0].mxu0 %v294
  %v742 = vpop.f32.mrb[0].mxu0
  %v743 = vadd.f32 0.0, %v742
  %v744 = vpop.f32.mrb[0].mxu0
  %v745 = vadd.f32 0.0, %v744
  %v746 = vpop.f32.mrb[0].mxu0
  %v747 = vadd.f32 0.0, %v746
  %v748 = vpop.f32.mrb[0].mxu0
  %v749 = vadd.f32 0.0, %v748
  %750 = vmatprep.mubr.bf16.mxu0 %v299
  %751 = vmatmul.mubr.bf16.gmra.mrb[0].mxu0 %v298
  %v752 = vpop.f32.mrb[0].mxu0
  %v753 = vadd.f32 0.0, %v752
  %v754 = vpop.f32.mrb[0].mxu0
  %v755 = vadd.f32 0.0, %v754
  %v756 = vpop.f32.mrb[0].mxu0
  %v757 = vadd.f32 0.0, %v756
  %v758 = vpop.f32.mrb[0].mxu0
  %v759 = vadd.f32 0.0, %v758
  %760 = vmatprep.mubr.bf16.mxu0 %v303
  %761 = vmatmul.mubr.bf16.gmra.mrb[0].mxu0 %v302
  %v762 = vpop.f32.mrb[0].mxu0
  %v763 = vadd.f32 0.0, %v762
  %v764 = vpop.f32.mrb[0].mxu0
  %v765 = vadd.f32 0.0, %v764
  %v766 = vpop.f32.mrb[0].mxu0
  %v767 = vadd.f32 0.0, %v766
  %v768 = vpop.f32.mrb[0].mxu0
  %v769 = vadd.f32 0.0, %v768
  %770 = vdwg.mxu0
  %771 = vmatprep.subr.bf16.mxu0 %v563
  %772 = vmatpush1.bf16.msra.mxu0 %v562
  %773 = vmatprep.subr.bf16.mxu0 %v565
  %774 = vmatpush1.bf16.msra.mxu0 %v564
  %775 = vmatprep.subr.bf16.mxu0 %v567
  %776 = vmatpush1.bf16.msra.mxu0 %v566
  %777 = vmatprep.subr.bf16.mxu0 %v569
  %778 = vmatpush1.bf16.msra.mxu0 %v568
  %779 = vmatprep.subr.bf16.mxu0 %v571
  %780 = vmatpush1.bf16.msra.mxu0 %v570
  %781 = vmatprep.subr.bf16.mxu0 %v573
  %782 = vmatpush1.bf16.msra.mxu0 %v572
  %783 = vmatprep.subr.bf16.mxu0 %v575
  %784 = vmatpush1.bf16.msra.mxu0 %v574
  %785 = vmatprep.subr.bf16.mxu0 %v577
  %786 = vmatpush1.bf16.msra.mxu0 %v576
  %787 = vmatprep.subr.bf16.mxu0 %v579
  %788 = vmatpush1.bf16.msra.mxu0 %v578
  %789 = vmatprep.subr.bf16.mxu0 %v581
  %790 = vmatpush1.bf16.msra.mxu0 %v580
  %791 = vmatprep.subr.bf16.mxu0 %v583
  %792 = vmatpush1.bf16.msra.mxu0 %v582
  %793 = vmatprep.subr.bf16.mxu0 %v585
  %794 = vmatpush1.bf16.msra.mxu0 %v584
  %795 = vmatprep.subr.bf16.mxu0 %v587
  %796 = vmatpush1.bf16.msra.mxu0 %v586
  %797 = vmatprep.subr.bf16.mxu0 %v589
  %798 = vmatpush1.bf16.msra.mxu0 %v588
  %799 = vmatprep.subr.bf16.mxu0 %v591
  %800 = vmatpush1.bf16.msra.mxu0 %v590
  %801 = vmatprep.subr.bf16.mxu0 %v593
  %802 = vmatpush1.bf16.msra.mxu0 %v592
  %803 = vmatprep.mubr.bf16.mxu0 %v277
  %804 = vmatmul.mubr.bf16.gmra.mrb[0].mxu0 %v276
  %v805 = vpop.f32.mrb[0].mxu0
  %v806 = vadd.f32 %v693, %v805
  %v807 = vpop.f32.mrb[0].mxu0
  %v808 = vadd.f32 %v695, %v807
  %v809 = vpop.f32.mrb[0].mxu0
  %v810 = vadd.f32 %v697, %v809
  %v811 = vpop.f32.mrb[0].mxu0
  %v812 = vadd.f32 %v699, %v811
  %813 = vmatprep.mubr.bf16.mxu0 %v281
  %814 = vmatmul.mubr.bf16.gmra.mrb[0].mxu0 %v280
  %v815 = vpop.f32.mrb[0].mxu0
  %v816 = vadd.f32 %v703, %v815
  %v817 = vpop.f32.mrb[0].mxu0
  %v818 = vadd.f32 %v705, %v817
  %v819 = vpop.f32.mrb[0].mxu0
  %v820 = vadd.f32 %v707, %v819
  %v821 = vpop.f32.mrb[0].mxu0
  %v822 = vadd.f32 %v709, %v821
  %823 = vmatprep.mubr.bf16.mxu0 %v285
  %824 = vmatmul.mubr.bf16.gmra.mrb[0].mxu0 %v284
  %v825 = vpop.f32.mrb[0].mxu0
  %v826 = vadd.f32 %v713, %v825
  %v827 = vpop.f32.mrb[0].mxu0
  %v828 = vadd.f32 %v715, %v827
  %v829 = vpop.f32.mrb[0].mxu0
  %v830 = vadd.f32 %v717, %v829
  %v831 = vpop.f32.mrb[0].mxu0
  %v832 = vadd.f32 %v719, %v831
  %833 = vmatprep.mubr.bf16.mxu0 %v289
  %834 = vmatmul.mubr.bf16.gmra.mrb[0].mxu0 %v288
  %v835 = vpop.f32.mrb[0].mxu0
  %v836 = vadd.f32 %v723, %v835
  %v837 = vpop.f32.mrb[0].mxu0
  %v838 = vadd.f32 %v725, %v837
  %v839 = vpop.f32.mrb[0].mxu0
  %v840 = vadd.f32 %v727, %v839
  %v841 = vpop.f32.mrb[0].mxu0
  %v842 = vadd.f32 %v729, %v841
  %843 = vmatprep.mubr.bf16.mxu0 %v293
  %844 = vmatmul.mubr.bf16.gmra.mrb[0].mxu0 %v292
  %v845 = vpop.f32.mrb[0].mxu0
  %v846 = vadd.f32 %v733, %v845
  %v847 = vpop.f32.mrb[0].mxu0
  %v848 = vadd.f32 %v735, %v847
  %v849 = vpop.f32.mrb[0].mxu0
  %v850 = vadd.f32 %v737, %v849
  %v851 = vpop.f32.mrb[0].mxu0
  %v852 = vadd.f32 %v739, %v851
  %853 = vmatprep.mubr.bf16.mxu0 %v297
  %854 = vmatmul.mubr.bf16.gmra.mrb[0].mxu0 %v296
  %v855 = vpop.f32.mrb[0].mxu0
  %v856 = vadd.f32 %v743, %v855
  %v857 = vpop.f32.mrb[0].mxu0
  %v858 = vadd.f32 %v745, %v857
  %v859 = vpop.f32.mrb[0].mxu0
  %v860 = vadd.f32 %v747, %v859
  %v861 = vpop.f32.mrb[0].mxu0
  %v862 = vadd.f32 %v749, %v861
  %863 = vmatprep.mubr.bf16.mxu0 %v301
  %864 = vmatmul.mubr.bf16.gmra.mrb[0].mxu0 %v300
  %v865 = vpop.f32.mrb[0].mxu0
  %v866 = vadd.f32 %v753, %v865
  %v867 = vpop.f32.mrb[0].mxu0
  %v868 = vadd.f32 %v755, %v867
  %v869 = vpop.f32.mrb[0].mxu0
  %v870 = vadd.f32 %v757, %v869
  %v871 = vpop.f32.mrb[0].mxu0
  %v872 = vadd.f32 %v759, %v871
  %873 = vmatprep.mubr.bf16.mxu0 %v305
  %874 = vmatmul.mubr.bf16.gmra.mrb[0].mxu0 %v304
  %v875 = vpop.f32.mrb[0].mxu0
  %v876 = vadd.f32 %v763, %v875
  %v877 = vpop.f32.mrb[0].mxu0
  %v878 = vadd.f32 %v765, %v877
  %v879 = vpop.f32.mrb[0].mxu0
  %v880 = vadd.f32 %v767, %v879
  %v881 = vpop.f32.mrb[0].mxu0
  %v882 = vadd.f32 %v769, %v881
  %883 = vdwg.mxu0
  %v884 = vadd.f32 %v50, %v806
  %v885 = vadd.f32 %v51, %v808
  %v886 = vadd.f32 %v52, %v810
  %v887 = vadd.f32 %v53, %v812
  %v888 = vadd.f32 %v54, %v816
  %v889 = vadd.f32 %v55, %v818
  %v890 = vadd.f32 %v56, %v820
  %v891 = vadd.f32 %v57, %v822
  %v892 = vadd.f32 %v58, %v826
  %v893 = vadd.f32 %v59, %v828
  %v894 = vadd.f32 %v60, %v830
  %v895 = vadd.f32 %v61, %v832
  %v896 = vadd.f32 %v62, %v836
  %v897 = vadd.f32 %v63, %v838
  %v898 = vadd.f32 %v64, %v840
  %v899 = vadd.f32 %v65, %v842
  %v900 = vadd.f32 %v66, %v846
  %v901 = vadd.f32 %v67, %v848
  %v902 = vadd.f32 %v68, %v850
  %v903 = vadd.f32 %v69, %v852
  %v904 = vadd.f32 %v70, %v856
  %v905 = vadd.f32 %v71, %v858
  %v906 = vadd.f32 %v72, %v860
  %v907 = vadd.f32 %v73, %v862
  %v908 = vadd.f32 %v74, %v866
  %v909 = vadd.f32 %v75, %v868
  %v910 = vadd.f32 %v76, %v870
  %v911 = vadd.f32 %v77, %v872
  %v912 = vadd.f32 %v78, %v876
  %v913 = vadd.f32 %v79, %v878
  %v914 = vadd.f32 %v80, %v880
  %v915 = vadd.f32 %v81, %v882
  %916 = vst [vmem:[#allocation2] sm:$0xff] %v884
  %917 = vst [vmem:[#allocation2 + $0x8] sm:$0xff] %v885
  %918 = vst [vmem:[#allocation2 + $0x10] sm:$0xff] %v886
  %919 = vst [vmem:[#allocation2 + $0x18] sm:$0xff] %v887
  %920 = vst [vmem:[#allocation2 + $0x20] sm:$0xff] %v888
  %921 = vst [vmem:[#allocation2 + $0x28] sm:$0xff] %v889
  %922 = vst [vmem:[#allocation2 + $0x30] sm:$0xff] %v890
  %923 = vst [vmem:[#allocation2 + $0x38] sm:$0xff] %v891
  %924 = vst [vmem:[#allocation2 + $0x40] sm:$0xff] %v892
  %925 = vst [vmem:[#allocation2 + $0x48] sm:$0xff] %v893
  %926 = vst [vmem:[#allocation2 + $0x50] sm:$0xff] %v894
  %927 = vst [vmem:[#allocation2 + $0x58] sm:$0xff] %v895
  %928 = vst [vmem:[#allocation2 + $0x60] sm:$0xff] %v896
  %929 = vst [vmem:[#allocation2 + $0x68] sm:$0xff] %v897
  %930 = vst [vmem:[#allocation2 + $0x70] sm:$0xff] %v898
  %931 = vst [vmem:[#allocation2 + $0x78] sm:$0xff] %v899
  %932 = vst [vmem:[#allocation2 + $0x80] sm:$0xff] %v900
  %933 = vst [vmem:[#allocation2 + $0x88] sm:$0xff] %v901
  %934 = vst [vmem:[#allocation2 + $0x90] sm:$0xff] %v902
  %935 = vst [vmem:[#allocation2 + $0x98] sm:$0xff] %v903
  %936 = vst [vmem:[#allocation2 + $0xa0] sm:$0xff] %v904
  %937 = vst [vmem:[#allocation2 + $0xa8] sm:$0xff] %v905
  %938 = vst [vmem:[#allocation2 + $0xb0] sm:$0xff] %v906
  %939 = vst [vmem:[#allocation2 + $0xb8] sm:$0xff] %v907
  %940 = vst [vmem:[#allocation2 + $0xc0] sm:$0xff] %v908
  %941 = vst [vmem:[#allocation2 + $0xc8] sm:$0xff] %v909
  %942 = vst [vmem:[#allocation2 + $0xd0] sm:$0xff] %v910
  %943 = vst [vmem:[#allocation2 + $0xd8] sm:$0xff] %v911
  %944 = vst [vmem:[#allocation2 + $0xe0] sm:$0xff] %v912
  %945 = vst [vmem:[#allocation2 + $0xe8] sm:$0xff] %v913
  %946 = vst [vmem:[#allocation2 + $0xf0] sm:$0xff] %v914
  %947 = vst [vmem:[#allocation2 + $0xf8] sm:$0xff] %v915
  // Predicated region
  $region18: #{fwd.41} parent=0 // pred_check
    %p948 = pneg %p14
  $region19: #{fwd.41} parent=0 // pred_check_branch
    %950 = sbr.rel (%p948) target = $region21
  $region20: #{fwd.41} parent=0 // pred_region
    %v951 = vld [vmem:[#allocation2] sm:$0xff]
    %v952 = vld [vmem:[#allocation2 + $0x8] sm:$0xff]
    %v953 = vld [vmem:[#allocation2 + $0x10] sm:$0xff]
    %v954 = vld [vmem:[#allocation2 + $0x18] sm:$0xff]
    %v955 = vld [vmem:[#allocation2 + $0x20] sm:$0xff]
    %v956 = vld [vmem:[#allocation2 + $0x28] sm:$0xff]
    %v957 = vld [vmem:[#allocation2 + $0x30] sm:$0xff]
    %v958 = vld [vmem:[#allocation2 + $0x38] sm:$0xff]
    %v959 = vld [vmem:[#allocation2 + $0x40] sm:$0xff]
    %v960 = vld [vmem:[#allocation2 + $0x48] sm:$0xff]
    %v961 = vld [vmem:[#allocation2 + $0x50] sm:$0xff]
    %v962 = vld [vmem:[#allocation2 + $0x58] sm:$0xff]
    %v963 = vld [vmem:[#allocation2 + $0x60] sm:$0xff]
    %v964 = vld [vmem:[#allocation2 + $0x68] sm:$0xff]
    %v965 = vld [vmem:[#allocation2 + $0x70] sm:$0xff]
    %v966 = vld [vmem:[#allocation2 + $0x78] sm:$0xff]
    %v967 = vld [vmem:[#allocation2 + $0x80] sm:$0xff]
    %v968 = vld [vmem:[#allocation2 + $0x88] sm:$0xff]
    %v969 = vld [vmem:[#allocation2 + $0x90] sm:$0xff]
    %v970 = vld [vmem:[#allocation2 + $0x98] sm:$0xff]
    %v971 = vld [vmem:[#allocation2 + $0xa0] sm:$0xff]
    %v972 = vld [vmem:[#allocation2 + $0xa8] sm:$0xff]
    %v973 = vld [vmem:[#allocation2 + $0xb0] sm:$0xff]
    %v974 = vld [vmem:[#allocation2 + $0xb8] sm:$0xff]
    %v975 = vld [vmem:[#allocation2 + $0xc0] sm:$0xff]
    %v976 = vld [vmem:[#allocation2 + $0xc8] sm:$0xff]
    %v977 = vld [vmem:[#allocation2 + $0xd0] sm:$0xff]
    %v978 = vld [vmem:[#allocation2 + $0xd8] sm:$0xff]
    %v979 = vld [vmem:[#allocation2 + $0xe0] sm:$0xff]
    %v980 = vld [vmem:[#allocation2 + $0xe8] sm:$0xff]
    %v981 = vld [vmem:[#allocation2 + $0xf0] sm:$0xff]
    %v982 = vld [vmem:[#allocation2 + $0xf8] sm:$0xff]
    %v983 = vld [vmem:[%s2] sm:$0x3]
    %v985 = vlaneseq
    %v986 = vshrl.u32 %v985, 7
    %v987 = vsub.s32 0, %v986
    %v988 = vrot.slane %v983, %v987
    %v989 = vlaneseq
    %v990 = vshrl.u32 %v989, 7
    %v991 = vsub.s32 1, %v990
    %v992 = vrot.slane %v983, %v991
    %v995 = vadd.f32 %v951, %v988
    %v996 = vadd.f32 %v952, %v992
    %v997 = vadd.f32 %v953, %v988
    %v998 = vadd.f32 %v954, %v992
    %v999 = vadd.f32 %v955, %v988
    %v1000 = vadd.f32 %v956, %v992
    %v1001 = vadd.f32 %v957, %v988
    %v1002 = vadd.f32 %v958, %v992
    %v1003 = vadd.f32 %v959, %v988
    %v1004 = vadd.f32 %v960, %v992
    %v1005 = vadd.f32 %v961, %v988
    %v1006 = vadd.f32 %v962, %v992
    %v1007 = vadd.f32 %v963, %v988
    %v1008 = vadd.f32 %v964, %v992
    %v1009 = vadd.f32 %v965, %v988
    %v1010 = vadd.f32 %v966, %v992
    %v1011 = vadd.f32 %v967, %v988
    %v1012 = vadd.f32 %v968, %v992
    %v1013 = vadd.f32 %v969, %v988
    %v1014 = vadd.f32 %v970, %v992
    %v1015 = vadd.f32 %v971, %v988
    %v1016 = vadd.f32 %v972, %v992
    %v1017 = vadd.f32 %v973, %v988
    %v1018 = vadd.f32 %v974, %v992
    %v1019 = vadd.f32 %v975, %v988
    %v1020 = vadd.f32 %v976, %v992
    %v1021 = vadd.f32 %v977, %v988
    %v1022 = vadd.f32 %v978, %v992
    %v1023 = vadd.f32 %v979, %v988
    %v1024 = vadd.f32 %v980, %v992
    %v1025 = vadd.f32 %v981, %v988
    %v1026 = vadd.f32 %v982, %v992
    %1027 = vst [vmem:[%s3] sm:$0xff] %v995
    %1028 = vst [vmem:[%s3 + $0x8] sm:$0xff] %v996
    %1029 = vst [vmem:[%s3 + $0x10] sm:$0xff] %v997
    %1030 = vst [vmem:[%s3 + $0x18] sm:$0xff] %v998
    %1031 = vst [vmem:[%s3 + $0x20] sm:$0xff] %v999
    %1032 = vst [vmem:[%s3 + $0x28] sm:$0xff] %v1000
    %1033 = vst [vmem:[%s3 + $0x30] sm:$0xff] %v1001
    %1034 = vst [vmem:[%s3 + $0x38] sm:$0xff] %v1002
    %1035 = vst [vmem:[%s3 + $0x40] sm:$0xff] %v1003
    %1036 = vst [vmem:[%s3 + $0x48] sm:$0xff] %v1004
    %1037 = vst [vmem:[%s3 + $0x50] sm:$0xff] %v1005
    %1038 = vst [vmem:[%s3 + $0x58] sm:$0xff] %v1006
    %1039 = vst [vmem:[%s3 + $0x60] sm:$0xff] %v1007
    %1040 = vst [vmem:[%s3 + $0x68] sm:$0xff] %v1008
    %1041 = vst [vmem:[%s3 + $0x70] sm:$0xff] %v1009
    %1042 = vst [vmem:[%s3 + $0x78] sm:$0xff] %v1010
    %1043 = vst [vmem:[%s3 + $0x80] sm:$0xff] %v1011
    %1044 = vst [vmem:[%s3 + $0x88] sm:$0xff] %v1012
    %1045 = vst [vmem:[%s3 + $0x90] sm:$0xff] %v1013
    %1046 = vst [vmem:[%s3 + $0x98] sm:$0xff] %v1014
    %1047 = vst [vmem:[%s3 + $0xa0] sm:$0xff] %v1015
    %1048 = vst [vmem:[%s3 + $0xa8] sm:$0xff] %v1016
    %1049 = vst [vmem:[%s3 + $0xb0] sm:$0xff] %v1017
    %1050 = vst [vmem:[%s3 + $0xb8] sm:$0xff] %v1018
    %1051 = vst [vmem:[%s3 + $0xc0] sm:$0xff] %v1019
    %1052 = vst [vmem:[%s3 + $0xc8] sm:$0xff] %v1020
    %1053 = vst [vmem:[%s3 + $0xd0] sm:$0xff] %v1021
    %1054 = vst [vmem:[%s3 + $0xd8] sm:$0xff] %v1022
    %1055 = vst [vmem:[%s3 + $0xe0] sm:$0xff] %v1023
    %1056 = vst [vmem:[%s3 + $0xe8] sm:$0xff] %v1024
    %1057 = vst [vmem:[%s3 + $0xf0] sm:$0xff] %v1025
    %1058 = vst [vmem:[%s3 + $0xf8] sm:$0xff] %v1026
  $region21: #{fwd.41} parent=0 // pred_fallthru
    _
  // Predicated region
  $region22: #{fwd.41} parent=0 // pred_check
    _
  $region23: #{fwd.41} parent=0 // pred_check_branch
    %1060 = sbr.rel (0) target = $region25
  $region24: #{fwd.41} parent=0 // pred_region
    _
  $region25: #{fwd.41} parent=0 // pred_fallthru
    _
  // Predicated region
  $region26: #{fwd.41} parent=0 // pred_check
    _
  $region27: #{fwd.41} parent=0 // pred_check_branch
    %1062 = sbr.rel (0) target = $region29
  $region28: #{fwd.41} parent=0 // pred_region
    _
  $region29: #{fwd.41} parent=0 // pred_fallthru
    _

</llo_original>
